<compile_context>
chip_gen: v7x
topology: tpu7x:2x2x1
jax: 0.10.0
libtpu: 0.0.40
codegen_flags: <defaults>
</compile_context>

<pallas_src>
import functools

import jax
import jax.numpy as jnp
from jax.experimental import pallas as pl
from jax.experimental.pallas import tpu as pltpu


# Leading zero rows of the padded RPN-conv scratch: makes the interior
# re-embed store start at PAD0 + Wp (a multiple of 8 when Wp is).
PAD0 = 8


# -----------------------------------------------------------------------------
# Host-side im2col for a 3x3 "same" conv (tiny: Cin = 3).
# -----------------------------------------------------------------------------
def _im2col_3x3(x_nchw, row_stride):
    """NCHW -> (N, H*row_stride, 9*C) bf16 patches.

    Row q = i*row_stride + j holds the flattened 3x3xC patch around pixel
    (i, j); rows with j >= W (present when row_stride > W) are zero.
    """
    N, C, H, W = x_nchw.shape
    x = jnp.transpose(x_nchw, (0, 2, 3, 1))                    # NHWC
    xp = jnp.pad(x, ((0, 0), (1, 1), (1, 1), (0, 0)))
    cols = [xp[:, kh:kh + H, kw:kw + W, :]
            for kh in range(3) for kw in range(3)]
    p = jnp.concatenate(cols, axis=-1)                         # (N, H, W, 9C)
    if row_stride > W:
        p = jnp.pad(p, ((0, 0), (0, 0), (0, row_stride - W), (0, 0)))
    return p.reshape(N, H * row_stride, 9 * C).astype(jnp.bfloat16)


# -----------------------------------------------------------------------------
# Kernel 1: support branch = backbone conv + ReLU fused with AdaptiveAvgPool(1,1)
#           AND the shot-mean (batch_pooling): one mean over all S*H*W rows.
# -----------------------------------------------------------------------------
def _supp_pool_kernel(x_ref, w_ref, b_ref, o_ref, *, inv_count):
    f = jnp.dot(x_ref[...], w_ref[...], preferred_element_type=jnp.float32)
    f = jnp.maximum(f + b_ref[...], 0.0)
    o_ref[...] = jnp.sum(f, axis=0, keepdims=True) * inv_count


# -----------------------------------------------------------------------------
# Kernel 2: query branch = backbone conv -> support scale -> RPN conv -> heads
# -----------------------------------------------------------------------------
def _query_fused_kernel(x_ref, pooled_ref, mask_ref,
                        wbb_ref, bbb_ref, wrpn_ref, brpn_ref,
                        whead_ref, bhead_ref,
                        o_ref, f2_ref, *, Wp, n_rows):
    C = f2_ref.shape[1]
    lead = PAD0 + Wp                              # rows before the interior
    tail = f2_ref.shape[0] - (lead + n_rows)      # rows after the interior

    # Zero only the halo bands (top/bottom padded rows + alignment pad); the
    # interior is fully rewritten below, so each grid step is self-contained.
    f2_ref[pl.ds(0, lead), :] = jnp.zeros((lead, C), f2_ref.dtype)
    f2_ref[pl.ds(lead + n_rows, tail), :] = jnp.zeros((tail, C), f2_ref.dtype)

    # 1) backbone 3x3 conv: one K=9*Cin bf16 MXU matmul (host im2col),
    #    f32 accumulation kept in vregs, + bias + ReLU.
    f = jnp.dot(x_ref[...], wbb_ref[...], preferred_element_type=jnp.float32)
    f = jnp.maximum(f + bbb_ref[...], 0.0)

    # 2) support modulation (shot-mean already folded into pooled) and zeroing
    #    of the Wp-stride pad columns (they double as the RPN-conv halo).
    f = f * mask_ref[...] * pooled_ref[...]

    # 3) re-embed the combined feature into the zero-halo padded buffer (bf16):
    #    a single 8-aligned contiguous store of the interior rows.
    f2_ref[pl.ds(lead, n_rows), :] = f.astype(jnp.bfloat16)

    # 4) RPN 3x3 conv: 9 shifted bf16 matmuls, accumulated in vregs (f32).
    acc = None
    for t in range(9):
        kh, kw = divmod(t, 3)
        off = PAD0 - 1 + kh * Wp + kw             # static slice start
        lhs = f2_ref[pl.ds(off, n_rows), :]
        p = jnp.dot(lhs, wrpn_ref[t], preferred_element_type=jnp.float32)
        acc = p if acc is None else acc + p
    trunk = jnp.maximum(acc + brpn_ref[...], 0.0)

    # 5) fused 1x1 objectness + bbox heads (one lane-padded matmul), bf16 out.
    head = jnp.dot(trunk.astype(jnp.bfloat16), whead_ref[...],
                   preferred_element_type=jnp.float32) + bhead_ref[...]
    o_ref[...] = head.astype(o_ref.dtype)


# -----------------------------------------------------------------------------
# GeneralizedRCNN (simplified config) in JAX/Pallas.
# -----------------------------------------------------------------------------
class GeneralizedRCNNPallas:
    def __init__(self, key, in_channels=3, out_channels=32, num_anchors=3):
        self.in_channels = in_channels
        self.out_channels = out_channels
        self.num_anchors = num_anchors
        # cls (A) + box (4A) heads concatenated and lane-padded.
        self.head_n = ((5 * num_anchors + 7) // 8) * 8
        k = jax.random.split(key, 4)

        def winit(kk, shape):
            fan_in = shape[1] * shape[2] * shape[3]
            return (jax.random.normal(kk, shape, jnp.float32)
                    * (1.0 / jnp.sqrt(jnp.float32(fan_in))))

        w_bb = winit(k[0], (out_channels, in_channels, 3, 3))
        w_rpn = winit(k[1], (out_channels, out_channels, 3, 3))
        w_cls = winit(k[2], (num_anchors, out_channels, 1, 1))
        w_box = winit(k[3], (num_anchors * 4, out_channels, 1, 1))

        def taps(w):   # (Cout, Cin, 3, 3) -> (9, Cin, Cout), tap t = kh*3 + kw
            co, ci = w.shape[0], w.shape[1]
            return jnp.transpose(w, (2, 3, 1, 0)).reshape(9, ci, co)

        # f32 masters (used by the pure-JAX reference), bf16 copies for the MXU.
        self.w_bb_f32 = taps(w_bb).reshape(9 * in_channels, out_channels)
        self.w_rpn_f32 = taps(w_rpn)
        self.b_bb = jnp.zeros((1, out_channels), jnp.float32)
        self.b_rpn = jnp.zeros((1, out_channels), jnp.float32)
        wh = jnp.concatenate(
            [w_cls.reshape(num_anchors, out_channels).T,
             w_box.reshape(num_anchors * 4, out_channels).T], axis=1)
        self.w_head_f32 = jnp.pad(wh, ((0, 0), (0, self.head_n - wh.shape[1])))
        self.b_head = jnp.zeros((1, self.head_n), jnp.float32)

        self.w_bb = self.w_bb_f32.astype(jnp.bfloat16)
        self.w_rpn = self.w_rpn_f32.astype(jnp.bfloat16)
        self.w_head = self.w_head_f32.astype(jnp.bfloat16)

    # --- pallas_call wrappers -------------------------------------------------
    def _supp_pooled(self, xs_im2col, S, H, W):
        B, rows, K = xs_im2col.shape
        C = self.out_channels
        return pl.pallas_call(
            functools.partial(_supp_pool_kernel, inv_count=1.0 / rows),
            out_shape=jax.ShapeDtypeStruct((B, 1, C), jnp.float32),
            grid_spec=pltpu.PrefetchScalarGridSpec(
                num_scalar_prefetch=0,
                grid=(B,),
                in_specs=[
                    pl.BlockSpec((None, rows, K), lambda b: (b, 0, 0)),
                    pl.BlockSpec((K, C), lambda b: (0, 0)),
                    pl.BlockSpec((1, C), lambda b: (0, 0)),
                ],
                out_specs=pl.BlockSpec((None, 1, C), lambda b: (b, 0, 0)),
            ),
            compiler_params=pltpu.CompilerParams(
                dimension_semantics=("parallel",),
                vmem_limit_bytes=32 * 1024 * 1024,
            ),
        )(xs_im2col, self.w_bb, self.b_bb)

    def _query_heads(self, xq_im2col, pooled, mask, H, W, Wp):
        B, n_rows, K = xq_im2col.shape
        C = self.out_channels
        R = PAD0 + (H + 2) * Wp + 8    # padded scratch rows (halo + align pad)
        return pl.pallas_call(
            functools.partial(_query_fused_kernel, Wp=Wp, n_rows=n_rows),
            out_shape=jax.ShapeDtypeStruct((B, n_rows, self.head_n),
                                           jnp.bfloat16),
            grid_spec=pltpu.PrefetchScalarGridSpec(
                num_scalar_prefetch=0,
                grid=(B,),
                in_specs=[
                    pl.BlockSpec((None, n_rows, K), lambda b: (b, 0, 0)),
                    pl.BlockSpec((None, 1, C), lambda b: (b, 0, 0)),
                    pl.BlockSpec((n_rows, 1), lambda b: (0, 0)),
                    pl.BlockSpec((K, C), lambda b: (0, 0)),
                    pl.BlockSpec((1, C), lambda b: (0, 0)),
                    pl.BlockSpec((9, C, C), lambda b: (0, 0, 0)),
                    pl.BlockSpec((1, C), lambda b: (0, 0)),
                    pl.BlockSpec((C, self.head_n), lambda b: (0, 0)),
                    pl.BlockSpec((1, self.head_n), lambda b: (0, 0)),
                ],
                out_specs=pl.BlockSpec((None, n_rows, self.head_n),
                                       lambda b: (b, 0, 0)),
                scratch_shapes=[pltpu.VMEM((R, C), jnp.bfloat16)],
            ),
            compiler_params=pltpu.CompilerParams(
                dimension_semantics=("parallel",),
                vmem_limit_bytes=32 * 1024 * 1024,
            ),
        )(xq_im2col, pooled, mask, self.w_bb, self.b_bb,
          self.w_rpn, self.b_rpn, self.w_head, self.b_head)

    # --- forward --------------------------------------------------------------
    def forward(self, images, images_supp):
        B, Cin, H, W = images.shape
        D = images_supp.shape[0]
        S = D // B
        A = self.num_anchors
        Wp = ((W + 2 + 7) // 8) * 8   # 8-aligned row stride of the padded layout

        # host-side im2col (tiny, Cin=3) -> single K=9*Cin matmuls in-kernel
        xs = _im2col_3x3(images_supp, row_stride=W).reshape(
            B, S * H * W, 9 * Cin)                      # shots stacked along M
        xq = _im2col_3x3(images, row_stride=Wp)         # (B, H*Wp, 9*Cin)
        mask = (jnp.arange(H * Wp, dtype=jnp.int32) % Wp < W
                ).astype(jnp.float32).reshape(H * Wp, 1)

        # support branch: backbone conv + AdaptiveAvgPool2d((1,1)) + shot-mean,
        # all fused; support feature maps never touch HBM.
        pooled = self._supp_pooled(xs, S, H, W)         # (B, 1, C)

        # query branch: backbone conv -> support scale -> RPN conv -> heads,
        # all in one gridded kernel; intermediates stay in vregs / VMEM scratch.
        head = self._query_heads(xq, pooled, mask, H, W, Wp)
        head = head.reshape(B, H, Wp, self.head_n)[:, :, :W, :]
        head = head.astype(jnp.float32)
        objectness = jnp.transpose(head[..., :A], (0, 3, 1, 2))
        bbox_deltas = jnp.transpose(head[..., A:5 * A], (0, 3, 1, 2))
        # TODO(synk): anchor generation, box decoding and NMS (the BoxList
        # proposal selection of the real RPN) have no clean Pallas equivalent;
        # the RPN head tensors are returned instead of decoded BoxLists.
        return [objectness], [bbox_deltas]

    # --- pure-JAX f32 reference (for validation) ------------------------------
    def reference_forward(self, images, images_supp):
        B, Cin, H, W = images.shape
        S = images_supp.shape[0] // B
        A = self.num_anchors
        C = self.out_channels

        def conv3x3(x_nhwc, w_flat, b):
            n, h, w, _ = x_nhwc.shape
            xp = jnp.pad(x_nhwc, ((0, 0), (1, 1), (1, 1), (0, 0)))
            cols = [xp[:, kh:kh + h, kw:kw + w, :]
                    for kh in range(3) for kw in range(3)]
            p = jnp.concatenate(cols, axis=-1)
            return (jnp.einsum('nhwk,kc->nhwc', p, w_flat)
                    + b.reshape(1, 1, 1, -1))

        q = jnp.transpose(images, (0, 2, 3, 1))
        s = jnp.transpose(images_supp, (0, 2, 3, 1))
        fq = jnp.maximum(conv3x3(q, self.w_bb_f32, self.b_bb), 0.0)
        fs = jnp.maximum(conv3x3(s, self.w_bb_f32, self.b_bb), 0.0)
        pooled = fs.mean(axis=(1, 2)).reshape(B, S, C).mean(axis=1)   # (B, C)
        comb = fq * pooled[:, None, None, :]
        trunk = jnp.maximum(
            conv3x3(comb, self.w_rpn_f32.reshape(9 * C, C), self.b_rpn), 0.0)
        head = (jnp.einsum('nhwc,ck->nhwk', trunk, self.w_head_f32)
                + self.b_head.reshape(1, 1, 1, -1))
        objectness = jnp.transpose(head[..., :A], (0, 3, 1, 2))
        bbox_deltas = jnp.transpose(head[..., A:5 * A], (0, 3, 1, 2))
        return [objectness], [bbox_deltas]


# -----------------------------------------------------------------------------
if __name__ == "__main__":
    key = jax.random.PRNGKey(0)
    k_model, k_img, k_supp = jax.random.split(key, 3)

    batch = 2
    shots = 2                      # support images per query image
    in_channels, H, W = 3, 16, 16

    model = GeneralizedRCNNPallas(k_model, in_channels=in_channels,
                                  out_channels=32, num_anchors=3)

    images = jax.random.normal(k_img, (batch, in_channels, H, W), jnp.float32)
    images_supp = jax.random.normal(
        k_supp, (batch * shots, in_channels, H, W), jnp.float32)

    objectness, bbox_deltas = jax.jit(model.forward)(images, images_supp)
    jax.block_until_ready((objectness, bbox_deltas))

    assert objectness[0].shape == (batch, 3, H, W)
    assert bbox_deltas[0].shape == (batch, 12, H, W)
    assert bool(jnp.all(jnp.isfinite(objectness[0])))
    assert bool(jnp.all(jnp.isfinite(bbox_deltas[0])))

    # validate against the pure-JAX f32 reference (bf16 MXU operands -> loose tol)
    obj_ref, box_ref = model.reference_forward(images, images_supp)
    assert bool(jnp.allclose(objectness[0], obj_ref[0], rtol=0.1, atol=0.1))
    assert bool(jnp.allclose(bbox_deltas[0], box_ref[0], rtol=0.1, atol=0.1))

    print("KERNEL_OK")
</pallas_src>

<mosaic_0001>
module attributes {stable_mosaic.version = 11 : i64} {
  func.func @_supp_pool_kernel(%arg0: i32, %arg1: memref<1x512x27xbf16, #tpu.memory_space<vmem>>, %arg2: memref<27x32xbf16, #tpu.memory_space<vmem>>, %arg3: memref<1x32xf32, #tpu.memory_space<vmem>>, %arg4: memref<1x1x32xf32, #tpu.memory_space<vmem>>) attributes {dimension_semantics = [#tpu.dimension_semantics<parallel>], iteration_bounds = array<i64: 2>, scalar_prefetch = 0 : i64, scratch_operands = 0 : i64, tpu.core_type = #tpu.core_type<tc>, window_params = [{transform_indices = @transform_0, window_bounds = array<i64: 1, 512, 27>}, {pipeline_mode = #tpu.pipeline_mode<synchronous>, transform_indices = @transform_1, window_bounds = array<i64: 27, 32>}, {pipeline_mode = #tpu.pipeline_mode<synchronous>, transform_indices = @transform_2, window_bounds = array<i64: 1, 32>}, {transform_indices = @transform_3, window_bounds = array<i64: 1, 1, 32>}]} {
    %c0 = arith.constant 0 : index
    %c0_0 = arith.constant 0 : index
    %c0_1 = arith.constant 0 : index
    %0 = vector.load %arg1[%c0, %c0_0, %c0_1] : memref<1x512x27xbf16, #tpu.memory_space<vmem>>, vector<1x512x27xbf16>
    %1 = vector.shape_cast %0 : vector<1x512x27xbf16> to vector<512x27xbf16>
    %c0_2 = arith.constant 0 : index
    %c0_3 = arith.constant 0 : index
    %2 = vector.load %arg2[%c0_2, %c0_3] : memref<27x32xbf16, #tpu.memory_space<vmem>>, vector<27x32xbf16>
    %cst = arith.constant dense<0.000000e+00> : vector<512x32xf32>
    %3 = tpu.matmul %1, %2, %cst {dimension_numbers = #tpu.dot_dimension_numbers<[1], [0], [0], [1], [0, 0, 1, 1], [], []>} : vector<512x27xbf16>, vector<27x32xbf16>, vector<512x32xf32> -> vector<512x32xf32>
    %c0_4 = arith.constant 0 : index
    %c0_5 = arith.constant 0 : index
    %4 = vector.load %arg3[%c0_4, %c0_5] : memref<1x32xf32, #tpu.memory_space<vmem>>, vector<1x32xf32>
    %5 = vector.broadcast %4 : vector<1x32xf32> to vector<512x32xf32>
    %6 = arith.addf %3, %5 : vector<512x32xf32>
    %cst_6 = arith.constant 0.000000e+00 : f32
    %7 = vector.broadcast %cst_6 : f32 to vector<512x32xf32>
    %8 = arith.maximumf %6, %7 : vector<512x32xf32>
    %cst_7 = arith.constant dense<0.000000e+00> : vector<32xf32>
    %9 = vector.multi_reduction <add>, %8, %cst_7 [0] : vector<512x32xf32> to vector<32xf32>
    %10 = vector.shape_cast %9 : vector<32xf32> to vector<1x32xf32>
    %cst_8 = arith.constant 0.001953125 : f32
    %11 = vector.broadcast %cst_8 : f32 to vector<1x32xf32>
    %12 = arith.mulf %10, %11 : vector<1x32xf32>
    %c0_9 = arith.constant 0 : index
    %c0_10 = arith.constant 0 : index
    %c0_11 = arith.constant 0 : index
    %13 = vector.load %arg4[%c0_9, %c0_10, %c0_11] : memref<1x1x32xf32, #tpu.memory_space<vmem>>, vector<1x1x32xf32>
    %14 = vector.shape_cast %13 : vector<1x1x32xf32> to vector<1x32xf32>
    %15 = vector.shape_cast %12 : vector<1x32xf32> to vector<1x1x32xf32>
    tpu.vector_store %arg4[%c0_9, %c0_10, %c0_11], %15 {strides = array<i32>} : memref<1x1x32xf32, #tpu.memory_space<vmem>>, vector<1x1x32xf32>,
    return
  }
  func.func @transform_0(%arg0: i32) -> (i32, i32, i32) {
    %c0_i32 = arith.constant 0 : i32
    %c0_i32_0 = arith.constant 0 : i32
    %c0_i32_1 = arith.constant 0 : i32
    return %arg0, %c0_i32, %c0_i32_0 : i32, i32, i32
  }
  func.func @transform_1(%arg0: i32) -> (i32, i32) {
    %c0_i32 = arith.constant 0 : i32
    %c0_i32_0 = arith.constant 0 : i32
    %c0_i32_1 = arith.constant 0 : i32
    return %c0_i32, %c0_i32_0 : i32, i32
  }
  func.func @transform_2(%arg0: i32) -> (i32, i32) {
    %c0_i32 = arith.constant 0 : i32
    %c0_i32_0 = arith.constant 0 : i32
    %c0_i32_1 = arith.constant 0 : i32
    return %c0_i32, %c0_i32_0 : i32, i32
  }
  func.func @transform_3(%arg0: i32) -> (i32, i32, i32) {
    %c0_i32 = arith.constant 0 : i32
    %c0_i32_0 = arith.constant 0 : i32
    %c0_i32_1 = arith.constant 0 : i32
    return %arg0, %c0_i32, %c0_i32_0 : i32, i32, i32
  }
}

module attributes {stable_mosaic.version = 11 : i64} {
  func.func @_query_fused_kernel(%arg0: i32, %arg1: memref<1x384x27xbf16, #tpu.memory_space<vmem>>, %arg2: memref<1x1x32xf32, #tpu.memory_space<vmem>>, %arg3: memref<384x1xf32, #tpu.memory_space<vmem>>, %arg4: memref<27x32xbf16, #tpu.memory_space<vmem>>, %arg5: memref<1x32xf32, #tpu.memory_space<vmem>>, %arg6: memref<9x32x32xbf16, #tpu.memory_space<vmem>>, %arg7: memref<1x32xf32, #tpu.memory_space<vmem>>, %arg8: memref<32x16xbf16, #tpu.memory_space<vmem>>, %arg9: memref<1x16xf32, #tpu.memory_space<vmem>>, %arg10: memref<1x384x16xbf16, #tpu.memory_space<vmem>>, %arg11: memref<448x32xbf16, #tpu.memory_space<vmem>>) attributes {dimension_semantics = [#tpu.dimension_semantics<parallel>], iteration_bounds = array<i64: 2>, scalar_prefetch = 0 : i64, scratch_operands = 1 : i64, tpu.core_type = #tpu.core_type<tc>, window_params = [{transform_indices = @transform_0, window_bounds = array<i64: 1, 384, 27>}, {transform_indices = @transform_1, window_bounds = array<i64: 1, 1, 32>}, {pipeline_mode = #tpu.pipeline_mode<synchronous>, transform_indices = @transform_2, window_bounds = array<i64: 384, 1>}, {pipeline_mode = #tpu.pipeline_mode<synchronous>, transform_indices = @transform_3, window_bounds = array<i64: 27, 32>}, {pipeline_mode = #tpu.pipeline_mode<synchronous>, transform_indices = @transform_4, window_bounds = array<i64: 1, 32>}, {pipeline_mode = #tpu.pipeline_mode<synchronous>, transform_indices = @transform_5, window_bounds = array<i64: 9, 32, 32>}, {pipeline_mode = #tpu.pipeline_mode<synchronous>, transform_indices = @transform_6, window_bounds = array<i64: 1, 32>}, {pipeline_mode = #tpu.pipeline_mode<synchronous>, transform_indices = @transform_7, window_bounds = array<i64: 32, 16>}, {pipeline_mode = #tpu.pipeline_mode<synchronous>, transform_indices = @transform_8, window_bounds = array<i64: 1, 16>}, {transform_indices = @transform_9, window_bounds = array<i64: 1, 384, 16>}]} {
    %cst = arith.constant 0.000000e+00 : bf16
    %0 = vector.broadcast %cst : bf16 to vector<32x32xbf16>
    %c0 = arith.constant 0 : index
    %c0_0 = arith.constant 0 : index
    %1 = vector.load %arg11[%c0, %c0_0] : memref<448x32xbf16, #tpu.memory_space<vmem>>, vector<32x32xbf16>
    tpu.vector_store %arg11[%c0, %c0_0], %0 {strides = array<i32>} : memref<448x32xbf16, #tpu.memory_space<vmem>>, vector<32x32xbf16>,
    %cst_1 = arith.constant 0.000000e+00 : bf16
    %2 = vector.broadcast %cst_1 : bf16 to vector<32x32xbf16>
    %c416 = arith.constant 416 : index
    %c0_2 = arith.constant 0 : index
    %3 = vector.load %arg11[%c416, %c0_2] : memref<448x32xbf16, #tpu.memory_space<vmem>>, vector<32x32xbf16>
    tpu.vector_store %arg11[%c416, %c0_2], %2 {strides = array<i32>} : memref<448x32xbf16, #tpu.memory_space<vmem>>, vector<32x32xbf16>,
    %c0_3 = arith.constant 0 : index
    %c0_4 = arith.constant 0 : index
    %c0_5 = arith.constant 0 : index
    %4 = vector.load %arg1[%c0_3, %c0_4, %c0_5] : memref<1x384x27xbf16, #tpu.memory_space<vmem>>, vector<1x384x27xbf16>
    %5 = vector.shape_cast %4 : vector<1x384x27xbf16> to vector<384x27xbf16>
    %c0_6 = arith.constant 0 : index
    %c0_7 = arith.constant 0 : index
    %6 = vector.load %arg4[%c0_6, %c0_7] : memref<27x32xbf16, #tpu.memory_space<vmem>>, vector<27x32xbf16>
    %cst_8 = arith.constant dense<0.000000e+00> : vector<384x32xf32>
    %7 = tpu.matmul %5, %6, %cst_8 {dimension_numbers = #tpu.dot_dimension_numbers<[1], [0], [0], [1], [0, 0, 1, 1], [], []>} : vector<384x27xbf16>, vector<27x32xbf16>, vector<384x32xf32> -> vector<384x32xf32>
    %c0_9 = arith.constant 0 : index
    %c0_10 = arith.constant 0 : index
    %8 = vector.load %arg5[%c0_9, %c0_10] : memref<1x32xf32, #tpu.memory_space<vmem>>, vector<1x32xf32>
    %9 = vector.broadcast %8 : vector<1x32xf32> to vector<384x32xf32>
    %10 = arith.addf %7, %9 : vector<384x32xf32>
    %cst_11 = arith.constant 0.000000e+00 : f32
    %11 = vector.broadcast %cst_11 : f32 to vector<384x32xf32>
    %12 = arith.maximumf %10, %11 : vector<384x32xf32>
    %c0_12 = arith.constant 0 : index
    %c0_13 = arith.constant 0 : index
    %13 = vector.load %arg3[%c0_12, %c0_13] : memref<384x1xf32, #tpu.memory_space<vmem>>, vector<384x1xf32>
    %14 = vector.broadcast %13 : vector<384x1xf32> to vector<384x32xf32>
    %15 = arith.mulf %12, %14 : vector<384x32xf32>
    %c0_14 = arith.constant 0 : index
    %c0_15 = arith.constant 0 : index
    %c0_16 = arith.constant 0 : index
    %16 = vector.load %arg2[%c0_14, %c0_15, %c0_16] : memref<1x1x32xf32, #tpu.memory_space<vmem>>, vector<1x1x32xf32>
    %17 = vector.shape_cast %16 : vector<1x1x32xf32> to vector<1x32xf32>
    %18 = vector.broadcast %17 : vector<1x32xf32> to vector<384x32xf32>
    %19 = arith.mulf %15, %18 : vector<384x32xf32>
    %20 = arith.truncf %19 : vector<384x32xf32> to vector<384x32xbf16>
    %c32 = arith.constant 32 : index
    %c0_17 = arith.constant 0 : index
    %21 = vector.load %arg11[%c32, %c0_17] : memref<448x32xbf16, #tpu.memory_space<vmem>>, vector<384x32xbf16>
    tpu.vector_store %arg11[%c32, %c0_17], %20 {strides = array<i32>} : memref<448x32xbf16, #tpu.memory_space<vmem>>, vector<384x32xbf16>,
    %c7 = arith.constant 7 : index
    %c0_18 = arith.constant 0 : index
    %22 = vector.load %arg11[%c7, %c0_18] : memref<448x32xbf16, #tpu.memory_space<vmem>>, vector<384x32xbf16>
    %c0_19 = arith.constant 0 : index
    %c0_20 = arith.constant 0 : index
    %c0_21 = arith.constant 0 : index
    %23 = vector.load %arg6[%c0_19, %c0_20, %c0_21] : memref<9x32x32xbf16, #tpu.memory_space<vmem>>, vector<1x32x32xbf16>
    %24 = vector.shape_cast %23 : vector<1x32x32xbf16> to vector<32x32xbf16>
    %cst_22 = arith.constant dense<0.000000e+00> : vector<384x32xf32>
    %25 = tpu.matmul %22, %24, %cst_22 {dimension_numbers = #tpu.dot_dimension_numbers<[1], [0], [0], [1], [0, 0, 1, 1], [], []>} : vector<384x32xbf16>, vector<32x32xbf16>, vector<384x32xf32> -> vector<384x32xf32>
    %c8 = arith.constant 8 : index
    %c0_23 = arith.constant 0 : index
    %26 = vector.load %arg11[%c8, %c0_23] : memref<448x32xbf16, #tpu.memory_space<vmem>>, vector<384x32xbf16>
    %c1 = arith.constant 1 : index
    %c0_24 = arith.constant 0 : index
    %c0_25 = arith.constant 0 : index
    %27 = vector.load %arg6[%c1, %c0_24, %c0_25] : memref<9x32x32xbf16, #tpu.memory_space<vmem>>, vector<1x32x32xbf16>
    %28 = vector.shape_cast %27 : vector<1x32x32xbf16> to vector<32x32xbf16>
    %cst_26 = arith.constant dense<0.000000e+00> : vector<384x32xf32>
    %29 = tpu.matmul %26, %28, %cst_26 {dimension_numbers = #tpu.dot_dimension_numbers<[1], [0], [0], [1], [0, 0, 1, 1], [], []>} : vector<384x32xbf16>, vector<32x32xbf16>, vector<384x32xf32> -> vector<384x32xf32>
    %30 = arith.addf %25, %29 : vector<384x32xf32>
    %c9 = arith.constant 9 : index
    %c0_27 = arith.constant 0 : index
    %31 = vector.load %arg11[%c9, %c0_27] : memref<448x32xbf16, #tpu.memory_space<vmem>>, vector<384x32xbf16>
    %c2 = arith.constant 2 : index
    %c0_28 = arith.constant 0 : index
    %c0_29 = arith.constant 0 : index
    %32 = vector.load %arg6[%c2, %c0_28, %c0_29] : memref<9x32x32xbf16, #tpu.memory_space<vmem>>, vector<1x32x32xbf16>
    %33 = vector.shape_cast %32 : vector<1x32x32xbf16> to vector<32x32xbf16>
    %cst_30 = arith.constant dense<0.000000e+00> : vector<384x32xf32>
    %34 = tpu.matmul %31, %33, %cst_30 {dimension_numbers = #tpu.dot_dimension_numbers<[1], [0], [0], [1], [0, 0, 1, 1], [], []>} : vector<384x32xbf16>, vector<32x32xbf16>, vector<384x32xf32> -> vector<384x32xf32>
    %35 = arith.addf %30, %34 : vector<384x32xf32>
    %c31 = arith.constant 31 : index
    %c0_31 = arith.constant 0 : index
    %36 = vector.load %arg11[%c31, %c0_31] : memref<448x32xbf16, #tpu.memory_space<vmem>>, vector<384x32xbf16>
    %c3 = arith.constant 3 : index
    %c0_32 = arith.constant 0 : index
    %c0_33 = arith.constant 0 : index
    %37 = vector.load %arg6[%c3, %c0_32, %c0_33] : memref<9x32x32xbf16, #tpu.memory_space<vmem>>, vector<1x32x32xbf16>
    %38 = vector.shape_cast %37 : vector<1x32x32xbf16> to vector<32x32xbf16>
    %cst_34 = arith.constant dense<0.000000e+00> : vector<384x32xf32>
    %39 = tpu.matmul %36, %38, %cst_34 {dimension_numbers = #tpu.dot_dimension_numbers<[1], [0], [0], [1], [0, 0, 1, 1], [], []>} : vector<384x32xbf16>, vector<32x32xbf16>, vector<384x32xf32> -> vector<384x32xf32>
    %40 = arith.addf %35, %39 : vector<384x32xf32>
    %c32_35 = arith.constant 32 : index
    %c0_36 = arith.constant 0 : index
    %41 = vector.load %arg11[%c32_35, %c0_36] : memref<448x32xbf16, #tpu.memory_space<vmem>>, vector<384x32xbf16>
    %c4 = arith.constant 4 : index
    %c0_37 = arith.constant 0 : index
    %c0_38 = arith.constant 0 : index
    %42 = vector.load %arg6[%c4, %c0_37, %c0_38] : memref<9x32x32xbf16, #tpu.memory_space<vmem>>, vector<1x32x32xbf16>
    %43 = vector.shape_cast %42 : vector<1x32x32xbf16> to vector<32x32xbf16>
    %cst_39 = arith.constant dense<0.000000e+00> : vector<384x32xf32>
    %44 = tpu.matmul %41, %43, %cst_39 {dimension_numbers = #tpu.dot_dimension_numbers<[1], [0], [0], [1], [0, 0, 1, 1], [], []>} : vector<384x32xbf16>, vector<32x32xbf16>, vector<384x32xf32> -> vector<384x32xf32>
    %45 = arith.addf %40, %44 : vector<384x32xf32>
    %c33 = arith.constant 33 : index
    %c0_40 = arith.constant 0 : index
    %46 = vector.load %arg11[%c33, %c0_40] : memref<448x32xbf16, #tpu.memory_space<vmem>>, vector<384x32xbf16>
    %c5 = arith.constant 5 : index
    %c0_41 = arith.constant 0 : index
    %c0_42 = arith.constant 0 : index
    %47 = vector.load %arg6[%c5, %c0_41, %c0_42] : memref<9x32x32xbf16, #tpu.memory_space<vmem>>, vector<1x32x32xbf16>
    %48 = vector.shape_cast %47 : vector<1x32x32xbf16> to vector<32x32xbf16>
    %cst_43 = arith.constant dense<0.000000e+00> : vector<384x32xf32>
    %49 = tpu.matmul %46, %48, %cst_43 {dimension_numbers = #tpu.dot_dimension_numbers<[1], [0], [0], [1], [0, 0, 1, 1], [], []>} : vector<384x32xbf16>, vector<32x32xbf16>, vector<384x32xf32> -> vector<384x32xf32>
    %50 = arith.addf %45, %49 : vector<384x32xf32>
    %c55 = arith.constant 55 : index
    %c0_44 = arith.constant 0 : index
    %51 = vector.load %arg11[%c55, %c0_44] : memref<448x32xbf16, #tpu.memory_space<vmem>>, vector<384x32xbf16>
    %c6 = arith.constant 6 : index
    %c0_45 = arith.constant 0 : index
    %c0_46 = arith.constant 0 : index
    %52 = vector.load %arg6[%c6, %c0_45, %c0_46] : memref<9x32x32xbf16, #tpu.memory_space<vmem>>, vector<1x32x32xbf16>
    %53 = vector.shape_cast %52 : vector<1x32x32xbf16> to vector<32x32xbf16>
    %cst_47 = arith.constant dense<0.000000e+00> : vector<384x32xf32>
    %54 = tpu.matmul %51, %53, %cst_47 {dimension_numbers = #tpu.dot_dimension_numbers<[1], [0], [0], [1], [0, 0, 1, 1], [], []>} : vector<384x32xbf16>, vector<32x32xbf16>, vector<384x32xf32> -> vector<384x32xf32>
    %55 = arith.addf %50, %54 : vector<384x32xf32>
    %c56 = arith.constant 56 : index
    %c0_48 = arith.constant 0 : index
    %56 = vector.load %arg11[%c56, %c0_48] : memref<448x32xbf16, #tpu.memory_space<vmem>>, vector<384x32xbf16>
    %c7_49 = arith.constant 7 : index
    %c0_50 = arith.constant 0 : index
    %c0_51 = arith.constant 0 : index
    %57 = vector.load %arg6[%c7_49, %c0_50, %c0_51] : memref<9x32x32xbf16, #tpu.memory_space<vmem>>, vector<1x32x32xbf16>
    %58 = vector.shape_cast %57 : vector<1x32x32xbf16> to vector<32x32xbf16>
    %cst_52 = arith.constant dense<0.000000e+00> : vector<384x32xf32>
    %59 = tpu.matmul %56, %58, %cst_52 {dimension_numbers = #tpu.dot_dimension_numbers<[1], [0], [0], [1], [0, 0, 1, 1], [], []>} : vector<384x32xbf16>, vector<32x32xbf16>, vector<384x32xf32> -> vector<384x32xf32>
    %60 = arith.addf %55, %59 : vector<384x32xf32>
    %c57 = arith.constant 57 : index
    %c0_53 = arith.constant 0 : index
    %61 = vector.load %arg11[%c57, %c0_53] : memref<448x32xbf16, #tpu.memory_space<vmem>>, vector<384x32xbf16>
    %c8_54 = arith.constant 8 : index
    %c0_55 = arith.constant 0 : index
    %c0_56 = arith.constant 0 : index
    %62 = vector.load %arg6[%c8_54, %c0_55, %c0_56] : memref<9x32x32xbf16, #tpu.memory_space<vmem>>, vector<1x32x32xbf16>
    %63 = vector.shape_cast %62 : vector<1x32x32xbf16> to vector<32x32xbf16>
    %cst_57 = arith.constant dense<0.000000e+00> : vector<384x32xf32>
    %64 = tpu.matmul %61, %63, %cst_57 {dimension_numbers = #tpu.dot_dimension_numbers<[1], [0], [0], [1], [0, 0, 1, 1], [], []>} : vector<384x32xbf16>, vector<32x32xbf16>, vector<384x32xf32> -> vector<384x32xf32>
    %65 = arith.addf %60, %64 : vector<384x32xf32>
    %c0_58 = arith.constant 0 : index
    %c0_59 = arith.constant 0 : index
    %66 = vector.load %arg7[%c0_58, %c0_59] : memref<1x32xf32, #tpu.memory_space<vmem>>, vector<1x32xf32>
    %67 = vector.broadcast %66 : vector<1x32xf32> to vector<384x32xf32>
    %68 = arith.addf %65, %67 : vector<384x32xf32>
    %cst_60 = arith.constant 0.000000e+00 : f32
    %69 = vector.broadcast %cst_60 : f32 to vector<384x32xf32>
    %70 = arith.maximumf %68, %69 : vector<384x32xf32>
    %71 = arith.truncf %70 : vector<384x32xf32> to vector<384x32xbf16>
    %c0_61 = arith.constant 0 : index
    %c0_62 = arith.constant 0 : index
    %72 = vector.load %arg8[%c0_61, %c0_62] : memref<32x16xbf16, #tpu.memory_space<vmem>>, vector<32x16xbf16>
    %cst_63 = arith.constant dense<0.000000e+00> : vector<384x16xf32>
    %73 = tpu.matmul %71, %72, %cst_63 {dimension_numbers = #tpu.dot_dimension_numbers<[1], [0], [0], [1], [0, 0, 1, 1], [], []>} : vector<384x32xbf16>, vector<32x16xbf16>, vector<384x16xf32> -> vector<384x16xf32>
    %c0_64 = arith.constant 0 : index
    %c0_65 = arith.constant 0 : index
    %74 = vector.load %arg9[%c0_64, %c0_65] : memref<1x16xf32, #tpu.memory_space<vmem>>, vector<1x16xf32>
    %75 = vector.broadcast %74 : vector<1x16xf32> to vector<384x16xf32>
    %76 = arith.addf %73, %75 : vector<384x16xf32>
    %77 = arith.truncf %76 : vector<384x16xf32> to vector<384x16xbf16>
    %c0_66 = arith.constant 0 : index
    %c0_67 = arith.constant 0 : index
    %c0_68 = arith.constant 0 : index
    %78 = vector.load %arg10[%c0_66, %c0_67, %c0_68] : memref<1x384x16xbf16, #tpu.memory_space<vmem>>, vector<1x384x16xbf16>
    %79 = vector.shape_cast %78 : vector<1x384x16xbf16> to vector<384x16xbf16>
    %80 = vector.shape_cast %77 : vector<384x16xbf16> to vector<1x384x16xbf16>
    tpu.vector_store %arg10[%c0_66, %c0_67, %c0_68], %80 {strides = array<i32>} : memref<1x384x16xbf16, #tpu.memory_space<vmem>>, vector<1x384x16xbf16>,
    return
  }
  func.func @transform_0(%arg0: i32) -> (i32, i32, i32) {
    %c0_i32 = arith.constant 0 : i32
    %c0_i32_0 = arith.constant 0 : i32
    %c0_i32_1 = arith.constant 0 : i32
    return %arg0, %c0_i32, %c0_i32_0 : i32, i32, i32
  }
  func.func @transform_1(%arg0: i32) -> (i32, i32, i32) {
    %c0_i32 = arith.constant 0 : i32
    %c0_i32_0 = arith.constant 0 : i32
    %c0_i32_1 = arith.constant 0 : i32
    return %arg0, %c0_i32, %c0_i32_0 : i32, i32, i32
  }
  func.func @transform_2(%arg0: i32) -> (i32, i32) {
    %c0_i32 = arith.constant 0 : i32
    %c0_i32_0 = arith.constant 0 : i32
    %c0_i32_1 = arith.constant 0 : i32
    return %c0_i32, %c0_i32_0 : i32, i32
  }
  func.func @transform_3(%arg0: i32) -> (i32, i32) {
    %c0_i32 = arith.constant 0 : i32
    %c0_i32_0 = arith.constant 0 : i32
    %c0_i32_1 = arith.constant 0 : i32
    return %c0_i32, %c0_i32_0 : i32, i32
  }
  func.func @transform_4(%arg0: i32) -> (i32, i32) {
    %c0_i32 = arith.constant 0 : i32
    %c0_i32_0 = arith.constant 0 : i32
    %c0_i32_1 = arith.constant 0 : i32
    return %c0_i32, %c0_i32_0 : i32, i32
  }
  func.func @transform_5(%arg0: i32) -> (i32, i32, i32) {
    %c0_i32 = arith.constant 0 : i32
    %c0_i32_0 = arith.constant 0 : i32
    %c0_i32_1 = arith.constant 0 : i32
    %c0_i32_2 = arith.constant 0 : i32
    return %c0_i32, %c0_i32_0, %c0_i32_1 : i32, i32, i32
  }
  func.func @transform_6(%arg0: i32) -> (i32, i32) {
    %c0_i32 = arith.constant 0 : i32
    %c0_i32_0 = arith.constant 0 : i32
    %c0_i32_1 = arith.constant 0 : i32
    return %c0_i32, %c0_i32_0 : i32, i32
  }
  func.func @transform_7(%arg0: i32) -> (i32, i32) {
    %c0_i32 = arith.constant 0 : i32
    %c0_i32_0 = arith.constant 0 : i32
    %c0_i32_1 = arith.constant 0 : i32
    return %c0_i32, %c0_i32_0 : i32, i32
  }
  func.func @transform_8(%arg0: i32) -> (i32, i32) {
    %c0_i32 = arith.constant 0 : i32
    %c0_i32_0 = arith.constant 0 : i32
    %c0_i32_1 = arith.constant 0 : i32
    return %c0_i32, %c0_i32_0 : i32, i32
  }
  func.func @transform_9(%arg0: i32) -> (i32, i32, i32) {
    %c0_i32 = arith.constant 0 : i32
    %c0_i32_0 = arith.constant 0 : i32
    %c0_i32_1 = arith.constant 0 : i32
    return %arg0, %c0_i32, %c0_i32_0 : i32, i32, i32
  }
}

</mosaic_0001>

<llo_original>
// kernel: forward.2
$region0: #{forward.2}
  #allocation0 [shape = 'u32[]', space=smem, size = 0x4, offset = 0x4, fixed_abs, tag = 'smem constant byte address 0x4 - core index']
  #allocation1 [shape = 'u32[144,128]{1,0:T(1,128)}', space=vmem, size = 0x12000, scoped, tag = 'internal scratch']
  %s0 = inlined_call_operand.vmem [shape: bf16[2,512,27], index: 0, kind: input, shape index: {}]
  %s1 = inlined_call_operand.vmem [shape: bf16[27,32], index: 1, kind: input, shape index: {}]
  %s2 = inlined_call_operand.vmem [shape: f32[1,32], index: 2, kind: input, shape index: {}]
  %s3 = inlined_call_operand.vmem [shape: f32[2,1,32], index: 3, kind: output, shape index: {}]
  %s4 = sld [smem:[#allocation0]]
  $region45: #{forward.2} parent=0
    _
  %s6 = ssub.s32 1, %s4
  %s7 = scalar_select 0, %s6, %s4
  loop: start=0, step=1, limit=4
  $region2: #{forward.2} parent=0 // loop_pre_header
    _
  $region3: #{forward.2} parent=0 // loop_header
    %s9 = sphi 0, %s13
    %p10 = scmp.ge.s32.totalorder %s9, 4
    %s19 = sphi 0, %s21
    %s22 = sphi 0, %s19
    %s23 = sphi 0, %s22
    %s39 = sphi 0, %s23
    %s43 = sphi 0, %s43
    %s45 = sphi 0, %s43
    %s46 = sphi 0, %s45
    %s60 = sphi 0, %s46
    %s64 = sphi 0, %s64
    %s66 = sphi 0, %s64
    %s67 = sphi 0, %s66
    %s81 = sphi 0, %s67
    %s87 = sphi 0, %s89
    %s90 = sphi 0, %s87
    %s91 = sphi 0, %s90
    %s107 = sphi 0, %s91
  $region4: #{forward.2} parent=0 // loop_header_branch
    %12 = sbr.rel (%p10) target = $region8
  $region5: #{forward.2} parent=0 // loop_body
    %s14 = ssub.s32 %s9, 1
    %s15 = ssub.s32 %s9, 2
    %s16 = sadd.s32 %s9, 1
    %s17 = ssub.s32 %s9, %s16
    %p18 = scmp.eq.s32.totalorder %s17, 0
    %s20 = sadd.s32 %s19, 1
    %s21 = scalar_select %p18, %s19, %s20
    %p24 = pneg %p18
    %p25 = scmp.eq.s32.totalorder %s9, 1
    %p26 = por %p24, %p25
    %p27 = scmp.ne.s32.totalorder %s19, %s22
    %p28 = scmp.eq.s32.totalorder %s9, 0
    %p29 = por %p27, %p28
    %p30 = scmp.ne.s32.totalorder %s19, %s22
    %p31 = scmp.eq.s32.totalorder %s14, 1
    %p32 = por %p30, %p31
    %p33 = scmp.ne.s32.totalorder %s22, %s23
    %p34 = scmp.eq.s32.totalorder %s14, 0
    %p35 = por %p33, %p34
    %p36 = scmp.ne.s32.totalorder %s22, %s23
    %p37 = scmp.eq.s32.totalorder %s15, 1
    %p38 = por %p36, %p37
    %p40 = scmp.ne.s32.totalorder %s23, %s39
    %p41 = scmp.eq.s32.totalorder %s15, 0
    %p42 = por %p40, %p41
    %s44 = sadd.s32 %s43, 1
    %p47 = scmp.eq.s32.totalorder %s9, 1
    %p48 = scmp.ne.s32.totalorder %s43, %s45
    %p49 = scmp.eq.s32.totalorder %s9, 0
    %p50 = por %p48, %p49
    %p51 = scmp.ne.s32.totalorder %s43, %s45
    %p52 = scmp.eq.s32.totalorder %s14, 1
    %p53 = por %p51, %p52
    %p54 = scmp.ne.s32.totalorder %s45, %s46
    %p55 = scmp.eq.s32.totalorder %s14, 0
    %p56 = por %p54, %p55
    %p57 = scmp.ne.s32.totalorder %s45, %s46
    %p58 = scmp.eq.s32.totalorder %s15, 1
    %p59 = por %p57, %p58
    %p61 = scmp.ne.s32.totalorder %s46, %s60
    %p62 = scmp.eq.s32.totalorder %s15, 0
    %p63 = por %p61, %p62
    %s65 = sadd.s32 %s64, 1
    %p68 = scmp.eq.s32.totalorder %s9, 1
    %p69 = scmp.ne.s32.totalorder %s64, %s66
    %p70 = scmp.eq.s32.totalorder %s9, 0
    %p71 = por %p69, %p70
    %p72 = scmp.ne.s32.totalorder %s64, %s66
    %p73 = scmp.eq.s32.totalorder %s14, 1
    %p74 = por %p72, %p73
    %p75 = scmp.ne.s32.totalorder %s66, %s67
    %p76 = scmp.eq.s32.totalorder %s14, 0
    %p77 = por %p75, %p76
    %p78 = scmp.ne.s32.totalorder %s66, %s67
    %p79 = scmp.eq.s32.totalorder %s15, 1
    %p80 = por %p78, %p79
    %p82 = scmp.ne.s32.totalorder %s67, %s81
    %p83 = scmp.eq.s32.totalorder %s15, 0
    %p84 = por %p82, %p83
    %s85 = ssub.s32 %s9, %s16
    %p86 = scmp.eq.s32.totalorder %s85, 0
    %s88 = sadd.s32 %s87, 1
    %s89 = scalar_select %p86, %s87, %s88
    %p92 = pneg %p86
    %p93 = scmp.eq.s32.totalorder %s9, 1
    %p94 = por %p92, %p93
    %p95 = scmp.ne.s32.totalorder %s87, %s90
    %p96 = scmp.eq.s32.totalorder %s9, 0
    %p97 = por %p95, %p96
    %p98 = scmp.ne.s32.totalorder %s87, %s90
    %p99 = scmp.eq.s32.totalorder %s14, 1
    %p100 = por %p98, %p99
    %p101 = scmp.ne.s32.totalorder %s90, %s91
    %p102 = scmp.eq.s32.totalorder %s14, 0
    %p103 = por %p101, %p102
    %p104 = scmp.ne.s32.totalorder %s90, %s91
    %p105 = scmp.eq.s32.totalorder %s15, 1
    %p106 = por %p104, %p105
    %p108 = scmp.ne.s32.totalorder %s91, %s107
    %p109 = scmp.eq.s32.totalorder %s15, 0
    %p110 = por %p108, %p109
    %p111 = scmp.le.s32.totalorder 1, %s9
    %p112 = scmp.lt.s32.totalorder %s9, 3
    %p113 = pnand %p111, %p112
    %p114 = pneg %p113
    // Predicated region
    $region9: #{forward.2} parent=5 // pred_check
      _
    $region10: #{forward.2} parent=5 // pred_check_branch
      %116 = sbr.rel (%p113) target = $region12
    $region11: #{forward.2} parent=5 // pred_region
      %s117 = ssub.s32 %s9, 1
      // Predicated region
      $region13: #{forward.2} parent=11 // pred_check
        %p118 = pneg %p56
      $region14: #{forward.2} parent=11 // pred_check_branch
        %120 = sbr.rel (%p118) target = $region16
      $region15: #{forward.2} parent=11 // pred_region
        _
      $region16: #{forward.2} parent=11 // pred_fallthru
        _
      // Predicated region
      $region17: #{forward.2} parent=11 // pred_check
        %p121 = pneg %p77
      $region18: #{forward.2} parent=11 // pred_check_branch
        %123 = sbr.rel (%p121) target = $region20
      $region19: #{forward.2} parent=11 // pred_region
        _
      $region20: #{forward.2} parent=11 // pred_fallthru
        _
    $region12: #{forward.2} parent=5 // pred_fallthru
      _
    %p124 = scmp.lt.s32.totalorder %s9, 2
    // Predicated region
    $region21: #{forward.2} parent=5 // pred_check
      %p125 = pneg %p124
    $region22: #{forward.2} parent=5 // pred_check_branch
      %127 = sbr.rel (%p125) target = $region24
    $region23: #{forward.2} parent=5 // pred_region
      // Predicated region
      $region25: #{forward.2} parent=23 // pred_check
        %p128 = pneg %p29
      $region26: #{forward.2} parent=23 // pred_check_branch
        %130 = sbr.rel (%p128) target = $region28
      $region27: #{forward.2} parent=23 // pred_region
        %p131 = scmp.lt.s32.totalorder %s9, 1
        %s132 = scalar_select %p131, %s9, 1
        %s133 = smul.addr %s132, 64
        %s134 = smul.addr %s133, 4
        %s135 = scalar_lea.vmem %s0, %s134
      $region28: #{forward.2} parent=23 // pred_fallthru
        _
    $region24: #{forward.2} parent=5 // pred_fallthru
      _
    %p136 = scmp.le.s32.totalorder 1, %s9
    %p137 = scmp.lt.s32.totalorder %s9, 3
    %p138 = pnand %p136, %p137
    %p139 = pneg %p138
    // Predicated region
    $region29: #{forward.2} parent=5 // pred_check
      _
    $region30: #{forward.2} parent=5 // pred_check_branch
      %141 = sbr.rel (%p138) target = $region32
    $region31: #{forward.2} parent=5 // pred_region
      %s142 = ssub.s32 %s9, 1
      %p143 = scmp.lt.s32.totalorder %s14, 1
      %s144 = scalar_select %p143, %s14, 1
      %s145 = smul.addr %s144, 64
      %s146 = smul.addr %s145, 4
      %s147 = scalar_lea.vmem %s0, %s146
      %p148 = pneg %p35
      %p149 = pneg %p32
      %p150 = pneg %p56
      %p151 = pneg %p53
      %p152 = pneg %p77
      %p153 = pneg %p74
      %p154 = pneg %p103
      %p155 = pneg %p100
      %p156 = scmp.lt.s32.totalorder %s14, 1
      %s157 = scalar_select %p156, %s14, 1
      %s158 = scalar_lea.vmem %s3, %s157
      %p159 = scmp.lt.s32.totalorder %s14, 1
      %s160 = scalar_select %p159, %s14, 1
      %s161 = smul.addr %s160, 64
      %s162 = smul.addr %s161, 4
      %s163 = scalar_lea.vmem %s0, %s162
      %p164 = scmp.lt.s32.totalorder %s14, 1
      %s165 = scalar_select %p164, %s14, 1
      %s166 = scalar_lea.vmem %s3, %s165
      %v168 = vld [vmem:[%s163] sm:$0xf]
      %v169 = vld [vmem:[%s163 + $0x4] sm:$0xf]
      %v170 = vld [vmem:[%s163 + $0x8] sm:$0xf]
      %v171 = vld [vmem:[%s163 + $0xc] sm:$0xf]
      %v172 = vld [vmem:[%s163 + $0x10] sm:$0xf]
      %v173 = vld [vmem:[%s163 + $0x14] sm:$0xf]
      %v174 = vld [vmem:[%s163 + $0x18] sm:$0xf]
      %v175 = vld [vmem:[%s163 + $0x1c] sm:$0xf]
      %v176 = vld [vmem:[%s163 + $0x20] sm:$0xf]
      %v177 = vld [vmem:[%s163 + $0x24] sm:$0xf]
      %v178 = vld [vmem:[%s163 + $0x28] sm:$0xf]
      %v179 = vld [vmem:[%s163 + $0x2c] sm:$0xf]
      %v180 = vld [vmem:[%s163 + $0x30] sm:$0xf]
      %v181 = vld [vmem:[%s163 + $0x34] sm:$0xf]
      %v182 = vld [vmem:[%s163 + $0x38] sm:$0xf]
      %v183 = vld [vmem:[%s163 + $0x3c] sm:$0xf]
      %v184 = vld [vmem:[%s163 + $0x40] sm:$0xf]
      %v185 = vld [vmem:[%s163 + $0x44] sm:$0xf]
      %v186 = vld [vmem:[%s163 + $0x48] sm:$0xf]
      %v187 = vld [vmem:[%s163 + $0x4c] sm:$0xf]
      %v188 = vld [vmem:[%s163 + $0x50] sm:$0xf]
      %v189 = vld [vmem:[%s163 + $0x54] sm:$0xf]
      %v190 = vld [vmem:[%s163 + $0x58] sm:$0xf]
      %v191 = vld [vmem:[%s163 + $0x5c] sm:$0xf]
      %v192 = vld [vmem:[%s163 + $0x60] sm:$0xf]
      %v193 = vld [vmem:[%s163 + $0x64] sm:$0xf]
      %v194 = vld [vmem:[%s163 + $0x68] sm:$0xf]
      %v195 = vld [vmem:[%s163 + $0x6c] sm:$0xf]
      %v196 = vld [vmem:[%s163 + $0x70] sm:$0xf]
      %v197 = vld [vmem:[%s163 + $0x74] sm:$0xf]
      %v198 = vld [vmem:[%s163 + $0x78] sm:$0xf]
      %v199 = vld [vmem:[%s163 + $0x7c] sm:$0xf]
      %v200 = vld [vmem:[%s163 + $0x80] sm:$0xf]
      %v201 = vld [vmem:[%s163 + $0x84] sm:$0xf]
      %v202 = vld [vmem:[%s163 + $0x88] sm:$0xf]
      %v203 = vld [vmem:[%s163 + $0x8c] sm:$0xf]
      %v204 = vld [vmem:[%s163 + $0x90] sm:$0xf]
      %v205 = vld [vmem:[%s163 + $0x94] sm:$0xf]
      %v206 = vld [vmem:[%s163 + $0x98] sm:$0xf]
      %v207 = vld [vmem:[%s163 + $0x9c] sm:$0xf]
      %v208 = vld [vmem:[%s163 + $0xa0] sm:$0xf]
      %v209 = vld [vmem:[%s163 + $0xa4] sm:$0xf]
      %v210 = vld [vmem:[%s163 + $0xa8] sm:$0xf]
      %v211 = vld [vmem:[%s163 + $0xac] sm:$0xf]
      %v212 = vld [vmem:[%s163 + $0xb0] sm:$0xf]
      %v213 = vld [vmem:[%s163 + $0xb4] sm:$0xf]
      %v214 = vld [vmem:[%s163 + $0xb8] sm:$0xf]
      %v215 = vld [vmem:[%s163 + $0xbc] sm:$0xf]
      %v216 = vld [vmem:[%s163 + $0xc0] sm:$0xf]
      %v217 = vld [vmem:[%s163 + $0xc4] sm:$0xf]
      %v218 = vld [vmem:[%s163 + $0xc8] sm:$0xf]
      %v219 = vld [vmem:[%s163 + $0xcc] sm:$0xf]
      %v220 = vld [vmem:[%s163 + $0xd0] sm:$0xf]
      %v221 = vld [vmem:[%s163 + $0xd4] sm:$0xf]
      %v222 = vld [vmem:[%s163 + $0xd8] sm:$0xf]
      %v223 = vld [vmem:[%s163 + $0xdc] sm:$0xf]
      %v224 = vld [vmem:[%s163 + $0xe0] sm:$0xf]
      %v225 = vld [vmem:[%s163 + $0xe4] sm:$0xf]
      %v226 = vld [vmem:[%s163 + $0xe8] sm:$0xf]
      %v227 = vld [vmem:[%s163 + $0xec] sm:$0xf]
      %v228 = vld [vmem:[%s163 + $0xf0] sm:$0xf]
      %v229 = vld [vmem:[%s163 + $0xf4] sm:$0xf]
      %v230 = vld [vmem:[%s163 + $0xf8] sm:$0xf]
      %v231 = vld [vmem:[%s163 + $0xfc] sm:$0xf]
      %v232 = vld [vmem:[%s1] sm:$0xf]
      %v233 = vld [vmem:[%s1 + $0x4] sm:$0xf]
      %v234 = vld [vmem:[%s1 + $0x8] sm:$0xf]
      %v235 = vld [vmem:[%s1 + $0xc] sm:$0x3]
      %v236 = vld [vmem:[%s2] sm:$0x1]
      %v238 = vlaneseq
      %v239 = vshrl.u32 %v238, 7
      %v240 = vsub.s32 0, %v239
      %v241 = vrot.slane %v236, %v240
      %v307 = vunpack.c.l.b16 %v168
      %v308 = vunpack.c.l.b16 %v169
      %v309 = vunpack.c.l.b16 %v170
      %v310 = vunpack.c.l.b16 %v171
      %v311 = vunpack.c.l.b16 %v172
      %v312 = vunpack.c.l.b16 %v173
      %v313 = vunpack.c.l.b16 %v174
      %v314 = vunpack.c.l.b16 %v175
      %v315 = vunpack.c.l.b16 %v176
      %v316 = vunpack.c.l.b16 %v177
      %v317 = vunpack.c.l.b16 %v178
      %v318 = vunpack.c.l.b16 %v179
      %v319 = vunpack.c.l.b16 %v180
      %v320 = vunpack.c.l.b16 %v181
      %v321 = vunpack.c.l.b16 %v182
      %v322 = vunpack.c.l.b16 %v183
      %v323 = vunpack.c.l.b16 %v184
      %v324 = vunpack.c.l.b16 %v185
      %v325 = vunpack.c.l.b16 %v186
      %v326 = vunpack.c.l.b16 %v187
      %v327 = vunpack.c.l.b16 %v188
      %v328 = vunpack.c.l.b16 %v189
      %v329 = vunpack.c.l.b16 %v190
      %v330 = vunpack.c.l.b16 %v191
      %v331 = vunpack.c.l.b16 %v192
      %v332 = vunpack.c.l.b16 %v193
      %v333 = vunpack.c.l.b16 %v194
      %v334 = vunpack.c.l.b16 %v195
      %v335 = vunpack.c.l.b16 %v196
      %v336 = vunpack.c.l.b16 %v197
      %v337 = vunpack.c.l.b16 %v198
      %v338 = vunpack.c.l.b16 %v199
      %v339 = vunpack.c.l.b16 %v200
      %v340 = vunpack.c.l.b16 %v201
      %v341 = vunpack.c.l.b16 %v202
      %v342 = vunpack.c.l.b16 %v203
      %v343 = vunpack.c.l.b16 %v204
      %v344 = vunpack.c.l.b16 %v205
      %v345 = vunpack.c.l.b16 %v206
      %v346 = vunpack.c.l.b16 %v207
      %v347 = vunpack.c.l.b16 %v208
      %v348 = vunpack.c.l.b16 %v209
      %v349 = vunpack.c.l.b16 %v210
      %v350 = vunpack.c.l.b16 %v211
      %v351 = vunpack.c.l.b16 %v212
      %v352 = vunpack.c.l.b16 %v213
      %v353 = vunpack.c.l.b16 %v214
      %v354 = vunpack.c.l.b16 %v215
      %v355 = vunpack.c.l.b16 %v216
      %v356 = vunpack.c.l.b16 %v217
      %v357 = vunpack.c.l.b16 %v218
      %v358 = vunpack.c.l.b16 %v219
      %v359 = vunpack.c.l.b16 %v220
      %v360 = vunpack.c.l.b16 %v221
      %v361 = vunpack.c.l.b16 %v222
      %v362 = vunpack.c.l.b16 %v223
      %v363 = vunpack.c.l.b16 %v224
      %v364 = vunpack.c.l.b16 %v225
      %v365 = vunpack.c.l.b16 %v226
      %v366 = vunpack.c.l.b16 %v227
      %v367 = vunpack.c.l.b16 %v228
      %v368 = vunpack.c.l.b16 %v229
      %v369 = vunpack.c.l.b16 %v230
      %v370 = vunpack.c.l.b16 %v231
      %v371 = vpack.c.b16 %v308, %v307
      %v372 = vpack.c.b16 %v310, %v309
      %v373 = vpack.c.b16 %v312, %v311
      %v374 = vpack.c.b16 %v314, %v313
      %v375 = vpack.c.b16 %v316, %v315
      %v376 = vpack.c.b16 %v318, %v317
      %v377 = vpack.c.b16 %v320, %v319
      %v378 = vpack.c.b16 %v322, %v321
      %v379 = vpack.c.b16 %v324, %v323
      %v380 = vpack.c.b16 %v326, %v325
      %v381 = vpack.c.b16 %v328, %v327
      %v382 = vpack.c.b16 %v330, %v329
      %v383 = vpack.c.b16 %v332, %v331
      %v384 = vpack.c.b16 %v334, %v333
      %v385 = vpack.c.b16 %v336, %v335
      %v386 = vpack.c.b16 %v338, %v337
      %v387 = vpack.c.b16 %v340, %v339
      %v388 = vpack.c.b16 %v342, %v341
      %v389 = vpack.c.b16 %v344, %v343
      %v390 = vpack.c.b16 %v346, %v345
      %v391 = vpack.c.b16 %v348, %v347
      %v392 = vpack.c.b16 %v350, %v349
      %v393 = vpack.c.b16 %v352, %v351
      %v394 = vpack.c.b16 %v354, %v353
      %v395 = vpack.c.b16 %v356, %v355
      %v396 = vpack.c.b16 %v358, %v357
      %v397 = vpack.c.b16 %v360, %v359
      %v398 = vpack.c.b16 %v362, %v361
      %v399 = vpack.c.b16 %v364, %v363
      %v400 = vpack.c.b16 %v366, %v365
      %v401 = vpack.c.b16 %v368, %v367
      %v402 = vpack.c.b16 %v370, %v369
      %v407 = vunpack.c.l.b16 %v232
      %v408 = vunpack.c.l.b16 %v233
      %v409 = vunpack.c.l.b16 %v234
      %v410 = vunpack.c.l.b16 %v235
      %v411 = vpack.c.b16 %v408, %v407
      %v412 = vpack.c.b16 %v410, %v409
      %vm414 = vcmask 220160
      %v416 = vsel %vm414, %v371, 0
      %v419 = vsel %vm414, %v372, 0
      %v422 = vsel %vm414, %v373, 0
      %v425 = vsel %vm414, %v374, 0
      %v428 = vsel %vm414, %v375, 0
      %v431 = vsel %vm414, %v376, 0
      %v434 = vsel %vm414, %v377, 0
      %v437 = vsel %vm414, %v378, 0
      %v440 = vsel %vm414, %v379, 0
      %v443 = vsel %vm414, %v380, 0
      %v446 = vsel %vm414, %v381, 0
      %v449 = vsel %vm414, %v382, 0
      %v452 = vsel %vm414, %v383, 0
      %v455 = vsel %vm414, %v384, 0
      %v458 = vsel %vm414, %v385, 0
      %v461 = vsel %vm414, %v386, 0
      %v464 = vsel %vm414, %v387, 0
      %v467 = vsel %vm414, %v388, 0
      %v470 = vsel %vm414, %v389, 0
      %v473 = vsel %vm414, %v390, 0
      %v476 = vsel %vm414, %v391, 0
      %v479 = vsel %vm414, %v392, 0
      %v482 = vsel %vm414, %v393, 0
      %v485 = vsel %vm414, %v394, 0
      %v488 = vsel %vm414, %v395, 0
      %v491 = vsel %vm414, %v396, 0
      %v494 = vsel %vm414, %v397, 0
      %v497 = vsel %vm414, %v398, 0
      %v500 = vsel %vm414, %v399, 0
      %v503 = vsel %vm414, %v400, 0
      %v506 = vsel %vm414, %v401, 0
      %v509 = vsel %vm414, %v402, 0
      %vm511 = vcmask 1044480
      %vm512 = vcmask 1045504
      %v513 = vsel %vm511, 4294967295, 65535
      %v514 = vsel %vm512, %v513, 0
      %v516 = vand.u32 %v412, %v514
      %518 = vmatprep.subr.bf16.mxu0 0
      %519 = vmatpush1.bf16.msra.mxu0 %v411
      %520 = vmatprep.subr.bf16.mxu0 0
      %521 = vmatpush1.bf16.msra.mxu0 %v516
      %522 = vmatprep.subr.bf16.mxu0 0
      %523 = vmatpush1.bf16.msra.mxu0 0
      %524 = vmatprep.subr.bf16.mxu0 0
      %525 = vmatpush1.bf16.msra.mxu0 0
      %526 = vmatprep.subr.bf16.mxu0 0
      %527 = vmatpush1.bf16.msra.mxu0 0
      %528 = vmatprep.subr.bf16.mxu0 0
      %529 = vmatpush1.bf16.msra.mxu0 0
      %530 = vmatprep.subr.bf16.mxu0 0
      %531 = vmatpush1.bf16.msra.mxu0 0
      %532 = vmatprep.subr.bf16.mxu0 0
      %533 = vmatpush1.bf16.msra.mxu0 0
      %534 = vmatprep.subr.bf16.mxu0 0
      %535 = vmatpush1.bf16.msra.mxu0 0
      %536 = vmatprep.subr.bf16.mxu0 0
      %537 = vmatpush1.bf16.msra.mxu0 0
      %538 = vmatprep.subr.bf16.mxu0 0
      %539 = vmatpush1.bf16.msra.mxu0 0
      %540 = vmatprep.subr.bf16.mxu0 0
      %541 = vmatpush1.bf16.msra.mxu0 0
      %542 = vmatprep.subr.bf16.mxu0 0
      %543 = vmatpush1.bf16.msra.mxu0 0
      %544 = vmatprep.subr.bf16.mxu0 0
      %545 = vmatpush1.bf16.msra.mxu0 0
      %546 = vmatprep.subr.bf16.mxu0 0
      %547 = vmatpush1.bf16.msra.mxu0 0
      %548 = vmatprep.subr.bf16.mxu0 0
      %549 = vmatpush1.bf16.msra.mxu0 0
      %550 = vmatprep.mubr.bf16.mxu0 0
      %551 = vmatmul.mubr.bf16.gmra.mrb[0].mxu0 %v416
      %v552 = vpop.f32.mrb[0].mxu0
      %v553 = vadd.f32 %v241, %v552
      %v554 = vpop.f32.mrb[0].mxu0
      %v555 = vpop.f32.mrb[0].mxu0
      %v556 = vadd.f32 %v241, %v555
      %v557 = vpop.f32.mrb[0].mxu0
      %558 = vmatprep.mubr.bf16.mxu0 0
      %559 = vmatmul.mubr.bf16.gmra.mrb[0].mxu0 %v419
      %v560 = vpop.f32.mrb[0].mxu0
      %v561 = vadd.f32 %v241, %v560
      %v562 = vpop.f32.mrb[0].mxu0
      %v563 = vpop.f32.mrb[0].mxu0
      %v564 = vadd.f32 %v241, %v563
      %v565 = vpop.f32.mrb[0].mxu0
      %566 = vmatprep.mubr.bf16.mxu0 0
      %567 = vmatmul.mubr.bf16.gmra.mrb[0].mxu0 %v422
      %v568 = vpop.f32.mrb[0].mxu0
      %v569 = vadd.f32 %v241, %v568
      %v570 = vpop.f32.mrb[0].mxu0
      %v571 = vpop.f32.mrb[0].mxu0
      %v572 = vadd.f32 %v241, %v571
      %v573 = vpop.f32.mrb[0].mxu0
      %574 = vmatprep.mubr.bf16.mxu0 0
      %575 = vmatmul.mubr.bf16.gmra.mrb[0].mxu0 %v425
      %v576 = vpop.f32.mrb[0].mxu0
      %v577 = vadd.f32 %v241, %v576
      %v578 = vpop.f32.mrb[0].mxu0
      %v579 = vpop.f32.mrb[0].mxu0
      %v580 = vadd.f32 %v241, %v579
      %v581 = vpop.f32.mrb[0].mxu0
      %582 = vmatprep.mubr.bf16.mxu0 0
      %583 = vmatmul.mubr.bf16.gmra.mrb[0].mxu0 %v428
      %v584 = vpop.f32.mrb[0].mxu0
      %v585 = vadd.f32 %v241, %v584
      %v586 = vpop.f32.mrb[0].mxu0
      %v587 = vpop.f32.mrb[0].mxu0
      %v588 = vadd.f32 %v241, %v587
      %v589 = vpop.f32.mrb[0].mxu0
      %590 = vmatprep.mubr.bf16.mxu0 0
      %591 = vmatmul.mubr.bf16.gmra.mrb[0].mxu0 %v431
      %v592 = vpop.f32.mrb[0].mxu0
      %v593 = vadd.f32 %v241, %v592
      %v594 = vpop.f32.mrb[0].mxu0
      %v595 = vpop.f32.mrb[0].mxu0
      %v596 = vadd.f32 %v241, %v595
      %v597 = vpop.f32.mrb[0].mxu0
      %598 = vmatprep.mubr.bf16.mxu0 0
      %599 = vmatmul.mubr.bf16.gmra.mrb[0].mxu0 %v434
      %v600 = vpop.f32.mrb[0].mxu0
      %v601 = vadd.f32 %v241, %v600
      %v602 = vpop.f32.mrb[0].mxu0
      %v603 = vpop.f32.mrb[0].mxu0
      %v604 = vadd.f32 %v241, %v603
      %v605 = vpop.f32.mrb[0].mxu0
      %606 = vmatprep.mubr.bf16.mxu0 0
      %607 = vmatmul.mubr.bf16.gmra.mrb[0].mxu0 %v437
      %v608 = vpop.f32.mrb[0].mxu0
      %v609 = vadd.f32 %v241, %v608
      %v610 = vpop.f32.mrb[0].mxu0
      %v611 = vpop.f32.mrb[0].mxu0
      %v612 = vadd.f32 %v241, %v611
      %v613 = vpop.f32.mrb[0].mxu0
      %614 = vmatprep.mubr.bf16.mxu0 0
      %615 = vmatmul.mubr.bf16.gmra.mrb[0].mxu0 %v440
      %v616 = vpop.f32.mrb[0].mxu0
      %v617 = vadd.f32 %v241, %v616
      %v618 = vpop.f32.mrb[0].mxu0
      %v619 = vpop.f32.mrb[0].mxu0
      %v620 = vadd.f32 %v241, %v619
      %v621 = vpop.f32.mrb[0].mxu0
      %622 = vmatprep.mubr.bf16.mxu0 0
      %623 = vmatmul.mubr.bf16.gmra.mrb[0].mxu0 %v443
      %v624 = vpop.f32.mrb[0].mxu0
      %v625 = vadd.f32 %v241, %v624
      %v626 = vpop.f32.mrb[0].mxu0
      %v627 = vpop.f32.mrb[0].mxu0
      %v628 = vadd.f32 %v241, %v627
      %v629 = vpop.f32.mrb[0].mxu0
      %630 = vmatprep.mubr.bf16.mxu0 0
      %631 = vmatmul.mubr.bf16.gmra.mrb[0].mxu0 %v446
      %v632 = vpop.f32.mrb[0].mxu0
      %v633 = vadd.f32 %v241, %v632
      %v634 = vpop.f32.mrb[0].mxu0
      %v635 = vpop.f32.mrb[0].mxu0
      %v636 = vadd.f32 %v241, %v635
      %v637 = vpop.f32.mrb[0].mxu0
      %638 = vmatprep.mubr.bf16.mxu0 0
      %639 = vmatmul.mubr.bf16.gmra.mrb[0].mxu0 %v449
      %v640 = vpop.f32.mrb[0].mxu0
      %v641 = vadd.f32 %v241, %v640
      %v642 = vpop.f32.mrb[0].mxu0
      %v643 = vpop.f32.mrb[0].mxu0
      %v644 = vadd.f32 %v241, %v643
      %v645 = vpop.f32.mrb[0].mxu0
      %646 = vmatprep.mubr.bf16.mxu0 0
      %647 = vmatmul.mubr.bf16.gmra.mrb[0].mxu0 %v452
      %v648 = vpop.f32.mrb[0].mxu0
      %v649 = vadd.f32 %v241, %v648
      %v650 = vpop.f32.mrb[0].mxu0
      %v651 = vpop.f32.mrb[0].mxu0
      %v652 = vadd.f32 %v241, %v651
      %v653 = vpop.f32.mrb[0].mxu0
      %654 = vmatprep.mubr.bf16.mxu0 0
      %655 = vmatmul.mubr.bf16.gmra.mrb[0].mxu0 %v455
      %v656 = vpop.f32.mrb[0].mxu0
      %v657 = vadd.f32 %v241, %v656
      %v658 = vpop.f32.mrb[0].mxu0
      %v659 = vpop.f32.mrb[0].mxu0
      %v660 = vadd.f32 %v241, %v659
      %v661 = vpop.f32.mrb[0].mxu0
      %662 = vmatprep.mubr.bf16.mxu0 0
      %663 = vmatmul.mubr.bf16.gmra.mrb[0].mxu0 %v458
      %v664 = vpop.f32.mrb[0].mxu0
      %v665 = vadd.f32 %v241, %v664
      %v666 = vpop.f32.mrb[0].mxu0
      %v667 = vpop.f32.mrb[0].mxu0
      %v668 = vadd.f32 %v241, %v667
      %v669 = vpop.f32.mrb[0].mxu0
      %670 = vmatprep.mubr.bf16.mxu0 0
      %671 = vmatmul.mubr.bf16.gmra.mrb[0].mxu0 %v461
      %v672 = vpop.f32.mrb[0].mxu0
      %v673 = vadd.f32 %v241, %v672
      %v674 = vpop.f32.mrb[0].mxu0
      %v675 = vpop.f32.mrb[0].mxu0
      %v676 = vadd.f32 %v241, %v675
      %v677 = vpop.f32.mrb[0].mxu0
      %678 = vmatprep.mubr.bf16.mxu0 0
      %679 = vmatmul.mubr.bf16.gmra.mrb[0].mxu0 %v464
      %v680 = vpop.f32.mrb[0].mxu0
      %v681 = vadd.f32 %v241, %v680
      %v682 = vpop.f32.mrb[0].mxu0
      %v683 = vpop.f32.mrb[0].mxu0
      %v684 = vadd.f32 %v241, %v683
      %v685 = vpop.f32.mrb[0].mxu0
      %686 = vmatprep.mubr.bf16.mxu0 0
      %687 = vmatmul.mubr.bf16.gmra.mrb[0].mxu0 %v467
      %v688 = vpop.f32.mrb[0].mxu0
      %v689 = vadd.f32 %v241, %v688
      %v690 = vpop.f32.mrb[0].mxu0
      %v691 = vpop.f32.mrb[0].mxu0
      %v692 = vadd.f32 %v241, %v691
      %v693 = vpop.f32.mrb[0].mxu0
      %694 = vmatprep.mubr.bf16.mxu0 0
      %695 = vmatmul.mubr.bf16.gmra.mrb[0].mxu0 %v470
      %v696 = vpop.f32.mrb[0].mxu0
      %v697 = vadd.f32 %v241, %v696
      %v698 = vpop.f32.mrb[0].mxu0
      %v699 = vpop.f32.mrb[0].mxu0
      %v700 = vadd.f32 %v241, %v699
      %v701 = vpop.f32.mrb[0].mxu0
      %702 = vmatprep.mubr.bf16.mxu0 0
      %703 = vmatmul.mubr.bf16.gmra.mrb[0].mxu0 %v473
      %v704 = vpop.f32.mrb[0].mxu0
      %v705 = vadd.f32 %v241, %v704
      %v706 = vpop.f32.mrb[0].mxu0
      %v707 = vpop.f32.mrb[0].mxu0
      %v708 = vadd.f32 %v241, %v707
      %v709 = vpop.f32.mrb[0].mxu0
      %710 = vmatprep.mubr.bf16.mxu0 0
      %711 = vmatmul.mubr.bf16.gmra.mrb[0].mxu0 %v476
      %v712 = vpop.f32.mrb[0].mxu0
      %v713 = vadd.f32 %v241, %v712
      %v714 = vpop.f32.mrb[0].mxu0
      %v715 = vpop.f32.mrb[0].mxu0
      %v716 = vadd.f32 %v241, %v715
      %v717 = vpop.f32.mrb[0].mxu0
      %718 = vmatprep.mubr.bf16.mxu0 0
      %719 = vmatmul.mubr.bf16.gmra.mrb[0].mxu0 %v479
      %v720 = vpop.f32.mrb[0].mxu0
      %v721 = vadd.f32 %v241, %v720
      %v722 = vpop.f32.mrb[0].mxu0
      %v723 = vpop.f32.mrb[0].mxu0
      %v724 = vadd.f32 %v241, %v723
      %v725 = vpop.f32.mrb[0].mxu0
      %726 = vmatprep.mubr.bf16.mxu0 0
      %727 = vmatmul.mubr.bf16.gmra.mrb[0].mxu0 %v482
      %v728 = vpop.f32.mrb[0].mxu0
      %v729 = vadd.f32 %v241, %v728
      %v730 = vpop.f32.mrb[0].mxu0
      %v731 = vpop.f32.mrb[0].mxu0
      %v732 = vadd.f32 %v241, %v731
      %v733 = vpop.f32.mrb[0].mxu0
      %734 = vmatprep.mubr.bf16.mxu0 0
      %735 = vmatmul.mubr.bf16.gmra.mrb[0].mxu0 %v485
      %v736 = vpop.f32.mrb[0].mxu0
      %v737 = vadd.f32 %v241, %v736
      %v738 = vpop.f32.mrb[0].mxu0
      %v739 = vpop.f32.mrb[0].mxu0
      %v740 = vadd.f32 %v241, %v739
      %v741 = vpop.f32.mrb[0].mxu0
      %742 = vmatprep.mubr.bf16.mxu0 0
      %743 = vmatmul.mubr.bf16.gmra.mrb[0].mxu0 %v488
      %v744 = vpop.f32.mrb[0].mxu0
      %v745 = vadd.f32 %v241, %v744
      %v746 = vpop.f32.mrb[0].mxu0
      %v747 = vpop.f32.mrb[0].mxu0
      %v748 = vadd.f32 %v241, %v747
      %v749 = vpop.f32.mrb[0].mxu0
      %750 = vmatprep.mubr.bf16.mxu0 0
      %751 = vmatmul.mubr.bf16.gmra.mrb[0].mxu0 %v491
      %v752 = vpop.f32.mrb[0].mxu0
      %v753 = vadd.f32 %v241, %v752
      %v754 = vpop.f32.mrb[0].mxu0
      %v755 = vpop.f32.mrb[0].mxu0
      %v756 = vadd.f32 %v241, %v755
      %v757 = vpop.f32.mrb[0].mxu0
      %758 = vmatprep.mubr.bf16.mxu0 0
      %759 = vmatmul.mubr.bf16.gmra.mrb[0].mxu0 %v494
      %v760 = vpop.f32.mrb[0].mxu0
      %v761 = vadd.f32 %v241, %v760
      %v762 = vpop.f32.mrb[0].mxu0
      %v763 = vpop.f32.mrb[0].mxu0
      %v764 = vadd.f32 %v241, %v763
      %v765 = vpop.f32.mrb[0].mxu0
      %766 = vmatprep.mubr.bf16.mxu0 0
      %767 = vmatmul.mubr.bf16.gmra.mrb[0].mxu0 %v497
      %v768 = vpop.f32.mrb[0].mxu0
      %v769 = vadd.f32 %v241, %v768
      %v770 = vpop.f32.mrb[0].mxu0
      %v771 = vpop.f32.mrb[0].mxu0
      %v772 = vadd.f32 %v241, %v771
      %v773 = vpop.f32.mrb[0].mxu0
      %774 = vmatprep.mubr.bf16.mxu0 0
      %775 = vmatmul.mubr.bf16.gmra.mrb[0].mxu0 %v500
      %v776 = vpop.f32.mrb[0].mxu0
      %v777 = vadd.f32 %v241, %v776
      %v778 = vpop.f32.mrb[0].mxu0
      %v779 = vpop.f32.mrb[0].mxu0
      %v780 = vadd.f32 %v241, %v779
      %v781 = vpop.f32.mrb[0].mxu0
      %782 = vmatprep.mubr.bf16.mxu0 0
      %783 = vmatmul.mubr.bf16.gmra.mrb[0].mxu0 %v503
      %v784 = vpop.f32.mrb[0].mxu0
      %v785 = vadd.f32 %v241, %v784
      %v786 = vpop.f32.mrb[0].mxu0
      %v787 = vpop.f32.mrb[0].mxu0
      %v788 = vadd.f32 %v241, %v787
      %v789 = vpop.f32.mrb[0].mxu0
      %790 = vmatprep.mubr.bf16.mxu0 0
      %791 = vmatmul.mubr.bf16.gmra.mrb[0].mxu0 %v506
      %v792 = vpop.f32.mrb[0].mxu0
      %v793 = vadd.f32 %v241, %v792
      %v794 = vpop.f32.mrb[0].mxu0
      %v795 = vpop.f32.mrb[0].mxu0
      %v796 = vadd.f32 %v241, %v795
      %v797 = vpop.f32.mrb[0].mxu0
      %798 = vmatprep.mubr.bf16.mxu0 0
      %799 = vmatmul.mubr.bf16.gmra.mrb[0].mxu0 %v509
      %v800 = vpop.f32.mrb[0].mxu0
      %v801 = vadd.f32 %v241, %v800
      %v802 = vpop.f32.mrb[0].mxu0
      %v803 = vpop.f32.mrb[0].mxu0
      %v804 = vadd.f32 %v241, %v803
      %v805 = vpop.f32.mrb[0].mxu0
      %806 = vdwg.mxu0
      %v807 = vmax.f32 %v553, 0.0
      %v808 = vmax.f32 %v556, 0.0
      %v809 = vmax.f32 %v561, 0.0
      %v810 = vmax.f32 %v564, 0.0
      %v811 = vmax.f32 %v569, 0.0
      %v812 = vmax.f32 %v572, 0.0
      %v813 = vmax.f32 %v577, 0.0
      %v814 = vmax.f32 %v580, 0.0
      %v815 = vmax.f32 %v585, 0.0
      %v816 = vmax.f32 %v588, 0.0
      %v817 = vmax.f32 %v593, 0.0
      %v818 = vmax.f32 %v596, 0.0
      %v819 = vmax.f32 %v601, 0.0
      %v820 = vmax.f32 %v604, 0.0
      %v821 = vmax.f32 %v609, 0.0
      %v822 = vmax.f32 %v612, 0.0
      %v823 = vmax.f32 %v617, 0.0
      %v824 = vmax.f32 %v620, 0.0
      %v825 = vmax.f32 %v625, 0.0
      %v826 = vmax.f32 %v628, 0.0
      %v827 = vmax.f32 %v633, 0.0
      %v828 = vmax.f32 %v636, 0.0
      %v829 = vmax.f32 %v641, 0.0
      %v830 = vmax.f32 %v644, 0.0
      %v831 = vmax.f32 %v649, 0.0
      %v832 = vmax.f32 %v652, 0.0
      %v833 = vmax.f32 %v657, 0.0
      %v834 = vmax.f32 %v660, 0.0
      %v835 = vmax.f32 %v665, 0.0
      %v836 = vmax.f32 %v668, 0.0
      %v837 = vmax.f32 %v673, 0.0
      %v838 = vmax.f32 %v676, 0.0
      %v839 = vmax.f32 %v681, 0.0
      %v840 = vmax.f32 %v684, 0.0
      %v841 = vmax.f32 %v689, 0.0
      %v842 = vmax.f32 %v692, 0.0
      %v843 = vmax.f32 %v697, 0.0
      %v844 = vmax.f32 %v700, 0.0
      %v845 = vmax.f32 %v705, 0.0
      %v846 = vmax.f32 %v708, 0.0
      %v847 = vmax.f32 %v713, 0.0
      %v848 = vmax.f32 %v716, 0.0
      %v849 = vmax.f32 %v721, 0.0
      %v850 = vmax.f32 %v724, 0.0
      %v851 = vmax.f32 %v729, 0.0
      %v852 = vmax.f32 %v732, 0.0
      %v853 = vmax.f32 %v737, 0.0
      %v854 = vmax.f32 %v740, 0.0
      %v855 = vmax.f32 %v745, 0.0
      %v856 = vmax.f32 %v748, 0.0
      %v857 = vmax.f32 %v753, 0.0
      %v858 = vmax.f32 %v756, 0.0
      %v859 = vmax.f32 %v761, 0.0
      %v860 = vmax.f32 %v764, 0.0
      %v861 = vmax.f32 %v769, 0.0
      %v862 = vmax.f32 %v772, 0.0
      %v863 = vmax.f32 %v777, 0.0
      %v864 = vmax.f32 %v780, 0.0
      %v865 = vmax.f32 %v785, 0.0
      %v866 = vmax.f32 %v788, 0.0
      %v867 = vmax.f32 %v793, 0.0
      %v868 = vmax.f32 %v796, 0.0
      %v869 = vmax.f32 %v801, 0.0
      %v870 = vmax.f32 %v804, 0.0
      %vm871 = vcmask 261120
      %v872 = vsel %vm871, %v807, 0.0
      %v873 = vsel %vm871, %v808, 0.0
      %v874 = vadd.f32 %v872, %v873
      %v875 = vsel %vm871, %v809, 0.0
      %v876 = vadd.f32 %v874, %v875
      %v877 = vsel %vm871, %v810, 0.0
      %v878 = vadd.f32 %v876, %v877
      %v879 = vsel %vm871, %v811, 0.0
      %v880 = vadd.f32 %v878, %v879
      %v881 = vsel %vm871, %v812, 0.0
      %v882 = vadd.f32 %v880, %v881
      %v883 = vsel %vm871, %v813, 0.0
      %v884 = vadd.f32 %v882, %v883
      %v885 = vsel %vm871, %v814, 0.0
      %v886 = vadd.f32 %v884, %v885
      %v887 = vsel %vm871, %v815, 0.0
      %v888 = vadd.f32 %v886, %v887
      %v889 = vsel %vm871, %v816, 0.0
      %v890 = vadd.f32 %v888, %v889
      %v891 = vsel %vm871, %v817, 0.0
      %v892 = vadd.f32 %v890, %v891
      %v893 = vsel %vm871, %v818, 0.0
      %v894 = vadd.f32 %v892, %v893
      %v895 = vsel %vm871, %v819, 0.0
      %v896 = vadd.f32 %v894, %v895
      %v897 = vsel %vm871, %v820, 0.0
      %v898 = vadd.f32 %v896, %v897
      %v899 = vsel %vm871, %v821, 0.0
      %v900 = vadd.f32 %v898, %v899
      %v901 = vsel %vm871, %v822, 0.0
      %v902 = vadd.f32 %v900, %v901
      %v903 = vsel %vm871, %v823, 0.0
      %v904 = vadd.f32 %v902, %v903
      %v905 = vsel %vm871, %v824, 0.0
      %v906 = vadd.f32 %v904, %v905
      %v907 = vsel %vm871, %v825, 0.0
      %v908 = vadd.f32 %v906, %v907
      %v909 = vsel %vm871, %v826, 0.0
      %v910 = vadd.f32 %v908, %v909
      %v911 = vsel %vm871, %v827, 0.0
      %v912 = vadd.f32 %v910, %v911
      %v913 = vsel %vm871, %v828, 0.0
      %v914 = vadd.f32 %v912, %v913
      %v915 = vsel %vm871, %v829, 0.0
      %v916 = vadd.f32 %v914, %v915
      %v917 = vsel %vm871, %v830, 0.0
      %v918 = vadd.f32 %v916, %v917
      %v919 = vsel %vm871, %v831, 0.0
      %v920 = vadd.f32 %v918, %v919
      %v921 = vsel %vm871, %v832, 0.0
      %v922 = vadd.f32 %v920, %v921
      %v923 = vsel %vm871, %v833, 0.0
      %v924 = vadd.f32 %v922, %v923
      %v925 = vsel %vm871, %v834, 0.0
      %v926 = vadd.f32 %v924, %v925
      %v927 = vsel %vm871, %v835, 0.0
      %v928 = vadd.f32 %v926, %v927
      %v929 = vsel %vm871, %v836, 0.0
      %v930 = vadd.f32 %v928, %v929
      %v931 = vsel %vm871, %v837, 0.0
      %v932 = vadd.f32 %v930, %v931
      %v933 = vsel %vm871, %v838, 0.0
      %v934 = vadd.f32 %v932, %v933
      %v935 = vsel %vm871, %v839, 0.0
      %v936 = vadd.f32 %v934, %v935
      %v937 = vsel %vm871, %v840, 0.0
      %v938 = vadd.f32 %v936, %v937
      %v939 = vsel %vm871, %v841, 0.0
      %v940 = vadd.f32 %v938, %v939
      %v941 = vsel %vm871, %v842, 0.0
      %v942 = vadd.f32 %v940, %v941
      %v943 = vsel %vm871, %v843, 0.0
      %v944 = vadd.f32 %v942, %v943
      %v945 = vsel %vm871, %v844, 0.0
      %v946 = vadd.f32 %v944, %v945
      %v947 = vsel %vm871, %v845, 0.0
      %v948 = vadd.f32 %v946, %v947
      %v949 = vsel %vm871, %v846, 0.0
      %v950 = vadd.f32 %v948, %v949
      %v951 = vsel %vm871, %v847, 0.0
      %v952 = vadd.f32 %v950, %v951
      %v953 = vsel %vm871, %v848, 0.0
      %v954 = vadd.f32 %v952, %v953
      %v955 = vsel %vm871, %v849, 0.0
      %v956 = vadd.f32 %v954, %v955
      %v957 = vsel %vm871, %v850, 0.0
      %v958 = vadd.f32 %v956, %v957
      %v959 = vsel %vm871, %v851, 0.0
      %v960 = vadd.f32 %v958, %v959
      %v961 = vsel %vm871, %v852, 0.0
      %v962 = vadd.f32 %v960, %v961
      %v963 = vsel %vm871, %v853, 0.0
      %v964 = vadd.f32 %v962, %v963
      %v965 = vsel %vm871, %v854, 0.0
      %v966 = vadd.f32 %v964, %v965
      %v967 = vsel %vm871, %v855, 0.0
      %v968 = vadd.f32 %v966, %v967
      %v969 = vsel %vm871, %v856, 0.0
      %v970 = vadd.f32 %v968, %v969
      %v971 = vsel %vm871, %v857, 0.0
      %v972 = vadd.f32 %v970, %v971
      %v973 = vsel %vm871, %v858, 0.0
      %v974 = vadd.f32 %v972, %v973
      %v975 = vsel %vm871, %v859, 0.0
      %v976 = vadd.f32 %v974, %v975
      %v977 = vsel %vm871, %v860, 0.0
      %v978 = vadd.f32 %v976, %v977
      %v979 = vsel %vm871, %v861, 0.0
      %v980 = vadd.f32 %v978, %v979
      %v981 = vsel %vm871, %v862, 0.0
      %v982 = vadd.f32 %v980, %v981
      %v983 = vsel %vm871, %v863, 0.0
      %v984 = vadd.f32 %v982, %v983
      %v985 = vsel %vm871, %v864, 0.0
      %v986 = vadd.f32 %v984, %v985
      %v987 = vsel %vm871, %v865, 0.0
      %v988 = vadd.f32 %v986, %v987
      %v989 = vsel %vm871, %v866, 0.0
      %v990 = vadd.f32 %v988, %v989
      %v991 = vsel %vm871, %v867, 0.0
      %v992 = vadd.f32 %v990, %v991
      %v993 = vsel %vm871, %v868, 0.0
      %v994 = vadd.f32 %v992, %v993
      %v995 = vsel %vm871, %v869, 0.0
      %v996 = vadd.f32 %v994, %v995
      %v997 = vsel %vm871, %v870, 0.0
      %v998 = vadd.f32 %v996, %v997
      %v999 = vrot.slane %v998, 4
      %v1000 = vadd.f32 %v998, %v999
      %v1001 = vrot.slane %v1000, 2
      %v1002 = vadd.f32 %v1000, %v1001
      %v1003 = vrot.slane %v1002, 1
      %v1004 = vadd.f32 %v1002, %v1003
      %v1005 = vmul.f32 %v1004, 0.001953125
      %vm1006 = vcmask 253952
      %1007 = vst.msk [vmem:[%s166] sm:$0x1] %vm1006, %v1005
      %p1008 = scmp.lt.s32.totalorder %s14, 1
      %s1009 = scalar_select %p1008, %s14, 1
      %s1010 = scalar_lea.vmem %s3, %s1009
      // Predicated region
      $region33: #{forward.2} parent=31 // pred_check
        %p1011 = pneg %p100
      $region34: #{forward.2} parent=31 // pred_check_branch
        %1013 = sbr.rel (%p1011) target = $region36
      $region35: #{forward.2} parent=31 // pred_region
        _
      $region36: #{forward.2} parent=31 // pred_fallthru
        _
    $region32: #{forward.2} parent=5 // pred_fallthru
      _
    %p1014 = scmp.le.s32.totalorder 2, %s9
    // Predicated region
    $region37: #{forward.2} parent=5 // pred_check
      %p1015 = pneg %p1014
    $region38: #{forward.2} parent=5 // pred_check_branch
      %1017 = sbr.rel (%p1015) target = $region40
    $region39: #{forward.2} parent=5 // pred_region
      %s1018 = ssub.s32 %s9, 2
      // Predicated region
      $region41: #{forward.2} parent=39 // pred_check
        %p1019 = pneg %p106
      $region42: #{forward.2} parent=39 // pred_check_branch
        %1021 = sbr.rel (%p1019) target = $region44
      $region43: #{forward.2} parent=39 // pred_region
        %p1022 = scmp.lt.s32.totalorder %s15, 1
        %s1023 = scalar_select %p1022, %s15, 1
        %s1024 = scalar_lea.vmem %s3, %s1023
      $region44: #{forward.2} parent=39 // pred_fallthru
        _
    $region40: #{forward.2} parent=5 // pred_fallthru
      _
  $region6: #{forward.2} parent=0 // loop_footer
    %s13 = sadd.s32 1, %s9
  $region7: #{forward.2} parent=0 // loop_footer_branch
    %8 = sbr.rel target = $region3
  $region8: #{forward.2} parent=0 // loop_exit
    _

// kernel: forward.3
$region0: #{forward.3}
  #allocation0 [shape = 'u32[]', space=smem, size = 0x4, offset = 0x4, fixed_abs, tag = 'smem constant byte address 0x4 - core index']
  #allocation1 [shape = 'u32[144,128]{1,0:T(1,128)}', space=vmem, size = 0x12000, scoped, tag = 'internal scratch']
  #allocation2 [shape = 'bf16[448,32]{1,0:T(16,128)(2,1)}', space=vmem, size = 0x1c000, scoped, tag = 'scratch operand']
  %s0 = inlined_call_operand.vmem [shape: bf16[2,384,27], index: 0, kind: input, shape index: {}]
  %s1 = inlined_call_operand.vmem [shape: f32[2,1,32], index: 1, kind: input, shape index: {}]
  %s2 = inlined_call_operand.vmem [shape: f32[384,1], index: 2, kind: input, shape index: {}]
  %s3 = inlined_call_operand.vmem [shape: bf16[27,32], index: 3, kind: input, shape index: {}]
  %s4 = inlined_call_operand.vmem [shape: f32[1,32], index: 4, kind: input, shape index: {}, may-alias: {4,6}]
  %s5 = inlined_call_operand.vmem [shape: bf16[9,32,32], index: 5, kind: input, shape index: {}]
  %s6 = inlined_call_operand.vmem [shape: f32[1,32], index: 6, kind: input, shape index: {}, may-alias: {4,6}]
  %s7 = inlined_call_operand.vmem [shape: bf16[32,16], index: 7, kind: input, shape index: {}]
  %s8 = inlined_call_operand.vmem [shape: f32[1,16], index: 8, kind: input, shape index: {}]
  %s9 = inlined_call_operand.vmem [shape: bf16[2,384,16], index: 9, kind: output, shape index: {}]
  %s10 = sld [smem:[#allocation0]]
  $region69: #{forward.3} parent=0
    _
  %s12 = ssub.s32 1, %s10
  %s13 = scalar_select 0, %s12, %s10
  loop: start=0, step=1, limit=4
  $region2: #{forward.3} parent=0 // loop_pre_header
    _
  $region3: #{forward.3} parent=0 // loop_header
    %s15 = sphi 0, %s19
    %p16 = scmp.ge.s32.totalorder %s15, 4
    %s25 = sphi 0, %s27
    %s28 = sphi 0, %s25
    %s29 = sphi 0, %s28
    %s45 = sphi 0, %s29
    %s51 = sphi 0, %s53
    %s54 = sphi 0, %s51
    %s55 = sphi 0, %s54
    %s71 = sphi 0, %s55
    %s75 = sphi 0, %s75
    %s77 = sphi 0, %s75
    %s78 = sphi 0, %s77
    %s92 = sphi 0, %s78
    %s96 = sphi 0, %s96
    %s98 = sphi 0, %s96
    %s99 = sphi 0, %s98
    %s113 = sphi 0, %s99
    %s117 = sphi 0, %s117
    %s119 = sphi 0, %s117
    %s120 = sphi 0, %s119
    %s134 = sphi 0, %s120
    %s138 = sphi 0, %s138
    %s140 = sphi 0, %s138
    %s141 = sphi 0, %s140
    %s155 = sphi 0, %s141
    %s159 = sphi 0, %s159
    %s161 = sphi 0, %s159
    %s162 = sphi 0, %s161
    %s176 = sphi 0, %s162
    %s180 = sphi 0, %s180
    %s182 = sphi 0, %s180
    %s183 = sphi 0, %s182
    %s197 = sphi 0, %s183
    %s201 = sphi 0, %s201
    %s203 = sphi 0, %s201
    %s204 = sphi 0, %s203
    %s218 = sphi 0, %s204
    %s224 = sphi 0, %s226
    %s227 = sphi 0, %s224
    %s228 = sphi 0, %s227
    %s244 = sphi 0, %s228
  $region4: #{forward.3} parent=0 // loop_header_branch
    %18 = sbr.rel (%p16) target = $region8
  $region5: #{forward.3} parent=0 // loop_body
    %s20 = ssub.s32 %s15, 1
    %s21 = ssub.s32 %s15, 2
    %s22 = sadd.s32 %s15, 1
    %s23 = ssub.s32 %s15, %s22
    %p24 = scmp.eq.s32.totalorder %s23, 0
    %s26 = sadd.s32 %s25, 1
    %s27 = scalar_select %p24, %s25, %s26
    %p30 = pneg %p24
    %p31 = scmp.eq.s32.totalorder %s15, 1
    %p32 = por %p30, %p31
    %p33 = scmp.ne.s32.totalorder %s25, %s28
    %p34 = scmp.eq.s32.totalorder %s15, 0
    %p35 = por %p33, %p34
    %p36 = scmp.ne.s32.totalorder %s25, %s28
    %p37 = scmp.eq.s32.totalorder %s20, 1
    %p38 = por %p36, %p37
    %p39 = scmp.ne.s32.totalorder %s28, %s29
    %p40 = scmp.eq.s32.totalorder %s20, 0
    %p41 = por %p39, %p40
    %p42 = scmp.ne.s32.totalorder %s28, %s29
    %p43 = scmp.eq.s32.totalorder %s21, 1
    %p44 = por %p42, %p43
    %p46 = scmp.ne.s32.totalorder %s29, %s45
    %p47 = scmp.eq.s32.totalorder %s21, 0
    %p48 = por %p46, %p47
    %s49 = ssub.s32 %s15, %s22
    %p50 = scmp.eq.s32.totalorder %s49, 0
    %s52 = sadd.s32 %s51, 1
    %s53 = scalar_select %p50, %s51, %s52
    %p56 = pneg %p50
    %p57 = scmp.eq.s32.totalorder %s15, 1
    %p58 = por %p56, %p57
    %p59 = scmp.ne.s32.totalorder %s51, %s54
    %p60 = scmp.eq.s32.totalorder %s15, 0
    %p61 = por %p59, %p60
    %p62 = scmp.ne.s32.totalorder %s51, %s54
    %p63 = scmp.eq.s32.totalorder %s20, 1
    %p64 = por %p62, %p63
    %p65 = scmp.ne.s32.totalorder %s54, %s55
    %p66 = scmp.eq.s32.totalorder %s20, 0
    %p67 = por %p65, %p66
    %p68 = scmp.ne.s32.totalorder %s54, %s55
    %p69 = scmp.eq.s32.totalorder %s21, 1
    %p70 = por %p68, %p69
    %p72 = scmp.ne.s32.totalorder %s55, %s71
    %p73 = scmp.eq.s32.totalorder %s21, 0
    %p74 = por %p72, %p73
    %s76 = sadd.s32 %s75, 1
    %p79 = scmp.eq.s32.totalorder %s15, 1
    %p80 = scmp.ne.s32.totalorder %s75, %s77
    %p81 = scmp.eq.s32.totalorder %s15, 0
    %p82 = por %p80, %p81
    %p83 = scmp.ne.s32.totalorder %s75, %s77
    %p84 = scmp.eq.s32.totalorder %s20, 1
    %p85 = por %p83, %p84
    %p86 = scmp.ne.s32.totalorder %s77, %s78
    %p87 = scmp.eq.s32.totalorder %s20, 0
    %p88 = por %p86, %p87
    %p89 = scmp.ne.s32.totalorder %s77, %s78
    %p90 = scmp.eq.s32.totalorder %s21, 1
    %p91 = por %p89, %p90
    %p93 = scmp.ne.s32.totalorder %s78, %s92
    %p94 = scmp.eq.s32.totalorder %s21, 0
    %p95 = por %p93, %p94
    %s97 = sadd.s32 %s96, 1
    %p100 = scmp.eq.s32.totalorder %s15, 1
    %p101 = scmp.ne.s32.totalorder %s96, %s98
    %p102 = scmp.eq.s32.totalorder %s15, 0
    %p103 = por %p101, %p102
    %p104 = scmp.ne.s32.totalorder %s96, %s98
    %p105 = scmp.eq.s32.totalorder %s20, 1
    %p106 = por %p104, %p105
    %p107 = scmp.ne.s32.totalorder %s98, %s99
    %p108 = scmp.eq.s32.totalorder %s20, 0
    %p109 = por %p107, %p108
    %p110 = scmp.ne.s32.totalorder %s98, %s99
    %p111 = scmp.eq.s32.totalorder %s21, 1
    %p112 = por %p110, %p111
    %p114 = scmp.ne.s32.totalorder %s99, %s113
    %p115 = scmp.eq.s32.totalorder %s21, 0
    %p116 = por %p114, %p115
    %s118 = sadd.s32 %s117, 1
    %p121 = scmp.eq.s32.totalorder %s15, 1
    %p122 = scmp.ne.s32.totalorder %s117, %s119
    %p123 = scmp.eq.s32.totalorder %s15, 0
    %p124 = por %p122, %p123
    %p125 = scmp.ne.s32.totalorder %s117, %s119
    %p126 = scmp.eq.s32.totalorder %s20, 1
    %p127 = por %p125, %p126
    %p128 = scmp.ne.s32.totalorder %s119, %s120
    %p129 = scmp.eq.s32.totalorder %s20, 0
    %p130 = por %p128, %p129
    %p131 = scmp.ne.s32.totalorder %s119, %s120
    %p132 = scmp.eq.s32.totalorder %s21, 1
    %p133 = por %p131, %p132
    %p135 = scmp.ne.s32.totalorder %s120, %s134
    %p136 = scmp.eq.s32.totalorder %s21, 0
    %p137 = por %p135, %p136
    %s139 = sadd.s32 %s138, 1
    %p142 = scmp.eq.s32.totalorder %s15, 1
    %p143 = scmp.ne.s32.totalorder %s138, %s140
    %p144 = scmp.eq.s32.totalorder %s15, 0
    %p145 = por %p143, %p144
    %p146 = scmp.ne.s32.totalorder %s138, %s140
    %p147 = scmp.eq.s32.totalorder %s20, 1
    %p148 = por %p146, %p147
    %p149 = scmp.ne.s32.totalorder %s140, %s141
    %p150 = scmp.eq.s32.totalorder %s20, 0
    %p151 = por %p149, %p150
    %p152 = scmp.ne.s32.totalorder %s140, %s141
    %p153 = scmp.eq.s32.totalorder %s21, 1
    %p154 = por %p152, %p153
    %p156 = scmp.ne.s32.totalorder %s141, %s155
    %p157 = scmp.eq.s32.totalorder %s21, 0
    %p158 = por %p156, %p157
    %s160 = sadd.s32 %s159, 1
    %p163 = scmp.eq.s32.totalorder %s15, 1
    %p164 = scmp.ne.s32.totalorder %s159, %s161
    %p165 = scmp.eq.s32.totalorder %s15, 0
    %p166 = por %p164, %p165
    %p167 = scmp.ne.s32.totalorder %s159, %s161
    %p168 = scmp.eq.s32.totalorder %s20, 1
    %p169 = por %p167, %p168
    %p170 = scmp.ne.s32.totalorder %s161, %s162
    %p171 = scmp.eq.s32.totalorder %s20, 0
    %p172 = por %p170, %p171
    %p173 = scmp.ne.s32.totalorder %s161, %s162
    %p174 = scmp.eq.s32.totalorder %s21, 1
    %p175 = por %p173, %p174
    %p177 = scmp.ne.s32.totalorder %s162, %s176
    %p178 = scmp.eq.s32.totalorder %s21, 0
    %p179 = por %p177, %p178
    %s181 = sadd.s32 %s180, 1
    %p184 = scmp.eq.s32.totalorder %s15, 1
    %p185 = scmp.ne.s32.totalorder %s180, %s182
    %p186 = scmp.eq.s32.totalorder %s15, 0
    %p187 = por %p185, %p186
    %p188 = scmp.ne.s32.totalorder %s180, %s182
    %p189 = scmp.eq.s32.totalorder %s20, 1
    %p190 = por %p188, %p189
    %p191 = scmp.ne.s32.totalorder %s182, %s183
    %p192 = scmp.eq.s32.totalorder %s20, 0
    %p193 = por %p191, %p192
    %p194 = scmp.ne.s32.totalorder %s182, %s183
    %p195 = scmp.eq.s32.totalorder %s21, 1
    %p196 = por %p194, %p195
    %p198 = scmp.ne.s32.totalorder %s183, %s197
    %p199 = scmp.eq.s32.totalorder %s21, 0
    %p200 = por %p198, %p199
    %s202 = sadd.s32 %s201, 1
    %p205 = scmp.eq.s32.totalorder %s15, 1
    %p206 = scmp.ne.s32.totalorder %s201, %s203
    %p207 = scmp.eq.s32.totalorder %s15, 0
    %p208 = por %p206, %p207
    %p209 = scmp.ne.s32.totalorder %s201, %s203
    %p210 = scmp.eq.s32.totalorder %s20, 1
    %p211 = por %p209, %p210
    %p212 = scmp.ne.s32.totalorder %s203, %s204
    %p213 = scmp.eq.s32.totalorder %s20, 0
    %p214 = por %p212, %p213
    %p215 = scmp.ne.s32.totalorder %s203, %s204
    %p216 = scmp.eq.s32.totalorder %s21, 1
    %p217 = por %p215, %p216
    %p219 = scmp.ne.s32.totalorder %s204, %s218
    %p220 = scmp.eq.s32.totalorder %s21, 0
    %p221 = por %p219, %p220
    %s222 = ssub.s32 %s15, %s22
    %p223 = scmp.eq.s32.totalorder %s222, 0
    %s225 = sadd.s32 %s224, 1
    %s226 = scalar_select %p223, %s224, %s225
    %p229 = pneg %p223
    %p230 = scmp.eq.s32.totalorder %s15, 1
    %p231 = por %p229, %p230
    %p232 = scmp.ne.s32.totalorder %s224, %s227
    %p233 = scmp.eq.s32.totalorder %s15, 0
    %p234 = por %p232, %p233
    %p235 = scmp.ne.s32.totalorder %s224, %s227
    %p236 = scmp.eq.s32.totalorder %s20, 1
    %p237 = por %p235, %p236
    %p238 = scmp.ne.s32.totalorder %s227, %s228
    %p239 = scmp.eq.s32.totalorder %s20, 0
    %p240 = por %p238, %p239
    %p241 = scmp.ne.s32.totalorder %s227, %s228
    %p242 = scmp.eq.s32.totalorder %s21, 1
    %p243 = por %p241, %p242
    %p245 = scmp.ne.s32.totalorder %s228, %s244
    %p246 = scmp.eq.s32.totalorder %s21, 0
    %p247 = por %p245, %p246
    %p248 = scmp.le.s32.totalorder 1, %s15
    %p249 = scmp.lt.s32.totalorder %s15, 3
    %p250 = pnand %p248, %p249
    %p251 = pneg %p250
    // Predicated region
    $region9: #{forward.3} parent=5 // pred_check
      _
    $region10: #{forward.3} parent=5 // pred_check_branch
      %253 = sbr.rel (%p250) target = $region12
    $region11: #{forward.3} parent=5 // pred_region
      %s254 = ssub.s32 %s15, 1
      // Predicated region
      $region13: #{forward.3} parent=11 // pred_check
        %p255 = pneg %p88
      $region14: #{forward.3} parent=11 // pred_check_branch
        %257 = sbr.rel (%p255) target = $region16
      $region15: #{forward.3} parent=11 // pred_region
        _
      $region16: #{forward.3} parent=11 // pred_fallthru
        _
      // Predicated region
      $region17: #{forward.3} parent=11 // pred_check
        %p258 = pneg %p109
      $region18: #{forward.3} parent=11 // pred_check_branch
        %260 = sbr.rel (%p258) target = $region20
      $region19: #{forward.3} parent=11 // pred_region
        _
      $region20: #{forward.3} parent=11 // pred_fallthru
        _
      // Predicated region
      $region21: #{forward.3} parent=11 // pred_check
        %p261 = pneg %p130
      $region22: #{forward.3} parent=11 // pred_check_branch
        %263 = sbr.rel (%p261) target = $region24
      $region23: #{forward.3} parent=11 // pred_region
        _
      $region24: #{forward.3} parent=11 // pred_fallthru
        _
      // Predicated region
      $region25: #{forward.3} parent=11 // pred_check
        %p264 = pneg %p151
      $region26: #{forward.3} parent=11 // pred_check_branch
        %266 = sbr.rel (%p264) target = $region28
      $region27: #{forward.3} parent=11 // pred_region
        _
      $region28: #{forward.3} parent=11 // pred_fallthru
        _
      // Predicated region
      $region29: #{forward.3} parent=11 // pred_check
        %p267 = pneg %p172
      $region30: #{forward.3} parent=11 // pred_check_branch
        %269 = sbr.rel (%p267) target = $region32
      $region31: #{forward.3} parent=11 // pred_region
        _
      $region32: #{forward.3} parent=11 // pred_fallthru
        _
      // Predicated region
      $region33: #{forward.3} parent=11 // pred_check
        %p270 = pneg %p193
      $region34: #{forward.3} parent=11 // pred_check_branch
        %272 = sbr.rel (%p270) target = $region36
      $region35: #{forward.3} parent=11 // pred_region
        _
      $region36: #{forward.3} parent=11 // pred_fallthru
        _
      // Predicated region
      $region37: #{forward.3} parent=11 // pred_check
        %p273 = pneg %p214
      $region38: #{forward.3} parent=11 // pred_check_branch
        %275 = sbr.rel (%p273) target = $region40
      $region39: #{forward.3} parent=11 // pred_region
        _
      $region40: #{forward.3} parent=11 // pred_fallthru
        _
    $region12: #{forward.3} parent=5 // pred_fallthru
      _
    %p276 = scmp.lt.s32.totalorder %s15, 2
    // Predicated region
    $region41: #{forward.3} parent=5 // pred_check
      %p277 = pneg %p276
    $region42: #{forward.3} parent=5 // pred_check_branch
      %279 = sbr.rel (%p277) target = $region44
    $region43: #{forward.3} parent=5 // pred_region
      // Predicated region
      $region45: #{forward.3} parent=43 // pred_check
        %p280 = pneg %p35
      $region46: #{forward.3} parent=43 // pred_check_branch
        %282 = sbr.rel (%p280) target = $region48
      $region47: #{forward.3} parent=43 // pred_region
        %p283 = scmp.lt.s32.totalorder %s15, 1
        %s284 = scalar_select %p283, %s15, 1
        %s285 = smul.addr %s284, 48
        %s286 = smul.addr %s285, 4
        %s287 = scalar_lea.vmem %s0, %s286
      $region48: #{forward.3} parent=43 // pred_fallthru
        _
      // Predicated region
      $region49: #{forward.3} parent=43 // pred_check
        %p288 = pneg %p61
      $region50: #{forward.3} parent=43 // pred_check_branch
        %290 = sbr.rel (%p288) target = $region52
      $region51: #{forward.3} parent=43 // pred_region
        %p291 = scmp.lt.s32.totalorder %s15, 1
        %s292 = scalar_select %p291, %s15, 1
        %s293 = scalar_lea.vmem %s1, %s292
      $region52: #{forward.3} parent=43 // pred_fallthru
        _
    $region44: #{forward.3} parent=5 // pred_fallthru
      _
    %p294 = scmp.le.s32.totalorder 1, %s15
    %p295 = scmp.lt.s32.totalorder %s15, 3
    %p296 = pnand %p294, %p295
    %p297 = pneg %p296
    // Predicated region
    $region53: #{forward.3} parent=5 // pred_check
      _
    $region54: #{forward.3} parent=5 // pred_check_branch
      %299 = sbr.rel (%p296) target = $region56
    $region55: #{forward.3} parent=5 // pred_region
      %s300 = ssub.s32 %s15, 1
      %p301 = scmp.lt.s32.totalorder %s20, 1
      %s302 = scalar_select %p301, %s20, 1
      %s303 = smul.addr %s302, 48
      %s304 = smul.addr %s303, 4
      %s305 = scalar_lea.vmem %s0, %s304
      %p306 = pneg %p41
      %p307 = pneg %p38
      %p308 = scmp.lt.s32.totalorder %s20, 1
      %s309 = scalar_select %p308, %s20, 1
      %s310 = scalar_lea.vmem %s1, %s309
      %p311 = pneg %p67
      %p312 = pneg %p64
      %p313 = pneg %p88
      %p314 = pneg %p85
      %p315 = pneg %p109
      %p316 = pneg %p106
      %p317 = pneg %p130
      %p318 = pneg %p127
      %p319 = pneg %p151
      %p320 = pneg %p148
      %p321 = pneg %p172
      %p322 = pneg %p169
      %p323 = pneg %p193
      %p324 = pneg %p190
      %p325 = pneg %p214
      %p326 = pneg %p211
      %p327 = pneg %p240
      %p328 = pneg %p237
      %p329 = scmp.lt.s32.totalorder %s20, 1
      %s330 = scalar_select %p329, %s20, 1
      %s331 = smul.addr %s330, 48
      %s332 = smul.addr %s331, 4
      %s333 = scalar_lea.vmem %s9, %s332
      %p334 = scmp.lt.s32.totalorder %s20, 1
      %s335 = scalar_select %p334, %s20, 1
      %s336 = smul.addr %s335, 48
      %s337 = smul.addr %s336, 4
      %s338 = scalar_lea.vmem %s0, %s337
      %p339 = scmp.lt.s32.totalorder %s20, 1
      %s340 = scalar_select %p339, %s20, 1
      %s341 = scalar_lea.vmem %s1, %s340
      %p342 = scmp.lt.s32.totalorder %s20, 1
      %s343 = scalar_select %p342, %s20, 1
      %s344 = smul.addr %s343, 48
      %s345 = smul.addr %s344, 4
      %s346 = scalar_lea.vmem %s9, %s345
      %vm348 = vcmask 261120
      %349 = vst.msk [vmem:[#allocation2] sm:$0xff] %vm348, 0
      %350 = vst.msk [vmem:[#allocation2 + $0x8] sm:$0xff] %vm348, 0
      %351 = vst.msk [vmem:[#allocation2 + $0xd0] sm:$0xff] %vm348, 0
      %352 = vst.msk [vmem:[#allocation2 + $0xd8] sm:$0xff] %vm348, 0
      %v353 = vld [vmem:[%s338] sm:$0xf]
      %v354 = vld [vmem:[%s338 + $0x4] sm:$0xf]
      %v355 = vld [vmem:[%s338 + $0x8] sm:$0xf]
      %v356 = vld [vmem:[%s338 + $0xc] sm:$0xf]
      %v357 = vld [vmem:[%s338 + $0x10] sm:$0xf]
      %v358 = vld [vmem:[%s338 + $0x14] sm:$0xf]
      %v359 = vld [vmem:[%s338 + $0x18] sm:$0xf]
      %v360 = vld [vmem:[%s338 + $0x1c] sm:$0xf]
      %v361 = vld [vmem:[%s338 + $0x20] sm:$0xf]
      %v362 = vld [vmem:[%s338 + $0x24] sm:$0xf]
      %v363 = vld [vmem:[%s338 + $0x28] sm:$0xf]
      %v364 = vld [vmem:[%s338 + $0x2c] sm:$0xf]
      %v365 = vld [vmem:[%s338 + $0x30] sm:$0xf]
      %v366 = vld [vmem:[%s338 + $0x34] sm:$0xf]
      %v367 = vld [vmem:[%s338 + $0x38] sm:$0xf]
      %v368 = vld [vmem:[%s338 + $0x3c] sm:$0xf]
      %v369 = vld [vmem:[%s338 + $0x40] sm:$0xf]
      %v370 = vld [vmem:[%s338 + $0x44] sm:$0xf]
      %v371 = vld [vmem:[%s338 + $0x48] sm:$0xf]
      %v372 = vld [vmem:[%s338 + $0x4c] sm:$0xf]
      %v373 = vld [vmem:[%s338 + $0x50] sm:$0xf]
      %v374 = vld [vmem:[%s338 + $0x54] sm:$0xf]
      %v375 = vld [vmem:[%s338 + $0x58] sm:$0xf]
      %v376 = vld [vmem:[%s338 + $0x5c] sm:$0xf]
      %v377 = vld [vmem:[%s338 + $0x60] sm:$0xf]
      %v378 = vld [vmem:[%s338 + $0x64] sm:$0xf]
      %v379 = vld [vmem:[%s338 + $0x68] sm:$0xf]
      %v380 = vld [vmem:[%s338 + $0x6c] sm:$0xf]
      %v381 = vld [vmem:[%s338 + $0x70] sm:$0xf]
      %v382 = vld [vmem:[%s338 + $0x74] sm:$0xf]
      %v383 = vld [vmem:[%s338 + $0x78] sm:$0xf]
      %v384 = vld [vmem:[%s338 + $0x7c] sm:$0xf]
      %v385 = vld [vmem:[%s338 + $0x80] sm:$0xf]
      %v386 = vld [vmem:[%s338 + $0x84] sm:$0xf]
      %v387 = vld [vmem:[%s338 + $0x88] sm:$0xf]
      %v388 = vld [vmem:[%s338 + $0x8c] sm:$0xf]
      %v389 = vld [vmem:[%s338 + $0x90] sm:$0xf]
      %v390 = vld [vmem:[%s338 + $0x94] sm:$0xf]
      %v391 = vld [vmem:[%s338 + $0x98] sm:$0xf]
      %v392 = vld [vmem:[%s338 + $0x9c] sm:$0xf]
      %v393 = vld [vmem:[%s338 + $0xa0] sm:$0xf]
      %v394 = vld [vmem:[%s338 + $0xa4] sm:$0xf]
      %v395 = vld [vmem:[%s338 + $0xa8] sm:$0xf]
      %v396 = vld [vmem:[%s338 + $0xac] sm:$0xf]
      %v397 = vld [vmem:[%s338 + $0xb0] sm:$0xf]
      %v398 = vld [vmem:[%s338 + $0xb4] sm:$0xf]
      %v399 = vld [vmem:[%s338 + $0xb8] sm:$0xf]
      %v400 = vld [vmem:[%s338 + $0xbc] sm:$0xf]
      %v401 = vld [vmem:[%s3] sm:$0xf]
      %v402 = vld [vmem:[%s3 + $0x4] sm:$0xf]
      %v403 = vld [vmem:[%s3 + $0x8] sm:$0xf]
      %v404 = vld [vmem:[%s3 + $0xc] sm:$0x3]
      %v405 = vld [vmem:[%s4] sm:$0x1]
      %v407 = vlaneseq
      %v408 = vshrl.u32 %v407, 7
      %v409 = vsub.s32 0, %v408
      %v410 = vrot.slane %v405, %v409
      %v460 = vunpack.c.l.b16 %v353
      %v461 = vunpack.c.l.b16 %v354
      %v462 = vunpack.c.l.b16 %v355
      %v463 = vunpack.c.l.b16 %v356
      %v464 = vunpack.c.l.b16 %v357
      %v465 = vunpack.c.l.b16 %v358
      %v466 = vunpack.c.l.b16 %v359
      %v467 = vunpack.c.l.b16 %v360
      %v468 = vunpack.c.l.b16 %v361
      %v469 = vunpack.c.l.b16 %v362
      %v470 = vunpack.c.l.b16 %v363
      %v471 = vunpack.c.l.b16 %v364
      %v472 = vunpack.c.l.b16 %v365
      %v473 = vunpack.c.l.b16 %v366
      %v474 = vunpack.c.l.b16 %v367
      %v475 = vunpack.c.l.b16 %v368
      %v476 = vunpack.c.l.b16 %v369
      %v477 = vunpack.c.l.b16 %v370
      %v478 = vunpack.c.l.b16 %v371
      %v479 = vunpack.c.l.b16 %v372
      %v480 = vunpack.c.l.b16 %v373
      %v481 = vunpack.c.l.b16 %v374
      %v482 = vunpack.c.l.b16 %v375
      %v483 = vunpack.c.l.b16 %v376
      %v484 = vunpack.c.l.b16 %v377
      %v485 = vunpack.c.l.b16 %v378
      %v486 = vunpack.c.l.b16 %v379
      %v487 = vunpack.c.l.b16 %v380
      %v488 = vunpack.c.l.b16 %v381
      %v489 = vunpack.c.l.b16 %v382
      %v490 = vunpack.c.l.b16 %v383
      %v491 = vunpack.c.l.b16 %v384
      %v492 = vunpack.c.l.b16 %v385
      %v493 = vunpack.c.l.b16 %v386
      %v494 = vunpack.c.l.b16 %v387
      %v495 = vunpack.c.l.b16 %v388
      %v496 = vunpack.c.l.b16 %v389
      %v497 = vunpack.c.l.b16 %v390
      %v498 = vunpack.c.l.b16 %v391
      %v499 = vunpack.c.l.b16 %v392
      %v500 = vunpack.c.l.b16 %v393
      %v501 = vunpack.c.l.b16 %v394
      %v502 = vunpack.c.l.b16 %v395
      %v503 = vunpack.c.l.b16 %v396
      %v504 = vunpack.c.l.b16 %v397
      %v505 = vunpack.c.l.b16 %v398
      %v506 = vunpack.c.l.b16 %v399
      %v507 = vunpack.c.l.b16 %v400
      %v508 = vpack.c.b16 %v461, %v460
      %v509 = vpack.c.b16 %v463, %v462
      %v510 = vpack.c.b16 %v465, %v464
      %v511 = vpack.c.b16 %v467, %v466
      %v512 = vpack.c.b16 %v469, %v468
      %v513 = vpack.c.b16 %v471, %v470
      %v514 = vpack.c.b16 %v473, %v472
      %v515 = vpack.c.b16 %v475, %v474
      %v516 = vpack.c.b16 %v477, %v476
      %v517 = vpack.c.b16 %v479, %v478
      %v518 = vpack.c.b16 %v481, %v480
      %v519 = vpack.c.b16 %v483, %v482
      %v520 = vpack.c.b16 %v485, %v484
      %v521 = vpack.c.b16 %v487, %v486
      %v522 = vpack.c.b16 %v489, %v488
      %v523 = vpack.c.b16 %v491, %v490
      %v524 = vpack.c.b16 %v493, %v492
      %v525 = vpack.c.b16 %v495, %v494
      %v526 = vpack.c.b16 %v497, %v496
      %v527 = vpack.c.b16 %v499, %v498
      %v528 = vpack.c.b16 %v501, %v500
      %v529 = vpack.c.b16 %v503, %v502
      %v530 = vpack.c.b16 %v505, %v504
      %v531 = vpack.c.b16 %v507, %v506
      %v536 = vunpack.c.l.b16 %v401
      %v537 = vunpack.c.l.b16 %v402
      %v538 = vunpack.c.l.b16 %v403
      %v539 = vunpack.c.l.b16 %v404
      %v540 = vpack.c.b16 %v537, %v536
      %v541 = vpack.c.b16 %v539, %v538
      %vm543 = vcmask 220160
      %v545 = vsel %vm543, %v508, 0
      %v548 = vsel %vm543, %v509, 0
      %v551 = vsel %vm543, %v510, 0
      %v554 = vsel %vm543, %v511, 0
      %v557 = vsel %vm543, %v512, 0
      %v560 = vsel %vm543, %v513, 0
      %v563 = vsel %vm543, %v514, 0
      %v566 = vsel %vm543, %v515, 0
      %v569 = vsel %vm543, %v516, 0
      %v572 = vsel %vm543, %v517, 0
      %v575 = vsel %vm543, %v518, 0
      %v578 = vsel %vm543, %v519, 0
      %v581 = vsel %vm543, %v520, 0
      %v584 = vsel %vm543, %v521, 0
      %v587 = vsel %vm543, %v522, 0
      %v590 = vsel %vm543, %v523, 0
      %v593 = vsel %vm543, %v524, 0
      %v596 = vsel %vm543, %v525, 0
      %v599 = vsel %vm543, %v526, 0
      %v602 = vsel %vm543, %v527, 0
      %v605 = vsel %vm543, %v528, 0
      %v608 = vsel %vm543, %v529, 0
      %v611 = vsel %vm543, %v530, 0
      %v614 = vsel %vm543, %v531, 0
      %vm616 = vcmask 1044480
      %vm617 = vcmask 1045504
      %v618 = vsel %vm616, 4294967295, 65535
      %v619 = vsel %vm617, %v618, 0
      %v621 = vand.u32 %v541, %v619
      %623 = vmatprep.subr.bf16.mxu0 0
      %624 = vmatpush1.bf16.msra.mxu0 %v540
      %625 = vmatprep.subr.bf16.mxu0 0
      %626 = vmatpush1.bf16.msra.mxu0 %v621
      %627 = vmatprep.subr.bf16.mxu0 0
      %628 = vmatpush1.bf16.msra.mxu0 0
      %629 = vmatprep.subr.bf16.mxu0 0
      %630 = vmatpush1.bf16.msra.mxu0 0
      %631 = vmatprep.subr.bf16.mxu0 0
      %632 = vmatpush1.bf16.msra.mxu0 0
      %633 = vmatprep.subr.bf16.mxu0 0
      %634 = vmatpush1.bf16.msra.mxu0 0
      %635 = vmatprep.subr.bf16.mxu0 0
      %636 = vmatpush1.bf16.msra.mxu0 0
      %637 = vmatprep.subr.bf16.mxu0 0
      %638 = vmatpush1.bf16.msra.mxu0 0
      %639 = vmatprep.subr.bf16.mxu0 0
      %640 = vmatpush1.bf16.msra.mxu0 0
      %641 = vmatprep.subr.bf16.mxu0 0
      %642 = vmatpush1.bf16.msra.mxu0 0
      %643 = vmatprep.subr.bf16.mxu0 0
      %644 = vmatpush1.bf16.msra.mxu0 0
      %645 = vmatprep.subr.bf16.mxu0 0
      %646 = vmatpush1.bf16.msra.mxu0 0
      %647 = vmatprep.subr.bf16.mxu0 0
      %648 = vmatpush1.bf16.msra.mxu0 0
      %649 = vmatprep.subr.bf16.mxu0 0
      %650 = vmatpush1.bf16.msra.mxu0 0
      %651 = vmatprep.subr.bf16.mxu0 0
      %652 = vmatpush1.bf16.msra.mxu0 0
      %653 = vmatprep.subr.bf16.mxu0 0
      %654 = vmatpush1.bf16.msra.mxu0 0
      %655 = vmatprep.mubr.bf16.mxu0 0
      %656 = vmatmul.mubr.bf16.gmra.mrb[0].mxu0 %v545
      %v657 = vpop.f32.mrb[0].mxu0
      %v658 = vadd.f32 %v410, %v657
      %v659 = vpop.f32.mrb[0].mxu0
      %v660 = vpop.f32.mrb[0].mxu0
      %v661 = vadd.f32 %v410, %v660
      %v662 = vpop.f32.mrb[0].mxu0
      %663 = vmatprep.mubr.bf16.mxu0 0
      %664 = vmatmul.mubr.bf16.gmra.mrb[0].mxu0 %v548
      %v665 = vpop.f32.mrb[0].mxu0
      %v666 = vadd.f32 %v410, %v665
      %v667 = vpop.f32.mrb[0].mxu0
      %v668 = vpop.f32.mrb[0].mxu0
      %v669 = vadd.f32 %v410, %v668
      %v670 = vpop.f32.mrb[0].mxu0
      %671 = vmatprep.mubr.bf16.mxu0 0
      %672 = vmatmul.mubr.bf16.gmra.mrb[0].mxu0 %v551
      %v673 = vpop.f32.mrb[0].mxu0
      %v674 = vadd.f32 %v410, %v673
      %v675 = vpop.f32.mrb[0].mxu0
      %v676 = vpop.f32.mrb[0].mxu0
      %v677 = vadd.f32 %v410, %v676
      %v678 = vpop.f32.mrb[0].mxu0
      %679 = vmatprep.mubr.bf16.mxu0 0
      %680 = vmatmul.mubr.bf16.gmra.mrb[0].mxu0 %v554
      %v681 = vpop.f32.mrb[0].mxu0
      %v682 = vadd.f32 %v410, %v681
      %v683 = vpop.f32.mrb[0].mxu0
      %v684 = vpop.f32.mrb[0].mxu0
      %v685 = vadd.f32 %v410, %v684
      %v686 = vpop.f32.mrb[0].mxu0
      %687 = vmatprep.mubr.bf16.mxu0 0
      %688 = vmatmul.mubr.bf16.gmra.mrb[0].mxu0 %v557
      %v689 = vpop.f32.mrb[0].mxu0
      %v690 = vadd.f32 %v410, %v689
      %v691 = vpop.f32.mrb[0].mxu0
      %v692 = vpop.f32.mrb[0].mxu0
      %v693 = vadd.f32 %v410, %v692
      %v694 = vpop.f32.mrb[0].mxu0
      %695 = vmatprep.mubr.bf16.mxu0 0
      %696 = vmatmul.mubr.bf16.gmra.mrb[0].mxu0 %v560
      %v697 = vpop.f32.mrb[0].mxu0
      %v698 = vadd.f32 %v410, %v697
      %v699 = vpop.f32.mrb[0].mxu0
      %v700 = vpop.f32.mrb[0].mxu0
      %v701 = vadd.f32 %v410, %v700
      %v702 = vpop.f32.mrb[0].mxu0
      %703 = vmatprep.mubr.bf16.mxu0 0
      %704 = vmatmul.mubr.bf16.gmra.mrb[0].mxu0 %v563
      %v705 = vpop.f32.mrb[0].mxu0
      %v706 = vadd.f32 %v410, %v705
      %v707 = vpop.f32.mrb[0].mxu0
      %v708 = vpop.f32.mrb[0].mxu0
      %v709 = vadd.f32 %v410, %v708
      %v710 = vpop.f32.mrb[0].mxu0
      %711 = vmatprep.mubr.bf16.mxu0 0
      %712 = vmatmul.mubr.bf16.gmra.mrb[0].mxu0 %v566
      %v713 = vpop.f32.mrb[0].mxu0
      %v714 = vadd.f32 %v410, %v713
      %v715 = vpop.f32.mrb[0].mxu0
      %v716 = vpop.f32.mrb[0].mxu0
      %v717 = vadd.f32 %v410, %v716
      %v718 = vpop.f32.mrb[0].mxu0
      %719 = vmatprep.mubr.bf16.mxu0 0
      %720 = vmatmul.mubr.bf16.gmra.mrb[0].mxu0 %v569
      %v721 = vpop.f32.mrb[0].mxu0
      %v722 = vadd.f32 %v410, %v721
      %v723 = vpop.f32.mrb[0].mxu0
      %v724 = vpop.f32.mrb[0].mxu0
      %v725 = vadd.f32 %v410, %v724
      %v726 = vpop.f32.mrb[0].mxu0
      %727 = vmatprep.mubr.bf16.mxu0 0
      %728 = vmatmul.mubr.bf16.gmra.mrb[0].mxu0 %v572
      %v729 = vpop.f32.mrb[0].mxu0
      %v730 = vadd.f32 %v410, %v729
      %v731 = vpop.f32.mrb[0].mxu0
      %v732 = vpop.f32.mrb[0].mxu0
      %v733 = vadd.f32 %v410, %v732
      %v734 = vpop.f32.mrb[0].mxu0
      %735 = vmatprep.mubr.bf16.mxu0 0
      %736 = vmatmul.mubr.bf16.gmra.mrb[0].mxu0 %v575
      %v737 = vpop.f32.mrb[0].mxu0
      %v738 = vadd.f32 %v410, %v737
      %v739 = vpop.f32.mrb[0].mxu0
      %v740 = vpop.f32.mrb[0].mxu0
      %v741 = vadd.f32 %v410, %v740
      %v742 = vpop.f32.mrb[0].mxu0
      %743 = vmatprep.mubr.bf16.mxu0 0
      %744 = vmatmul.mubr.bf16.gmra.mrb[0].mxu0 %v578
      %v745 = vpop.f32.mrb[0].mxu0
      %v746 = vadd.f32 %v410, %v745
      %v747 = vpop.f32.mrb[0].mxu0
      %v748 = vpop.f32.mrb[0].mxu0
      %v749 = vadd.f32 %v410, %v748
      %v750 = vpop.f32.mrb[0].mxu0
      %751 = vmatprep.mubr.bf16.mxu0 0
      %752 = vmatmul.mubr.bf16.gmra.mrb[0].mxu0 %v581
      %v753 = vpop.f32.mrb[0].mxu0
      %v754 = vadd.f32 %v410, %v753
      %v755 = vpop.f32.mrb[0].mxu0
      %v756 = vpop.f32.mrb[0].mxu0
      %v757 = vadd.f32 %v410, %v756
      %v758 = vpop.f32.mrb[0].mxu0
      %759 = vmatprep.mubr.bf16.mxu0 0
      %760 = vmatmul.mubr.bf16.gmra.mrb[0].mxu0 %v584
      %v761 = vpop.f32.mrb[0].mxu0
      %v762 = vadd.f32 %v410, %v761
      %v763 = vpop.f32.mrb[0].mxu0
      %v764 = vpop.f32.mrb[0].mxu0
      %v765 = vadd.f32 %v410, %v764
      %v766 = vpop.f32.mrb[0].mxu0
      %767 = vmatprep.mubr.bf16.mxu0 0
      %768 = vmatmul.mubr.bf16.gmra.mrb[0].mxu0 %v587
      %v769 = vpop.f32.mrb[0].mxu0
      %v770 = vadd.f32 %v410, %v769
      %v771 = vpop.f32.mrb[0].mxu0
      %v772 = vpop.f32.mrb[0].mxu0
      %v773 = vadd.f32 %v410, %v772
      %v774 = vpop.f32.mrb[0].mxu0
      %775 = vmatprep.mubr.bf16.mxu0 0
      %776 = vmatmul.mubr.bf16.gmra.mrb[0].mxu0 %v590
      %v777 = vpop.f32.mrb[0].mxu0
      %v778 = vadd.f32 %v410, %v777
      %v779 = vpop.f32.mrb[0].mxu0
      %v780 = vpop.f32.mrb[0].mxu0
      %v781 = vadd.f32 %v410, %v780
      %v782 = vpop.f32.mrb[0].mxu0
      %783 = vmatprep.mubr.bf16.mxu0 0
      %784 = vmatmul.mubr.bf16.gmra.mrb[0].mxu0 %v593
      %v785 = vpop.f32.mrb[0].mxu0
      %v786 = vadd.f32 %v410, %v785
      %v787 = vpop.f32.mrb[0].mxu0
      %v788 = vpop.f32.mrb[0].mxu0
      %v789 = vadd.f32 %v410, %v788
      %v790 = vpop.f32.mrb[0].mxu0
      %791 = vmatprep.mubr.bf16.mxu0 0
      %792 = vmatmul.mubr.bf16.gmra.mrb[0].mxu0 %v596
      %v793 = vpop.f32.mrb[0].mxu0
      %v794 = vadd.f32 %v410, %v793
      %v795 = vpop.f32.mrb[0].mxu0
      %v796 = vpop.f32.mrb[0].mxu0
      %v797 = vadd.f32 %v410, %v796
      %v798 = vpop.f32.mrb[0].mxu0
      %799 = vmatprep.mubr.bf16.mxu0 0
      %800 = vmatmul.mubr.bf16.gmra.mrb[0].mxu0 %v599
      %v801 = vpop.f32.mrb[0].mxu0
      %v802 = vadd.f32 %v410, %v801
      %v803 = vpop.f32.mrb[0].mxu0
      %v804 = vpop.f32.mrb[0].mxu0
      %v805 = vadd.f32 %v410, %v804
      %v806 = vpop.f32.mrb[0].mxu0
      %807 = vmatprep.mubr.bf16.mxu0 0
      %808 = vmatmul.mubr.bf16.gmra.mrb[0].mxu0 %v602
      %v809 = vpop.f32.mrb[0].mxu0
      %v810 = vadd.f32 %v410, %v809
      %v811 = vpop.f32.mrb[0].mxu0
      %v812 = vpop.f32.mrb[0].mxu0
      %v813 = vadd.f32 %v410, %v812
      %v814 = vpop.f32.mrb[0].mxu0
      %815 = vmatprep.mubr.bf16.mxu0 0
      %816 = vmatmul.mubr.bf16.gmra.mrb[0].mxu0 %v605
      %v817 = vpop.f32.mrb[0].mxu0
      %v818 = vadd.f32 %v410, %v817
      %v819 = vpop.f32.mrb[0].mxu0
      %v820 = vpop.f32.mrb[0].mxu0
      %v821 = vadd.f32 %v410, %v820
      %v822 = vpop.f32.mrb[0].mxu0
      %823 = vmatprep.mubr.bf16.mxu0 0
      %824 = vmatmul.mubr.bf16.gmra.mrb[0].mxu0 %v608
      %v825 = vpop.f32.mrb[0].mxu0
      %v826 = vadd.f32 %v410, %v825
      %v827 = vpop.f32.mrb[0].mxu0
      %v828 = vpop.f32.mrb[0].mxu0
      %v829 = vadd.f32 %v410, %v828
      %v830 = vpop.f32.mrb[0].mxu0
      %831 = vmatprep.mubr.bf16.mxu0 0
      %832 = vmatmul.mubr.bf16.gmra.mrb[0].mxu0 %v611
      %v833 = vpop.f32.mrb[0].mxu0
      %v834 = vadd.f32 %v410, %v833
      %v835 = vpop.f32.mrb[0].mxu0
      %v836 = vpop.f32.mrb[0].mxu0
      %v837 = vadd.f32 %v410, %v836
      %v838 = vpop.f32.mrb[0].mxu0
      %839 = vmatprep.mubr.bf16.mxu0 0
      %840 = vmatmul.mubr.bf16.gmra.mrb[0].mxu0 %v614
      %v841 = vpop.f32.mrb[0].mxu0
      %v842 = vadd.f32 %v410, %v841
      %v843 = vpop.f32.mrb[0].mxu0
      %v844 = vpop.f32.mrb[0].mxu0
      %v845 = vadd.f32 %v410, %v844
      %v846 = vpop.f32.mrb[0].mxu0
      %847 = vdwg.mxu0
      %v848 = vmax.f32 %v658, 0.0
      %v849 = vmax.f32 %v661, 0.0
      %v850 = vmax.f32 %v666, 0.0
      %v851 = vmax.f32 %v669, 0.0
      %v852 = vmax.f32 %v674, 0.0
      %v853 = vmax.f32 %v677, 0.0
      %v854 = vmax.f32 %v682, 0.0
      %v855 = vmax.f32 %v685, 0.0
      %v856 = vmax.f32 %v690, 0.0
      %v857 = vmax.f32 %v693, 0.0
      %v858 = vmax.f32 %v698, 0.0
      %v859 = vmax.f32 %v701, 0.0
      %v860 = vmax.f32 %v706, 0.0
      %v861 = vmax.f32 %v709, 0.0
      %v862 = vmax.f32 %v714, 0.0
      %v863 = vmax.f32 %v717, 0.0
      %v864 = vmax.f32 %v722, 0.0
      %v865 = vmax.f32 %v725, 0.0
      %v866 = vmax.f32 %v730, 0.0
      %v867 = vmax.f32 %v733, 0.0
      %v868 = vmax.f32 %v738, 0.0
      %v869 = vmax.f32 %v741, 0.0
      %v870 = vmax.f32 %v746, 0.0
      %v871 = vmax.f32 %v749, 0.0
      %v872 = vmax.f32 %v754, 0.0
      %v873 = vmax.f32 %v757, 0.0
      %v874 = vmax.f32 %v762, 0.0
      %v875 = vmax.f32 %v765, 0.0
      %v876 = vmax.f32 %v770, 0.0
      %v877 = vmax.f32 %v773, 0.0
      %v878 = vmax.f32 %v778, 0.0
      %v879 = vmax.f32 %v781, 0.0
      %v880 = vmax.f32 %v786, 0.0
      %v881 = vmax.f32 %v789, 0.0
      %v882 = vmax.f32 %v794, 0.0
      %v883 = vmax.f32 %v797, 0.0
      %v884 = vmax.f32 %v802, 0.0
      %v885 = vmax.f32 %v805, 0.0
      %v886 = vmax.f32 %v810, 0.0
      %v887 = vmax.f32 %v813, 0.0
      %v888 = vmax.f32 %v818, 0.0
      %v889 = vmax.f32 %v821, 0.0
      %v890 = vmax.f32 %v826, 0.0
      %v891 = vmax.f32 %v829, 0.0
      %v892 = vmax.f32 %v834, 0.0
      %v893 = vmax.f32 %v837, 0.0
      %v894 = vmax.f32 %v842, 0.0
      %v895 = vmax.f32 %v845, 0.0
      %v896 = vld [vmem:[%s2] sm:$0xff]
      %v897 = vld [vmem:[%s2 + $0x8] sm:$0xff]
      %v898 = vld [vmem:[%s2 + $0x10] sm:$0xff]
      %v899 = vld [vmem:[%s2 + $0x18] sm:$0xff]
      %v900 = vld [vmem:[%s2 + $0x20] sm:$0xff]
      %v901 = vld [vmem:[%s2 + $0x28] sm:$0xff]
      %v902 = vld [vmem:[%s2 + $0x30] sm:$0xff]
      %v903 = vld [vmem:[%s2 + $0x38] sm:$0xff]
      %v904 = vld [vmem:[%s2 + $0x40] sm:$0xff]
      %v905 = vld [vmem:[%s2 + $0x48] sm:$0xff]
      %v906 = vld [vmem:[%s2 + $0x50] sm:$0xff]
      %v907 = vld [vmem:[%s2 + $0x58] sm:$0xff]
      %v908 = vld [vmem:[%s2 + $0x60] sm:$0xff]
      %v909 = vld [vmem:[%s2 + $0x68] sm:$0xff]
      %v910 = vld [vmem:[%s2 + $0x70] sm:$0xff]
      %v911 = vld [vmem:[%s2 + $0x78] sm:$0xff]
      %v912 = vld [vmem:[%s2 + $0x80] sm:$0xff]
      %v913 = vld [vmem:[%s2 + $0x88] sm:$0xff]
      %v914 = vld [vmem:[%s2 + $0x90] sm:$0xff]
      %v915 = vld [vmem:[%s2 + $0x98] sm:$0xff]
      %v916 = vld [vmem:[%s2 + $0xa0] sm:$0xff]
      %v917 = vld [vmem:[%s2 + $0xa8] sm:$0xff]
      %v918 = vld [vmem:[%s2 + $0xb0] sm:$0xff]
      %v919 = vld [vmem:[%s2 + $0xb8] sm:$0xff]
      %v920 = vld [vmem:[%s2 + $0xc0] sm:$0xff]
      %v921 = vld [vmem:[%s2 + $0xc8] sm:$0xff]
      %v922 = vld [vmem:[%s2 + $0xd0] sm:$0xff]
      %v923 = vld [vmem:[%s2 + $0xd8] sm:$0xff]
      %v924 = vld [vmem:[%s2 + $0xe0] sm:$0xff]
      %v925 = vld [vmem:[%s2 + $0xe8] sm:$0xff]
      %v926 = vld [vmem:[%s2 + $0xf0] sm:$0xff]
      %v927 = vld [vmem:[%s2 + $0xf8] sm:$0xff]
      %v928 = vld [vmem:[%s2 + $0x100] sm:$0xff]
      %v929 = vld [vmem:[%s2 + $0x108] sm:$0xff]
      %v930 = vld [vmem:[%s2 + $0x110] sm:$0xff]
      %v931 = vld [vmem:[%s2 + $0x118] sm:$0xff]
      %v932 = vld [vmem:[%s2 + $0x120] sm:$0xff]
      %v933 = vld [vmem:[%s2 + $0x128] sm:$0xff]
      %v934 = vld [vmem:[%s2 + $0x130] sm:$0xff]
      %v935 = vld [vmem:[%s2 + $0x138] sm:$0xff]
      %v936 = vld [vmem:[%s2 + $0x140] sm:$0xff]
      %v937 = vld [vmem:[%s2 + $0x148] sm:$0xff]
      %v938 = vld [vmem:[%s2 + $0x150] sm:$0xff]
      %v939 = vld [vmem:[%s2 + $0x158] sm:$0xff]
      %v940 = vld [vmem:[%s2 + $0x160] sm:$0xff]
      %v941 = vld [vmem:[%s2 + $0x168] sm:$0xff]
      %v942 = vld [vmem:[%s2 + $0x170] sm:$0xff]
      %v943 = vld [vmem:[%s2 + $0x178] sm:$0xff]
      %945 = vset.pattern.permute.xlu0 0
      %946 = vperm.xlu0 %945, %v896
      %v947 = vpop.permute.xlu0 %946
      %950 = vset.pattern.permute.xlu0 0
      %951 = vperm.xlu0 %950, %v897
      %v952 = vpop.permute.xlu0 %951
      %955 = vset.pattern.permute.xlu0 0
      %956 = vperm.xlu0 %955, %v898
      %v957 = vpop.permute.xlu0 %956
      %960 = vset.pattern.permute.xlu0 0
      %961 = vperm.xlu0 %960, %v899
      %v962 = vpop.permute.xlu0 %961
      %965 = vset.pattern.permute.xlu0 0
      %966 = vperm.xlu0 %965, %v900
      %v967 = vpop.permute.xlu0 %966
      %970 = vset.pattern.permute.xlu0 0
      %971 = vperm.xlu0 %970, %v901
      %v972 = vpop.permute.xlu0 %971
      %975 = vset.pattern.permute.xlu0 0
      %976 = vperm.xlu0 %975, %v902
      %v977 = vpop.permute.xlu0 %976
      %980 = vset.pattern.permute.xlu0 0
      %981 = vperm.xlu0 %980, %v903
      %v982 = vpop.permute.xlu0 %981
      %985 = vset.pattern.permute.xlu0 0
      %986 = vperm.xlu0 %985, %v904
      %v987 = vpop.permute.xlu0 %986
      %990 = vset.pattern.permute.xlu0 0
      %991 = vperm.xlu0 %990, %v905
      %v992 = vpop.permute.xlu0 %991
      %995 = vset.pattern.permute.xlu0 0
      %996 = vperm.xlu0 %995, %v906
      %v997 = vpop.permute.xlu0 %996
      %1000 = vset.pattern.permute.xlu0 0
      %1001 = vperm.xlu0 %1000, %v907
      %v1002 = vpop.permute.xlu0 %1001
      %1005 = vset.pattern.permute.xlu0 0
      %1006 = vperm.xlu0 %1005, %v908
      %v1007 = vpop.permute.xlu0 %1006
      %1010 = vset.pattern.permute.xlu0 0
      %1011 = vperm.xlu0 %1010, %v909
      %v1012 = vpop.permute.xlu0 %1011
      %1015 = vset.pattern.permute.xlu0 0
      %1016 = vperm.xlu0 %1015, %v910
      %v1017 = vpop.permute.xlu0 %1016
      %1020 = vset.pattern.permute.xlu0 0
      %1021 = vperm.xlu0 %1020, %v911
      %v1022 = vpop.permute.xlu0 %1021
      %1025 = vset.pattern.permute.xlu0 0
      %1026 = vperm.xlu0 %1025, %v912
      %v1027 = vpop.permute.xlu0 %1026
      %1030 = vset.pattern.permute.xlu0 0
      %1031 = vperm.xlu0 %1030, %v913
      %v1032 = vpop.permute.xlu0 %1031
      %1035 = vset.pattern.permute.xlu0 0
      %1036 = vperm.xlu0 %1035, %v914
      %v1037 = vpop.permute.xlu0 %1036
      %1040 = vset.pattern.permute.xlu0 0
      %1041 = vperm.xlu0 %1040, %v915
      %v1042 = vpop.permute.xlu0 %1041
      %1045 = vset.pattern.permute.xlu0 0
      %1046 = vperm.xlu0 %1045, %v916
      %v1047 = vpop.permute.xlu0 %1046
      %1050 = vset.pattern.permute.xlu0 0
      %1051 = vperm.xlu0 %1050, %v917
      %v1052 = vpop.permute.xlu0 %1051
      %1055 = vset.pattern.permute.xlu0 0
      %1056 = vperm.xlu0 %1055, %v918
      %v1057 = vpop.permute.xlu0 %1056
      %1060 = vset.pattern.permute.xlu0 0
      %1061 = vperm.xlu0 %1060, %v919
      %v1062 = vpop.permute.xlu0 %1061
      %1065 = vset.pattern.permute.xlu0 0
      %1066 = vperm.xlu0 %1065, %v920
      %v1067 = vpop.permute.xlu0 %1066
      %1070 = vset.pattern.permute.xlu0 0
      %1071 = vperm.xlu0 %1070, %v921
      %v1072 = vpop.permute.xlu0 %1071
      %1075 = vset.pattern.permute.xlu0 0
      %1076 = vperm.xlu0 %1075, %v922
      %v1077 = vpop.permute.xlu0 %1076
      %1080 = vset.pattern.permute.xlu0 0
      %1081 = vperm.xlu0 %1080, %v923
      %v1082 = vpop.permute.xlu0 %1081
      %1085 = vset.pattern.permute.xlu0 0
      %1086 = vperm.xlu0 %1085, %v924
      %v1087 = vpop.permute.xlu0 %1086
      %1090 = vset.pattern.permute.xlu0 0
      %1091 = vperm.xlu0 %1090, %v925
      %v1092 = vpop.permute.xlu0 %1091
      %1095 = vset.pattern.permute.xlu0 0
      %1096 = vperm.xlu0 %1095, %v926
      %v1097 = vpop.permute.xlu0 %1096
      %1100 = vset.pattern.permute.xlu0 0
      %1101 = vperm.xlu0 %1100, %v927
      %v1102 = vpop.permute.xlu0 %1101
      %1105 = vset.pattern.permute.xlu0 0
      %1106 = vperm.xlu0 %1105, %v928
      %v1107 = vpop.permute.xlu0 %1106
      %1110 = vset.pattern.permute.xlu0 0
      %1111 = vperm.xlu0 %1110, %v929
      %v1112 = vpop.permute.xlu0 %1111
      %1115 = vset.pattern.permute.xlu0 0
      %1116 = vperm.xlu0 %1115, %v930
      %v1117 = vpop.permute.xlu0 %1116
      %1120 = vset.pattern.permute.xlu0 0
      %1121 = vperm.xlu0 %1120, %v931
      %v1122 = vpop.permute.xlu0 %1121
      %1125 = vset.pattern.permute.xlu0 0
      %1126 = vperm.xlu0 %1125, %v932
      %v1127 = vpop.permute.xlu0 %1126
      %1130 = vset.pattern.permute.xlu0 0
      %1131 = vperm.xlu0 %1130, %v933
      %v1132 = vpop.permute.xlu0 %1131
      %1135 = vset.pattern.permute.xlu0 0
      %1136 = vperm.xlu0 %1135, %v934
      %v1137 = vpop.permute.xlu0 %1136
      %1140 = vset.pattern.permute.xlu0 0
      %1141 = vperm.xlu0 %1140, %v935
      %v1142 = vpop.permute.xlu0 %1141
      %1145 = vset.pattern.permute.xlu0 0
      %1146 = vperm.xlu0 %1145, %v936
      %v1147 = vpop.permute.xlu0 %1146
      %1150 = vset.pattern.permute.xlu0 0
      %1151 = vperm.xlu0 %1150, %v937
      %v1152 = vpop.permute.xlu0 %1151
      %1155 = vset.pattern.permute.xlu0 0
      %1156 = vperm.xlu0 %1155, %v938
      %v1157 = vpop.permute.xlu0 %1156
      %1160 = vset.pattern.permute.xlu0 0
      %1161 = vperm.xlu0 %1160, %v939
      %v1162 = vpop.permute.xlu0 %1161
      %1165 = vset.pattern.permute.xlu0 0
      %1166 = vperm.xlu0 %1165, %v940
      %v1167 = vpop.permute.xlu0 %1166
      %1170 = vset.pattern.permute.xlu0 0
      %1171 = vperm.xlu0 %1170, %v941
      %v1172 = vpop.permute.xlu0 %1171
      %1175 = vset.pattern.permute.xlu0 0
      %1176 = vperm.xlu0 %1175, %v942
      %v1177 = vpop.permute.xlu0 %1176
      %1180 = vset.pattern.permute.xlu0 0
      %1181 = vperm.xlu0 %1180, %v943
      %v1182 = vpop.permute.xlu0 %1181
      %v1184 = vmul.f32 %v848, %v947
      %v1185 = vmul.f32 %v849, %v952
      %v1186 = vmul.f32 %v850, %v957
      %v1187 = vmul.f32 %v851, %v962
      %v1188 = vmul.f32 %v852, %v967
      %v1189 = vmul.f32 %v853, %v972
      %v1190 = vmul.f32 %v854, %v977
      %v1191 = vmul.f32 %v855, %v982
      %v1192 = vmul.f32 %v856, %v987
      %v1193 = vmul.f32 %v857, %v992
      %v1194 = vmul.f32 %v858, %v997
      %v1195 = vmul.f32 %v859, %v1002
      %v1196 = vmul.f32 %v860, %v1007
      %v1197 = vmul.f32 %v861, %v1012
      %v1198 = vmul.f32 %v862, %v1017
      %v1199 = vmul.f32 %v863, %v1022
      %v1200 = vmul.f32 %v864, %v1027
      %v1201 = vmul.f32 %v865, %v1032
      %v1202 = vmul.f32 %v866, %v1037
      %v1203 = vmul.f32 %v867, %v1042
      %v1204 = vmul.f32 %v868, %v1047
      %v1205 = vmul.f32 %v869, %v1052
      %v1206 = vmul.f32 %v870, %v1057
      %v1207 = vmul.f32 %v871, %v1062
      %v1208 = vmul.f32 %v872, %v1067
      %v1209 = vmul.f32 %v873, %v1072
      %v1210 = vmul.f32 %v874, %v1077
      %v1211 = vmul.f32 %v875, %v1082
      %v1212 = vmul.f32 %v876, %v1087
      %v1213 = vmul.f32 %v877, %v1092
      %v1214 = vmul.f32 %v878, %v1097
      %v1215 = vmul.f32 %v879, %v1102
      %v1216 = vmul.f32 %v880, %v1107
      %v1217 = vmul.f32 %v881, %v1112
      %v1218 = vmul.f32 %v882, %v1117
      %v1219 = vmul.f32 %v883, %v1122
      %v1220 = vmul.f32 %v884, %v1127
      %v1221 = vmul.f32 %v885, %v1132
      %v1222 = vmul.f32 %v886, %v1137
      %v1223 = vmul.f32 %v887, %v1142
      %v1224 = vmul.f32 %v888, %v1147
      %v1225 = vmul.f32 %v889, %v1152
      %v1226 = vmul.f32 %v890, %v1157
      %v1227 = vmul.f32 %v891, %v1162
      %v1228 = vmul.f32 %v892, %v1167
      %v1229 = vmul.f32 %v893, %v1172
      %v1230 = vmul.f32 %v894, %v1177
      %v1231 = vmul.f32 %v895, %v1182
      %v1232 = vld [vmem:[%s341] sm:$0x1]
      %v1234 = vlaneseq
      %v1235 = vshrl.u32 %v1234, 7
      %v1236 = vsub.s32 0, %v1235
      %v1237 = vrot.slane %v1232, %v1236
      %v1239 = vmul.f32 %v1184, %v1237
      %v1240 = vmul.f32 %v1185, %v1237
      %v1241 = vmul.f32 %v1186, %v1237
      %v1242 = vmul.f32 %v1187, %v1237
      %v1243 = vmul.f32 %v1188, %v1237
      %v1244 = vmul.f32 %v1189, %v1237
      %v1245 = vmul.f32 %v1190, %v1237
      %v1246 = vmul.f32 %v1191, %v1237
      %v1247 = vmul.f32 %v1192, %v1237
      %v1248 = vmul.f32 %v1193, %v1237
      %v1249 = vmul.f32 %v1194, %v1237
      %v1250 = vmul.f32 %v1195, %v1237
      %v1251 = vmul.f32 %v1196, %v1237
      %v1252 = vmul.f32 %v1197, %v1237
      %v1253 = vmul.f32 %v1198, %v1237
      %v1254 = vmul.f32 %v1199, %v1237
      %v1255 = vmul.f32 %v1200, %v1237
      %v1256 = vmul.f32 %v1201, %v1237
      %v1257 = vmul.f32 %v1202, %v1237
      %v1258 = vmul.f32 %v1203, %v1237
      %v1259 = vmul.f32 %v1204, %v1237
      %v1260 = vmul.f32 %v1205, %v1237
      %v1261 = vmul.f32 %v1206, %v1237
      %v1262 = vmul.f32 %v1207, %v1237
      %v1263 = vmul.f32 %v1208, %v1237
      %v1264 = vmul.f32 %v1209, %v1237
      %v1265 = vmul.f32 %v1210, %v1237
      %v1266 = vmul.f32 %v1211, %v1237
      %v1267 = vmul.f32 %v1212, %v1237
      %v1268 = vmul.f32 %v1213, %v1237
      %v1269 = vmul.f32 %v1214, %v1237
      %v1270 = vmul.f32 %v1215, %v1237
      %v1271 = vmul.f32 %v1216, %v1237
      %v1272 = vmul.f32 %v1217, %v1237
      %v1273 = vmul.f32 %v1218, %v1237
      %v1274 = vmul.f32 %v1219, %v1237
      %v1275 = vmul.f32 %v1220, %v1237
      %v1276 = vmul.f32 %v1221, %v1237
      %v1277 = vmul.f32 %v1222, %v1237
      %v1278 = vmul.f32 %v1223, %v1237
      %v1279 = vmul.f32 %v1224, %v1237
      %v1280 = vmul.f32 %v1225, %v1237
      %v1281 = vmul.f32 %v1226, %v1237
      %v1282 = vmul.f32 %v1227, %v1237
      %v1283 = vmul.f32 %v1228, %v1237
      %v1284 = vmul.f32 %v1229, %v1237
      %v1285 = vmul.f32 %v1230, %v1237
      %v1286 = vmul.f32 %v1231, %v1237
      %v1287 = vpack.c.bf16 %v1240, %v1239
      %v1288 = vpack.c.bf16 %v1242, %v1241
      %v1289 = vpack.c.bf16 %v1244, %v1243
      %v1290 = vpack.c.bf16 %v1246, %v1245
      %v1291 = vpack.c.bf16 %v1248, %v1247
      %v1292 = vpack.c.bf16 %v1250, %v1249
      %v1293 = vpack.c.bf16 %v1252, %v1251
      %v1294 = vpack.c.bf16 %v1254, %v1253
      %v1295 = vpack.c.bf16 %v1256, %v1255
      %v1296 = vpack.c.bf16 %v1258, %v1257
      %v1297 = vpack.c.bf16 %v1260, %v1259
      %v1298 = vpack.c.bf16 %v1262, %v1261
      %v1299 = vpack.c.bf16 %v1264, %v1263
      %v1300 = vpack.c.bf16 %v1266, %v1265
      %v1301 = vpack.c.bf16 %v1268, %v1267
      %v1302 = vpack.c.bf16 %v1270, %v1269
      %v1303 = vpack.c.bf16 %v1272, %v1271
      %v1304 = vpack.c.bf16 %v1274, %v1273
      %v1305 = vpack.c.bf16 %v1276, %v1275
      %v1306 = vpack.c.bf16 %v1278, %v1277
      %v1307 = vpack.c.bf16 %v1280, %v1279
      %v1308 = vpack.c.bf16 %v1282, %v1281
      %v1309 = vpack.c.bf16 %v1284, %v1283
      %v1310 = vpack.c.bf16 %v1286, %v1285
      %1311 = vst.msk [vmem:[#allocation2 + $0x10] sm:$0xff] %vm348, %v1287
      %1312 = vst.msk [vmem:[#allocation2 + $0x18] sm:$0xff] %vm348, %v1288
      %1313 = vst.msk [vmem:[#allocation2 + $0x20] sm:$0xff] %vm348, %v1289
      %1314 = vst.msk [vmem:[#allocation2 + $0x28] sm:$0xff] %vm348, %v1290
      %1315 = vst.msk [vmem:[#allocation2 + $0x30] sm:$0xff] %vm348, %v1291
      %1316 = vst.msk [vmem:[#allocation2 + $0x38] sm:$0xff] %vm348, %v1292
      %1317 = vst.msk [vmem:[#allocation2 + $0x40] sm:$0xff] %vm348, %v1293
      %1318 = vst.msk [vmem:[#allocation2 + $0x48] sm:$0xff] %vm348, %v1294
      %1319 = vst.msk [vmem:[#allocation2 + $0x50] sm:$0xff] %vm348, %v1295
      %1320 = vst.msk [vmem:[#allocation2 + $0x58] sm:$0xff] %vm348, %v1296
      %1321 = vst.msk [vmem:[#allocation2 + $0x60] sm:$0xff] %vm348, %v1297
      %1322 = vst.msk [vmem:[#allocation2 + $0x68] sm:$0xff] %vm348, %v1298
      %1323 = vst.msk [vmem:[#allocation2 + $0x70] sm:$0xff] %vm348, %v1299
      %1324 = vst.msk [vmem:[#allocation2 + $0x78] sm:$0xff] %vm348, %v1300
      %1325 = vst.msk [vmem:[#allocation2 + $0x80] sm:$0xff] %vm348, %v1301
      %1326 = vst.msk [vmem:[#allocation2 + $0x88] sm:$0xff] %vm348, %v1302
      %1327 = vst.msk [vmem:[#allocation2 + $0x90] sm:$0xff] %vm348, %v1303
      %1328 = vst.msk [vmem:[#allocation2 + $0x98] sm:$0xff] %vm348, %v1304
      %1329 = vst.msk [vmem:[#allocation2 + $0xa0] sm:$0xff] %vm348, %v1305
      %1330 = vst.msk [vmem:[#allocation2 + $0xa8] sm:$0xff] %vm348, %v1306
      %1331 = vst.msk [vmem:[#allocation2 + $0xb0] sm:$0xff] %vm348, %v1307
      %1332 = vst.msk [vmem:[#allocation2 + $0xb8] sm:$0xff] %vm348, %v1308
      %1333 = vst.msk [vmem:[#allocation2 + $0xc0] sm:$0xff] %vm348, %v1309
      %1334 = vst.msk [vmem:[#allocation2 + $0xc8] sm:$0xff] %vm348, %v1310
      %v1335 = vld [vmem:[#allocation2] sm:$0xf8]
      %v1336 = vld [vmem:[#allocation2 + $0x8] sm:$0xff]
      %v1337 = vld [vmem:[#allocation2 + $0x10] sm:$0xff]
      %v1338 = vld [vmem:[#allocation2 + $0x18] sm:$0xff]
      %v1339 = vld [vmem:[#allocation2 + $0x20] sm:$0xff]
      %v1340 = vld [vmem:[#allocation2 + $0x28] sm:$0xff]
      %v1341 = vld [vmem:[#allocation2 + $0x30] sm:$0xff]
      %v1342 = vld [vmem:[#allocation2 + $0x38] sm:$0xff]
      %v1343 = vld [vmem:[#allocation2 + $0x40] sm:$0xff]
      %v1344 = vld [vmem:[#allocation2 + $0x48] sm:$0xff]
      %v1345 = vld [vmem:[#allocation2 + $0x50] sm:$0xff]
      %v1346 = vld [vmem:[#allocation2 + $0x58] sm:$0xff]
      %v1347 = vld [vmem:[#allocation2 + $0x60] sm:$0xff]
      %v1348 = vld [vmem:[#allocation2 + $0x68] sm:$0xff]
      %v1349 = vld [vmem:[#allocation2 + $0x70] sm:$0xff]
      %v1350 = vld [vmem:[#allocation2 + $0x78] sm:$0xff]
      %v1351 = vld [vmem:[#allocation2 + $0x80] sm:$0xff]
      %v1352 = vld [vmem:[#allocation2 + $0x88] sm:$0xff]
      %v1353 = vld [vmem:[#allocation2 + $0x90] sm:$0xff]
      %v1354 = vld [vmem:[#allocation2 + $0x98] sm:$0xff]
      %v1355 = vld [vmem:[#allocation2 + $0xa0] sm:$0xff]
      %v1356 = vld [vmem:[#allocation2 + $0xa8] sm:$0xff]
      %v1357 = vld [vmem:[#allocation2 + $0xb0] sm:$0xff]
      %v1358 = vld [vmem:[#allocation2 + $0xb8] sm:$0xff]
      %v1359 = vld [vmem:[#allocation2 + $0xc0] sm:$0xf]
      %v1360 = vld [vmem:[%s5] sm:$0xf]
      %v1361 = vld [vmem:[%s5 + $0x4] sm:$0xf]
      %v1362 = vld [vmem:[%s5 + $0x8] sm:$0xf]
      %v1363 = vld [vmem:[%s5 + $0xc] sm:$0xf]
      %v1364 = vld [vmem:[#allocation2] sm:$0xf0]
      %s1365 = scalar_lea.vmem %s5, 16
      %v1366 = vld [vmem:[%s1365] sm:$0xf]
      %v1367 = vld [vmem:[%s1365 + $0x4] sm:$0xf]
      %v1368 = vld [vmem:[%s1365 + $0x8] sm:$0xf]
      %v1369 = vld [vmem:[%s1365 + $0xc] sm:$0xf]
      %vm1395 = vcmask 1043456
      %v1396 = vrot.slane %v1364, 4
      %v1397 = vrot.slane %v1336, 4
      %v1398 = vsel %vm1395, %v1396, %v1397
      %v1399 = vrot.slane %v1337, 4
      %v1400 = vsel %vm1395, %v1397, %v1399
      %v1401 = vrot.slane %v1338, 4
      %v1402 = vsel %vm1395, %v1399, %v1401
      %v1403 = vrot.slane %v1339, 4
      %v1404 = vsel %vm1395, %v1401, %v1403
      %v1405 = vrot.slane %v1340, 4
      %v1406 = vsel %vm1395, %v1403, %v1405
      %v1407 = vrot.slane %v1341, 4
      %v1408 = vsel %vm1395, %v1405, %v1407
      %v1409 = vrot.slane %v1342, 4
      %v1410 = vsel %vm1395, %v1407, %v1409
      %v1411 = vrot.slane %v1343, 4
      %v1412 = vsel %vm1395, %v1409, %v1411
      %v1413 = vrot.slane %v1344, 4
      %v1414 = vsel %vm1395, %v1411, %v1413
      %v1415 = vrot.slane %v1345, 4
      %v1416 = vsel %vm1395, %v1413, %v1415
      %v1417 = vrot.slane %v1346, 4
      %v1418 = vsel %vm1395, %v1415, %v1417
      %v1419 = vrot.slane %v1347, 4
      %v1420 = vsel %vm1395, %v1417, %v1419
      %v1421 = vrot.slane %v1348, 4
      %v1422 = vsel %vm1395, %v1419, %v1421
      %v1423 = vrot.slane %v1349, 4
      %v1424 = vsel %vm1395, %v1421, %v1423
      %v1425 = vrot.slane %v1350, 4
      %v1426 = vsel %vm1395, %v1423, %v1425
      %v1427 = vrot.slane %v1351, 4
      %v1428 = vsel %vm1395, %v1425, %v1427
      %v1429 = vrot.slane %v1352, 4
      %v1430 = vsel %vm1395, %v1427, %v1429
      %v1431 = vrot.slane %v1353, 4
      %v1432 = vsel %vm1395, %v1429, %v1431
      %v1433 = vrot.slane %v1354, 4
      %v1434 = vsel %vm1395, %v1431, %v1433
      %v1435 = vrot.slane %v1355, 4
      %v1436 = vsel %vm1395, %v1433, %v1435
      %v1437 = vrot.slane %v1356, 4
      %v1438 = vsel %vm1395, %v1435, %v1437
      %v1439 = vrot.slane %v1357, 4
      %v1440 = vsel %vm1395, %v1437, %v1439
      %v1441 = vrot.slane %v1358, 4
      %v1442 = vsel %vm1395, %v1439, %v1441
      %v1443 = vrot.slane %v1359, 4
      %v1444 = vsel %vm1395, %v1441, %v1443
      %v1449 = vunpack.c.l.b16 %v1366
      %v1450 = vunpack.c.l.b16 %v1367
      %v1451 = vunpack.c.l.b16 %v1368
      %v1452 = vunpack.c.l.b16 %v1369
      %v1453 = vpack.c.b16 %v1450, %v1449
      %v1454 = vpack.c.b16 %v1452, %v1451
      %v1458 = vsel %vm348, %v1398, 0
      %v1461 = vsel %vm348, %v1400, 0
      %v1464 = vsel %vm348, %v1402, 0
      %v1467 = vsel %vm348, %v1404, 0
      %v1470 = vsel %vm348, %v1406, 0
      %v1473 = vsel %vm348, %v1408, 0
      %v1476 = vsel %vm348, %v1410, 0
      %v1479 = vsel %vm348, %v1412, 0
      %v1482 = vsel %vm348, %v1414, 0
      %v1485 = vsel %vm348, %v1416, 0
      %v1488 = vsel %vm348, %v1418, 0
      %v1491 = vsel %vm348, %v1420, 0
      %v1494 = vsel %vm348, %v1422, 0
      %v1497 = vsel %vm348, %v1424, 0
      %v1500 = vsel %vm348, %v1426, 0
      %v1503 = vsel %vm348, %v1428, 0
      %v1506 = vsel %vm348, %v1430, 0
      %v1509 = vsel %vm348, %v1432, 0
      %v1512 = vsel %vm348, %v1434, 0
      %v1515 = vsel %vm348, %v1436, 0
      %v1518 = vsel %vm348, %v1438, 0
      %v1521 = vsel %vm348, %v1440, 0
      %v1524 = vsel %vm348, %v1442, 0
      %v1527 = vsel %vm348, %v1444, 0
      %1529 = vmatprep.subr.bf16.mxu0 0
      %1530 = vmatpush1.bf16.msra.mxu0 %v1453
      %1531 = vmatprep.subr.bf16.mxu0 0
      %1532 = vmatpush1.bf16.msra.mxu0 %v1454
      %1533 = vmatprep.subr.bf16.mxu0 0
      %1534 = vmatpush1.bf16.msra.mxu0 0
      %1535 = vmatprep.subr.bf16.mxu0 0
      %1536 = vmatpush1.bf16.msra.mxu0 0
      %1537 = vmatprep.subr.bf16.mxu0 0
      %1538 = vmatpush1.bf16.msra.mxu0 0
      %1539 = vmatprep.subr.bf16.mxu0 0
      %1540 = vmatpush1.bf16.msra.mxu0 0
      %1541 = vmatprep.subr.bf16.mxu0 0
      %1542 = vmatpush1.bf16.msra.mxu0 0
      %1543 = vmatprep.subr.bf16.mxu0 0
      %1544 = vmatpush1.bf16.msra.mxu0 0
      %1545 = vmatprep.subr.bf16.mxu0 0
      %1546 = vmatpush1.bf16.msra.mxu0 0
      %1547 = vmatprep.subr.bf16.mxu0 0
      %1548 = vmatpush1.bf16.msra.mxu0 0
      %1549 = vmatprep.subr.bf16.mxu0 0
      %1550 = vmatpush1.bf16.msra.mxu0 0
      %1551 = vmatprep.subr.bf16.mxu0 0
      %1552 = vmatpush1.bf16.msra.mxu0 0
      %1553 = vmatprep.subr.bf16.mxu0 0
      %1554 = vmatpush1.bf16.msra.mxu0 0
      %1555 = vmatprep.subr.bf16.mxu0 0
      %1556 = vmatpush1.bf16.msra.mxu0 0
      %1557 = vmatprep.subr.bf16.mxu0 0
      %1558 = vmatpush1.bf16.msra.mxu0 0
      %1559 = vmatprep.subr.bf16.mxu0 0
      %1560 = vmatpush1.bf16.msra.mxu0 0
      %1561 = vmatprep.mubr.bf16.mxu0 0
      %1562 = vmatmul.mubr.bf16.gmra.mrb[0].mxu0 %v1458
      %v1563 = vpop.f32.mrb[0].mxu0
      %v1564 = vadd.f32 0.0, %v1563
      %v1565 = vpop.f32.mrb[0].mxu0
      %v1566 = vpop.f32.mrb[0].mxu0
      %v1567 = vadd.f32 0.0, %v1566
      %v1568 = vpop.f32.mrb[0].mxu0
      %1569 = vmatprep.mubr.bf16.mxu0 0
      %1570 = vmatmul.mubr.bf16.gmra.mrb[0].mxu0 %v1461
      %v1571 = vpop.f32.mrb[0].mxu0
      %v1572 = vadd.f32 0.0, %v1571
      %v1573 = vpop.f32.mrb[0].mxu0
      %v1574 = vpop.f32.mrb[0].mxu0
      %v1575 = vadd.f32 0.0, %v1574
      %v1576 = vpop.f32.mrb[0].mxu0
      %1577 = vmatprep.mubr.bf16.mxu0 0
      %1578 = vmatmul.mubr.bf16.gmra.mrb[0].mxu0 %v1464
      %v1579 = vpop.f32.mrb[0].mxu0
      %v1580 = vadd.f32 0.0, %v1579
      %v1581 = vpop.f32.mrb[0].mxu0
      %v1582 = vpop.f32.mrb[0].mxu0
      %v1583 = vadd.f32 0.0, %v1582
      %v1584 = vpop.f32.mrb[0].mxu0
      %1585 = vmatprep.mubr.bf16.mxu0 0
      %1586 = vmatmul.mubr.bf16.gmra.mrb[0].mxu0 %v1467
      %v1587 = vpop.f32.mrb[0].mxu0
      %v1588 = vadd.f32 0.0, %v1587
      %v1589 = vpop.f32.mrb[0].mxu0
      %v1590 = vpop.f32.mrb[0].mxu0
      %v1591 = vadd.f32 0.0, %v1590
      %v1592 = vpop.f32.mrb[0].mxu0
      %1593 = vmatprep.mubr.bf16.mxu0 0
      %1594 = vmatmul.mubr.bf16.gmra.mrb[0].mxu0 %v1470
      %v1595 = vpop.f32.mrb[0].mxu0
      %v1596 = vadd.f32 0.0, %v1595
      %v1597 = vpop.f32.mrb[0].mxu0
      %v1598 = vpop.f32.mrb[0].mxu0
      %v1599 = vadd.f32 0.0, %v1598
      %v1600 = vpop.f32.mrb[0].mxu0
      %1601 = vmatprep.mubr.bf16.mxu0 0
      %1602 = vmatmul.mubr.bf16.gmra.mrb[0].mxu0 %v1473
      %v1603 = vpop.f32.mrb[0].mxu0
      %v1604 = vadd.f32 0.0, %v1603
      %v1605 = vpop.f32.mrb[0].mxu0
      %v1606 = vpop.f32.mrb[0].mxu0
      %v1607 = vadd.f32 0.0, %v1606
      %v1608 = vpop.f32.mrb[0].mxu0
      %1609 = vmatprep.mubr.bf16.mxu0 0
      %1610 = vmatmul.mubr.bf16.gmra.mrb[0].mxu0 %v1476
      %v1611 = vpop.f32.mrb[0].mxu0
      %v1612 = vadd.f32 0.0, %v1611
      %v1613 = vpop.f32.mrb[0].mxu0
      %v1614 = vpop.f32.mrb[0].mxu0
      %v1615 = vadd.f32 0.0, %v1614
      %v1616 = vpop.f32.mrb[0].mxu0
      %1617 = vmatprep.mubr.bf16.mxu0 0
      %1618 = vmatmul.mubr.bf16.gmra.mrb[0].mxu0 %v1479
      %v1619 = vpop.f32.mrb[0].mxu0
      %v1620 = vadd.f32 0.0, %v1619
      %v1621 = vpop.f32.mrb[0].mxu0
      %v1622 = vpop.f32.mrb[0].mxu0
      %v1623 = vadd.f32 0.0, %v1622
      %v1624 = vpop.f32.mrb[0].mxu0
      %1625 = vmatprep.mubr.bf16.mxu0 0
      %1626 = vmatmul.mubr.bf16.gmra.mrb[0].mxu0 %v1482
      %v1627 = vpop.f32.mrb[0].mxu0
      %v1628 = vadd.f32 0.0, %v1627
      %v1629 = vpop.f32.mrb[0].mxu0
      %v1630 = vpop.f32.mrb[0].mxu0
      %v1631 = vadd.f32 0.0, %v1630
      %v1632 = vpop.f32.mrb[0].mxu0
      %1633 = vmatprep.mubr.bf16.mxu0 0
      %1634 = vmatmul.mubr.bf16.gmra.mrb[0].mxu0 %v1485
      %v1635 = vpop.f32.mrb[0].mxu0
      %v1636 = vadd.f32 0.0, %v1635
      %v1637 = vpop.f32.mrb[0].mxu0
      %v1638 = vpop.f32.mrb[0].mxu0
      %v1639 = vadd.f32 0.0, %v1638
      %v1640 = vpop.f32.mrb[0].mxu0
      %1641 = vmatprep.mubr.bf16.mxu0 0
      %1642 = vmatmul.mubr.bf16.gmra.mrb[0].mxu0 %v1488
      %v1643 = vpop.f32.mrb[0].mxu0
      %v1644 = vadd.f32 0.0, %v1643
      %v1645 = vpop.f32.mrb[0].mxu0
      %v1646 = vpop.f32.mrb[0].mxu0
      %v1647 = vadd.f32 0.0, %v1646
      %v1648 = vpop.f32.mrb[0].mxu0
      %1649 = vmatprep.mubr.bf16.mxu0 0
      %1650 = vmatmul.mubr.bf16.gmra.mrb[0].mxu0 %v1491
      %v1651 = vpop.f32.mrb[0].mxu0
      %v1652 = vadd.f32 0.0, %v1651
      %v1653 = vpop.f32.mrb[0].mxu0
      %v1654 = vpop.f32.mrb[0].mxu0
      %v1655 = vadd.f32 0.0, %v1654
      %v1656 = vpop.f32.mrb[0].mxu0
      %1657 = vmatprep.mubr.bf16.mxu0 0
      %1658 = vmatmul.mubr.bf16.gmra.mrb[0].mxu0 %v1494
      %v1659 = vpop.f32.mrb[0].mxu0
      %v1660 = vadd.f32 0.0, %v1659
      %v1661 = vpop.f32.mrb[0].mxu0
      %v1662 = vpop.f32.mrb[0].mxu0
      %v1663 = vadd.f32 0.0, %v1662
      %v1664 = vpop.f32.mrb[0].mxu0
      %1665 = vmatprep.mubr.bf16.mxu0 0
      %1666 = vmatmul.mubr.bf16.gmra.mrb[0].mxu0 %v1497
      %v1667 = vpop.f32.mrb[0].mxu0
      %v1668 = vadd.f32 0.0, %v1667
      %v1669 = vpop.f32.mrb[0].mxu0
      %v1670 = vpop.f32.mrb[0].mxu0
      %v1671 = vadd.f32 0.0, %v1670
      %v1672 = vpop.f32.mrb[0].mxu0
      %1673 = vmatprep.mubr.bf16.mxu0 0
      %1674 = vmatmul.mubr.bf16.gmra.mrb[0].mxu0 %v1500
      %v1675 = vpop.f32.mrb[0].mxu0
      %v1676 = vadd.f32 0.0, %v1675
      %v1677 = vpop.f32.mrb[0].mxu0
      %v1678 = vpop.f32.mrb[0].mxu0
      %v1679 = vadd.f32 0.0, %v1678
      %v1680 = vpop.f32.mrb[0].mxu0
      %1681 = vmatprep.mubr.bf16.mxu0 0
      %1682 = vmatmul.mubr.bf16.gmra.mrb[0].mxu0 %v1503
      %v1683 = vpop.f32.mrb[0].mxu0
      %v1684 = vadd.f32 0.0, %v1683
      %v1685 = vpop.f32.mrb[0].mxu0
      %v1686 = vpop.f32.mrb[0].mxu0
      %v1687 = vadd.f32 0.0, %v1686
      %v1688 = vpop.f32.mrb[0].mxu0
      %1689 = vmatprep.mubr.bf16.mxu0 0
      %1690 = vmatmul.mubr.bf16.gmra.mrb[0].mxu0 %v1506
      %v1691 = vpop.f32.mrb[0].mxu0
      %v1692 = vadd.f32 0.0, %v1691
      %v1693 = vpop.f32.mrb[0].mxu0
      %v1694 = vpop.f32.mrb[0].mxu0
      %v1695 = vadd.f32 0.0, %v1694
      %v1696 = vpop.f32.mrb[0].mxu0
      %1697 = vmatprep.mubr.bf16.mxu0 0
      %1698 = vmatmul.mubr.bf16.gmra.mrb[0].mxu0 %v1509
      %v1699 = vpop.f32.mrb[0].mxu0
      %v1700 = vadd.f32 0.0, %v1699
      %v1701 = vpop.f32.mrb[0].mxu0
      %v1702 = vpop.f32.mrb[0].mxu0
      %v1703 = vadd.f32 0.0, %v1702
      %v1704 = vpop.f32.mrb[0].mxu0
      %1705 = vmatprep.mubr.bf16.mxu0 0
      %1706 = vmatmul.mubr.bf16.gmra.mrb[0].mxu0 %v1512
      %v1707 = vpop.f32.mrb[0].mxu0
      %v1708 = vadd.f32 0.0, %v1707
      %v1709 = vpop.f32.mrb[0].mxu0
      %v1710 = vpop.f32.mrb[0].mxu0
      %v1711 = vadd.f32 0.0, %v1710
      %v1712 = vpop.f32.mrb[0].mxu0
      %1713 = vmatprep.mubr.bf16.mxu0 0
      %1714 = vmatmul.mubr.bf16.gmra.mrb[0].mxu0 %v1515
      %v1715 = vpop.f32.mrb[0].mxu0
      %v1716 = vadd.f32 0.0, %v1715
      %v1717 = vpop.f32.mrb[0].mxu0
      %v1718 = vpop.f32.mrb[0].mxu0
      %v1719 = vadd.f32 0.0, %v1718
      %v1720 = vpop.f32.mrb[0].mxu0
      %1721 = vmatprep.mubr.bf16.mxu0 0
      %1722 = vmatmul.mubr.bf16.gmra.mrb[0].mxu0 %v1518
      %v1723 = vpop.f32.mrb[0].mxu0
      %v1724 = vadd.f32 0.0, %v1723
      %v1725 = vpop.f32.mrb[0].mxu0
      %v1726 = vpop.f32.mrb[0].mxu0
      %v1727 = vadd.f32 0.0, %v1726
      %v1728 = vpop.f32.mrb[0].mxu0
      %1729 = vmatprep.mubr.bf16.mxu0 0
      %1730 = vmatmul.mubr.bf16.gmra.mrb[0].mxu0 %v1521
      %v1731 = vpop.f32.mrb[0].mxu0
      %v1732 = vadd.f32 0.0, %v1731
      %v1733 = vpop.f32.mrb[0].mxu0
      %v1734 = vpop.f32.mrb[0].mxu0
      %v1735 = vadd.f32 0.0, %v1734
      %v1736 = vpop.f32.mrb[0].mxu0
      %1737 = vmatprep.mubr.bf16.mxu0 0
      %1738 = vmatmul.mubr.bf16.gmra.mrb[0].mxu0 %v1524
      %v1739 = vpop.f32.mrb[0].mxu0
      %v1740 = vadd.f32 0.0, %v1739
      %v1741 = vpop.f32.mrb[0].mxu0
      %v1742 = vpop.f32.mrb[0].mxu0
      %v1743 = vadd.f32 0.0, %v1742
      %v1744 = vpop.f32.mrb[0].mxu0
      %1745 = vmatprep.mubr.bf16.mxu0 0
      %1746 = vmatmul.mubr.bf16.gmra.mrb[0].mxu0 %v1527
      %v1747 = vpop.f32.mrb[0].mxu0
      %v1748 = vadd.f32 0.0, %v1747
      %v1749 = vpop.f32.mrb[0].mxu0
      %v1750 = vpop.f32.mrb[0].mxu0
      %v1751 = vadd.f32 0.0, %v1750
      %v1752 = vpop.f32.mrb[0].mxu0
      %1753 = vdwg.mxu0
      %vm1754 = vsmask.f32 4352
      %v1756 = vshrl.u32 %v1335, 16
      %v1758 = vrot.slane %v1756, 3
      %v1759 = vshll.u32 %v1335, 16
      %v1761 = vrot.slane %v1759, 4
      %v1762 = vor.u32 %v1758, %v1761
      %v1764 = vshrl.u32 %v1336, 16
      %v1766 = vrot.slane %v1764, 3
      %v1767 = vshll.u32 %v1336, 16
      %v1769 = vrot.slane %v1767, 4
      %v1770 = vor.u32 %v1766, %v1769
      %v1771 = vsel %vm1754, %v1762, %v1770
      %v1773 = vshrl.u32 %v1337, 16
      %v1775 = vrot.slane %v1773, 3
      %v1776 = vshll.u32 %v1337, 16
      %v1778 = vrot.slane %v1776, 4
      %v1779 = vor.u32 %v1775, %v1778
      %v1780 = vsel %vm1754, %v1770, %v1779
      %v1782 = vshrl.u32 %v1338, 16
      %v1784 = vrot.slane %v1782, 3
      %v1785 = vshll.u32 %v1338, 16
      %v1787 = vrot.slane %v1785, 4
      %v1788 = vor.u32 %v1784, %v1787
      %v1789 = vsel %vm1754, %v1779, %v1788
      %v1791 = vshrl.u32 %v1339, 16
      %v1793 = vrot.slane %v1791, 3
      %v1794 = vshll.u32 %v1339, 16
      %v1796 = vrot.slane %v1794, 4
      %v1797 = vor.u32 %v1793, %v1796
      %v1798 = vsel %vm1754, %v1788, %v1797
      %v1800 = vshrl.u32 %v1340, 16
      %v1802 = vrot.slane %v1800, 3
      %v1803 = vshll.u32 %v1340, 16
      %v1805 = vrot.slane %v1803, 4
      %v1806 = vor.u32 %v1802, %v1805
      %v1807 = vsel %vm1754, %v1797, %v1806
      %v1809 = vshrl.u32 %v1341, 16
      %v1811 = vrot.slane %v1809, 3
      %v1812 = vshll.u32 %v1341, 16
      %v1814 = vrot.slane %v1812, 4
      %v1815 = vor.u32 %v1811, %v1814
      %v1816 = vsel %vm1754, %v1806, %v1815
      %v1818 = vshrl.u32 %v1342, 16
      %v1820 = vrot.slane %v1818, 3
      %v1821 = vshll.u32 %v1342, 16
      %v1823 = vrot.slane %v1821, 4
      %v1824 = vor.u32 %v1820, %v1823
      %v1825 = vsel %vm1754, %v1815, %v1824
      %v1827 = vshrl.u32 %v1343, 16
      %v1829 = vrot.slane %v1827, 3
      %v1830 = vshll.u32 %v1343, 16
      %v1832 = vrot.slane %v1830, 4
      %v1833 = vor.u32 %v1829, %v1832
      %v1834 = vsel %vm1754, %v1824, %v1833
      %v1836 = vshrl.u32 %v1344, 16
      %v1838 = vrot.slane %v1836, 3
      %v1839 = vshll.u32 %v1344, 16
      %v1841 = vrot.slane %v1839, 4
      %v1842 = vor.u32 %v1838, %v1841
      %v1843 = vsel %vm1754, %v1833, %v1842
      %v1845 = vshrl.u32 %v1345, 16
      %v1847 = vrot.slane %v1845, 3
      %v1848 = vshll.u32 %v1345, 16
      %v1850 = vrot.slane %v1848, 4
      %v1851 = vor.u32 %v1847, %v1850
      %v1852 = vsel %vm1754, %v1842, %v1851
      %v1854 = vshrl.u32 %v1346, 16
      %v1856 = vrot.slane %v1854, 3
      %v1857 = vshll.u32 %v1346, 16
      %v1859 = vrot.slane %v1857, 4
      %v1860 = vor.u32 %v1856, %v1859
      %v1861 = vsel %vm1754, %v1851, %v1860
      %v1863 = vshrl.u32 %v1347, 16
      %v1865 = vrot.slane %v1863, 3
      %v1866 = vshll.u32 %v1347, 16
      %v1868 = vrot.slane %v1866, 4
      %v1869 = vor.u32 %v1865, %v1868
      %v1870 = vsel %vm1754, %v1860, %v1869
      %v1872 = vshrl.u32 %v1348, 16
      %v1874 = vrot.slane %v1872, 3
      %v1875 = vshll.u32 %v1348, 16
      %v1877 = vrot.slane %v1875, 4
      %v1878 = vor.u32 %v1874, %v1877
      %v1879 = vsel %vm1754, %v1869, %v1878
      %v1881 = vshrl.u32 %v1349, 16
      %v1883 = vrot.slane %v1881, 3
      %v1884 = vshll.u32 %v1349, 16
      %v1886 = vrot.slane %v1884, 4
      %v1887 = vor.u32 %v1883, %v1886
      %v1888 = vsel %vm1754, %v1878, %v1887
      %v1890 = vshrl.u32 %v1350, 16
      %v1892 = vrot.slane %v1890, 3
      %v1893 = vshll.u32 %v1350, 16
      %v1895 = vrot.slane %v1893, 4
      %v1896 = vor.u32 %v1892, %v1895
      %v1897 = vsel %vm1754, %v1887, %v1896
      %v1899 = vshrl.u32 %v1351, 16
      %v1901 = vrot.slane %v1899, 3
      %v1902 = vshll.u32 %v1351, 16
      %v1904 = vrot.slane %v1902, 4
      %v1905 = vor.u32 %v1901, %v1904
      %v1906 = vsel %vm1754, %v1896, %v1905
      %v1908 = vshrl.u32 %v1352, 16
      %v1910 = vrot.slane %v1908, 3
      %v1911 = vshll.u32 %v1352, 16
      %v1913 = vrot.slane %v1911, 4
      %v1914 = vor.u32 %v1910, %v1913
      %v1915 = vsel %vm1754, %v1905, %v1914
      %v1917 = vshrl.u32 %v1353, 16
      %v1919 = vrot.slane %v1917, 3
      %v1920 = vshll.u32 %v1353, 16
      %v1922 = vrot.slane %v1920, 4
      %v1923 = vor.u32 %v1919, %v1922
      %v1924 = vsel %vm1754, %v1914, %v1923
      %v1926 = vshrl.u32 %v1354, 16
      %v1928 = vrot.slane %v1926, 3
      %v1929 = vshll.u32 %v1354, 16
      %v1931 = vrot.slane %v1929, 4
      %v1932 = vor.u32 %v1928, %v1931
      %v1933 = vsel %vm1754, %v1923, %v1932
      %v1935 = vshrl.u32 %v1355, 16
      %v1937 = vrot.slane %v1935, 3
      %v1938 = vshll.u32 %v1355, 16
      %v1940 = vrot.slane %v1938, 4
      %v1941 = vor.u32 %v1937, %v1940
      %v1942 = vsel %vm1754, %v1932, %v1941
      %v1944 = vshrl.u32 %v1356, 16
      %v1946 = vrot.slane %v1944, 3
      %v1947 = vshll.u32 %v1356, 16
      %v1949 = vrot.slane %v1947, 4
      %v1950 = vor.u32 %v1946, %v1949
      %v1951 = vsel %vm1754, %v1941, %v1950
      %v1953 = vshrl.u32 %v1357, 16
      %v1955 = vrot.slane %v1953, 3
      %v1956 = vshll.u32 %v1357, 16
      %v1958 = vrot.slane %v1956, 4
      %v1959 = vor.u32 %v1955, %v1958
      %v1960 = vsel %vm1754, %v1950, %v1959
      %v1962 = vshrl.u32 %v1358, 16
      %v1964 = vrot.slane %v1962, 3
      %v1965 = vshll.u32 %v1358, 16
      %v1967 = vrot.slane %v1965, 4
      %v1968 = vor.u32 %v1964, %v1967
      %v1969 = vsel %vm1754, %v1959, %v1968
      %v1971 = vshrl.u32 %v1359, 16
      %v1973 = vrot.slane %v1971, 3
      %v1974 = vshll.u32 %v1359, 16
      %v1976 = vrot.slane %v1974, 4
      %v1977 = vor.u32 %v1973, %v1976
      %v1978 = vsel %vm1754, %v1968, %v1977
      %v1983 = vunpack.c.l.b16 %v1360
      %v1984 = vunpack.c.l.b16 %v1361
      %v1985 = vunpack.c.l.b16 %v1362
      %v1986 = vunpack.c.l.b16 %v1363
      %v1987 = vpack.c.b16 %v1984, %v1983
      %v1988 = vpack.c.b16 %v1986, %v1985
      %v1992 = vsel %vm348, %v1771, 0
      %v1995 = vsel %vm348, %v1780, 0
      %v1998 = vsel %vm348, %v1789, 0
      %v2001 = vsel %vm348, %v1798, 0
      %v2004 = vsel %vm348, %v1807, 0
      %v2007 = vsel %vm348, %v1816, 0
      %v2010 = vsel %vm348, %v1825, 0
      %v2013 = vsel %vm348, %v1834, 0
      %v2016 = vsel %vm348, %v1843, 0
      %v2019 = vsel %vm348, %v1852, 0
      %v2022 = vsel %vm348, %v1861, 0
      %v2025 = vsel %vm348, %v1870, 0
      %v2028 = vsel %vm348, %v1879, 0
      %v2031 = vsel %vm348, %v1888, 0
      %v2034 = vsel %vm348, %v1897, 0
      %v2037 = vsel %vm348, %v1906, 0
      %v2040 = vsel %vm348, %v1915, 0
      %v2043 = vsel %vm348, %v1924, 0
      %v2046 = vsel %vm348, %v1933, 0
      %v2049 = vsel %vm348, %v1942, 0
      %v2052 = vsel %vm348, %v1951, 0
      %v2055 = vsel %vm348, %v1960, 0
      %v2058 = vsel %vm348, %v1969, 0
      %v2061 = vsel %vm348, %v1978, 0
      %2063 = vmatprep.subr.bf16.mxu0 0
      %2064 = vmatpush1.bf16.msra.mxu0 %v1987
      %2065 = vmatprep.subr.bf16.mxu0 0
      %2066 = vmatpush1.bf16.msra.mxu0 %v1988
      %2067 = vmatprep.subr.bf16.mxu0 0
      %2068 = vmatpush1.bf16.msra.mxu0 0
      %2069 = vmatprep.subr.bf16.mxu0 0
      %2070 = vmatpush1.bf16.msra.mxu0 0
      %2071 = vmatprep.subr.bf16.mxu0 0
      %2072 = vmatpush1.bf16.msra.mxu0 0
      %2073 = vmatprep.subr.bf16.mxu0 0
      %2074 = vmatpush1.bf16.msra.mxu0 0
      %2075 = vmatprep.subr.bf16.mxu0 0
      %2076 = vmatpush1.bf16.msra.mxu0 0
      %2077 = vmatprep.subr.bf16.mxu0 0
      %2078 = vmatpush1.bf16.msra.mxu0 0
      %2079 = vmatprep.subr.bf16.mxu0 0
      %2080 = vmatpush1.bf16.msra.mxu0 0
      %2081 = vmatprep.subr.bf16.mxu0 0
      %2082 = vmatpush1.bf16.msra.mxu0 0
      %2083 = vmatprep.subr.bf16.mxu0 0
      %2084 = vmatpush1.bf16.msra.mxu0 0
      %2085 = vmatprep.subr.bf16.mxu0 0
      %2086 = vmatpush1.bf16.msra.mxu0 0
      %2087 = vmatprep.subr.bf16.mxu0 0
      %2088 = vmatpush1.bf16.msra.mxu0 0
      %2089 = vmatprep.subr.bf16.mxu0 0
      %2090 = vmatpush1.bf16.msra.mxu0 0
      %2091 = vmatprep.subr.bf16.mxu0 0
      %2092 = vmatpush1.bf16.msra.mxu0 0
      %2093 = vmatprep.subr.bf16.mxu0 0
      %2094 = vmatpush1.bf16.msra.mxu0 0
      %2095 = vmatprep.mubr.bf16.mxu0 0
      %2096 = vmatmul.mubr.bf16.gmra.mrb[0].mxu0 %v1992
      %v2097 = vpop.f32.mrb[0].mxu0
      %v2098 = vadd.f32 %v1564, %v2097
      %v2099 = vpop.f32.mrb[0].mxu0
      %v2100 = vpop.f32.mrb[0].mxu0
      %v2101 = vadd.f32 %v1567, %v2100
      %v2102 = vpop.f32.mrb[0].mxu0
      %2103 = vmatprep.mubr.bf16.mxu0 0
      %2104 = vmatmul.mubr.bf16.gmra.mrb[0].mxu0 %v1995
      %v2105 = vpop.f32.mrb[0].mxu0
      %v2106 = vadd.f32 %v1572, %v2105
      %v2107 = vpop.f32.mrb[0].mxu0
      %v2108 = vpop.f32.mrb[0].mxu0
      %v2109 = vadd.f32 %v1575, %v2108
      %v2110 = vpop.f32.mrb[0].mxu0
      %2111 = vmatprep.mubr.bf16.mxu0 0
      %2112 = vmatmul.mubr.bf16.gmra.mrb[0].mxu0 %v1998
      %v2113 = vpop.f32.mrb[0].mxu0
      %v2114 = vadd.f32 %v1580, %v2113
      %v2115 = vpop.f32.mrb[0].mxu0
      %v2116 = vpop.f32.mrb[0].mxu0
      %v2117 = vadd.f32 %v1583, %v2116
      %v2118 = vpop.f32.mrb[0].mxu0
      %2119 = vmatprep.mubr.bf16.mxu0 0
      %2120 = vmatmul.mubr.bf16.gmra.mrb[0].mxu0 %v2001
      %v2121 = vpop.f32.mrb[0].mxu0
      %v2122 = vadd.f32 %v1588, %v2121
      %v2123 = vpop.f32.mrb[0].mxu0
      %v2124 = vpop.f32.mrb[0].mxu0
      %v2125 = vadd.f32 %v1591, %v2124
      %v2126 = vpop.f32.mrb[0].mxu0
      %2127 = vmatprep.mubr.bf16.mxu0 0
      %2128 = vmatmul.mubr.bf16.gmra.mrb[0].mxu0 %v2004
      %v2129 = vpop.f32.mrb[0].mxu0
      %v2130 = vadd.f32 %v1596, %v2129
      %v2131 = vpop.f32.mrb[0].mxu0
      %v2132 = vpop.f32.mrb[0].mxu0
      %v2133 = vadd.f32 %v1599, %v2132
      %v2134 = vpop.f32.mrb[0].mxu0
      %2135 = vmatprep.mubr.bf16.mxu0 0
      %2136 = vmatmul.mubr.bf16.gmra.mrb[0].mxu0 %v2007
      %v2137 = vpop.f32.mrb[0].mxu0
      %v2138 = vadd.f32 %v1604, %v2137
      %v2139 = vpop.f32.mrb[0].mxu0
      %v2140 = vpop.f32.mrb[0].mxu0
      %v2141 = vadd.f32 %v1607, %v2140
      %v2142 = vpop.f32.mrb[0].mxu0
      %2143 = vmatprep.mubr.bf16.mxu0 0
      %2144 = vmatmul.mubr.bf16.gmra.mrb[0].mxu0 %v2010
      %v2145 = vpop.f32.mrb[0].mxu0
      %v2146 = vadd.f32 %v1612, %v2145
      %v2147 = vpop.f32.mrb[0].mxu0
      %v2148 = vpop.f32.mrb[0].mxu0
      %v2149 = vadd.f32 %v1615, %v2148
      %v2150 = vpop.f32.mrb[0].mxu0
      %2151 = vmatprep.mubr.bf16.mxu0 0
      %2152 = vmatmul.mubr.bf16.gmra.mrb[0].mxu0 %v2013
      %v2153 = vpop.f32.mrb[0].mxu0
      %v2154 = vadd.f32 %v1620, %v2153
      %v2155 = vpop.f32.mrb[0].mxu0
      %v2156 = vpop.f32.mrb[0].mxu0
      %v2157 = vadd.f32 %v1623, %v2156
      %v2158 = vpop.f32.mrb[0].mxu0
      %2159 = vmatprep.mubr.bf16.mxu0 0
      %2160 = vmatmul.mubr.bf16.gmra.mrb[0].mxu0 %v2016
      %v2161 = vpop.f32.mrb[0].mxu0
      %v2162 = vadd.f32 %v1628, %v2161
      %v2163 = vpop.f32.mrb[0].mxu0
      %v2164 = vpop.f32.mrb[0].mxu0
      %v2165 = vadd.f32 %v1631, %v2164
      %v2166 = vpop.f32.mrb[0].mxu0
      %2167 = vmatprep.mubr.bf16.mxu0 0
      %2168 = vmatmul.mubr.bf16.gmra.mrb[0].mxu0 %v2019
      %v2169 = vpop.f32.mrb[0].mxu0
      %v2170 = vadd.f32 %v1636, %v2169
      %v2171 = vpop.f32.mrb[0].mxu0
      %v2172 = vpop.f32.mrb[0].mxu0
      %v2173 = vadd.f32 %v1639, %v2172
      %v2174 = vpop.f32.mrb[0].mxu0
      %2175 = vmatprep.mubr.bf16.mxu0 0
      %2176 = vmatmul.mubr.bf16.gmra.mrb[0].mxu0 %v2022
      %v2177 = vpop.f32.mrb[0].mxu0
      %v2178 = vadd.f32 %v1644, %v2177
      %v2179 = vpop.f32.mrb[0].mxu0
      %v2180 = vpop.f32.mrb[0].mxu0
      %v2181 = vadd.f32 %v1647, %v2180
      %v2182 = vpop.f32.mrb[0].mxu0
      %2183 = vmatprep.mubr.bf16.mxu0 0
      %2184 = vmatmul.mubr.bf16.gmra.mrb[0].mxu0 %v2025
      %v2185 = vpop.f32.mrb[0].mxu0
      %v2186 = vadd.f32 %v1652, %v2185
      %v2187 = vpop.f32.mrb[0].mxu0
      %v2188 = vpop.f32.mrb[0].mxu0
      %v2189 = vadd.f32 %v1655, %v2188
      %v2190 = vpop.f32.mrb[0].mxu0
      %2191 = vmatprep.mubr.bf16.mxu0 0
      %2192 = vmatmul.mubr.bf16.gmra.mrb[0].mxu0 %v2028
      %v2193 = vpop.f32.mrb[0].mxu0
      %v2194 = vadd.f32 %v1660, %v2193
      %v2195 = vpop.f32.mrb[0].mxu0
      %v2196 = vpop.f32.mrb[0].mxu0
      %v2197 = vadd.f32 %v1663, %v2196
      %v2198 = vpop.f32.mrb[0].mxu0
      %2199 = vmatprep.mubr.bf16.mxu0 0
      %2200 = vmatmul.mubr.bf16.gmra.mrb[0].mxu0 %v2031
      %v2201 = vpop.f32.mrb[0].mxu0
      %v2202 = vadd.f32 %v1668, %v2201
      %v2203 = vpop.f32.mrb[0].mxu0
      %v2204 = vpop.f32.mrb[0].mxu0
      %v2205 = vadd.f32 %v1671, %v2204
      %v2206 = vpop.f32.mrb[0].mxu0
      %2207 = vmatprep.mubr.bf16.mxu0 0
      %2208 = vmatmul.mubr.bf16.gmra.mrb[0].mxu0 %v2034
      %v2209 = vpop.f32.mrb[0].mxu0
      %v2210 = vadd.f32 %v1676, %v2209
      %v2211 = vpop.f32.mrb[0].mxu0
      %v2212 = vpop.f32.mrb[0].mxu0
      %v2213 = vadd.f32 %v1679, %v2212
      %v2214 = vpop.f32.mrb[0].mxu0
      %2215 = vmatprep.mubr.bf16.mxu0 0
      %2216 = vmatmul.mubr.bf16.gmra.mrb[0].mxu0 %v2037
      %v2217 = vpop.f32.mrb[0].mxu0
      %v2218 = vadd.f32 %v1684, %v2217
      %v2219 = vpop.f32.mrb[0].mxu0
      %v2220 = vpop.f32.mrb[0].mxu0
      %v2221 = vadd.f32 %v1687, %v2220
      %v2222 = vpop.f32.mrb[0].mxu0
      %2223 = vmatprep.mubr.bf16.mxu0 0
      %2224 = vmatmul.mubr.bf16.gmra.mrb[0].mxu0 %v2040
      %v2225 = vpop.f32.mrb[0].mxu0
      %v2226 = vadd.f32 %v1692, %v2225
      %v2227 = vpop.f32.mrb[0].mxu0
      %v2228 = vpop.f32.mrb[0].mxu0
      %v2229 = vadd.f32 %v1695, %v2228
      %v2230 = vpop.f32.mrb[0].mxu0
      %2231 = vmatprep.mubr.bf16.mxu0 0
      %2232 = vmatmul.mubr.bf16.gmra.mrb[0].mxu0 %v2043
      %v2233 = vpop.f32.mrb[0].mxu0
      %v2234 = vadd.f32 %v1700, %v2233
      %v2235 = vpop.f32.mrb[0].mxu0
      %v2236 = vpop.f32.mrb[0].mxu0
      %v2237 = vadd.f32 %v1703, %v2236
      %v2238 = vpop.f32.mrb[0].mxu0
      %2239 = vmatprep.mubr.bf16.mxu0 0
      %2240 = vmatmul.mubr.bf16.gmra.mrb[0].mxu0 %v2046
      %v2241 = vpop.f32.mrb[0].mxu0
      %v2242 = vadd.f32 %v1708, %v2241
      %v2243 = vpop.f32.mrb[0].mxu0
      %v2244 = vpop.f32.mrb[0].mxu0
      %v2245 = vadd.f32 %v1711, %v2244
      %v2246 = vpop.f32.mrb[0].mxu0
      %2247 = vmatprep.mubr.bf16.mxu0 0
      %2248 = vmatmul.mubr.bf16.gmra.mrb[0].mxu0 %v2049
      %v2249 = vpop.f32.mrb[0].mxu0
      %v2250 = vadd.f32 %v1716, %v2249
      %v2251 = vpop.f32.mrb[0].mxu0
      %v2252 = vpop.f32.mrb[0].mxu0
      %v2253 = vadd.f32 %v1719, %v2252
      %v2254 = vpop.f32.mrb[0].mxu0
      %2255 = vmatprep.mubr.bf16.mxu0 0
      %2256 = vmatmul.mubr.bf16.gmra.mrb[0].mxu0 %v2052
      %v2257 = vpop.f32.mrb[0].mxu0
      %v2258 = vadd.f32 %v1724, %v2257
      %v2259 = vpop.f32.mrb[0].mxu0
      %v2260 = vpop.f32.mrb[0].mxu0
      %v2261 = vadd.f32 %v1727, %v2260
      %v2262 = vpop.f32.mrb[0].mxu0
      %2263 = vmatprep.mubr.bf16.mxu0 0
      %2264 = vmatmul.mubr.bf16.gmra.mrb[0].mxu0 %v2055
      %v2265 = vpop.f32.mrb[0].mxu0
      %v2266 = vadd.f32 %v1732, %v2265
      %v2267 = vpop.f32.mrb[0].mxu0
      %v2268 = vpop.f32.mrb[0].mxu0
      %v2269 = vadd.f32 %v1735, %v2268
      %v2270 = vpop.f32.mrb[0].mxu0
      %2271 = vmatprep.mubr.bf16.mxu0 0
      %2272 = vmatmul.mubr.bf16.gmra.mrb[0].mxu0 %v2058
      %v2273 = vpop.f32.mrb[0].mxu0
      %v2274 = vadd.f32 %v1740, %v2273
      %v2275 = vpop.f32.mrb[0].mxu0
      %v2276 = vpop.f32.mrb[0].mxu0
      %v2277 = vadd.f32 %v1743, %v2276
      %v2278 = vpop.f32.mrb[0].mxu0
      %2279 = vmatprep.mubr.bf16.mxu0 0
      %2280 = vmatmul.mubr.bf16.gmra.mrb[0].mxu0 %v2061
      %v2281 = vpop.f32.mrb[0].mxu0
      %v2282 = vadd.f32 %v1748, %v2281
      %v2283 = vpop.f32.mrb[0].mxu0
      %v2284 = vpop.f32.mrb[0].mxu0
      %v2285 = vadd.f32 %v1751, %v2284
      %v2286 = vpop.f32.mrb[0].mxu0
      %2287 = vdwg.mxu0
      %v2288 = vld [vmem:[#allocation2 + $0xc0] sm:$0x1f]
      %s2289 = scalar_lea.vmem %s5, 32
      %v2290 = vld [vmem:[%s2289] sm:$0xf]
      %v2291 = vld [vmem:[%s2289 + $0x4] sm:$0xf]
      %v2292 = vld [vmem:[%s2289 + $0x8] sm:$0xf]
      %v2293 = vld [vmem:[%s2289 + $0xc] sm:$0xf]
      %vm2294 = vsmask.f32 3328
      %v2296 = vshrl.u32 %v1364, 16
      %v2298 = vrot.slane %v2296, 4
      %v2299 = vshll.u32 %v1364, 16
      %v2301 = vrot.slane %v2299, 5
      %v2302 = vor.u32 %v2298, %v2301
      %v2303 = vrot.slane %v1764, 4
      %v2304 = vrot.slane %v1767, 5
      %v2305 = vor.u32 %v2303, %v2304
      %v2306 = vsel %vm2294, %v2302, %v2305
      %v2307 = vrot.slane %v1773, 4
      %v2308 = vrot.slane %v1776, 5
      %v2309 = vor.u32 %v2307, %v2308
      %v2310 = vsel %vm2294, %v2305, %v2309
      %v2311 = vrot.slane %v1782, 4
      %v2312 = vrot.slane %v1785, 5
      %v2313 = vor.u32 %v2311, %v2312
      %v2314 = vsel %vm2294, %v2309, %v2313
      %v2315 = vrot.slane %v1791, 4
      %v2316 = vrot.slane %v1794, 5
      %v2317 = vor.u32 %v2315, %v2316
      %v2318 = vsel %vm2294, %v2313, %v2317
      %v2319 = vrot.slane %v1800, 4
      %v2320 = vrot.slane %v1803, 5
      %v2321 = vor.u32 %v2319, %v2320
      %v2322 = vsel %vm2294, %v2317, %v2321
      %v2323 = vrot.slane %v1809, 4
      %v2324 = vrot.slane %v1812, 5
      %v2325 = vor.u32 %v2323, %v2324
      %v2326 = vsel %vm2294, %v2321, %v2325
      %v2327 = vrot.slane %v1818, 4
      %v2328 = vrot.slane %v1821, 5
      %v2329 = vor.u32 %v2327, %v2328
      %v2330 = vsel %vm2294, %v2325, %v2329
      %v2331 = vrot.slane %v1827, 4
      %v2332 = vrot.slane %v1830, 5
      %v2333 = vor.u32 %v2331, %v2332
      %v2334 = vsel %vm2294, %v2329, %v2333
      %v2335 = vrot.slane %v1836, 4
      %v2336 = vrot.slane %v1839, 5
      %v2337 = vor.u32 %v2335, %v2336
      %v2338 = vsel %vm2294, %v2333, %v2337
      %v2339 = vrot.slane %v1845, 4
      %v2340 = vrot.slane %v1848, 5
      %v2341 = vor.u32 %v2339, %v2340
      %v2342 = vsel %vm2294, %v2337, %v2341
      %v2343 = vrot.slane %v1854, 4
      %v2344 = vrot.slane %v1857, 5
      %v2345 = vor.u32 %v2343, %v2344
      %v2346 = vsel %vm2294, %v2341, %v2345
      %v2347 = vrot.slane %v1863, 4
      %v2348 = vrot.slane %v1866, 5
      %v2349 = vor.u32 %v2347, %v2348
      %v2350 = vsel %vm2294, %v2345, %v2349
      %v2351 = vrot.slane %v1872, 4
      %v2352 = vrot.slane %v1875, 5
      %v2353 = vor.u32 %v2351, %v2352
      %v2354 = vsel %vm2294, %v2349, %v2353
      %v2355 = vrot.slane %v1881, 4
      %v2356 = vrot.slane %v1884, 5
      %v2357 = vor.u32 %v2355, %v2356
      %v2358 = vsel %vm2294, %v2353, %v2357
      %v2359 = vrot.slane %v1890, 4
      %v2360 = vrot.slane %v1893, 5
      %v2361 = vor.u32 %v2359, %v2360
      %v2362 = vsel %vm2294, %v2357, %v2361
      %v2363 = vrot.slane %v1899, 4
      %v2364 = vrot.slane %v1902, 5
      %v2365 = vor.u32 %v2363, %v2364
      %v2366 = vsel %vm2294, %v2361, %v2365
      %v2367 = vrot.slane %v1908, 4
      %v2368 = vrot.slane %v1911, 5
      %v2369 = vor.u32 %v2367, %v2368
      %v2370 = vsel %vm2294, %v2365, %v2369
      %v2371 = vrot.slane %v1917, 4
      %v2372 = vrot.slane %v1920, 5
      %v2373 = vor.u32 %v2371, %v2372
      %v2374 = vsel %vm2294, %v2369, %v2373
      %v2375 = vrot.slane %v1926, 4
      %v2376 = vrot.slane %v1929, 5
      %v2377 = vor.u32 %v2375, %v2376
      %v2378 = vsel %vm2294, %v2373, %v2377
      %v2379 = vrot.slane %v1935, 4
      %v2380 = vrot.slane %v1938, 5
      %v2381 = vor.u32 %v2379, %v2380
      %v2382 = vsel %vm2294, %v2377, %v2381
      %v2383 = vrot.slane %v1944, 4
      %v2384 = vrot.slane %v1947, 5
      %v2385 = vor.u32 %v2383, %v2384
      %v2386 = vsel %vm2294, %v2381, %v2385
      %v2387 = vrot.slane %v1953, 4
      %v2388 = vrot.slane %v1956, 5
      %v2389 = vor.u32 %v2387, %v2388
      %v2390 = vsel %vm2294, %v2385, %v2389
      %v2391 = vrot.slane %v1962, 4
      %v2392 = vrot.slane %v1965, 5
      %v2393 = vor.u32 %v2391, %v2392
      %v2394 = vsel %vm2294, %v2389, %v2393
      %v2396 = vshrl.u32 %v2288, 16
      %v2398 = vrot.slane %v2396, 4
      %v2399 = vshll.u32 %v2288, 16
      %v2401 = vrot.slane %v2399, 5
      %v2402 = vor.u32 %v2398, %v2401
      %v2403 = vsel %vm2294, %v2393, %v2402
      %v2408 = vunpack.c.l.b16 %v2290
      %v2409 = vunpack.c.l.b16 %v2291
      %v2410 = vunpack.c.l.b16 %v2292
      %v2411 = vunpack.c.l.b16 %v2293
      %v2412 = vpack.c.b16 %v2409, %v2408
      %v2413 = vpack.c.b16 %v2411, %v2410
      %v2417 = vsel %vm348, %v2306, 0
      %v2420 = vsel %vm348, %v2310, 0
      %v2423 = vsel %vm348, %v2314, 0
      %v2426 = vsel %vm348, %v2318, 0
      %v2429 = vsel %vm348, %v2322, 0
      %v2432 = vsel %vm348, %v2326, 0
      %v2435 = vsel %vm348, %v2330, 0
      %v2438 = vsel %vm348, %v2334, 0
      %v2441 = vsel %vm348, %v2338, 0
      %v2444 = vsel %vm348, %v2342, 0
      %v2447 = vsel %vm348, %v2346, 0
      %v2450 = vsel %vm348, %v2350, 0
      %v2453 = vsel %vm348, %v2354, 0
      %v2456 = vsel %vm348, %v2358, 0
      %v2459 = vsel %vm348, %v2362, 0
      %v2462 = vsel %vm348, %v2366, 0
      %v2465 = vsel %vm348, %v2370, 0
      %v2468 = vsel %vm348, %v2374, 0
      %v2471 = vsel %vm348, %v2378, 0
      %v2474 = vsel %vm348, %v2382, 0
      %v2477 = vsel %vm348, %v2386, 0
      %v2480 = vsel %vm348, %v2390, 0
      %v2483 = vsel %vm348, %v2394, 0
      %v2486 = vsel %vm348, %v2403, 0
      %2488 = vmatprep.subr.bf16.mxu0 0
      %2489 = vmatpush1.bf16.msra.mxu0 %v2412
      %2490 = vmatprep.subr.bf16.mxu0 0
      %2491 = vmatpush1.bf16.msra.mxu0 %v2413
      %2492 = vmatprep.subr.bf16.mxu0 0
      %2493 = vmatpush1.bf16.msra.mxu0 0
      %2494 = vmatprep.subr.bf16.mxu0 0
      %2495 = vmatpush1.bf16.msra.mxu0 0
      %2496 = vmatprep.subr.bf16.mxu0 0
      %2497 = vmatpush1.bf16.msra.mxu0 0
      %2498 = vmatprep.subr.bf16.mxu0 0
      %2499 = vmatpush1.bf16.msra.mxu0 0
      %2500 = vmatprep.subr.bf16.mxu0 0
      %2501 = vmatpush1.bf16.msra.mxu0 0
      %2502 = vmatprep.subr.bf16.mxu0 0
      %2503 = vmatpush1.bf16.msra.mxu0 0
      %2504 = vmatprep.subr.bf16.mxu0 0
      %2505 = vmatpush1.bf16.msra.mxu0 0
      %2506 = vmatprep.subr.bf16.mxu0 0
      %2507 = vmatpush1.bf16.msra.mxu0 0
      %2508 = vmatprep.subr.bf16.mxu0 0
      %2509 = vmatpush1.bf16.msra.mxu0 0
      %2510 = vmatprep.subr.bf16.mxu0 0
      %2511 = vmatpush1.bf16.msra.mxu0 0
      %2512 = vmatprep.subr.bf16.mxu0 0
      %2513 = vmatpush1.bf16.msra.mxu0 0
      %2514 = vmatprep.subr.bf16.mxu0 0
      %2515 = vmatpush1.bf16.msra.mxu0 0
      %2516 = vmatprep.subr.bf16.mxu0 0
      %2517 = vmatpush1.bf16.msra.mxu0 0
      %2518 = vmatprep.subr.bf16.mxu0 0
      %2519 = vmatpush1.bf16.msra.mxu0 0
      %2520 = vmatprep.mubr.bf16.mxu0 0
      %2521 = vmatmul.mubr.bf16.gmra.mrb[0].mxu0 %v2417
      %v2522 = vpop.f32.mrb[0].mxu0
      %v2523 = vadd.f32 0.0, %v2522
      %v2524 = vpop.f32.mrb[0].mxu0
      %v2525 = vpop.f32.mrb[0].mxu0
      %v2526 = vadd.f32 0.0, %v2525
      %v2527 = vpop.f32.mrb[0].mxu0
      %2528 = vmatprep.mubr.bf16.mxu0 0
      %2529 = vmatmul.mubr.bf16.gmra.mrb[0].mxu0 %v2420
      %v2530 = vpop.f32.mrb[0].mxu0
      %v2531 = vadd.f32 0.0, %v2530
      %v2532 = vpop.f32.mrb[0].mxu0
      %v2533 = vpop.f32.mrb[0].mxu0
      %v2534 = vadd.f32 0.0, %v2533
      %v2535 = vpop.f32.mrb[0].mxu0
      %2536 = vmatprep.mubr.bf16.mxu0 0
      %2537 = vmatmul.mubr.bf16.gmra.mrb[0].mxu0 %v2423
      %v2538 = vpop.f32.mrb[0].mxu0
      %v2539 = vadd.f32 0.0, %v2538
      %v2540 = vpop.f32.mrb[0].mxu0
      %v2541 = vpop.f32.mrb[0].mxu0
      %v2542 = vadd.f32 0.0, %v2541
      %v2543 = vpop.f32.mrb[0].mxu0
      %2544 = vmatprep.mubr.bf16.mxu0 0
      %2545 = vmatmul.mubr.bf16.gmra.mrb[0].mxu0 %v2426
      %v2546 = vpop.f32.mrb[0].mxu0
      %v2547 = vadd.f32 0.0, %v2546
      %v2548 = vpop.f32.mrb[0].mxu0
      %v2549 = vpop.f32.mrb[0].mxu0
      %v2550 = vadd.f32 0.0, %v2549
      %v2551 = vpop.f32.mrb[0].mxu0
      %2552 = vmatprep.mubr.bf16.mxu0 0
      %2553 = vmatmul.mubr.bf16.gmra.mrb[0].mxu0 %v2429
      %v2554 = vpop.f32.mrb[0].mxu0
      %v2555 = vadd.f32 0.0, %v2554
      %v2556 = vpop.f32.mrb[0].mxu0
      %v2557 = vpop.f32.mrb[0].mxu0
      %v2558 = vadd.f32 0.0, %v2557
      %v2559 = vpop.f32.mrb[0].mxu0
      %2560 = vmatprep.mubr.bf16.mxu0 0
      %2561 = vmatmul.mubr.bf16.gmra.mrb[0].mxu0 %v2432
      %v2562 = vpop.f32.mrb[0].mxu0
      %v2563 = vadd.f32 0.0, %v2562
      %v2564 = vpop.f32.mrb[0].mxu0
      %v2565 = vpop.f32.mrb[0].mxu0
      %v2566 = vadd.f32 0.0, %v2565
      %v2567 = vpop.f32.mrb[0].mxu0
      %2568 = vmatprep.mubr.bf16.mxu0 0
      %2569 = vmatmul.mubr.bf16.gmra.mrb[0].mxu0 %v2435
      %v2570 = vpop.f32.mrb[0].mxu0
      %v2571 = vadd.f32 0.0, %v2570
      %v2572 = vpop.f32.mrb[0].mxu0
      %v2573 = vpop.f32.mrb[0].mxu0
      %v2574 = vadd.f32 0.0, %v2573
      %v2575 = vpop.f32.mrb[0].mxu0
      %2576 = vmatprep.mubr.bf16.mxu0 0
      %2577 = vmatmul.mubr.bf16.gmra.mrb[0].mxu0 %v2438
      %v2578 = vpop.f32.mrb[0].mxu0
      %v2579 = vadd.f32 0.0, %v2578
      %v2580 = vpop.f32.mrb[0].mxu0
      %v2581 = vpop.f32.mrb[0].mxu0
      %v2582 = vadd.f32 0.0, %v2581
      %v2583 = vpop.f32.mrb[0].mxu0
      %2584 = vmatprep.mubr.bf16.mxu0 0
      %2585 = vmatmul.mubr.bf16.gmra.mrb[0].mxu0 %v2441
      %v2586 = vpop.f32.mrb[0].mxu0
      %v2587 = vadd.f32 0.0, %v2586
      %v2588 = vpop.f32.mrb[0].mxu0
      %v2589 = vpop.f32.mrb[0].mxu0
      %v2590 = vadd.f32 0.0, %v2589
      %v2591 = vpop.f32.mrb[0].mxu0
      %2592 = vmatprep.mubr.bf16.mxu0 0
      %2593 = vmatmul.mubr.bf16.gmra.mrb[0].mxu0 %v2444
      %v2594 = vpop.f32.mrb[0].mxu0
      %v2595 = vadd.f32 0.0, %v2594
      %v2596 = vpop.f32.mrb[0].mxu0
      %v2597 = vpop.f32.mrb[0].mxu0
      %v2598 = vadd.f32 0.0, %v2597
      %v2599 = vpop.f32.mrb[0].mxu0
      %2600 = vmatprep.mubr.bf16.mxu0 0
      %2601 = vmatmul.mubr.bf16.gmra.mrb[0].mxu0 %v2447
      %v2602 = vpop.f32.mrb[0].mxu0
      %v2603 = vadd.f32 0.0, %v2602
      %v2604 = vpop.f32.mrb[0].mxu0
      %v2605 = vpop.f32.mrb[0].mxu0
      %v2606 = vadd.f32 0.0, %v2605
      %v2607 = vpop.f32.mrb[0].mxu0
      %2608 = vmatprep.mubr.bf16.mxu0 0
      %2609 = vmatmul.mubr.bf16.gmra.mrb[0].mxu0 %v2450
      %v2610 = vpop.f32.mrb[0].mxu0
      %v2611 = vadd.f32 0.0, %v2610
      %v2612 = vpop.f32.mrb[0].mxu0
      %v2613 = vpop.f32.mrb[0].mxu0
      %v2614 = vadd.f32 0.0, %v2613
      %v2615 = vpop.f32.mrb[0].mxu0
      %2616 = vmatprep.mubr.bf16.mxu0 0
      %2617 = vmatmul.mubr.bf16.gmra.mrb[0].mxu0 %v2453
      %v2618 = vpop.f32.mrb[0].mxu0
      %v2619 = vadd.f32 0.0, %v2618
      %v2620 = vpop.f32.mrb[0].mxu0
      %v2621 = vpop.f32.mrb[0].mxu0
      %v2622 = vadd.f32 0.0, %v2621
      %v2623 = vpop.f32.mrb[0].mxu0
      %2624 = vmatprep.mubr.bf16.mxu0 0
      %2625 = vmatmul.mubr.bf16.gmra.mrb[0].mxu0 %v2456
      %v2626 = vpop.f32.mrb[0].mxu0
      %v2627 = vadd.f32 0.0, %v2626
      %v2628 = vpop.f32.mrb[0].mxu0
      %v2629 = vpop.f32.mrb[0].mxu0
      %v2630 = vadd.f32 0.0, %v2629
      %v2631 = vpop.f32.mrb[0].mxu0
      %2632 = vmatprep.mubr.bf16.mxu0 0
      %2633 = vmatmul.mubr.bf16.gmra.mrb[0].mxu0 %v2459
      %v2634 = vpop.f32.mrb[0].mxu0
      %v2635 = vadd.f32 0.0, %v2634
      %v2636 = vpop.f32.mrb[0].mxu0
      %v2637 = vpop.f32.mrb[0].mxu0
      %v2638 = vadd.f32 0.0, %v2637
      %v2639 = vpop.f32.mrb[0].mxu0
      %2640 = vmatprep.mubr.bf16.mxu0 0
      %2641 = vmatmul.mubr.bf16.gmra.mrb[0].mxu0 %v2462
      %v2642 = vpop.f32.mrb[0].mxu0
      %v2643 = vadd.f32 0.0, %v2642
      %v2644 = vpop.f32.mrb[0].mxu0
      %v2645 = vpop.f32.mrb[0].mxu0
      %v2646 = vadd.f32 0.0, %v2645
      %v2647 = vpop.f32.mrb[0].mxu0
      %2648 = vmatprep.mubr.bf16.mxu0 0
      %2649 = vmatmul.mubr.bf16.gmra.mrb[0].mxu0 %v2465
      %v2650 = vpop.f32.mrb[0].mxu0
      %v2651 = vadd.f32 0.0, %v2650
      %v2652 = vpop.f32.mrb[0].mxu0
      %v2653 = vpop.f32.mrb[0].mxu0
      %v2654 = vadd.f32 0.0, %v2653
      %v2655 = vpop.f32.mrb[0].mxu0
      %2656 = vmatprep.mubr.bf16.mxu0 0
      %2657 = vmatmul.mubr.bf16.gmra.mrb[0].mxu0 %v2468
      %v2658 = vpop.f32.mrb[0].mxu0
      %v2659 = vadd.f32 0.0, %v2658
      %v2660 = vpop.f32.mrb[0].mxu0
      %v2661 = vpop.f32.mrb[0].mxu0
      %v2662 = vadd.f32 0.0, %v2661
      %v2663 = vpop.f32.mrb[0].mxu0
      %2664 = vmatprep.mubr.bf16.mxu0 0
      %2665 = vmatmul.mubr.bf16.gmra.mrb[0].mxu0 %v2471
      %v2666 = vpop.f32.mrb[0].mxu0
      %v2667 = vadd.f32 0.0, %v2666
      %v2668 = vpop.f32.mrb[0].mxu0
      %v2669 = vpop.f32.mrb[0].mxu0
      %v2670 = vadd.f32 0.0, %v2669
      %v2671 = vpop.f32.mrb[0].mxu0
      %2672 = vmatprep.mubr.bf16.mxu0 0
      %2673 = vmatmul.mubr.bf16.gmra.mrb[0].mxu0 %v2474
      %v2674 = vpop.f32.mrb[0].mxu0
      %v2675 = vadd.f32 0.0, %v2674
      %v2676 = vpop.f32.mrb[0].mxu0
      %v2677 = vpop.f32.mrb[0].mxu0
      %v2678 = vadd.f32 0.0, %v2677
      %v2679 = vpop.f32.mrb[0].mxu0
      %2680 = vmatprep.mubr.bf16.mxu0 0
      %2681 = vmatmul.mubr.bf16.gmra.mrb[0].mxu0 %v2477
      %v2682 = vpop.f32.mrb[0].mxu0
      %v2683 = vadd.f32 0.0, %v2682
      %v2684 = vpop.f32.mrb[0].mxu0
      %v2685 = vpop.f32.mrb[0].mxu0
      %v2686 = vadd.f32 0.0, %v2685
      %v2687 = vpop.f32.mrb[0].mxu0
      %2688 = vmatprep.mubr.bf16.mxu0 0
      %2689 = vmatmul.mubr.bf16.gmra.mrb[0].mxu0 %v2480
      %v2690 = vpop.f32.mrb[0].mxu0
      %v2691 = vadd.f32 0.0, %v2690
      %v2692 = vpop.f32.mrb[0].mxu0
      %v2693 = vpop.f32.mrb[0].mxu0
      %v2694 = vadd.f32 0.0, %v2693
      %v2695 = vpop.f32.mrb[0].mxu0
      %2696 = vmatprep.mubr.bf16.mxu0 0
      %2697 = vmatmul.mubr.bf16.gmra.mrb[0].mxu0 %v2483
      %v2698 = vpop.f32.mrb[0].mxu0
      %v2699 = vadd.f32 0.0, %v2698
      %v2700 = vpop.f32.mrb[0].mxu0
      %v2701 = vpop.f32.mrb[0].mxu0
      %v2702 = vadd.f32 0.0, %v2701
      %v2703 = vpop.f32.mrb[0].mxu0
      %2704 = vmatprep.mubr.bf16.mxu0 0
      %2705 = vmatmul.mubr.bf16.gmra.mrb[0].mxu0 %v2486
      %v2706 = vpop.f32.mrb[0].mxu0
      %v2707 = vadd.f32 0.0, %v2706
      %v2708 = vpop.f32.mrb[0].mxu0
      %v2709 = vpop.f32.mrb[0].mxu0
      %v2710 = vadd.f32 0.0, %v2709
      %v2711 = vpop.f32.mrb[0].mxu0
      %2712 = vdwg.mxu0
      %v2713 = vadd.f32 %v2098, %v2523
      %v2714 = vadd.f32 %v2101, %v2526
      %v2715 = vadd.f32 %v2106, %v2531
      %v2716 = vadd.f32 %v2109, %v2534
      %v2717 = vadd.f32 %v2114, %v2539
      %v2718 = vadd.f32 %v2117, %v2542
      %v2719 = vadd.f32 %v2122, %v2547
      %v2720 = vadd.f32 %v2125, %v2550
      %v2721 = vadd.f32 %v2130, %v2555
      %v2722 = vadd.f32 %v2133, %v2558
      %v2723 = vadd.f32 %v2138, %v2563
      %v2724 = vadd.f32 %v2141, %v2566
      %v2725 = vadd.f32 %v2146, %v2571
      %v2726 = vadd.f32 %v2149, %v2574
      %v2727 = vadd.f32 %v2154, %v2579
      %v2728 = vadd.f32 %v2157, %v2582
      %v2729 = vadd.f32 %v2162, %v2587
      %v2730 = vadd.f32 %v2165, %v2590
      %v2731 = vadd.f32 %v2170, %v2595
      %v2732 = vadd.f32 %v2173, %v2598
      %v2733 = vadd.f32 %v2178, %v2603
      %v2734 = vadd.f32 %v2181, %v2606
      %v2735 = vadd.f32 %v2186, %v2611
      %v2736 = vadd.f32 %v2189, %v2614
      %v2737 = vadd.f32 %v2194, %v2619
      %v2738 = vadd.f32 %v2197, %v2622
      %v2739 = vadd.f32 %v2202, %v2627
      %v2740 = vadd.f32 %v2205, %v2630
      %v2741 = vadd.f32 %v2210, %v2635
      %v2742 = vadd.f32 %v2213, %v2638
      %v2743 = vadd.f32 %v2218, %v2643
      %v2744 = vadd.f32 %v2221, %v2646
      %v2745 = vadd.f32 %v2226, %v2651
      %v2746 = vadd.f32 %v2229, %v2654
      %v2747 = vadd.f32 %v2234, %v2659
      %v2748 = vadd.f32 %v2237, %v2662
      %v2749 = vadd.f32 %v2242, %v2667
      %v2750 = vadd.f32 %v2245, %v2670
      %v2751 = vadd.f32 %v2250, %v2675
      %v2752 = vadd.f32 %v2253, %v2678
      %v2753 = vadd.f32 %v2258, %v2683
      %v2754 = vadd.f32 %v2261, %v2686
      %v2755 = vadd.f32 %v2266, %v2691
      %v2756 = vadd.f32 %v2269, %v2694
      %v2757 = vadd.f32 %v2274, %v2699
      %v2758 = vadd.f32 %v2277, %v2702
      %v2759 = vadd.f32 %v2282, %v2707
      %v2760 = vadd.f32 %v2285, %v2710
      %v2761 = vld [vmem:[#allocation2 + $0x8] sm:$0x80]
      %v2762 = vld [vmem:[#allocation2 + $0x10] sm:$0xff]
      %v2763 = vld [vmem:[#allocation2 + $0x18] sm:$0xff]
      %v2764 = vld [vmem:[#allocation2 + $0x20] sm:$0xff]
      %v2765 = vld [vmem:[#allocation2 + $0x28] sm:$0xff]
      %v2766 = vld [vmem:[#allocation2 + $0x30] sm:$0xff]
      %v2767 = vld [vmem:[#allocation2 + $0x38] sm:$0xff]
      %v2768 = vld [vmem:[#allocation2 + $0x40] sm:$0xff]
      %v2769 = vld [vmem:[#allocation2 + $0x48] sm:$0xff]
      %v2770 = vld [vmem:[#allocation2 + $0x50] sm:$0xff]
      %v2771 = vld [vmem:[#allocation2 + $0x58] sm:$0xff]
      %v2772 = vld [vmem:[#allocation2 + $0x60] sm:$0xff]
      %v2773 = vld [vmem:[#allocation2 + $0x68] sm:$0xff]
      %v2774 = vld [vmem:[#allocation2 + $0x70] sm:$0xff]
      %v2775 = vld [vmem:[#allocation2 + $0x78] sm:$0xff]
      %v2776 = vld [vmem:[#allocation2 + $0x80] sm:$0xff]
      %v2777 = vld [vmem:[#allocation2 + $0x88] sm:$0xff]
      %v2778 = vld [vmem:[#allocation2 + $0x90] sm:$0xff]
      %v2779 = vld [vmem:[#allocation2 + $0x98] sm:$0xff]
      %v2780 = vld [vmem:[#allocation2 + $0xa0] sm:$0xff]
      %v2781 = vld [vmem:[#allocation2 + $0xa8] sm:$0xff]
      %v2782 = vld [vmem:[#allocation2 + $0xb0] sm:$0xff]
      %v2783 = vld [vmem:[#allocation2 + $0xb8] sm:$0xff]
      %v2784 = vld [vmem:[#allocation2 + $0xc0] sm:$0xff]
      %v2785 = vld [vmem:[#allocation2 + $0xc8] sm:$0xff]
      %s2786 = scalar_lea.vmem %s5, 48
      %v2787 = vld [vmem:[%s2786] sm:$0xf]
      %v2788 = vld [vmem:[%s2786 + $0x4] sm:$0xf]
      %v2789 = vld [vmem:[%s2786 + $0x8] sm:$0xf]
      %v2790 = vld [vmem:[%s2786 + $0xc] sm:$0xf]
      %vm2791 = vsmask.f32 256
      %v2793 = vshrl.u32 %v2761, 16
      %v2795 = vrot.slane %v2793, 7
      %v2797 = vshrl.u32 %v2762, 16
      %v2799 = vrot.slane %v2797, 7
      %v2800 = vshll.u32 %v2762, 16
      %v2802 = vor.u32 %v2799, %v2800
      %v2803 = vsel %vm2791, %v2795, %v2802
      %v2805 = vshrl.u32 %v2763, 16
      %v2807 = vrot.slane %v2805, 7
      %v2808 = vshll.u32 %v2763, 16
      %v2810 = vor.u32 %v2807, %v2808
      %v2811 = vsel %vm2791, %v2799, %v2810
      %v2813 = vshrl.u32 %v2764, 16
      %v2815 = vrot.slane %v2813, 7
      %v2816 = vshll.u32 %v2764, 16
      %v2818 = vor.u32 %v2815, %v2816
      %v2819 = vsel %vm2791, %v2807, %v2818
      %v2821 = vshrl.u32 %v2765, 16
      %v2823 = vrot.slane %v2821, 7
      %v2824 = vshll.u32 %v2765, 16
      %v2826 = vor.u32 %v2823, %v2824
      %v2827 = vsel %vm2791, %v2815, %v2826
      %v2829 = vshrl.u32 %v2766, 16
      %v2831 = vrot.slane %v2829, 7
      %v2832 = vshll.u32 %v2766, 16
      %v2834 = vor.u32 %v2831, %v2832
      %v2835 = vsel %vm2791, %v2823, %v2834
      %v2837 = vshrl.u32 %v2767, 16
      %v2839 = vrot.slane %v2837, 7
      %v2840 = vshll.u32 %v2767, 16
      %v2842 = vor.u32 %v2839, %v2840
      %v2843 = vsel %vm2791, %v2831, %v2842
      %v2845 = vshrl.u32 %v2768, 16
      %v2847 = vrot.slane %v2845, 7
      %v2848 = vshll.u32 %v2768, 16
      %v2850 = vor.u32 %v2847, %v2848
      %v2851 = vsel %vm2791, %v2839, %v2850
      %v2853 = vshrl.u32 %v2769, 16
      %v2855 = vrot.slane %v2853, 7
      %v2856 = vshll.u32 %v2769, 16
      %v2858 = vor.u32 %v2855, %v2856
      %v2859 = vsel %vm2791, %v2847, %v2858
      %v2861 = vshrl.u32 %v2770, 16
      %v2863 = vrot.slane %v2861, 7
      %v2864 = vshll.u32 %v2770, 16
      %v2866 = vor.u32 %v2863, %v2864
      %v2867 = vsel %vm2791, %v2855, %v2866
      %v2869 = vshrl.u32 %v2771, 16
      %v2871 = vrot.slane %v2869, 7
      %v2872 = vshll.u32 %v2771, 16
      %v2874 = vor.u32 %v2871, %v2872
      %v2875 = vsel %vm2791, %v2863, %v2874
      %v2877 = vshrl.u32 %v2772, 16
      %v2879 = vrot.slane %v2877, 7
      %v2880 = vshll.u32 %v2772, 16
      %v2882 = vor.u32 %v2879, %v2880
      %v2883 = vsel %vm2791, %v2871, %v2882
      %v2885 = vshrl.u32 %v2773, 16
      %v2887 = vrot.slane %v2885, 7
      %v2888 = vshll.u32 %v2773, 16
      %v2890 = vor.u32 %v2887, %v2888
      %v2891 = vsel %vm2791, %v2879, %v2890
      %v2893 = vshrl.u32 %v2774, 16
      %v2895 = vrot.slane %v2893, 7
      %v2896 = vshll.u32 %v2774, 16
      %v2898 = vor.u32 %v2895, %v2896
      %v2899 = vsel %vm2791, %v2887, %v2898
      %v2901 = vshrl.u32 %v2775, 16
      %v2903 = vrot.slane %v2901, 7
      %v2904 = vshll.u32 %v2775, 16
      %v2906 = vor.u32 %v2903, %v2904
      %v2907 = vsel %vm2791, %v2895, %v2906
      %v2909 = vshrl.u32 %v2776, 16
      %v2911 = vrot.slane %v2909, 7
      %v2912 = vshll.u32 %v2776, 16
      %v2914 = vor.u32 %v2911, %v2912
      %v2915 = vsel %vm2791, %v2903, %v2914
      %v2917 = vshrl.u32 %v2777, 16
      %v2919 = vrot.slane %v2917, 7
      %v2920 = vshll.u32 %v2777, 16
      %v2922 = vor.u32 %v2919, %v2920
      %v2923 = vsel %vm2791, %v2911, %v2922
      %v2925 = vshrl.u32 %v2778, 16
      %v2927 = vrot.slane %v2925, 7
      %v2928 = vshll.u32 %v2778, 16
      %v2930 = vor.u32 %v2927, %v2928
      %v2931 = vsel %vm2791, %v2919, %v2930
      %v2933 = vshrl.u32 %v2779, 16
      %v2935 = vrot.slane %v2933, 7
      %v2936 = vshll.u32 %v2779, 16
      %v2938 = vor.u32 %v2935, %v2936
      %v2939 = vsel %vm2791, %v2927, %v2938
      %v2941 = vshrl.u32 %v2780, 16
      %v2943 = vrot.slane %v2941, 7
      %v2944 = vshll.u32 %v2780, 16
      %v2946 = vor.u32 %v2943, %v2944
      %v2947 = vsel %vm2791, %v2935, %v2946
      %v2949 = vshrl.u32 %v2781, 16
      %v2951 = vrot.slane %v2949, 7
      %v2952 = vshll.u32 %v2781, 16
      %v2954 = vor.u32 %v2951, %v2952
      %v2955 = vsel %vm2791, %v2943, %v2954
      %v2957 = vshrl.u32 %v2782, 16
      %v2959 = vrot.slane %v2957, 7
      %v2960 = vshll.u32 %v2782, 16
      %v2962 = vor.u32 %v2959, %v2960
      %v2963 = vsel %vm2791, %v2951, %v2962
      %v2965 = vshrl.u32 %v2783, 16
      %v2967 = vrot.slane %v2965, 7
      %v2968 = vshll.u32 %v2783, 16
      %v2970 = vor.u32 %v2967, %v2968
      %v2971 = vsel %vm2791, %v2959, %v2970
      %v2973 = vshrl.u32 %v2784, 16
      %v2975 = vrot.slane %v2973, 7
      %v2976 = vshll.u32 %v2784, 16
      %v2978 = vor.u32 %v2975, %v2976
      %v2979 = vsel %vm2791, %v2967, %v2978
      %v2981 = vshrl.u32 %v2785, 16
      %v2983 = vrot.slane %v2981, 7
      %v2984 = vshll.u32 %v2785, 16
      %v2986 = vor.u32 %v2983, %v2984
      %v2987 = vsel %vm2791, %v2975, %v2986
      %v2992 = vunpack.c.l.b16 %v2787
      %v2993 = vunpack.c.l.b16 %v2788
      %v2994 = vunpack.c.l.b16 %v2789
      %v2995 = vunpack.c.l.b16 %v2790
      %v2996 = vpack.c.b16 %v2993, %v2992
      %v2997 = vpack.c.b16 %v2995, %v2994
      %v3001 = vsel %vm348, %v2803, 0
      %v3004 = vsel %vm348, %v2811, 0
      %v3007 = vsel %vm348, %v2819, 0
      %v3010 = vsel %vm348, %v2827, 0
      %v3013 = vsel %vm348, %v2835, 0
      %v3016 = vsel %vm348, %v2843, 0
      %v3019 = vsel %vm348, %v2851, 0
      %v3022 = vsel %vm348, %v2859, 0
      %v3025 = vsel %vm348, %v2867, 0
      %v3028 = vsel %vm348, %v2875, 0
      %v3031 = vsel %vm348, %v2883, 0
      %v3034 = vsel %vm348, %v2891, 0
      %v3037 = vsel %vm348, %v2899, 0
      %v3040 = vsel %vm348, %v2907, 0
      %v3043 = vsel %vm348, %v2915, 0
      %v3046 = vsel %vm348, %v2923, 0
      %v3049 = vsel %vm348, %v2931, 0
      %v3052 = vsel %vm348, %v2939, 0
      %v3055 = vsel %vm348, %v2947, 0
      %v3058 = vsel %vm348, %v2955, 0
      %v3061 = vsel %vm348, %v2963, 0
      %v3064 = vsel %vm348, %v2971, 0
      %v3067 = vsel %vm348, %v2979, 0
      %v3070 = vsel %vm348, %v2987, 0
      %3072 = vmatprep.subr.bf16.mxu0 0
      %3073 = vmatpush1.bf16.msra.mxu0 %v2996
      %3074 = vmatprep.subr.bf16.mxu0 0
      %3075 = vmatpush1.bf16.msra.mxu0 %v2997
      %3076 = vmatprep.subr.bf16.mxu0 0
      %3077 = vmatpush1.bf16.msra.mxu0 0
      %3078 = vmatprep.subr.bf16.mxu0 0
      %3079 = vmatpush1.bf16.msra.mxu0 0
      %3080 = vmatprep.subr.bf16.mxu0 0
      %3081 = vmatpush1.bf16.msra.mxu0 0
      %3082 = vmatprep.subr.bf16.mxu0 0
      %3083 = vmatpush1.bf16.msra.mxu0 0
      %3084 = vmatprep.subr.bf16.mxu0 0
      %3085 = vmatpush1.bf16.msra.mxu0 0
      %3086 = vmatprep.subr.bf16.mxu0 0
      %3087 = vmatpush1.bf16.msra.mxu0 0
      %3088 = vmatprep.subr.bf16.mxu0 0
      %3089 = vmatpush1.bf16.msra.mxu0 0
      %3090 = vmatprep.subr.bf16.mxu0 0
      %3091 = vmatpush1.bf16.msra.mxu0 0
      %3092 = vmatprep.subr.bf16.mxu0 0
      %3093 = vmatpush1.bf16.msra.mxu0 0
      %3094 = vmatprep.subr.bf16.mxu0 0
      %3095 = vmatpush1.bf16.msra.mxu0 0
      %3096 = vmatprep.subr.bf16.mxu0 0
      %3097 = vmatpush1.bf16.msra.mxu0 0
      %3098 = vmatprep.subr.bf16.mxu0 0
      %3099 = vmatpush1.bf16.msra.mxu0 0
      %3100 = vmatprep.subr.bf16.mxu0 0
      %3101 = vmatpush1.bf16.msra.mxu0 0
      %3102 = vmatprep.subr.bf16.mxu0 0
      %3103 = vmatpush1.bf16.msra.mxu0 0
      %3104 = vmatprep.mubr.bf16.mxu0 0
      %3105 = vmatmul.mubr.bf16.gmra.mrb[0].mxu0 %v3001
      %v3106 = vpop.f32.mrb[0].mxu0
      %v3107 = vadd.f32 0.0, %v3106
      %v3108 = vpop.f32.mrb[0].mxu0
      %v3109 = vpop.f32.mrb[0].mxu0
      %v3110 = vadd.f32 0.0, %v3109
      %v3111 = vpop.f32.mrb[0].mxu0
      %3112 = vmatprep.mubr.bf16.mxu0 0
      %3113 = vmatmul.mubr.bf16.gmra.mrb[0].mxu0 %v3004
      %v3114 = vpop.f32.mrb[0].mxu0
      %v3115 = vadd.f32 0.0, %v3114
      %v3116 = vpop.f32.mrb[0].mxu0
      %v3117 = vpop.f32.mrb[0].mxu0
      %v3118 = vadd.f32 0.0, %v3117
      %v3119 = vpop.f32.mrb[0].mxu0
      %3120 = vmatprep.mubr.bf16.mxu0 0
      %3121 = vmatmul.mubr.bf16.gmra.mrb[0].mxu0 %v3007
      %v3122 = vpop.f32.mrb[0].mxu0
      %v3123 = vadd.f32 0.0, %v3122
      %v3124 = vpop.f32.mrb[0].mxu0
      %v3125 = vpop.f32.mrb[0].mxu0
      %v3126 = vadd.f32 0.0, %v3125
      %v3127 = vpop.f32.mrb[0].mxu0
      %3128 = vmatprep.mubr.bf16.mxu0 0
      %3129 = vmatmul.mubr.bf16.gmra.mrb[0].mxu0 %v3010
      %v3130 = vpop.f32.mrb[0].mxu0
      %v3131 = vadd.f32 0.0, %v3130
      %v3132 = vpop.f32.mrb[0].mxu0
      %v3133 = vpop.f32.mrb[0].mxu0
      %v3134 = vadd.f32 0.0, %v3133
      %v3135 = vpop.f32.mrb[0].mxu0
      %3136 = vmatprep.mubr.bf16.mxu0 0
      %3137 = vmatmul.mubr.bf16.gmra.mrb[0].mxu0 %v3013
      %v3138 = vpop.f32.mrb[0].mxu0
      %v3139 = vadd.f32 0.0, %v3138
      %v3140 = vpop.f32.mrb[0].mxu0
      %v3141 = vpop.f32.mrb[0].mxu0
      %v3142 = vadd.f32 0.0, %v3141
      %v3143 = vpop.f32.mrb[0].mxu0
      %3144 = vmatprep.mubr.bf16.mxu0 0
      %3145 = vmatmul.mubr.bf16.gmra.mrb[0].mxu0 %v3016
      %v3146 = vpop.f32.mrb[0].mxu0
      %v3147 = vadd.f32 0.0, %v3146
      %v3148 = vpop.f32.mrb[0].mxu0
      %v3149 = vpop.f32.mrb[0].mxu0
      %v3150 = vadd.f32 0.0, %v3149
      %v3151 = vpop.f32.mrb[0].mxu0
      %3152 = vmatprep.mubr.bf16.mxu0 0
      %3153 = vmatmul.mubr.bf16.gmra.mrb[0].mxu0 %v3019
      %v3154 = vpop.f32.mrb[0].mxu0
      %v3155 = vadd.f32 0.0, %v3154
      %v3156 = vpop.f32.mrb[0].mxu0
      %v3157 = vpop.f32.mrb[0].mxu0
      %v3158 = vadd.f32 0.0, %v3157
      %v3159 = vpop.f32.mrb[0].mxu0
      %3160 = vmatprep.mubr.bf16.mxu0 0
      %3161 = vmatmul.mubr.bf16.gmra.mrb[0].mxu0 %v3022
      %v3162 = vpop.f32.mrb[0].mxu0
      %v3163 = vadd.f32 0.0, %v3162
      %v3164 = vpop.f32.mrb[0].mxu0
      %v3165 = vpop.f32.mrb[0].mxu0
      %v3166 = vadd.f32 0.0, %v3165
      %v3167 = vpop.f32.mrb[0].mxu0
      %3168 = vmatprep.mubr.bf16.mxu0 0
      %3169 = vmatmul.mubr.bf16.gmra.mrb[0].mxu0 %v3025
      %v3170 = vpop.f32.mrb[0].mxu0
      %v3171 = vadd.f32 0.0, %v3170
      %v3172 = vpop.f32.mrb[0].mxu0
      %v3173 = vpop.f32.mrb[0].mxu0
      %v3174 = vadd.f32 0.0, %v3173
      %v3175 = vpop.f32.mrb[0].mxu0
      %3176 = vmatprep.mubr.bf16.mxu0 0
      %3177 = vmatmul.mubr.bf16.gmra.mrb[0].mxu0 %v3028
      %v3178 = vpop.f32.mrb[0].mxu0
      %v3179 = vadd.f32 0.0, %v3178
      %v3180 = vpop.f32.mrb[0].mxu0
      %v3181 = vpop.f32.mrb[0].mxu0
      %v3182 = vadd.f32 0.0, %v3181
      %v3183 = vpop.f32.mrb[0].mxu0
      %3184 = vmatprep.mubr.bf16.mxu0 0
      %3185 = vmatmul.mubr.bf16.gmra.mrb[0].mxu0 %v3031
      %v3186 = vpop.f32.mrb[0].mxu0
      %v3187 = vadd.f32 0.0, %v3186
      %v3188 = vpop.f32.mrb[0].mxu0
      %v3189 = vpop.f32.mrb[0].mxu0
      %v3190 = vadd.f32 0.0, %v3189
      %v3191 = vpop.f32.mrb[0].mxu0
      %3192 = vmatprep.mubr.bf16.mxu0 0
      %3193 = vmatmul.mubr.bf16.gmra.mrb[0].mxu0 %v3034
      %v3194 = vpop.f32.mrb[0].mxu0
      %v3195 = vadd.f32 0.0, %v3194
      %v3196 = vpop.f32.mrb[0].mxu0
      %v3197 = vpop.f32.mrb[0].mxu0
      %v3198 = vadd.f32 0.0, %v3197
      %v3199 = vpop.f32.mrb[0].mxu0
      %3200 = vmatprep.mubr.bf16.mxu0 0
      %3201 = vmatmul.mubr.bf16.gmra.mrb[0].mxu0 %v3037
      %v3202 = vpop.f32.mrb[0].mxu0
      %v3203 = vadd.f32 0.0, %v3202
      %v3204 = vpop.f32.mrb[0].mxu0
      %v3205 = vpop.f32.mrb[0].mxu0
      %v3206 = vadd.f32 0.0, %v3205
      %v3207 = vpop.f32.mrb[0].mxu0
      %3208 = vmatprep.mubr.bf16.mxu0 0
      %3209 = vmatmul.mubr.bf16.gmra.mrb[0].mxu0 %v3040
      %v3210 = vpop.f32.mrb[0].mxu0
      %v3211 = vadd.f32 0.0, %v3210
      %v3212 = vpop.f32.mrb[0].mxu0
      %v3213 = vpop.f32.mrb[0].mxu0
      %v3214 = vadd.f32 0.0, %v3213
      %v3215 = vpop.f32.mrb[0].mxu0
      %3216 = vmatprep.mubr.bf16.mxu0 0
      %3217 = vmatmul.mubr.bf16.gmra.mrb[0].mxu0 %v3043
      %v3218 = vpop.f32.mrb[0].mxu0
      %v3219 = vadd.f32 0.0, %v3218
      %v3220 = vpop.f32.mrb[0].mxu0
      %v3221 = vpop.f32.mrb[0].mxu0
      %v3222 = vadd.f32 0.0, %v3221
      %v3223 = vpop.f32.mrb[0].mxu0
      %3224 = vmatprep.mubr.bf16.mxu0 0
      %3225 = vmatmul.mubr.bf16.gmra.mrb[0].mxu0 %v3046
      %v3226 = vpop.f32.mrb[0].mxu0
      %v3227 = vadd.f32 0.0, %v3226
      %v3228 = vpop.f32.mrb[0].mxu0
      %v3229 = vpop.f32.mrb[0].mxu0
      %v3230 = vadd.f32 0.0, %v3229
      %v3231 = vpop.f32.mrb[0].mxu0
      %3232 = vmatprep.mubr.bf16.mxu0 0
      %3233 = vmatmul.mubr.bf16.gmra.mrb[0].mxu0 %v3049
      %v3234 = vpop.f32.mrb[0].mxu0
      %v3235 = vadd.f32 0.0, %v3234
      %v3236 = vpop.f32.mrb[0].mxu0
      %v3237 = vpop.f32.mrb[0].mxu0
      %v3238 = vadd.f32 0.0, %v3237
      %v3239 = vpop.f32.mrb[0].mxu0
      %3240 = vmatprep.mubr.bf16.mxu0 0
      %3241 = vmatmul.mubr.bf16.gmra.mrb[0].mxu0 %v3052
      %v3242 = vpop.f32.mrb[0].mxu0
      %v3243 = vadd.f32 0.0, %v3242
      %v3244 = vpop.f32.mrb[0].mxu0
      %v3245 = vpop.f32.mrb[0].mxu0
      %v3246 = vadd.f32 0.0, %v3245
      %v3247 = vpop.f32.mrb[0].mxu0
      %3248 = vmatprep.mubr.bf16.mxu0 0
      %3249 = vmatmul.mubr.bf16.gmra.mrb[0].mxu0 %v3055
      %v3250 = vpop.f32.mrb[0].mxu0
      %v3251 = vadd.f32 0.0, %v3250
      %v3252 = vpop.f32.mrb[0].mxu0
      %v3253 = vpop.f32.mrb[0].mxu0
      %v3254 = vadd.f32 0.0, %v3253
      %v3255 = vpop.f32.mrb[0].mxu0
      %3256 = vmatprep.mubr.bf16.mxu0 0
      %3257 = vmatmul.mubr.bf16.gmra.mrb[0].mxu0 %v3058
      %v3258 = vpop.f32.mrb[0].mxu0
      %v3259 = vadd.f32 0.0, %v3258
      %v3260 = vpop.f32.mrb[0].mxu0
      %v3261 = vpop.f32.mrb[0].mxu0
      %v3262 = vadd.f32 0.0, %v3261
      %v3263 = vpop.f32.mrb[0].mxu0
      %3264 = vmatprep.mubr.bf16.mxu0 0
      %3265 = vmatmul.mubr.bf16.gmra.mrb[0].mxu0 %v3061
      %v3266 = vpop.f32.mrb[0].mxu0
      %v3267 = vadd.f32 0.0, %v3266
      %v3268 = vpop.f32.mrb[0].mxu0
      %v3269 = vpop.f32.mrb[0].mxu0
      %v3270 = vadd.f32 0.0, %v3269
      %v3271 = vpop.f32.mrb[0].mxu0
      %3272 = vmatprep.mubr.bf16.mxu0 0
      %3273 = vmatmul.mubr.bf16.gmra.mrb[0].mxu0 %v3064
      %v3274 = vpop.f32.mrb[0].mxu0
      %v3275 = vadd.f32 0.0, %v3274
      %v3276 = vpop.f32.mrb[0].mxu0
      %v3277 = vpop.f32.mrb[0].mxu0
      %v3278 = vadd.f32 0.0, %v3277
      %v3279 = vpop.f32.mrb[0].mxu0
      %3280 = vmatprep.mubr.bf16.mxu0 0
      %3281 = vmatmul.mubr.bf16.gmra.mrb[0].mxu0 %v3067
      %v3282 = vpop.f32.mrb[0].mxu0
      %v3283 = vadd.f32 0.0, %v3282
      %v3284 = vpop.f32.mrb[0].mxu0
      %v3285 = vpop.f32.mrb[0].mxu0
      %v3286 = vadd.f32 0.0, %v3285
      %v3287 = vpop.f32.mrb[0].mxu0
      %3288 = vmatprep.mubr.bf16.mxu0 0
      %3289 = vmatmul.mubr.bf16.gmra.mrb[0].mxu0 %v3070
      %v3290 = vpop.f32.mrb[0].mxu0
      %v3291 = vadd.f32 0.0, %v3290
      %v3292 = vpop.f32.mrb[0].mxu0
      %v3293 = vpop.f32.mrb[0].mxu0
      %v3294 = vadd.f32 0.0, %v3293
      %v3295 = vpop.f32.mrb[0].mxu0
      %3296 = vdwg.mxu0
      %v3297 = vadd.f32 %v2713, %v3107
      %v3298 = vadd.f32 %v2714, %v3110
      %v3299 = vadd.f32 %v2715, %v3115
      %v3300 = vadd.f32 %v2716, %v3118
      %v3301 = vadd.f32 %v2717, %v3123
      %v3302 = vadd.f32 %v2718, %v3126
      %v3303 = vadd.f32 %v2719, %v3131
      %v3304 = vadd.f32 %v2720, %v3134
      %v3305 = vadd.f32 %v2721, %v3139
      %v3306 = vadd.f32 %v2722, %v3142
      %v3307 = vadd.f32 %v2723, %v3147
      %v3308 = vadd.f32 %v2724, %v3150
      %v3309 = vadd.f32 %v2725, %v3155
      %v3310 = vadd.f32 %v2726, %v3158
      %v3311 = vadd.f32 %v2727, %v3163
      %v3312 = vadd.f32 %v2728, %v3166
      %v3313 = vadd.f32 %v2729, %v3171
      %v3314 = vadd.f32 %v2730, %v3174
      %v3315 = vadd.f32 %v2731, %v3179
      %v3316 = vadd.f32 %v2732, %v3182
      %v3317 = vadd.f32 %v2733, %v3187
      %v3318 = vadd.f32 %v2734, %v3190
      %v3319 = vadd.f32 %v2735, %v3195
      %v3320 = vadd.f32 %v2736, %v3198
      %v3321 = vadd.f32 %v2737, %v3203
      %v3322 = vadd.f32 %v2738, %v3206
      %v3323 = vadd.f32 %v2739, %v3211
      %v3324 = vadd.f32 %v2740, %v3214
      %v3325 = vadd.f32 %v2741, %v3219
      %v3326 = vadd.f32 %v2742, %v3222
      %v3327 = vadd.f32 %v2743, %v3227
      %v3328 = vadd.f32 %v2744, %v3230
      %v3329 = vadd.f32 %v2745, %v3235
      %v3330 = vadd.f32 %v2746, %v3238
      %v3331 = vadd.f32 %v2747, %v3243
      %v3332 = vadd.f32 %v2748, %v3246
      %v3333 = vadd.f32 %v2749, %v3251
      %v3334 = vadd.f32 %v2750, %v3254
      %v3335 = vadd.f32 %v2751, %v3259
      %v3336 = vadd.f32 %v2752, %v3262
      %v3337 = vadd.f32 %v2753, %v3267
      %v3338 = vadd.f32 %v2754, %v3270
      %v3339 = vadd.f32 %v2755, %v3275
      %v3340 = vadd.f32 %v2756, %v3278
      %v3341 = vadd.f32 %v2757, %v3283
      %v3342 = vadd.f32 %v2758, %v3286
      %v3343 = vadd.f32 %v2759, %v3291
      %v3344 = vadd.f32 %v2760, %v3294
      %s3345 = scalar_lea.vmem %s5, 64
      %v3346 = vld [vmem:[%s3345] sm:$0xf]
      %v3347 = vld [vmem:[%s3345 + $0x4] sm:$0xf]
      %v3348 = vld [vmem:[%s3345 + $0x8] sm:$0xf]
      %v3349 = vld [vmem:[%s3345 + $0xc] sm:$0xf]
      %v3354 = vunpack.c.l.b16 %v3346
      %v3355 = vunpack.c.l.b16 %v3347
      %v3356 = vunpack.c.l.b16 %v3348
      %v3357 = vunpack.c.l.b16 %v3349
      %v3358 = vpack.c.b16 %v3355, %v3354
      %v3359 = vpack.c.b16 %v3357, %v3356
      %v3362 = vsel %vm348, %v2762, 0
      %v3364 = vsel %vm348, %v2763, 0
      %v3366 = vsel %vm348, %v2764, 0
      %v3368 = vsel %vm348, %v2765, 0
      %v3370 = vsel %vm348, %v2766, 0
      %v3372 = vsel %vm348, %v2767, 0
      %v3374 = vsel %vm348, %v2768, 0
      %v3376 = vsel %vm348, %v2769, 0
      %v3378 = vsel %vm348, %v2770, 0
      %v3380 = vsel %vm348, %v2771, 0
      %v3382 = vsel %vm348, %v2772, 0
      %v3384 = vsel %vm348, %v2773, 0
      %v3386 = vsel %vm348, %v2774, 0
      %v3388 = vsel %vm348, %v2775, 0
      %v3390 = vsel %vm348, %v2776, 0
      %v3392 = vsel %vm348, %v2777, 0
      %v3394 = vsel %vm348, %v2778, 0
      %v3396 = vsel %vm348, %v2779, 0
      %v3398 = vsel %vm348, %v2780, 0
      %v3400 = vsel %vm348, %v2781, 0
      %v3402 = vsel %vm348, %v2782, 0
      %v3404 = vsel %vm348, %v2783, 0
      %v3406 = vsel %vm348, %v2784, 0
      %v3408 = vsel %vm348, %v2785, 0
      %3410 = vmatprep.subr.bf16.mxu0 0
      %3411 = vmatpush1.bf16.msra.mxu0 %v3358
      %3412 = vmatprep.subr.bf16.mxu0 0
      %3413 = vmatpush1.bf16.msra.mxu0 %v3359
      %3414 = vmatprep.subr.bf16.mxu0 0
      %3415 = vmatpush1.bf16.msra.mxu0 0
      %3416 = vmatprep.subr.bf16.mxu0 0
      %3417 = vmatpush1.bf16.msra.mxu0 0
      %3418 = vmatprep.subr.bf16.mxu0 0
      %3419 = vmatpush1.bf16.msra.mxu0 0
      %3420 = vmatprep.subr.bf16.mxu0 0
      %3421 = vmatpush1.bf16.msra.mxu0 0
      %3422 = vmatprep.subr.bf16.mxu0 0
      %3423 = vmatpush1.bf16.msra.mxu0 0
      %3424 = vmatprep.subr.bf16.mxu0 0
      %3425 = vmatpush1.bf16.msra.mxu0 0
      %3426 = vmatprep.subr.bf16.mxu0 0
      %3427 = vmatpush1.bf16.msra.mxu0 0
      %3428 = vmatprep.subr.bf16.mxu0 0
      %3429 = vmatpush1.bf16.msra.mxu0 0
      %3430 = vmatprep.subr.bf16.mxu0 0
      %3431 = vmatpush1.bf16.msra.mxu0 0
      %3432 = vmatprep.subr.bf16.mxu0 0
      %3433 = vmatpush1.bf16.msra.mxu0 0
      %3434 = vmatprep.subr.bf16.mxu0 0
      %3435 = vmatpush1.bf16.msra.mxu0 0
      %3436 = vmatprep.subr.bf16.mxu0 0
      %3437 = vmatpush1.bf16.msra.mxu0 0
      %3438 = vmatprep.subr.bf16.mxu0 0
      %3439 = vmatpush1.bf16.msra.mxu0 0
      %3440 = vmatprep.subr.bf16.mxu0 0
      %3441 = vmatpush1.bf16.msra.mxu0 0
      %3442 = vmatprep.mubr.bf16.mxu0 0
      %3443 = vmatmul.mubr.bf16.gmra.mrb[0].mxu0 %v3362
      %v3444 = vpop.f32.mrb[0].mxu0
      %v3445 = vadd.f32 0.0, %v3444
      %v3446 = vpop.f32.mrb[0].mxu0
      %v3447 = vpop.f32.mrb[0].mxu0
      %v3448 = vadd.f32 0.0, %v3447
      %v3449 = vpop.f32.mrb[0].mxu0
      %3450 = vmatprep.mubr.bf16.mxu0 0
      %3451 = vmatmul.mubr.bf16.gmra.mrb[0].mxu0 %v3364
      %v3452 = vpop.f32.mrb[0].mxu0
      %v3453 = vadd.f32 0.0, %v3452
      %v3454 = vpop.f32.mrb[0].mxu0
      %v3455 = vpop.f32.mrb[0].mxu0
      %v3456 = vadd.f32 0.0, %v3455
      %v3457 = vpop.f32.mrb[0].mxu0
      %3458 = vmatprep.mubr.bf16.mxu0 0
      %3459 = vmatmul.mubr.bf16.gmra.mrb[0].mxu0 %v3366
      %v3460 = vpop.f32.mrb[0].mxu0
      %v3461 = vadd.f32 0.0, %v3460
      %v3462 = vpop.f32.mrb[0].mxu0
      %v3463 = vpop.f32.mrb[0].mxu0
      %v3464 = vadd.f32 0.0, %v3463
      %v3465 = vpop.f32.mrb[0].mxu0
      %3466 = vmatprep.mubr.bf16.mxu0 0
      %3467 = vmatmul.mubr.bf16.gmra.mrb[0].mxu0 %v3368
      %v3468 = vpop.f32.mrb[0].mxu0
      %v3469 = vadd.f32 0.0, %v3468
      %v3470 = vpop.f32.mrb[0].mxu0
      %v3471 = vpop.f32.mrb[0].mxu0
      %v3472 = vadd.f32 0.0, %v3471
      %v3473 = vpop.f32.mrb[0].mxu0
      %3474 = vmatprep.mubr.bf16.mxu0 0
      %3475 = vmatmul.mubr.bf16.gmra.mrb[0].mxu0 %v3370
      %v3476 = vpop.f32.mrb[0].mxu0
      %v3477 = vadd.f32 0.0, %v3476
      %v3478 = vpop.f32.mrb[0].mxu0
      %v3479 = vpop.f32.mrb[0].mxu0
      %v3480 = vadd.f32 0.0, %v3479
      %v3481 = vpop.f32.mrb[0].mxu0
      %3482 = vmatprep.mubr.bf16.mxu0 0
      %3483 = vmatmul.mubr.bf16.gmra.mrb[0].mxu0 %v3372
      %v3484 = vpop.f32.mrb[0].mxu0
      %v3485 = vadd.f32 0.0, %v3484
      %v3486 = vpop.f32.mrb[0].mxu0
      %v3487 = vpop.f32.mrb[0].mxu0
      %v3488 = vadd.f32 0.0, %v3487
      %v3489 = vpop.f32.mrb[0].mxu0
      %3490 = vmatprep.mubr.bf16.mxu0 0
      %3491 = vmatmul.mubr.bf16.gmra.mrb[0].mxu0 %v3374
      %v3492 = vpop.f32.mrb[0].mxu0
      %v3493 = vadd.f32 0.0, %v3492
      %v3494 = vpop.f32.mrb[0].mxu0
      %v3495 = vpop.f32.mrb[0].mxu0
      %v3496 = vadd.f32 0.0, %v3495
      %v3497 = vpop.f32.mrb[0].mxu0
      %3498 = vmatprep.mubr.bf16.mxu0 0
      %3499 = vmatmul.mubr.bf16.gmra.mrb[0].mxu0 %v3376
      %v3500 = vpop.f32.mrb[0].mxu0
      %v3501 = vadd.f32 0.0, %v3500
      %v3502 = vpop.f32.mrb[0].mxu0
      %v3503 = vpop.f32.mrb[0].mxu0
      %v3504 = vadd.f32 0.0, %v3503
      %v3505 = vpop.f32.mrb[0].mxu0
      %3506 = vmatprep.mubr.bf16.mxu0 0
      %3507 = vmatmul.mubr.bf16.gmra.mrb[0].mxu0 %v3378
      %v3508 = vpop.f32.mrb[0].mxu0
      %v3509 = vadd.f32 0.0, %v3508
      %v3510 = vpop.f32.mrb[0].mxu0
      %v3511 = vpop.f32.mrb[0].mxu0
      %v3512 = vadd.f32 0.0, %v3511
      %v3513 = vpop.f32.mrb[0].mxu0
      %3514 = vmatprep.mubr.bf16.mxu0 0
      %3515 = vmatmul.mubr.bf16.gmra.mrb[0].mxu0 %v3380
      %v3516 = vpop.f32.mrb[0].mxu0
      %v3517 = vadd.f32 0.0, %v3516
      %v3518 = vpop.f32.mrb[0].mxu0
      %v3519 = vpop.f32.mrb[0].mxu0
      %v3520 = vadd.f32 0.0, %v3519
      %v3521 = vpop.f32.mrb[0].mxu0
      %3522 = vmatprep.mubr.bf16.mxu0 0
      %3523 = vmatmul.mubr.bf16.gmra.mrb[0].mxu0 %v3382
      %v3524 = vpop.f32.mrb[0].mxu0
      %v3525 = vadd.f32 0.0, %v3524
      %v3526 = vpop.f32.mrb[0].mxu0
      %v3527 = vpop.f32.mrb[0].mxu0
      %v3528 = vadd.f32 0.0, %v3527
      %v3529 = vpop.f32.mrb[0].mxu0
      %3530 = vmatprep.mubr.bf16.mxu0 0
      %3531 = vmatmul.mubr.bf16.gmra.mrb[0].mxu0 %v3384
      %v3532 = vpop.f32.mrb[0].mxu0
      %v3533 = vadd.f32 0.0, %v3532
      %v3534 = vpop.f32.mrb[0].mxu0
      %v3535 = vpop.f32.mrb[0].mxu0
      %v3536 = vadd.f32 0.0, %v3535
      %v3537 = vpop.f32.mrb[0].mxu0
      %3538 = vmatprep.mubr.bf16.mxu0 0
      %3539 = vmatmul.mubr.bf16.gmra.mrb[0].mxu0 %v3386
      %v3540 = vpop.f32.mrb[0].mxu0
      %v3541 = vadd.f32 0.0, %v3540
      %v3542 = vpop.f32.mrb[0].mxu0
      %v3543 = vpop.f32.mrb[0].mxu0
      %v3544 = vadd.f32 0.0, %v3543
      %v3545 = vpop.f32.mrb[0].mxu0
      %3546 = vmatprep.mubr.bf16.mxu0 0
      %3547 = vmatmul.mubr.bf16.gmra.mrb[0].mxu0 %v3388
      %v3548 = vpop.f32.mrb[0].mxu0
      %v3549 = vadd.f32 0.0, %v3548
      %v3550 = vpop.f32.mrb[0].mxu0
      %v3551 = vpop.f32.mrb[0].mxu0
      %v3552 = vadd.f32 0.0, %v3551
      %v3553 = vpop.f32.mrb[0].mxu0
      %3554 = vmatprep.mubr.bf16.mxu0 0
      %3555 = vmatmul.mubr.bf16.gmra.mrb[0].mxu0 %v3390
      %v3556 = vpop.f32.mrb[0].mxu0
      %v3557 = vadd.f32 0.0, %v3556
      %v3558 = vpop.f32.mrb[0].mxu0
      %v3559 = vpop.f32.mrb[0].mxu0
      %v3560 = vadd.f32 0.0, %v3559
      %v3561 = vpop.f32.mrb[0].mxu0
      %3562 = vmatprep.mubr.bf16.mxu0 0
      %3563 = vmatmul.mubr.bf16.gmra.mrb[0].mxu0 %v3392
      %v3564 = vpop.f32.mrb[0].mxu0
      %v3565 = vadd.f32 0.0, %v3564
      %v3566 = vpop.f32.mrb[0].mxu0
      %v3567 = vpop.f32.mrb[0].mxu0
      %v3568 = vadd.f32 0.0, %v3567
      %v3569 = vpop.f32.mrb[0].mxu0
      %3570 = vmatprep.mubr.bf16.mxu0 0
      %3571 = vmatmul.mubr.bf16.gmra.mrb[0].mxu0 %v3394
      %v3572 = vpop.f32.mrb[0].mxu0
      %v3573 = vadd.f32 0.0, %v3572
      %v3574 = vpop.f32.mrb[0].mxu0
      %v3575 = vpop.f32.mrb[0].mxu0
      %v3576 = vadd.f32 0.0, %v3575
      %v3577 = vpop.f32.mrb[0].mxu0
      %3578 = vmatprep.mubr.bf16.mxu0 0
      %3579 = vmatmul.mubr.bf16.gmra.mrb[0].mxu0 %v3396
      %v3580 = vpop.f32.mrb[0].mxu0
      %v3581 = vadd.f32 0.0, %v3580
      %v3582 = vpop.f32.mrb[0].mxu0
      %v3583 = vpop.f32.mrb[0].mxu0
      %v3584 = vadd.f32 0.0, %v3583
      %v3585 = vpop.f32.mrb[0].mxu0
      %3586 = vmatprep.mubr.bf16.mxu0 0
      %3587 = vmatmul.mubr.bf16.gmra.mrb[0].mxu0 %v3398
      %v3588 = vpop.f32.mrb[0].mxu0
      %v3589 = vadd.f32 0.0, %v3588
      %v3590 = vpop.f32.mrb[0].mxu0
      %v3591 = vpop.f32.mrb[0].mxu0
      %v3592 = vadd.f32 0.0, %v3591
      %v3593 = vpop.f32.mrb[0].mxu0
      %3594 = vmatprep.mubr.bf16.mxu0 0
      %3595 = vmatmul.mubr.bf16.gmra.mrb[0].mxu0 %v3400
      %v3596 = vpop.f32.mrb[0].mxu0
      %v3597 = vadd.f32 0.0, %v3596
      %v3598 = vpop.f32.mrb[0].mxu0
      %v3599 = vpop.f32.mrb[0].mxu0
      %v3600 = vadd.f32 0.0, %v3599
      %v3601 = vpop.f32.mrb[0].mxu0
      %3602 = vmatprep.mubr.bf16.mxu0 0
      %3603 = vmatmul.mubr.bf16.gmra.mrb[0].mxu0 %v3402
      %v3604 = vpop.f32.mrb[0].mxu0
      %v3605 = vadd.f32 0.0, %v3604
      %v3606 = vpop.f32.mrb[0].mxu0
      %v3607 = vpop.f32.mrb[0].mxu0
      %v3608 = vadd.f32 0.0, %v3607
      %v3609 = vpop.f32.mrb[0].mxu0
      %3610 = vmatprep.mubr.bf16.mxu0 0
      %3611 = vmatmul.mubr.bf16.gmra.mrb[0].mxu0 %v3404
      %v3612 = vpop.f32.mrb[0].mxu0
      %v3613 = vadd.f32 0.0, %v3612
      %v3614 = vpop.f32.mrb[0].mxu0
      %v3615 = vpop.f32.mrb[0].mxu0
      %v3616 = vadd.f32 0.0, %v3615
      %v3617 = vpop.f32.mrb[0].mxu0
      %3618 = vmatprep.mubr.bf16.mxu0 0
      %3619 = vmatmul.mubr.bf16.gmra.mrb[0].mxu0 %v3406
      %v3620 = vpop.f32.mrb[0].mxu0
      %v3621 = vadd.f32 0.0, %v3620
      %v3622 = vpop.f32.mrb[0].mxu0
      %v3623 = vpop.f32.mrb[0].mxu0
      %v3624 = vadd.f32 0.0, %v3623
      %v3625 = vpop.f32.mrb[0].mxu0
      %3626 = vmatprep.mubr.bf16.mxu0 0
      %3627 = vmatmul.mubr.bf16.gmra.mrb[0].mxu0 %v3408
      %v3628 = vpop.f32.mrb[0].mxu0
      %v3629 = vadd.f32 0.0, %v3628
      %v3630 = vpop.f32.mrb[0].mxu0
      %v3631 = vpop.f32.mrb[0].mxu0
      %v3632 = vadd.f32 0.0, %v3631
      %v3633 = vpop.f32.mrb[0].mxu0
      %3634 = vdwg.mxu0
      %v3635 = vadd.f32 %v3297, %v3445
      %v3636 = vadd.f32 %v3298, %v3448
      %v3637 = vadd.f32 %v3299, %v3453
      %v3638 = vadd.f32 %v3300, %v3456
      %v3639 = vadd.f32 %v3301, %v3461
      %v3640 = vadd.f32 %v3302, %v3464
      %v3641 = vadd.f32 %v3303, %v3469
      %v3642 = vadd.f32 %v3304, %v3472
      %v3643 = vadd.f32 %v3305, %v3477
      %v3644 = vadd.f32 %v3306, %v3480
      %v3645 = vadd.f32 %v3307, %v3485
      %v3646 = vadd.f32 %v3308, %v3488
      %v3647 = vadd.f32 %v3309, %v3493
      %v3648 = vadd.f32 %v3310, %v3496
      %v3649 = vadd.f32 %v3311, %v3501
      %v3650 = vadd.f32 %v3312, %v3504
      %v3651 = vadd.f32 %v3313, %v3509
      %v3652 = vadd.f32 %v3314, %v3512
      %v3653 = vadd.f32 %v3315, %v3517
      %v3654 = vadd.f32 %v3316, %v3520
      %v3655 = vadd.f32 %v3317, %v3525
      %v3656 = vadd.f32 %v3318, %v3528
      %v3657 = vadd.f32 %v3319, %v3533
      %v3658 = vadd.f32 %v3320, %v3536
      %v3659 = vadd.f32 %v3321, %v3541
      %v3660 = vadd.f32 %v3322, %v3544
      %v3661 = vadd.f32 %v3323, %v3549
      %v3662 = vadd.f32 %v3324, %v3552
      %v3663 = vadd.f32 %v3325, %v3557
      %v3664 = vadd.f32 %v3326, %v3560
      %v3665 = vadd.f32 %v3327, %v3565
      %v3666 = vadd.f32 %v3328, %v3568
      %v3667 = vadd.f32 %v3329, %v3573
      %v3668 = vadd.f32 %v3330, %v3576
      %v3669 = vadd.f32 %v3331, %v3581
      %v3670 = vadd.f32 %v3332, %v3584
      %v3671 = vadd.f32 %v3333, %v3589
      %v3672 = vadd.f32 %v3334, %v3592
      %v3673 = vadd.f32 %v3335, %v3597
      %v3674 = vadd.f32 %v3336, %v3600
      %v3675 = vadd.f32 %v3337, %v3605
      %v3676 = vadd.f32 %v3338, %v3608
      %v3677 = vadd.f32 %v3339, %v3613
      %v3678 = vadd.f32 %v3340, %v3616
      %v3679 = vadd.f32 %v3341, %v3621
      %v3680 = vadd.f32 %v3342, %v3624
      %v3681 = vadd.f32 %v3343, %v3629
      %v3682 = vadd.f32 %v3344, %v3632
      %v3683 = vld [vmem:[#allocation2 + $0x10] sm:$0xff]
      %v3684 = vld [vmem:[#allocation2 + $0x18] sm:$0xff]
      %v3685 = vld [vmem:[#allocation2 + $0x20] sm:$0xff]
      %v3686 = vld [vmem:[#allocation2 + $0x28] sm:$0xff]
      %v3687 = vld [vmem:[#allocation2 + $0x30] sm:$0xff]
      %v3688 = vld [vmem:[#allocation2 + $0x38] sm:$0xff]
      %v3689 = vld [vmem:[#allocation2 + $0x40] sm:$0xff]
      %v3690 = vld [vmem:[#allocation2 + $0x48] sm:$0xff]
      %v3691 = vld [vmem:[#allocation2 + $0x50] sm:$0xff]
      %v3692 = vld [vmem:[#allocation2 + $0x58] sm:$0xff]
      %v3693 = vld [vmem:[#allocation2 + $0x60] sm:$0xff]
      %v3694 = vld [vmem:[#allocation2 + $0x68] sm:$0xff]
      %v3695 = vld [vmem:[#allocation2 + $0x70] sm:$0xff]
      %v3696 = vld [vmem:[#allocation2 + $0x78] sm:$0xff]
      %v3697 = vld [vmem:[#allocation2 + $0x80] sm:$0xff]
      %v3698 = vld [vmem:[#allocation2 + $0x88] sm:$0xff]
      %v3699 = vld [vmem:[#allocation2 + $0x90] sm:$0xff]
      %v3700 = vld [vmem:[#allocation2 + $0x98] sm:$0xff]
      %v3701 = vld [vmem:[#allocation2 + $0xa0] sm:$0xff]
      %v3702 = vld [vmem:[#allocation2 + $0xa8] sm:$0xff]
      %v3703 = vld [vmem:[#allocation2 + $0xb0] sm:$0xff]
      %v3704 = vld [vmem:[#allocation2 + $0xb8] sm:$0xff]
      %v3705 = vld [vmem:[#allocation2 + $0xc0] sm:$0xff]
      %v3706 = vld [vmem:[#allocation2 + $0xc8] sm:$0xff]
      %v3707 = vld [vmem:[#allocation2 + $0xd0] sm:$0x1]
      %s3708 = scalar_lea.vmem %s5, 80
      %v3709 = vld [vmem:[%s3708] sm:$0xf]
      %v3710 = vld [vmem:[%s3708 + $0x4] sm:$0xf]
      %v3711 = vld [vmem:[%s3708 + $0x8] sm:$0xf]
      %v3712 = vld [vmem:[%s3708 + $0xc] sm:$0xf]
      %vm3713 = vsmask.f32 7424
      %v3715 = vshrl.u32 %v3683, 16
      %v3717 = vshll.u32 %v3683, 16
      %v3719 = vrot.slane %v3717, 1
      %v3720 = vor.u32 %v3715, %v3719
      %v3722 = vshll.u32 %v3684, 16
      %v3724 = vrot.slane %v3722, 1
      %v3725 = vsel %vm3713, %v3720, %v3724
      %v3726 = vshrl.u32 %v3684, 16
      %v3728 = vor.u32 %v3726, %v3724
      %v3730 = vshll.u32 %v3685, 16
      %v3732 = vrot.slane %v3730, 1
      %v3733 = vsel %vm3713, %v3728, %v3732
      %v3734 = vshrl.u32 %v3685, 16
      %v3736 = vor.u32 %v3734, %v3732
      %v3738 = vshll.u32 %v3686, 16
      %v3740 = vrot.slane %v3738, 1
      %v3741 = vsel %vm3713, %v3736, %v3740
      %v3742 = vshrl.u32 %v3686, 16
      %v3744 = vor.u32 %v3742, %v3740
      %v3746 = vshll.u32 %v3687, 16
      %v3748 = vrot.slane %v3746, 1
      %v3749 = vsel %vm3713, %v3744, %v3748
      %v3750 = vshrl.u32 %v3687, 16
      %v3752 = vor.u32 %v3750, %v3748
      %v3754 = vshll.u32 %v3688, 16
      %v3756 = vrot.slane %v3754, 1
      %v3757 = vsel %vm3713, %v3752, %v3756
      %v3758 = vshrl.u32 %v3688, 16
      %v3760 = vor.u32 %v3758, %v3756
      %v3762 = vshll.u32 %v3689, 16
      %v3764 = vrot.slane %v3762, 1
      %v3765 = vsel %vm3713, %v3760, %v3764
      %v3766 = vshrl.u32 %v3689, 16
      %v3768 = vor.u32 %v3766, %v3764
      %v3770 = vshll.u32 %v3690, 16
      %v3772 = vrot.slane %v3770, 1
      %v3773 = vsel %vm3713, %v3768, %v3772
      %v3774 = vshrl.u32 %v3690, 16
      %v3776 = vor.u32 %v3774, %v3772
      %v3778 = vshll.u32 %v3691, 16
      %v3780 = vrot.slane %v3778, 1
      %v3781 = vsel %vm3713, %v3776, %v3780
      %v3782 = vshrl.u32 %v3691, 16
      %v3784 = vor.u32 %v3782, %v3780
      %v3786 = vshll.u32 %v3692, 16
      %v3788 = vrot.slane %v3786, 1
      %v3789 = vsel %vm3713, %v3784, %v3788
      %v3790 = vshrl.u32 %v3692, 16
      %v3792 = vor.u32 %v3790, %v3788
      %v3794 = vshll.u32 %v3693, 16
      %v3796 = vrot.slane %v3794, 1
      %v3797 = vsel %vm3713, %v3792, %v3796
      %v3798 = vshrl.u32 %v3693, 16
      %v3800 = vor.u32 %v3798, %v3796
      %v3802 = vshll.u32 %v3694, 16
      %v3804 = vrot.slane %v3802, 1
      %v3805 = vsel %vm3713, %v3800, %v3804
      %v3806 = vshrl.u32 %v3694, 16
      %v3808 = vor.u32 %v3806, %v3804
      %v3810 = vshll.u32 %v3695, 16
      %v3812 = vrot.slane %v3810, 1
      %v3813 = vsel %vm3713, %v3808, %v3812
      %v3814 = vshrl.u32 %v3695, 16
      %v3816 = vor.u32 %v3814, %v3812
      %v3818 = vshll.u32 %v3696, 16
      %v3820 = vrot.slane %v3818, 1
      %v3821 = vsel %vm3713, %v3816, %v3820
      %v3822 = vshrl.u32 %v3696, 16
      %v3824 = vor.u32 %v3822, %v3820
      %v3826 = vshll.u32 %v3697, 16
      %v3828 = vrot.slane %v3826, 1
      %v3829 = vsel %vm3713, %v3824, %v3828
      %v3830 = vshrl.u32 %v3697, 16
      %v3832 = vor.u32 %v3830, %v3828
      %v3834 = vshll.u32 %v3698, 16
      %v3836 = vrot.slane %v3834, 1
      %v3837 = vsel %vm3713, %v3832, %v3836
      %v3838 = vshrl.u32 %v3698, 16
      %v3840 = vor.u32 %v3838, %v3836
      %v3842 = vshll.u32 %v3699, 16
      %v3844 = vrot.slane %v3842, 1
      %v3845 = vsel %vm3713, %v3840, %v3844
      %v3846 = vshrl.u32 %v3699, 16
      %v3848 = vor.u32 %v3846, %v3844
      %v3850 = vshll.u32 %v3700, 16
      %v3852 = vrot.slane %v3850, 1
      %v3853 = vsel %vm3713, %v3848, %v3852
      %v3854 = vshrl.u32 %v3700, 16
      %v3856 = vor.u32 %v3854, %v3852
      %v3858 = vshll.u32 %v3701, 16
      %v3860 = vrot.slane %v3858, 1
      %v3861 = vsel %vm3713, %v3856, %v3860
      %v3862 = vshrl.u32 %v3701, 16
      %v3864 = vor.u32 %v3862, %v3860
      %v3866 = vshll.u32 %v3702, 16
      %v3868 = vrot.slane %v3866, 1
      %v3869 = vsel %vm3713, %v3864, %v3868
      %v3870 = vshrl.u32 %v3702, 16
      %v3872 = vor.u32 %v3870, %v3868
      %v3874 = vshll.u32 %v3703, 16
      %v3876 = vrot.slane %v3874, 1
      %v3877 = vsel %vm3713, %v3872, %v3876
      %v3878 = vshrl.u32 %v3703, 16
      %v3880 = vor.u32 %v3878, %v3876
      %v3882 = vshll.u32 %v3704, 16
      %v3884 = vrot.slane %v3882, 1
      %v3885 = vsel %vm3713, %v3880, %v3884
      %v3886 = vshrl.u32 %v3704, 16
      %v3888 = vor.u32 %v3886, %v3884
      %v3890 = vshll.u32 %v3705, 16
      %v3892 = vrot.slane %v3890, 1
      %v3893 = vsel %vm3713, %v3888, %v3892
      %v3894 = vshrl.u32 %v3705, 16
      %v3896 = vor.u32 %v3894, %v3892
      %v3898 = vshll.u32 %v3706, 16
      %v3900 = vrot.slane %v3898, 1
      %v3901 = vsel %vm3713, %v3896, %v3900
      %v3902 = vshrl.u32 %v3706, 16
      %v3904 = vor.u32 %v3902, %v3900
      %v3906 = vshll.u32 %v3707, 16
      %v3908 = vrot.slane %v3906, 1
      %v3909 = vsel %vm3713, %v3904, %v3908
      %v3914 = vunpack.c.l.b16 %v3709
      %v3915 = vunpack.c.l.b16 %v3710
      %v3916 = vunpack.c.l.b16 %v3711
      %v3917 = vunpack.c.l.b16 %v3712
      %v3918 = vpack.c.b16 %v3915, %v3914
      %v3919 = vpack.c.b16 %v3917, %v3916
      %v3923 = vsel %vm348, %v3725, 0
      %v3926 = vsel %vm348, %v3733, 0
      %v3929 = vsel %vm348, %v3741, 0
      %v3932 = vsel %vm348, %v3749, 0
      %v3935 = vsel %vm348, %v3757, 0
      %v3938 = vsel %vm348, %v3765, 0
      %v3941 = vsel %vm348, %v3773, 0
      %v3944 = vsel %vm348, %v3781, 0
      %v3947 = vsel %vm348, %v3789, 0
      %v3950 = vsel %vm348, %v3797, 0
      %v3953 = vsel %vm348, %v3805, 0
      %v3956 = vsel %vm348, %v3813, 0
      %v3959 = vsel %vm348, %v3821, 0
      %v3962 = vsel %vm348, %v3829, 0
      %v3965 = vsel %vm348, %v3837, 0
      %v3968 = vsel %vm348, %v3845, 0
      %v3971 = vsel %vm348, %v3853, 0
      %v3974 = vsel %vm348, %v3861, 0
      %v3977 = vsel %vm348, %v3869, 0
      %v3980 = vsel %vm348, %v3877, 0
      %v3983 = vsel %vm348, %v3885, 0
      %v3986 = vsel %vm348, %v3893, 0
      %v3989 = vsel %vm348, %v3901, 0
      %v3992 = vsel %vm348, %v3909, 0
      %3994 = vmatprep.subr.bf16.mxu0 0
      %3995 = vmatpush1.bf16.msra.mxu0 %v3918
      %3996 = vmatprep.subr.bf16.mxu0 0
      %3997 = vmatpush1.bf16.msra.mxu0 %v3919
      %3998 = vmatprep.subr.bf16.mxu0 0
      %3999 = vmatpush1.bf16.msra.mxu0 0
      %4000 = vmatprep.subr.bf16.mxu0 0
      %4001 = vmatpush1.bf16.msra.mxu0 0
      %4002 = vmatprep.subr.bf16.mxu0 0
      %4003 = vmatpush1.bf16.msra.mxu0 0
      %4004 = vmatprep.subr.bf16.mxu0 0
      %4005 = vmatpush1.bf16.msra.mxu0 0
      %4006 = vmatprep.subr.bf16.mxu0 0
      %4007 = vmatpush1.bf16.msra.mxu0 0
      %4008 = vmatprep.subr.bf16.mxu0 0
      %4009 = vmatpush1.bf16.msra.mxu0 0
      %4010 = vmatprep.subr.bf16.mxu0 0
      %4011 = vmatpush1.bf16.msra.mxu0 0
      %4012 = vmatprep.subr.bf16.mxu0 0
      %4013 = vmatpush1.bf16.msra.mxu0 0
      %4014 = vmatprep.subr.bf16.mxu0 0
      %4015 = vmatpush1.bf16.msra.mxu0 0
      %4016 = vmatprep.subr.bf16.mxu0 0
      %4017 = vmatpush1.bf16.msra.mxu0 0
      %4018 = vmatprep.subr.bf16.mxu0 0
      %4019 = vmatpush1.bf16.msra.mxu0 0
      %4020 = vmatprep.subr.bf16.mxu0 0
      %4021 = vmatpush1.bf16.msra.mxu0 0
      %4022 = vmatprep.subr.bf16.mxu0 0
      %4023 = vmatpush1.bf16.msra.mxu0 0
      %4024 = vmatprep.subr.bf16.mxu0 0
      %4025 = vmatpush1.bf16.msra.mxu0 0
      %4026 = vmatprep.mubr.bf16.mxu0 0
      %4027 = vmatmul.mubr.bf16.gmra.mrb[0].mxu0 %v3923
      %v4028 = vpop.f32.mrb[0].mxu0
      %v4029 = vadd.f32 0.0, %v4028
      %v4030 = vpop.f32.mrb[0].mxu0
      %v4031 = vpop.f32.mrb[0].mxu0
      %v4032 = vadd.f32 0.0, %v4031
      %v4033 = vpop.f32.mrb[0].mxu0
      %4034 = vmatprep.mubr.bf16.mxu0 0
      %4035 = vmatmul.mubr.bf16.gmra.mrb[0].mxu0 %v3926
      %v4036 = vpop.f32.mrb[0].mxu0
      %v4037 = vadd.f32 0.0, %v4036
      %v4038 = vpop.f32.mrb[0].mxu0
      %v4039 = vpop.f32.mrb[0].mxu0
      %v4040 = vadd.f32 0.0, %v4039
      %v4041 = vpop.f32.mrb[0].mxu0
      %4042 = vmatprep.mubr.bf16.mxu0 0
      %4043 = vmatmul.mubr.bf16.gmra.mrb[0].mxu0 %v3929
      %v4044 = vpop.f32.mrb[0].mxu0
      %v4045 = vadd.f32 0.0, %v4044
      %v4046 = vpop.f32.mrb[0].mxu0
      %v4047 = vpop.f32.mrb[0].mxu0
      %v4048 = vadd.f32 0.0, %v4047
      %v4049 = vpop.f32.mrb[0].mxu0
      %4050 = vmatprep.mubr.bf16.mxu0 0
      %4051 = vmatmul.mubr.bf16.gmra.mrb[0].mxu0 %v3932
      %v4052 = vpop.f32.mrb[0].mxu0
      %v4053 = vadd.f32 0.0, %v4052
      %v4054 = vpop.f32.mrb[0].mxu0
      %v4055 = vpop.f32.mrb[0].mxu0
      %v4056 = vadd.f32 0.0, %v4055
      %v4057 = vpop.f32.mrb[0].mxu0
      %4058 = vmatprep.mubr.bf16.mxu0 0
      %4059 = vmatmul.mubr.bf16.gmra.mrb[0].mxu0 %v3935
      %v4060 = vpop.f32.mrb[0].mxu0
      %v4061 = vadd.f32 0.0, %v4060
      %v4062 = vpop.f32.mrb[0].mxu0
      %v4063 = vpop.f32.mrb[0].mxu0
      %v4064 = vadd.f32 0.0, %v4063
      %v4065 = vpop.f32.mrb[0].mxu0
      %4066 = vmatprep.mubr.bf16.mxu0 0
      %4067 = vmatmul.mubr.bf16.gmra.mrb[0].mxu0 %v3938
      %v4068 = vpop.f32.mrb[0].mxu0
      %v4069 = vadd.f32 0.0, %v4068
      %v4070 = vpop.f32.mrb[0].mxu0
      %v4071 = vpop.f32.mrb[0].mxu0
      %v4072 = vadd.f32 0.0, %v4071
      %v4073 = vpop.f32.mrb[0].mxu0
      %4074 = vmatprep.mubr.bf16.mxu0 0
      %4075 = vmatmul.mubr.bf16.gmra.mrb[0].mxu0 %v3941
      %v4076 = vpop.f32.mrb[0].mxu0
      %v4077 = vadd.f32 0.0, %v4076
      %v4078 = vpop.f32.mrb[0].mxu0
      %v4079 = vpop.f32.mrb[0].mxu0
      %v4080 = vadd.f32 0.0, %v4079
      %v4081 = vpop.f32.mrb[0].mxu0
      %4082 = vmatprep.mubr.bf16.mxu0 0
      %4083 = vmatmul.mubr.bf16.gmra.mrb[0].mxu0 %v3944
      %v4084 = vpop.f32.mrb[0].mxu0
      %v4085 = vadd.f32 0.0, %v4084
      %v4086 = vpop.f32.mrb[0].mxu0
      %v4087 = vpop.f32.mrb[0].mxu0
      %v4088 = vadd.f32 0.0, %v4087
      %v4089 = vpop.f32.mrb[0].mxu0
      %4090 = vmatprep.mubr.bf16.mxu0 0
      %4091 = vmatmul.mubr.bf16.gmra.mrb[0].mxu0 %v3947
      %v4092 = vpop.f32.mrb[0].mxu0
      %v4093 = vadd.f32 0.0, %v4092
      %v4094 = vpop.f32.mrb[0].mxu0
      %v4095 = vpop.f32.mrb[0].mxu0
      %v4096 = vadd.f32 0.0, %v4095
      %v4097 = vpop.f32.mrb[0].mxu0
      %4098 = vmatprep.mubr.bf16.mxu0 0
      %4099 = vmatmul.mubr.bf16.gmra.mrb[0].mxu0 %v3950
      %v4100 = vpop.f32.mrb[0].mxu0
      %v4101 = vadd.f32 0.0, %v4100
      %v4102 = vpop.f32.mrb[0].mxu0
      %v4103 = vpop.f32.mrb[0].mxu0
      %v4104 = vadd.f32 0.0, %v4103
      %v4105 = vpop.f32.mrb[0].mxu0
      %4106 = vmatprep.mubr.bf16.mxu0 0
      %4107 = vmatmul.mubr.bf16.gmra.mrb[0].mxu0 %v3953
      %v4108 = vpop.f32.mrb[0].mxu0
      %v4109 = vadd.f32 0.0, %v4108
      %v4110 = vpop.f32.mrb[0].mxu0
      %v4111 = vpop.f32.mrb[0].mxu0
      %v4112 = vadd.f32 0.0, %v4111
      %v4113 = vpop.f32.mrb[0].mxu0
      %4114 = vmatprep.mubr.bf16.mxu0 0
      %4115 = vmatmul.mubr.bf16.gmra.mrb[0].mxu0 %v3956
      %v4116 = vpop.f32.mrb[0].mxu0
      %v4117 = vadd.f32 0.0, %v4116
      %v4118 = vpop.f32.mrb[0].mxu0
      %v4119 = vpop.f32.mrb[0].mxu0
      %v4120 = vadd.f32 0.0, %v4119
      %v4121 = vpop.f32.mrb[0].mxu0
      %4122 = vmatprep.mubr.bf16.mxu0 0
      %4123 = vmatmul.mubr.bf16.gmra.mrb[0].mxu0 %v3959
      %v4124 = vpop.f32.mrb[0].mxu0
      %v4125 = vadd.f32 0.0, %v4124
      %v4126 = vpop.f32.mrb[0].mxu0
      %v4127 = vpop.f32.mrb[0].mxu0
      %v4128 = vadd.f32 0.0, %v4127
      %v4129 = vpop.f32.mrb[0].mxu0
      %4130 = vmatprep.mubr.bf16.mxu0 0
      %4131 = vmatmul.mubr.bf16.gmra.mrb[0].mxu0 %v3962
      %v4132 = vpop.f32.mrb[0].mxu0
      %v4133 = vadd.f32 0.0, %v4132
      %v4134 = vpop.f32.mrb[0].mxu0
      %v4135 = vpop.f32.mrb[0].mxu0
      %v4136 = vadd.f32 0.0, %v4135
      %v4137 = vpop.f32.mrb[0].mxu0
      %4138 = vmatprep.mubr.bf16.mxu0 0
      %4139 = vmatmul.mubr.bf16.gmra.mrb[0].mxu0 %v3965
      %v4140 = vpop.f32.mrb[0].mxu0
      %v4141 = vadd.f32 0.0, %v4140
      %v4142 = vpop.f32.mrb[0].mxu0
      %v4143 = vpop.f32.mrb[0].mxu0
      %v4144 = vadd.f32 0.0, %v4143
      %v4145 = vpop.f32.mrb[0].mxu0
      %4146 = vmatprep.mubr.bf16.mxu0 0
      %4147 = vmatmul.mubr.bf16.gmra.mrb[0].mxu0 %v3968
      %v4148 = vpop.f32.mrb[0].mxu0
      %v4149 = vadd.f32 0.0, %v4148
      %v4150 = vpop.f32.mrb[0].mxu0
      %v4151 = vpop.f32.mrb[0].mxu0
      %v4152 = vadd.f32 0.0, %v4151
      %v4153 = vpop.f32.mrb[0].mxu0
      %4154 = vmatprep.mubr.bf16.mxu0 0
      %4155 = vmatmul.mubr.bf16.gmra.mrb[0].mxu0 %v3971
      %v4156 = vpop.f32.mrb[0].mxu0
      %v4157 = vadd.f32 0.0, %v4156
      %v4158 = vpop.f32.mrb[0].mxu0
      %v4159 = vpop.f32.mrb[0].mxu0
      %v4160 = vadd.f32 0.0, %v4159
      %v4161 = vpop.f32.mrb[0].mxu0
      %4162 = vmatprep.mubr.bf16.mxu0 0
      %4163 = vmatmul.mubr.bf16.gmra.mrb[0].mxu0 %v3974
      %v4164 = vpop.f32.mrb[0].mxu0
      %v4165 = vadd.f32 0.0, %v4164
      %v4166 = vpop.f32.mrb[0].mxu0
      %v4167 = vpop.f32.mrb[0].mxu0
      %v4168 = vadd.f32 0.0, %v4167
      %v4169 = vpop.f32.mrb[0].mxu0
      %4170 = vmatprep.mubr.bf16.mxu0 0
      %4171 = vmatmul.mubr.bf16.gmra.mrb[0].mxu0 %v3977
      %v4172 = vpop.f32.mrb[0].mxu0
      %v4173 = vadd.f32 0.0, %v4172
      %v4174 = vpop.f32.mrb[0].mxu0
      %v4175 = vpop.f32.mrb[0].mxu0
      %v4176 = vadd.f32 0.0, %v4175
      %v4177 = vpop.f32.mrb[0].mxu0
      %4178 = vmatprep.mubr.bf16.mxu0 0
      %4179 = vmatmul.mubr.bf16.gmra.mrb[0].mxu0 %v3980
      %v4180 = vpop.f32.mrb[0].mxu0
      %v4181 = vadd.f32 0.0, %v4180
      %v4182 = vpop.f32.mrb[0].mxu0
      %v4183 = vpop.f32.mrb[0].mxu0
      %v4184 = vadd.f32 0.0, %v4183
      %v4185 = vpop.f32.mrb[0].mxu0
      %4186 = vmatprep.mubr.bf16.mxu0 0
      %4187 = vmatmul.mubr.bf16.gmra.mrb[0].mxu0 %v3983
      %v4188 = vpop.f32.mrb[0].mxu0
      %v4189 = vadd.f32 0.0, %v4188
      %v4190 = vpop.f32.mrb[0].mxu0
      %v4191 = vpop.f32.mrb[0].mxu0
      %v4192 = vadd.f32 0.0, %v4191
      %v4193 = vpop.f32.mrb[0].mxu0
      %4194 = vmatprep.mubr.bf16.mxu0 0
      %4195 = vmatmul.mubr.bf16.gmra.mrb[0].mxu0 %v3986
      %v4196 = vpop.f32.mrb[0].mxu0
      %v4197 = vadd.f32 0.0, %v4196
      %v4198 = vpop.f32.mrb[0].mxu0
      %v4199 = vpop.f32.mrb[0].mxu0
      %v4200 = vadd.f32 0.0, %v4199
      %v4201 = vpop.f32.mrb[0].mxu0
      %4202 = vmatprep.mubr.bf16.mxu0 0
      %4203 = vmatmul.mubr.bf16.gmra.mrb[0].mxu0 %v3989
      %v4204 = vpop.f32.mrb[0].mxu0
      %v4205 = vadd.f32 0.0, %v4204
      %v4206 = vpop.f32.mrb[0].mxu0
      %v4207 = vpop.f32.mrb[0].mxu0
      %v4208 = vadd.f32 0.0, %v4207
      %v4209 = vpop.f32.mrb[0].mxu0
      %4210 = vmatprep.mubr.bf16.mxu0 0
      %4211 = vmatmul.mubr.bf16.gmra.mrb[0].mxu0 %v3992
      %v4212 = vpop.f32.mrb[0].mxu0
      %v4213 = vadd.f32 0.0, %v4212
      %v4214 = vpop.f32.mrb[0].mxu0
      %v4215 = vpop.f32.mrb[0].mxu0
      %v4216 = vadd.f32 0.0, %v4215
      %v4217 = vpop.f32.mrb[0].mxu0
      %4218 = vdwg.mxu0
      %v4219 = vadd.f32 %v3635, %v4029
      %v4220 = vadd.f32 %v3636, %v4032
      %v4221 = vadd.f32 %v3637, %v4037
      %v4222 = vadd.f32 %v3638, %v4040
      %v4223 = vadd.f32 %v3639, %v4045
      %v4224 = vadd.f32 %v3640, %v4048
      %v4225 = vadd.f32 %v3641, %v4053
      %v4226 = vadd.f32 %v3642, %v4056
      %v4227 = vadd.f32 %v3643, %v4061
      %v4228 = vadd.f32 %v3644, %v4064
      %v4229 = vadd.f32 %v3645, %v4069
      %v4230 = vadd.f32 %v3646, %v4072
      %v4231 = vadd.f32 %v3647, %v4077
      %v4232 = vadd.f32 %v3648, %v4080
      %v4233 = vadd.f32 %v3649, %v4085
      %v4234 = vadd.f32 %v3650, %v4088
      %v4235 = vadd.f32 %v3651, %v4093
      %v4236 = vadd.f32 %v3652, %v4096
      %v4237 = vadd.f32 %v3653, %v4101
      %v4238 = vadd.f32 %v3654, %v4104
      %v4239 = vadd.f32 %v3655, %v4109
      %v4240 = vadd.f32 %v3656, %v4112
      %v4241 = vadd.f32 %v3657, %v4117
      %v4242 = vadd.f32 %v3658, %v4120
      %v4243 = vadd.f32 %v3659, %v4125
      %v4244 = vadd.f32 %v3660, %v4128
      %v4245 = vadd.f32 %v3661, %v4133
      %v4246 = vadd.f32 %v3662, %v4136
      %v4247 = vadd.f32 %v3663, %v4141
      %v4248 = vadd.f32 %v3664, %v4144
      %v4249 = vadd.f32 %v3665, %v4149
      %v4250 = vadd.f32 %v3666, %v4152
      %v4251 = vadd.f32 %v3667, %v4157
      %v4252 = vadd.f32 %v3668, %v4160
      %v4253 = vadd.f32 %v3669, %v4165
      %v4254 = vadd.f32 %v3670, %v4168
      %v4255 = vadd.f32 %v3671, %v4173
      %v4256 = vadd.f32 %v3672, %v4176
      %v4257 = vadd.f32 %v3673, %v4181
      %v4258 = vadd.f32 %v3674, %v4184
      %v4259 = vadd.f32 %v3675, %v4189
      %v4260 = vadd.f32 %v3676, %v4192
      %v4261 = vadd.f32 %v3677, %v4197
      %v4262 = vadd.f32 %v3678, %v4200
      %v4263 = vadd.f32 %v3679, %v4205
      %v4264 = vadd.f32 %v3680, %v4208
      %v4265 = vadd.f32 %v3681, %v4213
      %v4266 = vadd.f32 %v3682, %v4216
      %v4267 = vld [vmem:[#allocation2 + $0x18] sm:$0xf8]
      %v4268 = vld [vmem:[#allocation2 + $0x20] sm:$0xff]
      %v4269 = vld [vmem:[#allocation2 + $0x28] sm:$0xff]
      %v4270 = vld [vmem:[#allocation2 + $0x30] sm:$0xff]
      %v4271 = vld [vmem:[#allocation2 + $0x38] sm:$0xff]
      %v4272 = vld [vmem:[#allocation2 + $0x40] sm:$0xff]
      %v4273 = vld [vmem:[#allocation2 + $0x48] sm:$0xff]
      %v4274 = vld [vmem:[#allocation2 + $0x50] sm:$0xff]
      %v4275 = vld [vmem:[#allocation2 + $0x58] sm:$0xff]
      %v4276 = vld [vmem:[#allocation2 + $0x60] sm:$0xff]
      %v4277 = vld [vmem:[#allocation2 + $0x68] sm:$0xff]
      %v4278 = vld [vmem:[#allocation2 + $0x70] sm:$0xff]
      %v4279 = vld [vmem:[#allocation2 + $0x78] sm:$0xff]
      %v4280 = vld [vmem:[#allocation2 + $0x80] sm:$0xff]
      %v4281 = vld [vmem:[#allocation2 + $0x88] sm:$0xff]
      %v4282 = vld [vmem:[#allocation2 + $0x90] sm:$0xff]
      %v4283 = vld [vmem:[#allocation2 + $0x98] sm:$0xff]
      %v4284 = vld [vmem:[#allocation2 + $0xa0] sm:$0xff]
      %v4285 = vld [vmem:[#allocation2 + $0xa8] sm:$0xff]
      %v4286 = vld [vmem:[#allocation2 + $0xb0] sm:$0xff]
      %v4287 = vld [vmem:[#allocation2 + $0xb8] sm:$0xff]
      %v4288 = vld [vmem:[#allocation2 + $0xc0] sm:$0xff]
      %v4289 = vld [vmem:[#allocation2 + $0xc8] sm:$0xff]
      %v4290 = vld [vmem:[#allocation2 + $0xd0] sm:$0xff]
      %v4291 = vld [vmem:[#allocation2 + $0xd8] sm:$0xf]
      %s4292 = scalar_lea.vmem %s5, 96
      %v4293 = vld [vmem:[%s4292] sm:$0xf]
      %v4294 = vld [vmem:[%s4292 + $0x4] sm:$0xf]
      %v4295 = vld [vmem:[%s4292 + $0x8] sm:$0xf]
      %v4296 = vld [vmem:[%s4292 + $0xc] sm:$0xf]
      %v4298 = vshrl.u32 %v4267, 16
      %v4300 = vrot.slane %v4298, 3
      %v4301 = vshll.u32 %v4267, 16
      %v4303 = vrot.slane %v4301, 4
      %v4304 = vor.u32 %v4300, %v4303
      %v4306 = vshrl.u32 %v4268, 16
      %v4308 = vrot.slane %v4306, 3
      %v4309 = vshll.u32 %v4268, 16
      %v4311 = vrot.slane %v4309, 4
      %v4312 = vor.u32 %v4308, %v4311
      %v4313 = vsel %vm1754, %v4304, %v4312
      %v4315 = vshrl.u32 %v4269, 16
      %v4317 = vrot.slane %v4315, 3
      %v4318 = vshll.u32 %v4269, 16
      %v4320 = vrot.slane %v4318, 4
      %v4321 = vor.u32 %v4317, %v4320
      %v4322 = vsel %vm1754, %v4312, %v4321
      %v4324 = vshrl.u32 %v4270, 16
      %v4326 = vrot.slane %v4324, 3
      %v4327 = vshll.u32 %v4270, 16
      %v4329 = vrot.slane %v4327, 4
      %v4330 = vor.u32 %v4326, %v4329
      %v4331 = vsel %vm1754, %v4321, %v4330
      %v4333 = vshrl.u32 %v4271, 16
      %v4335 = vrot.slane %v4333, 3
      %v4336 = vshll.u32 %v4271, 16
      %v4338 = vrot.slane %v4336, 4
      %v4339 = vor.u32 %v4335, %v4338
      %v4340 = vsel %vm1754, %v4330, %v4339
      %v4342 = vshrl.u32 %v4272, 16
      %v4344 = vrot.slane %v4342, 3
      %v4345 = vshll.u32 %v4272, 16
      %v4347 = vrot.slane %v4345, 4
      %v4348 = vor.u32 %v4344, %v4347
      %v4349 = vsel %vm1754, %v4339, %v4348
      %v4351 = vshrl.u32 %v4273, 16
      %v4353 = vrot.slane %v4351, 3
      %v4354 = vshll.u32 %v4273, 16
      %v4356 = vrot.slane %v4354, 4
      %v4357 = vor.u32 %v4353, %v4356
      %v4358 = vsel %vm1754, %v4348, %v4357
      %v4360 = vshrl.u32 %v4274, 16
      %v4362 = vrot.slane %v4360, 3
      %v4363 = vshll.u32 %v4274, 16
      %v4365 = vrot.slane %v4363, 4
      %v4366 = vor.u32 %v4362, %v4365
      %v4367 = vsel %vm1754, %v4357, %v4366
      %v4369 = vshrl.u32 %v4275, 16
      %v4371 = vrot.slane %v4369, 3
      %v4372 = vshll.u32 %v4275, 16
      %v4374 = vrot.slane %v4372, 4
      %v4375 = vor.u32 %v4371, %v4374
      %v4376 = vsel %vm1754, %v4366, %v4375
      %v4378 = vshrl.u32 %v4276, 16
      %v4380 = vrot.slane %v4378, 3
      %v4381 = vshll.u32 %v4276, 16
      %v4383 = vrot.slane %v4381, 4
      %v4384 = vor.u32 %v4380, %v4383
      %v4385 = vsel %vm1754, %v4375, %v4384
      %v4387 = vshrl.u32 %v4277, 16
      %v4389 = vrot.slane %v4387, 3
      %v4390 = vshll.u32 %v4277, 16
      %v4392 = vrot.slane %v4390, 4
      %v4393 = vor.u32 %v4389, %v4392
      %v4394 = vsel %vm1754, %v4384, %v4393
      %v4396 = vshrl.u32 %v4278, 16
      %v4398 = vrot.slane %v4396, 3
      %v4399 = vshll.u32 %v4278, 16
      %v4401 = vrot.slane %v4399, 4
      %v4402 = vor.u32 %v4398, %v4401
      %v4403 = vsel %vm1754, %v4393, %v4402
      %v4405 = vshrl.u32 %v4279, 16
      %v4407 = vrot.slane %v4405, 3
      %v4408 = vshll.u32 %v4279, 16
      %v4410 = vrot.slane %v4408, 4
      %v4411 = vor.u32 %v4407, %v4410
      %v4412 = vsel %vm1754, %v4402, %v4411
      %v4414 = vshrl.u32 %v4280, 16
      %v4416 = vrot.slane %v4414, 3
      %v4417 = vshll.u32 %v4280, 16
      %v4419 = vrot.slane %v4417, 4
      %v4420 = vor.u32 %v4416, %v4419
      %v4421 = vsel %vm1754, %v4411, %v4420
      %v4423 = vshrl.u32 %v4281, 16
      %v4425 = vrot.slane %v4423, 3
      %v4426 = vshll.u32 %v4281, 16
      %v4428 = vrot.slane %v4426, 4
      %v4429 = vor.u32 %v4425, %v4428
      %v4430 = vsel %vm1754, %v4420, %v4429
      %v4432 = vshrl.u32 %v4282, 16
      %v4434 = vrot.slane %v4432, 3
      %v4435 = vshll.u32 %v4282, 16
      %v4437 = vrot.slane %v4435, 4
      %v4438 = vor.u32 %v4434, %v4437
      %v4439 = vsel %vm1754, %v4429, %v4438
      %v4441 = vshrl.u32 %v4283, 16
      %v4443 = vrot.slane %v4441, 3
      %v4444 = vshll.u32 %v4283, 16
      %v4446 = vrot.slane %v4444, 4
      %v4447 = vor.u32 %v4443, %v4446
      %v4448 = vsel %vm1754, %v4438, %v4447
      %v4450 = vshrl.u32 %v4284, 16
      %v4452 = vrot.slane %v4450, 3
      %v4453 = vshll.u32 %v4284, 16
      %v4455 = vrot.slane %v4453, 4
      %v4456 = vor.u32 %v4452, %v4455
      %v4457 = vsel %vm1754, %v4447, %v4456
      %v4459 = vshrl.u32 %v4285, 16
      %v4461 = vrot.slane %v4459, 3
      %v4462 = vshll.u32 %v4285, 16
      %v4464 = vrot.slane %v4462, 4
      %v4465 = vor.u32 %v4461, %v4464
      %v4466 = vsel %vm1754, %v4456, %v4465
      %v4468 = vshrl.u32 %v4286, 16
      %v4470 = vrot.slane %v4468, 3
      %v4471 = vshll.u32 %v4286, 16
      %v4473 = vrot.slane %v4471, 4
      %v4474 = vor.u32 %v4470, %v4473
      %v4475 = vsel %vm1754, %v4465, %v4474
      %v4477 = vshrl.u32 %v4287, 16
      %v4479 = vrot.slane %v4477, 3
      %v4480 = vshll.u32 %v4287, 16
      %v4482 = vrot.slane %v4480, 4
      %v4483 = vor.u32 %v4479, %v4482
      %v4484 = vsel %vm1754, %v4474, %v4483
      %v4486 = vshrl.u32 %v4288, 16
      %v4488 = vrot.slane %v4486, 3
      %v4489 = vshll.u32 %v4288, 16
      %v4491 = vrot.slane %v4489, 4
      %v4492 = vor.u32 %v4488, %v4491
      %v4493 = vsel %vm1754, %v4483, %v4492
      %v4495 = vshrl.u32 %v4289, 16
      %v4497 = vrot.slane %v4495, 3
      %v4498 = vshll.u32 %v4289, 16
      %v4500 = vrot.slane %v4498, 4
      %v4501 = vor.u32 %v4497, %v4500
      %v4502 = vsel %vm1754, %v4492, %v4501
      %v4504 = vshrl.u32 %v4290, 16
      %v4506 = vrot.slane %v4504, 3
      %v4507 = vshll.u32 %v4290, 16
      %v4509 = vrot.slane %v4507, 4
      %v4510 = vor.u32 %v4506, %v4509
      %v4511 = vsel %vm1754, %v4501, %v4510
      %v4513 = vshrl.u32 %v4291, 16
      %v4515 = vrot.slane %v4513, 3
      %v4516 = vshll.u32 %v4291, 16
      %v4518 = vrot.slane %v4516, 4
      %v4519 = vor.u32 %v4515, %v4518
      %v4520 = vsel %vm1754, %v4510, %v4519
      %v4525 = vunpack.c.l.b16 %v4293
      %v4526 = vunpack.c.l.b16 %v4294
      %v4527 = vunpack.c.l.b16 %v4295
      %v4528 = vunpack.c.l.b16 %v4296
      %v4529 = vpack.c.b16 %v4526, %v4525
      %v4530 = vpack.c.b16 %v4528, %v4527
      %v4534 = vsel %vm348, %v4313, 0
      %v4537 = vsel %vm348, %v4322, 0
      %v4540 = vsel %vm348, %v4331, 0
      %v4543 = vsel %vm348, %v4340, 0
      %v4546 = vsel %vm348, %v4349, 0
      %v4549 = vsel %vm348, %v4358, 0
      %v4552 = vsel %vm348, %v4367, 0
      %v4555 = vsel %vm348, %v4376, 0
      %v4558 = vsel %vm348, %v4385, 0
      %v4561 = vsel %vm348, %v4394, 0
      %v4564 = vsel %vm348, %v4403, 0
      %v4567 = vsel %vm348, %v4412, 0
      %v4570 = vsel %vm348, %v4421, 0
      %v4573 = vsel %vm348, %v4430, 0
      %v4576 = vsel %vm348, %v4439, 0
      %v4579 = vsel %vm348, %v4448, 0
      %v4582 = vsel %vm348, %v4457, 0
      %v4585 = vsel %vm348, %v4466, 0
      %v4588 = vsel %vm348, %v4475, 0
      %v4591 = vsel %vm348, %v4484, 0
      %v4594 = vsel %vm348, %v4493, 0
      %v4597 = vsel %vm348, %v4502, 0
      %v4600 = vsel %vm348, %v4511, 0
      %v4603 = vsel %vm348, %v4520, 0
      %4605 = vmatprep.subr.bf16.mxu0 0
      %4606 = vmatpush1.bf16.msra.mxu0 %v4529
      %4607 = vmatprep.subr.bf16.mxu0 0
      %4608 = vmatpush1.bf16.msra.mxu0 %v4530
      %4609 = vmatprep.subr.bf16.mxu0 0
      %4610 = vmatpush1.bf16.msra.mxu0 0
      %4611 = vmatprep.subr.bf16.mxu0 0
      %4612 = vmatpush1.bf16.msra.mxu0 0
      %4613 = vmatprep.subr.bf16.mxu0 0
      %4614 = vmatpush1.bf16.msra.mxu0 0
      %4615 = vmatprep.subr.bf16.mxu0 0
      %4616 = vmatpush1.bf16.msra.mxu0 0
      %4617 = vmatprep.subr.bf16.mxu0 0
      %4618 = vmatpush1.bf16.msra.mxu0 0
      %4619 = vmatprep.subr.bf16.mxu0 0
      %4620 = vmatpush1.bf16.msra.mxu0 0
      %4621 = vmatprep.subr.bf16.mxu0 0
      %4622 = vmatpush1.bf16.msra.mxu0 0
      %4623 = vmatprep.subr.bf16.mxu0 0
      %4624 = vmatpush1.bf16.msra.mxu0 0
      %4625 = vmatprep.subr.bf16.mxu0 0
      %4626 = vmatpush1.bf16.msra.mxu0 0
      %4627 = vmatprep.subr.bf16.mxu0 0
      %4628 = vmatpush1.bf16.msra.mxu0 0
      %4629 = vmatprep.subr.bf16.mxu0 0
      %4630 = vmatpush1.bf16.msra.mxu0 0
      %4631 = vmatprep.subr.bf16.mxu0 0
      %4632 = vmatpush1.bf16.msra.mxu0 0
      %4633 = vmatprep.subr.bf16.mxu0 0
      %4634 = vmatpush1.bf16.msra.mxu0 0
      %4635 = vmatprep.subr.bf16.mxu0 0
      %4636 = vmatpush1.bf16.msra.mxu0 0
      %4637 = vmatprep.mubr.bf16.mxu0 0
      %4638 = vmatmul.mubr.bf16.gmra.mrb[0].mxu0 %v4534
      %v4639 = vpop.f32.mrb[0].mxu0
      %v4640 = vadd.f32 0.0, %v4639
      %v4641 = vpop.f32.mrb[0].mxu0
      %v4642 = vpop.f32.mrb[0].mxu0
      %v4643 = vadd.f32 0.0, %v4642
      %v4644 = vpop.f32.mrb[0].mxu0
      %4645 = vmatprep.mubr.bf16.mxu0 0
      %4646 = vmatmul.mubr.bf16.gmra.mrb[0].mxu0 %v4537
      %v4647 = vpop.f32.mrb[0].mxu0
      %v4648 = vadd.f32 0.0, %v4647
      %v4649 = vpop.f32.mrb[0].mxu0
      %v4650 = vpop.f32.mrb[0].mxu0
      %v4651 = vadd.f32 0.0, %v4650
      %v4652 = vpop.f32.mrb[0].mxu0
      %4653 = vmatprep.mubr.bf16.mxu0 0
      %4654 = vmatmul.mubr.bf16.gmra.mrb[0].mxu0 %v4540
      %v4655 = vpop.f32.mrb[0].mxu0
      %v4656 = vadd.f32 0.0, %v4655
      %v4657 = vpop.f32.mrb[0].mxu0
      %v4658 = vpop.f32.mrb[0].mxu0
      %v4659 = vadd.f32 0.0, %v4658
      %v4660 = vpop.f32.mrb[0].mxu0
      %4661 = vmatprep.mubr.bf16.mxu0 0
      %4662 = vmatmul.mubr.bf16.gmra.mrb[0].mxu0 %v4543
      %v4663 = vpop.f32.mrb[0].mxu0
      %v4664 = vadd.f32 0.0, %v4663
      %v4665 = vpop.f32.mrb[0].mxu0
      %v4666 = vpop.f32.mrb[0].mxu0
      %v4667 = vadd.f32 0.0, %v4666
      %v4668 = vpop.f32.mrb[0].mxu0
      %4669 = vmatprep.mubr.bf16.mxu0 0
      %4670 = vmatmul.mubr.bf16.gmra.mrb[0].mxu0 %v4546
      %v4671 = vpop.f32.mrb[0].mxu0
      %v4672 = vadd.f32 0.0, %v4671
      %v4673 = vpop.f32.mrb[0].mxu0
      %v4674 = vpop.f32.mrb[0].mxu0
      %v4675 = vadd.f32 0.0, %v4674
      %v4676 = vpop.f32.mrb[0].mxu0
      %4677 = vmatprep.mubr.bf16.mxu0 0
      %4678 = vmatmul.mubr.bf16.gmra.mrb[0].mxu0 %v4549
      %v4679 = vpop.f32.mrb[0].mxu0
      %v4680 = vadd.f32 0.0, %v4679
      %v4681 = vpop.f32.mrb[0].mxu0
      %v4682 = vpop.f32.mrb[0].mxu0
      %v4683 = vadd.f32 0.0, %v4682
      %v4684 = vpop.f32.mrb[0].mxu0
      %4685 = vmatprep.mubr.bf16.mxu0 0
      %4686 = vmatmul.mubr.bf16.gmra.mrb[0].mxu0 %v4552
      %v4687 = vpop.f32.mrb[0].mxu0
      %v4688 = vadd.f32 0.0, %v4687
      %v4689 = vpop.f32.mrb[0].mxu0
      %v4690 = vpop.f32.mrb[0].mxu0
      %v4691 = vadd.f32 0.0, %v4690
      %v4692 = vpop.f32.mrb[0].mxu0
      %4693 = vmatprep.mubr.bf16.mxu0 0
      %4694 = vmatmul.mubr.bf16.gmra.mrb[0].mxu0 %v4555
      %v4695 = vpop.f32.mrb[0].mxu0
      %v4696 = vadd.f32 0.0, %v4695
      %v4697 = vpop.f32.mrb[0].mxu0
      %v4698 = vpop.f32.mrb[0].mxu0
      %v4699 = vadd.f32 0.0, %v4698
      %v4700 = vpop.f32.mrb[0].mxu0
      %4701 = vmatprep.mubr.bf16.mxu0 0
      %4702 = vmatmul.mubr.bf16.gmra.mrb[0].mxu0 %v4558
      %v4703 = vpop.f32.mrb[0].mxu0
      %v4704 = vadd.f32 0.0, %v4703
      %v4705 = vpop.f32.mrb[0].mxu0
      %v4706 = vpop.f32.mrb[0].mxu0
      %v4707 = vadd.f32 0.0, %v4706
      %v4708 = vpop.f32.mrb[0].mxu0
      %4709 = vmatprep.mubr.bf16.mxu0 0
      %4710 = vmatmul.mubr.bf16.gmra.mrb[0].mxu0 %v4561
      %v4711 = vpop.f32.mrb[0].mxu0
      %v4712 = vadd.f32 0.0, %v4711
      %v4713 = vpop.f32.mrb[0].mxu0
      %v4714 = vpop.f32.mrb[0].mxu0
      %v4715 = vadd.f32 0.0, %v4714
      %v4716 = vpop.f32.mrb[0].mxu0
      %4717 = vmatprep.mubr.bf16.mxu0 0
      %4718 = vmatmul.mubr.bf16.gmra.mrb[0].mxu0 %v4564
      %v4719 = vpop.f32.mrb[0].mxu0
      %v4720 = vadd.f32 0.0, %v4719
      %v4721 = vpop.f32.mrb[0].mxu0
      %v4722 = vpop.f32.mrb[0].mxu0
      %v4723 = vadd.f32 0.0, %v4722
      %v4724 = vpop.f32.mrb[0].mxu0
      %4725 = vmatprep.mubr.bf16.mxu0 0
      %4726 = vmatmul.mubr.bf16.gmra.mrb[0].mxu0 %v4567
      %v4727 = vpop.f32.mrb[0].mxu0
      %v4728 = vadd.f32 0.0, %v4727
      %v4729 = vpop.f32.mrb[0].mxu0
      %v4730 = vpop.f32.mrb[0].mxu0
      %v4731 = vadd.f32 0.0, %v4730
      %v4732 = vpop.f32.mrb[0].mxu0
      %4733 = vmatprep.mubr.bf16.mxu0 0
      %4734 = vmatmul.mubr.bf16.gmra.mrb[0].mxu0 %v4570
      %v4735 = vpop.f32.mrb[0].mxu0
      %v4736 = vadd.f32 0.0, %v4735
      %v4737 = vpop.f32.mrb[0].mxu0
      %v4738 = vpop.f32.mrb[0].mxu0
      %v4739 = vadd.f32 0.0, %v4738
      %v4740 = vpop.f32.mrb[0].mxu0
      %4741 = vmatprep.mubr.bf16.mxu0 0
      %4742 = vmatmul.mubr.bf16.gmra.mrb[0].mxu0 %v4573
      %v4743 = vpop.f32.mrb[0].mxu0
      %v4744 = vadd.f32 0.0, %v4743
      %v4745 = vpop.f32.mrb[0].mxu0
      %v4746 = vpop.f32.mrb[0].mxu0
      %v4747 = vadd.f32 0.0, %v4746
      %v4748 = vpop.f32.mrb[0].mxu0
      %4749 = vmatprep.mubr.bf16.mxu0 0
      %4750 = vmatmul.mubr.bf16.gmra.mrb[0].mxu0 %v4576
      %v4751 = vpop.f32.mrb[0].mxu0
      %v4752 = vadd.f32 0.0, %v4751
      %v4753 = vpop.f32.mrb[0].mxu0
      %v4754 = vpop.f32.mrb[0].mxu0
      %v4755 = vadd.f32 0.0, %v4754
      %v4756 = vpop.f32.mrb[0].mxu0
      %4757 = vmatprep.mubr.bf16.mxu0 0
      %4758 = vmatmul.mubr.bf16.gmra.mrb[0].mxu0 %v4579
      %v4759 = vpop.f32.mrb[0].mxu0
      %v4760 = vadd.f32 0.0, %v4759
      %v4761 = vpop.f32.mrb[0].mxu0
      %v4762 = vpop.f32.mrb[0].mxu0
      %v4763 = vadd.f32 0.0, %v4762
      %v4764 = vpop.f32.mrb[0].mxu0
      %4765 = vmatprep.mubr.bf16.mxu0 0
      %4766 = vmatmul.mubr.bf16.gmra.mrb[0].mxu0 %v4582
      %v4767 = vpop.f32.mrb[0].mxu0
      %v4768 = vadd.f32 0.0, %v4767
      %v4769 = vpop.f32.mrb[0].mxu0
      %v4770 = vpop.f32.mrb[0].mxu0
      %v4771 = vadd.f32 0.0, %v4770
      %v4772 = vpop.f32.mrb[0].mxu0
      %4773 = vmatprep.mubr.bf16.mxu0 0
      %4774 = vmatmul.mubr.bf16.gmra.mrb[0].mxu0 %v4585
      %v4775 = vpop.f32.mrb[0].mxu0
      %v4776 = vadd.f32 0.0, %v4775
      %v4777 = vpop.f32.mrb[0].mxu0
      %v4778 = vpop.f32.mrb[0].mxu0
      %v4779 = vadd.f32 0.0, %v4778
      %v4780 = vpop.f32.mrb[0].mxu0
      %4781 = vmatprep.mubr.bf16.mxu0 0
      %4782 = vmatmul.mubr.bf16.gmra.mrb[0].mxu0 %v4588
      %v4783 = vpop.f32.mrb[0].mxu0
      %v4784 = vadd.f32 0.0, %v4783
      %v4785 = vpop.f32.mrb[0].mxu0
      %v4786 = vpop.f32.mrb[0].mxu0
      %v4787 = vadd.f32 0.0, %v4786
      %v4788 = vpop.f32.mrb[0].mxu0
      %4789 = vmatprep.mubr.bf16.mxu0 0
      %4790 = vmatmul.mubr.bf16.gmra.mrb[0].mxu0 %v4591
      %v4791 = vpop.f32.mrb[0].mxu0
      %v4792 = vadd.f32 0.0, %v4791
      %v4793 = vpop.f32.mrb[0].mxu0
      %v4794 = vpop.f32.mrb[0].mxu0
      %v4795 = vadd.f32 0.0, %v4794
      %v4796 = vpop.f32.mrb[0].mxu0
      %4797 = vmatprep.mubr.bf16.mxu0 0
      %4798 = vmatmul.mubr.bf16.gmra.mrb[0].mxu0 %v4594
      %v4799 = vpop.f32.mrb[0].mxu0
      %v4800 = vadd.f32 0.0, %v4799
      %v4801 = vpop.f32.mrb[0].mxu0
      %v4802 = vpop.f32.mrb[0].mxu0
      %v4803 = vadd.f32 0.0, %v4802
      %v4804 = vpop.f32.mrb[0].mxu0
      %4805 = vmatprep.mubr.bf16.mxu0 0
      %4806 = vmatmul.mubr.bf16.gmra.mrb[0].mxu0 %v4597
      %v4807 = vpop.f32.mrb[0].mxu0
      %v4808 = vadd.f32 0.0, %v4807
      %v4809 = vpop.f32.mrb[0].mxu0
      %v4810 = vpop.f32.mrb[0].mxu0
      %v4811 = vadd.f32 0.0, %v4810
      %v4812 = vpop.f32.mrb[0].mxu0
      %4813 = vmatprep.mubr.bf16.mxu0 0
      %4814 = vmatmul.mubr.bf16.gmra.mrb[0].mxu0 %v4600
      %v4815 = vpop.f32.mrb[0].mxu0
      %v4816 = vadd.f32 0.0, %v4815
      %v4817 = vpop.f32.mrb[0].mxu0
      %v4818 = vpop.f32.mrb[0].mxu0
      %v4819 = vadd.f32 0.0, %v4818
      %v4820 = vpop.f32.mrb[0].mxu0
      %4821 = vmatprep.mubr.bf16.mxu0 0
      %4822 = vmatmul.mubr.bf16.gmra.mrb[0].mxu0 %v4603
      %v4823 = vpop.f32.mrb[0].mxu0
      %v4824 = vadd.f32 0.0, %v4823
      %v4825 = vpop.f32.mrb[0].mxu0
      %v4826 = vpop.f32.mrb[0].mxu0
      %v4827 = vadd.f32 0.0, %v4826
      %v4828 = vpop.f32.mrb[0].mxu0
      %4829 = vdwg.mxu0
      %v4830 = vadd.f32 %v4219, %v4640
      %v4831 = vadd.f32 %v4220, %v4643
      %v4832 = vadd.f32 %v4221, %v4648
      %v4833 = vadd.f32 %v4222, %v4651
      %v4834 = vadd.f32 %v4223, %v4656
      %v4835 = vadd.f32 %v4224, %v4659
      %v4836 = vadd.f32 %v4225, %v4664
      %v4837 = vadd.f32 %v4226, %v4667
      %v4838 = vadd.f32 %v4227, %v4672
      %v4839 = vadd.f32 %v4228, %v4675
      %v4840 = vadd.f32 %v4229, %v4680
      %v4841 = vadd.f32 %v4230, %v4683
      %v4842 = vadd.f32 %v4231, %v4688
      %v4843 = vadd.f32 %v4232, %v4691
      %v4844 = vadd.f32 %v4233, %v4696
      %v4845 = vadd.f32 %v4234, %v4699
      %v4846 = vadd.f32 %v4235, %v4704
      %v4847 = vadd.f32 %v4236, %v4707
      %v4848 = vadd.f32 %v4237, %v4712
      %v4849 = vadd.f32 %v4238, %v4715
      %v4850 = vadd.f32 %v4239, %v4720
      %v4851 = vadd.f32 %v4240, %v4723
      %v4852 = vadd.f32 %v4241, %v4728
      %v4853 = vadd.f32 %v4242, %v4731
      %v4854 = vadd.f32 %v4243, %v4736
      %v4855 = vadd.f32 %v4244, %v4739
      %v4856 = vadd.f32 %v4245, %v4744
      %v4857 = vadd.f32 %v4246, %v4747
      %v4858 = vadd.f32 %v4247, %v4752
      %v4859 = vadd.f32 %v4248, %v4755
      %v4860 = vadd.f32 %v4249, %v4760
      %v4861 = vadd.f32 %v4250, %v4763
      %v4862 = vadd.f32 %v4251, %v4768
      %v4863 = vadd.f32 %v4252, %v4771
      %v4864 = vadd.f32 %v4253, %v4776
      %v4865 = vadd.f32 %v4254, %v4779
      %v4866 = vadd.f32 %v4255, %v4784
      %v4867 = vadd.f32 %v4256, %v4787
      %v4868 = vadd.f32 %v4257, %v4792
      %v4869 = vadd.f32 %v4258, %v4795
      %v4870 = vadd.f32 %v4259, %v4800
      %v4871 = vadd.f32 %v4260, %v4803
      %v4872 = vadd.f32 %v4261, %v4808
      %v4873 = vadd.f32 %v4262, %v4811
      %v4874 = vadd.f32 %v4263, %v4816
      %v4875 = vadd.f32 %v4264, %v4819
      %v4876 = vadd.f32 %v4265, %v4824
      %v4877 = vadd.f32 %v4266, %v4827
      %v4878 = vld [vmem:[#allocation2 + $0x18] sm:$0xf0]
      %s4879 = scalar_lea.vmem %s5, 112
      %v4880 = vld [vmem:[%s4879] sm:$0xf]
      %v4881 = vld [vmem:[%s4879 + $0x4] sm:$0xf]
      %v4882 = vld [vmem:[%s4879 + $0x8] sm:$0xf]
      %v4883 = vld [vmem:[%s4879 + $0xc] sm:$0xf]
      %v4909 = vrot.slane %v4878, 4
      %v4910 = vrot.slane %v4268, 4
      %v4911 = vsel %vm1395, %v4909, %v4910
      %v4912 = vrot.slane %v4269, 4
      %v4913 = vsel %vm1395, %v4910, %v4912
      %v4914 = vrot.slane %v4270, 4
      %v4915 = vsel %vm1395, %v4912, %v4914
      %v4916 = vrot.slane %v4271, 4
      %v4917 = vsel %vm1395, %v4914, %v4916
      %v4918 = vrot.slane %v4272, 4
      %v4919 = vsel %vm1395, %v4916, %v4918
      %v4920 = vrot.slane %v4273, 4
      %v4921 = vsel %vm1395, %v4918, %v4920
      %v4922 = vrot.slane %v4274, 4
      %v4923 = vsel %vm1395, %v4920, %v4922
      %v4924 = vrot.slane %v4275, 4
      %v4925 = vsel %vm1395, %v4922, %v4924
      %v4926 = vrot.slane %v4276, 4
      %v4927 = vsel %vm1395, %v4924, %v4926
      %v4928 = vrot.slane %v4277, 4
      %v4929 = vsel %vm1395, %v4926, %v4928
      %v4930 = vrot.slane %v4278, 4
      %v4931 = vsel %vm1395, %v4928, %v4930
      %v4932 = vrot.slane %v4279, 4
      %v4933 = vsel %vm1395, %v4930, %v4932
      %v4934 = vrot.slane %v4280, 4
      %v4935 = vsel %vm1395, %v4932, %v4934
      %v4936 = vrot.slane %v4281, 4
      %v4937 = vsel %vm1395, %v4934, %v4936
      %v4938 = vrot.slane %v4282, 4
      %v4939 = vsel %vm1395, %v4936, %v4938
      %v4940 = vrot.slane %v4283, 4
      %v4941 = vsel %vm1395, %v4938, %v4940
      %v4942 = vrot.slane %v4284, 4
      %v4943 = vsel %vm1395, %v4940, %v4942
      %v4944 = vrot.slane %v4285, 4
      %v4945 = vsel %vm1395, %v4942, %v4944
      %v4946 = vrot.slane %v4286, 4
      %v4947 = vsel %vm1395, %v4944, %v4946
      %v4948 = vrot.slane %v4287, 4
      %v4949 = vsel %vm1395, %v4946, %v4948
      %v4950 = vrot.slane %v4288, 4
      %v4951 = vsel %vm1395, %v4948, %v4950
      %v4952 = vrot.slane %v4289, 4
      %v4953 = vsel %vm1395, %v4950, %v4952
      %v4954 = vrot.slane %v4290, 4
      %v4955 = vsel %vm1395, %v4952, %v4954
      %v4956 = vrot.slane %v4291, 4
      %v4957 = vsel %vm1395, %v4954, %v4956
      %v4962 = vunpack.c.l.b16 %v4880
      %v4963 = vunpack.c.l.b16 %v4881
      %v4964 = vunpack.c.l.b16 %v4882
      %v4965 = vunpack.c.l.b16 %v4883
      %v4966 = vpack.c.b16 %v4963, %v4962
      %v4967 = vpack.c.b16 %v4965, %v4964
      %v4971 = vsel %vm348, %v4911, 0
      %v4974 = vsel %vm348, %v4913, 0
      %v4977 = vsel %vm348, %v4915, 0
      %v4980 = vsel %vm348, %v4917, 0
      %v4983 = vsel %vm348, %v4919, 0
      %v4986 = vsel %vm348, %v4921, 0
      %v4989 = vsel %vm348, %v4923, 0
      %v4992 = vsel %vm348, %v4925, 0
      %v4995 = vsel %vm348, %v4927, 0
      %v4998 = vsel %vm348, %v4929, 0
      %v5001 = vsel %vm348, %v4931, 0
      %v5004 = vsel %vm348, %v4933, 0
      %v5007 = vsel %vm348, %v4935, 0
      %v5010 = vsel %vm348, %v4937, 0
      %v5013 = vsel %vm348, %v4939, 0
      %v5016 = vsel %vm348, %v4941, 0
      %v5019 = vsel %vm348, %v4943, 0
      %v5022 = vsel %vm348, %v4945, 0
      %v5025 = vsel %vm348, %v4947, 0
      %v5028 = vsel %vm348, %v4949, 0
      %v5031 = vsel %vm348, %v4951, 0
      %v5034 = vsel %vm348, %v4953, 0
      %v5037 = vsel %vm348, %v4955, 0
      %v5040 = vsel %vm348, %v4957, 0
      %5042 = vmatprep.subr.bf16.mxu0 0
      %5043 = vmatpush1.bf16.msra.mxu0 %v4966
      %5044 = vmatprep.subr.bf16.mxu0 0
      %5045 = vmatpush1.bf16.msra.mxu0 %v4967
      %5046 = vmatprep.subr.bf16.mxu0 0
      %5047 = vmatpush1.bf16.msra.mxu0 0
      %5048 = vmatprep.subr.bf16.mxu0 0
      %5049 = vmatpush1.bf16.msra.mxu0 0
      %5050 = vmatprep.subr.bf16.mxu0 0
      %5051 = vmatpush1.bf16.msra.mxu0 0
      %5052 = vmatprep.subr.bf16.mxu0 0
      %5053 = vmatpush1.bf16.msra.mxu0 0
      %5054 = vmatprep.subr.bf16.mxu0 0
      %5055 = vmatpush1.bf16.msra.mxu0 0
      %5056 = vmatprep.subr.bf16.mxu0 0
      %5057 = vmatpush1.bf16.msra.mxu0 0
      %5058 = vmatprep.subr.bf16.mxu0 0
      %5059 = vmatpush1.bf16.msra.mxu0 0
      %5060 = vmatprep.subr.bf16.mxu0 0
      %5061 = vmatpush1.bf16.msra.mxu0 0
      %5062 = vmatprep.subr.bf16.mxu0 0
      %5063 = vmatpush1.bf16.msra.mxu0 0
      %5064 = vmatprep.subr.bf16.mxu0 0
      %5065 = vmatpush1.bf16.msra.mxu0 0
      %5066 = vmatprep.subr.bf16.mxu0 0
      %5067 = vmatpush1.bf16.msra.mxu0 0
      %5068 = vmatprep.subr.bf16.mxu0 0
      %5069 = vmatpush1.bf16.msra.mxu0 0
      %5070 = vmatprep.subr.bf16.mxu0 0
      %5071 = vmatpush1.bf16.msra.mxu0 0
      %5072 = vmatprep.subr.bf16.mxu0 0
      %5073 = vmatpush1.bf16.msra.mxu0 0
      %5074 = vmatprep.mubr.bf16.mxu0 0
      %5075 = vmatmul.mubr.bf16.gmra.mrb[0].mxu0 %v4971
      %v5076 = vpop.f32.mrb[0].mxu0
      %v5077 = vadd.f32 0.0, %v5076
      %v5078 = vpop.f32.mrb[0].mxu0
      %v5079 = vpop.f32.mrb[0].mxu0
      %v5080 = vadd.f32 0.0, %v5079
      %v5081 = vpop.f32.mrb[0].mxu0
      %5082 = vmatprep.mubr.bf16.mxu0 0
      %5083 = vmatmul.mubr.bf16.gmra.mrb[0].mxu0 %v4974
      %v5084 = vpop.f32.mrb[0].mxu0
      %v5085 = vadd.f32 0.0, %v5084
      %v5086 = vpop.f32.mrb[0].mxu0
      %v5087 = vpop.f32.mrb[0].mxu0
      %v5088 = vadd.f32 0.0, %v5087
      %v5089 = vpop.f32.mrb[0].mxu0
      %5090 = vmatprep.mubr.bf16.mxu0 0
      %5091 = vmatmul.mubr.bf16.gmra.mrb[0].mxu0 %v4977
      %v5092 = vpop.f32.mrb[0].mxu0
      %v5093 = vadd.f32 0.0, %v5092
      %v5094 = vpop.f32.mrb[0].mxu0
      %v5095 = vpop.f32.mrb[0].mxu0
      %v5096 = vadd.f32 0.0, %v5095
      %v5097 = vpop.f32.mrb[0].mxu0
      %5098 = vmatprep.mubr.bf16.mxu0 0
      %5099 = vmatmul.mubr.bf16.gmra.mrb[0].mxu0 %v4980
      %v5100 = vpop.f32.mrb[0].mxu0
      %v5101 = vadd.f32 0.0, %v5100
      %v5102 = vpop.f32.mrb[0].mxu0
      %v5103 = vpop.f32.mrb[0].mxu0
      %v5104 = vadd.f32 0.0, %v5103
      %v5105 = vpop.f32.mrb[0].mxu0
      %5106 = vmatprep.mubr.bf16.mxu0 0
      %5107 = vmatmul.mubr.bf16.gmra.mrb[0].mxu0 %v4983
      %v5108 = vpop.f32.mrb[0].mxu0
      %v5109 = vadd.f32 0.0, %v5108
      %v5110 = vpop.f32.mrb[0].mxu0
      %v5111 = vpop.f32.mrb[0].mxu0
      %v5112 = vadd.f32 0.0, %v5111
      %v5113 = vpop.f32.mrb[0].mxu0
      %5114 = vmatprep.mubr.bf16.mxu0 0
      %5115 = vmatmul.mubr.bf16.gmra.mrb[0].mxu0 %v4986
      %v5116 = vpop.f32.mrb[0].mxu0
      %v5117 = vadd.f32 0.0, %v5116
      %v5118 = vpop.f32.mrb[0].mxu0
      %v5119 = vpop.f32.mrb[0].mxu0
      %v5120 = vadd.f32 0.0, %v5119
      %v5121 = vpop.f32.mrb[0].mxu0
      %5122 = vmatprep.mubr.bf16.mxu0 0
      %5123 = vmatmul.mubr.bf16.gmra.mrb[0].mxu0 %v4989
      %v5124 = vpop.f32.mrb[0].mxu0
      %v5125 = vadd.f32 0.0, %v5124
      %v5126 = vpop.f32.mrb[0].mxu0
      %v5127 = vpop.f32.mrb[0].mxu0
      %v5128 = vadd.f32 0.0, %v5127
      %v5129 = vpop.f32.mrb[0].mxu0
      %5130 = vmatprep.mubr.bf16.mxu0 0
      %5131 = vmatmul.mubr.bf16.gmra.mrb[0].mxu0 %v4992
      %v5132 = vpop.f32.mrb[0].mxu0
      %v5133 = vadd.f32 0.0, %v5132
      %v5134 = vpop.f32.mrb[0].mxu0
      %v5135 = vpop.f32.mrb[0].mxu0
      %v5136 = vadd.f32 0.0, %v5135
      %v5137 = vpop.f32.mrb[0].mxu0
      %5138 = vmatprep.mubr.bf16.mxu0 0
      %5139 = vmatmul.mubr.bf16.gmra.mrb[0].mxu0 %v4995
      %v5140 = vpop.f32.mrb[0].mxu0
      %v5141 = vadd.f32 0.0, %v5140
      %v5142 = vpop.f32.mrb[0].mxu0
      %v5143 = vpop.f32.mrb[0].mxu0
      %v5144 = vadd.f32 0.0, %v5143
      %v5145 = vpop.f32.mrb[0].mxu0
      %5146 = vmatprep.mubr.bf16.mxu0 0
      %5147 = vmatmul.mubr.bf16.gmra.mrb[0].mxu0 %v4998
      %v5148 = vpop.f32.mrb[0].mxu0
      %v5149 = vadd.f32 0.0, %v5148
      %v5150 = vpop.f32.mrb[0].mxu0
      %v5151 = vpop.f32.mrb[0].mxu0
      %v5152 = vadd.f32 0.0, %v5151
      %v5153 = vpop.f32.mrb[0].mxu0
      %5154 = vmatprep.mubr.bf16.mxu0 0
      %5155 = vmatmul.mubr.bf16.gmra.mrb[0].mxu0 %v5001
      %v5156 = vpop.f32.mrb[0].mxu0
      %v5157 = vadd.f32 0.0, %v5156
      %v5158 = vpop.f32.mrb[0].mxu0
      %v5159 = vpop.f32.mrb[0].mxu0
      %v5160 = vadd.f32 0.0, %v5159
      %v5161 = vpop.f32.mrb[0].mxu0
      %5162 = vmatprep.mubr.bf16.mxu0 0
      %5163 = vmatmul.mubr.bf16.gmra.mrb[0].mxu0 %v5004
      %v5164 = vpop.f32.mrb[0].mxu0
      %v5165 = vadd.f32 0.0, %v5164
      %v5166 = vpop.f32.mrb[0].mxu0
      %v5167 = vpop.f32.mrb[0].mxu0
      %v5168 = vadd.f32 0.0, %v5167
      %v5169 = vpop.f32.mrb[0].mxu0
      %5170 = vmatprep.mubr.bf16.mxu0 0
      %5171 = vmatmul.mubr.bf16.gmra.mrb[0].mxu0 %v5007
      %v5172 = vpop.f32.mrb[0].mxu0
      %v5173 = vadd.f32 0.0, %v5172
      %v5174 = vpop.f32.mrb[0].mxu0
      %v5175 = vpop.f32.mrb[0].mxu0
      %v5176 = vadd.f32 0.0, %v5175
      %v5177 = vpop.f32.mrb[0].mxu0
      %5178 = vmatprep.mubr.bf16.mxu0 0
      %5179 = vmatmul.mubr.bf16.gmra.mrb[0].mxu0 %v5010
      %v5180 = vpop.f32.mrb[0].mxu0
      %v5181 = vadd.f32 0.0, %v5180
      %v5182 = vpop.f32.mrb[0].mxu0
      %v5183 = vpop.f32.mrb[0].mxu0
      %v5184 = vadd.f32 0.0, %v5183
      %v5185 = vpop.f32.mrb[0].mxu0
      %5186 = vmatprep.mubr.bf16.mxu0 0
      %5187 = vmatmul.mubr.bf16.gmra.mrb[0].mxu0 %v5013
      %v5188 = vpop.f32.mrb[0].mxu0
      %v5189 = vadd.f32 0.0, %v5188
      %v5190 = vpop.f32.mrb[0].mxu0
      %v5191 = vpop.f32.mrb[0].mxu0
      %v5192 = vadd.f32 0.0, %v5191
      %v5193 = vpop.f32.mrb[0].mxu0
      %5194 = vmatprep.mubr.bf16.mxu0 0
      %5195 = vmatmul.mubr.bf16.gmra.mrb[0].mxu0 %v5016
      %v5196 = vpop.f32.mrb[0].mxu0
      %v5197 = vadd.f32 0.0, %v5196
      %v5198 = vpop.f32.mrb[0].mxu0
      %v5199 = vpop.f32.mrb[0].mxu0
      %v5200 = vadd.f32 0.0, %v5199
      %v5201 = vpop.f32.mrb[0].mxu0
      %5202 = vmatprep.mubr.bf16.mxu0 0
      %5203 = vmatmul.mubr.bf16.gmra.mrb[0].mxu0 %v5019
      %v5204 = vpop.f32.mrb[0].mxu0
      %v5205 = vadd.f32 0.0, %v5204
      %v5206 = vpop.f32.mrb[0].mxu0
      %v5207 = vpop.f32.mrb[0].mxu0
      %v5208 = vadd.f32 0.0, %v5207
      %v5209 = vpop.f32.mrb[0].mxu0
      %5210 = vmatprep.mubr.bf16.mxu0 0
      %5211 = vmatmul.mubr.bf16.gmra.mrb[0].mxu0 %v5022
      %v5212 = vpop.f32.mrb[0].mxu0
      %v5213 = vadd.f32 0.0, %v5212
      %v5214 = vpop.f32.mrb[0].mxu0
      %v5215 = vpop.f32.mrb[0].mxu0
      %v5216 = vadd.f32 0.0, %v5215
      %v5217 = vpop.f32.mrb[0].mxu0
      %5218 = vmatprep.mubr.bf16.mxu0 0
      %5219 = vmatmul.mubr.bf16.gmra.mrb[0].mxu0 %v5025
      %v5220 = vpop.f32.mrb[0].mxu0
      %v5221 = vadd.f32 0.0, %v5220
      %v5222 = vpop.f32.mrb[0].mxu0
      %v5223 = vpop.f32.mrb[0].mxu0
      %v5224 = vadd.f32 0.0, %v5223
      %v5225 = vpop.f32.mrb[0].mxu0
      %5226 = vmatprep.mubr.bf16.mxu0 0
      %5227 = vmatmul.mubr.bf16.gmra.mrb[0].mxu0 %v5028
      %v5228 = vpop.f32.mrb[0].mxu0
      %v5229 = vadd.f32 0.0, %v5228
      %v5230 = vpop.f32.mrb[0].mxu0
      %v5231 = vpop.f32.mrb[0].mxu0
      %v5232 = vadd.f32 0.0, %v5231
      %v5233 = vpop.f32.mrb[0].mxu0
      %5234 = vmatprep.mubr.bf16.mxu0 0
      %5235 = vmatmul.mubr.bf16.gmra.mrb[0].mxu0 %v5031
      %v5236 = vpop.f32.mrb[0].mxu0
      %v5237 = vadd.f32 0.0, %v5236
      %v5238 = vpop.f32.mrb[0].mxu0
      %v5239 = vpop.f32.mrb[0].mxu0
      %v5240 = vadd.f32 0.0, %v5239
      %v5241 = vpop.f32.mrb[0].mxu0
      %5242 = vmatprep.mubr.bf16.mxu0 0
      %5243 = vmatmul.mubr.bf16.gmra.mrb[0].mxu0 %v5034
      %v5244 = vpop.f32.mrb[0].mxu0
      %v5245 = vadd.f32 0.0, %v5244
      %v5246 = vpop.f32.mrb[0].mxu0
      %v5247 = vpop.f32.mrb[0].mxu0
      %v5248 = vadd.f32 0.0, %v5247
      %v5249 = vpop.f32.mrb[0].mxu0
      %5250 = vmatprep.mubr.bf16.mxu0 0
      %5251 = vmatmul.mubr.bf16.gmra.mrb[0].mxu0 %v5037
      %v5252 = vpop.f32.mrb[0].mxu0
      %v5253 = vadd.f32 0.0, %v5252
      %v5254 = vpop.f32.mrb[0].mxu0
      %v5255 = vpop.f32.mrb[0].mxu0
      %v5256 = vadd.f32 0.0, %v5255
      %v5257 = vpop.f32.mrb[0].mxu0
      %5258 = vmatprep.mubr.bf16.mxu0 0
      %5259 = vmatmul.mubr.bf16.gmra.mrb[0].mxu0 %v5040
      %v5260 = vpop.f32.mrb[0].mxu0
      %v5261 = vadd.f32 0.0, %v5260
      %v5262 = vpop.f32.mrb[0].mxu0
      %v5263 = vpop.f32.mrb[0].mxu0
      %v5264 = vadd.f32 0.0, %v5263
      %v5265 = vpop.f32.mrb[0].mxu0
      %5266 = vdwg.mxu0
      %v5267 = vadd.f32 %v4830, %v5077
      %v5268 = vadd.f32 %v4831, %v5080
      %v5269 = vadd.f32 %v4832, %v5085
      %v5270 = vadd.f32 %v4833, %v5088
      %v5271 = vadd.f32 %v4834, %v5093
      %v5272 = vadd.f32 %v4835, %v5096
      %v5273 = vadd.f32 %v4836, %v5101
      %v5274 = vadd.f32 %v4837, %v5104
      %v5275 = vadd.f32 %v4838, %v5109
      %v5276 = vadd.f32 %v4839, %v5112
      %v5277 = vadd.f32 %v4840, %v5117
      %v5278 = vadd.f32 %v4841, %v5120
      %v5279 = vadd.f32 %v4842, %v5125
      %v5280 = vadd.f32 %v4843, %v5128
      %v5281 = vadd.f32 %v4844, %v5133
      %v5282 = vadd.f32 %v4845, %v5136
      %v5283 = vadd.f32 %v4846, %v5141
      %v5284 = vadd.f32 %v4847, %v5144
      %v5285 = vadd.f32 %v4848, %v5149
      %v5286 = vadd.f32 %v4849, %v5152
      %v5287 = vadd.f32 %v4850, %v5157
      %v5288 = vadd.f32 %v4851, %v5160
      %v5289 = vadd.f32 %v4852, %v5165
      %v5290 = vadd.f32 %v4853, %v5168
      %v5291 = vadd.f32 %v4854, %v5173
      %v5292 = vadd.f32 %v4855, %v5176
      %v5293 = vadd.f32 %v4856, %v5181
      %v5294 = vadd.f32 %v4857, %v5184
      %v5295 = vadd.f32 %v4858, %v5189
      %v5296 = vadd.f32 %v4859, %v5192
      %v5297 = vadd.f32 %v4860, %v5197
      %v5298 = vadd.f32 %v4861, %v5200
      %v5299 = vadd.f32 %v4862, %v5205
      %v5300 = vadd.f32 %v4863, %v5208
      %v5301 = vadd.f32 %v4864, %v5213
      %v5302 = vadd.f32 %v4865, %v5216
      %v5303 = vadd.f32 %v4866, %v5221
      %v5304 = vadd.f32 %v4867, %v5224
      %v5305 = vadd.f32 %v4868, %v5229
      %v5306 = vadd.f32 %v4869, %v5232
      %v5307 = vadd.f32 %v4870, %v5237
      %v5308 = vadd.f32 %v4871, %v5240
      %v5309 = vadd.f32 %v4872, %v5245
      %v5310 = vadd.f32 %v4873, %v5248
      %v5311 = vadd.f32 %v4874, %v5253
      %v5312 = vadd.f32 %v4875, %v5256
      %v5313 = vadd.f32 %v4876, %v5261
      %v5314 = vadd.f32 %v4877, %v5264
      %v5315 = vld [vmem:[#allocation2 + $0xd8] sm:$0x1f]
      %s5316 = scalar_lea.vmem %s5, 128
      %v5317 = vld [vmem:[%s5316] sm:$0xf]
      %v5318 = vld [vmem:[%s5316 + $0x4] sm:$0xf]
      %v5319 = vld [vmem:[%s5316 + $0x8] sm:$0xf]
      %v5320 = vld [vmem:[%s5316 + $0xc] sm:$0xf]
      %v5322 = vshrl.u32 %v4878, 16
      %v5324 = vrot.slane %v5322, 4
      %v5325 = vshll.u32 %v4878, 16
      %v5327 = vrot.slane %v5325, 5
      %v5328 = vor.u32 %v5324, %v5327
      %v5329 = vrot.slane %v4306, 4
      %v5330 = vrot.slane %v4309, 5
      %v5331 = vor.u32 %v5329, %v5330
      %v5332 = vsel %vm2294, %v5328, %v5331
      %v5333 = vrot.slane %v4315, 4
      %v5334 = vrot.slane %v4318, 5
      %v5335 = vor.u32 %v5333, %v5334
      %v5336 = vsel %vm2294, %v5331, %v5335
      %v5337 = vrot.slane %v4324, 4
      %v5338 = vrot.slane %v4327, 5
      %v5339 = vor.u32 %v5337, %v5338
      %v5340 = vsel %vm2294, %v5335, %v5339
      %v5341 = vrot.slane %v4333, 4
      %v5342 = vrot.slane %v4336, 5
      %v5343 = vor.u32 %v5341, %v5342
      %v5344 = vsel %vm2294, %v5339, %v5343
      %v5345 = vrot.slane %v4342, 4
      %v5346 = vrot.slane %v4345, 5
      %v5347 = vor.u32 %v5345, %v5346
      %v5348 = vsel %vm2294, %v5343, %v5347
      %v5349 = vrot.slane %v4351, 4
      %v5350 = vrot.slane %v4354, 5
      %v5351 = vor.u32 %v5349, %v5350
      %v5352 = vsel %vm2294, %v5347, %v5351
      %v5353 = vrot.slane %v4360, 4
      %v5354 = vrot.slane %v4363, 5
      %v5355 = vor.u32 %v5353, %v5354
      %v5356 = vsel %vm2294, %v5351, %v5355
      %v5357 = vrot.slane %v4369, 4
      %v5358 = vrot.slane %v4372, 5
      %v5359 = vor.u32 %v5357, %v5358
      %v5360 = vsel %vm2294, %v5355, %v5359
      %v5361 = vrot.slane %v4378, 4
      %v5362 = vrot.slane %v4381, 5
      %v5363 = vor.u32 %v5361, %v5362
      %v5364 = vsel %vm2294, %v5359, %v5363
      %v5365 = vrot.slane %v4387, 4
      %v5366 = vrot.slane %v4390, 5
      %v5367 = vor.u32 %v5365, %v5366
      %v5368 = vsel %vm2294, %v5363, %v5367
      %v5369 = vrot.slane %v4396, 4
      %v5370 = vrot.slane %v4399, 5
      %v5371 = vor.u32 %v5369, %v5370
      %v5372 = vsel %vm2294, %v5367, %v5371
      %v5373 = vrot.slane %v4405, 4
      %v5374 = vrot.slane %v4408, 5
      %v5375 = vor.u32 %v5373, %v5374
      %v5376 = vsel %vm2294, %v5371, %v5375
      %v5377 = vrot.slane %v4414, 4
      %v5378 = vrot.slane %v4417, 5
      %v5379 = vor.u32 %v5377, %v5378
      %v5380 = vsel %vm2294, %v5375, %v5379
      %v5381 = vrot.slane %v4423, 4
      %v5382 = vrot.slane %v4426, 5
      %v5383 = vor.u32 %v5381, %v5382
      %v5384 = vsel %vm2294, %v5379, %v5383
      %v5385 = vrot.slane %v4432, 4
      %v5386 = vrot.slane %v4435, 5
      %v5387 = vor.u32 %v5385, %v5386
      %v5388 = vsel %vm2294, %v5383, %v5387
      %v5389 = vrot.slane %v4441, 4
      %v5390 = vrot.slane %v4444, 5
      %v5391 = vor.u32 %v5389, %v5390
      %v5392 = vsel %vm2294, %v5387, %v5391
      %v5393 = vrot.slane %v4450, 4
      %v5394 = vrot.slane %v4453, 5
      %v5395 = vor.u32 %v5393, %v5394
      %v5396 = vsel %vm2294, %v5391, %v5395
      %v5397 = vrot.slane %v4459, 4
      %v5398 = vrot.slane %v4462, 5
      %v5399 = vor.u32 %v5397, %v5398
      %v5400 = vsel %vm2294, %v5395, %v5399
      %v5401 = vrot.slane %v4468, 4
      %v5402 = vrot.slane %v4471, 5
      %v5403 = vor.u32 %v5401, %v5402
      %v5404 = vsel %vm2294, %v5399, %v5403
      %v5405 = vrot.slane %v4477, 4
      %v5406 = vrot.slane %v4480, 5
      %v5407 = vor.u32 %v5405, %v5406
      %v5408 = vsel %vm2294, %v5403, %v5407
      %v5409 = vrot.slane %v4486, 4
      %v5410 = vrot.slane %v4489, 5
      %v5411 = vor.u32 %v5409, %v5410
      %v5412 = vsel %vm2294, %v5407, %v5411
      %v5413 = vrot.slane %v4495, 4
      %v5414 = vrot.slane %v4498, 5
      %v5415 = vor.u32 %v5413, %v5414
      %v5416 = vsel %vm2294, %v5411, %v5415
      %v5417 = vrot.slane %v4504, 4
      %v5418 = vrot.slane %v4507, 5
      %v5419 = vor.u32 %v5417, %v5418
      %v5420 = vsel %vm2294, %v5415, %v5419
      %v5422 = vshrl.u32 %v5315, 16
      %v5424 = vrot.slane %v5422, 4
      %v5425 = vshll.u32 %v5315, 16
      %v5427 = vrot.slane %v5425, 5
      %v5428 = vor.u32 %v5424, %v5427
      %v5429 = vsel %vm2294, %v5419, %v5428
      %v5434 = vunpack.c.l.b16 %v5317
      %v5435 = vunpack.c.l.b16 %v5318
      %v5436 = vunpack.c.l.b16 %v5319
      %v5437 = vunpack.c.l.b16 %v5320
      %v5438 = vpack.c.b16 %v5435, %v5434
      %v5439 = vpack.c.b16 %v5437, %v5436
      %v5443 = vsel %vm348, %v5332, 0
      %v5446 = vsel %vm348, %v5336, 0
      %v5449 = vsel %vm348, %v5340, 0
      %v5452 = vsel %vm348, %v5344, 0
      %v5455 = vsel %vm348, %v5348, 0
      %v5458 = vsel %vm348, %v5352, 0
      %v5461 = vsel %vm348, %v5356, 0
      %v5464 = vsel %vm348, %v5360, 0
      %v5467 = vsel %vm348, %v5364, 0
      %v5470 = vsel %vm348, %v5368, 0
      %v5473 = vsel %vm348, %v5372, 0
      %v5476 = vsel %vm348, %v5376, 0
      %v5479 = vsel %vm348, %v5380, 0
      %v5482 = vsel %vm348, %v5384, 0
      %v5485 = vsel %vm348, %v5388, 0
      %v5488 = vsel %vm348, %v5392, 0
      %v5491 = vsel %vm348, %v5396, 0
      %v5494 = vsel %vm348, %v5400, 0
      %v5497 = vsel %vm348, %v5404, 0
      %v5500 = vsel %vm348, %v5408, 0
      %v5503 = vsel %vm348, %v5412, 0
      %v5506 = vsel %vm348, %v5416, 0
      %v5509 = vsel %vm348, %v5420, 0
      %v5512 = vsel %vm348, %v5429, 0
      %5514 = vmatprep.subr.bf16.mxu0 0
      %5515 = vmatpush1.bf16.msra.mxu0 %v5438
      %5516 = vmatprep.subr.bf16.mxu0 0
      %5517 = vmatpush1.bf16.msra.mxu0 %v5439
      %5518 = vmatprep.subr.bf16.mxu0 0
      %5519 = vmatpush1.bf16.msra.mxu0 0
      %5520 = vmatprep.subr.bf16.mxu0 0
      %5521 = vmatpush1.bf16.msra.mxu0 0
      %5522 = vmatprep.subr.bf16.mxu0 0
      %5523 = vmatpush1.bf16.msra.mxu0 0
      %5524 = vmatprep.subr.bf16.mxu0 0
      %5525 = vmatpush1.bf16.msra.mxu0 0
      %5526 = vmatprep.subr.bf16.mxu0 0
      %5527 = vmatpush1.bf16.msra.mxu0 0
      %5528 = vmatprep.subr.bf16.mxu0 0
      %5529 = vmatpush1.bf16.msra.mxu0 0
      %5530 = vmatprep.subr.bf16.mxu0 0
      %5531 = vmatpush1.bf16.msra.mxu0 0
      %5532 = vmatprep.subr.bf16.mxu0 0
      %5533 = vmatpush1.bf16.msra.mxu0 0
      %5534 = vmatprep.subr.bf16.mxu0 0
      %5535 = vmatpush1.bf16.msra.mxu0 0
      %5536 = vmatprep.subr.bf16.mxu0 0
      %5537 = vmatpush1.bf16.msra.mxu0 0
      %5538 = vmatprep.subr.bf16.mxu0 0
      %5539 = vmatpush1.bf16.msra.mxu0 0
      %5540 = vmatprep.subr.bf16.mxu0 0
      %5541 = vmatpush1.bf16.msra.mxu0 0
      %5542 = vmatprep.subr.bf16.mxu0 0
      %5543 = vmatpush1.bf16.msra.mxu0 0
      %5544 = vmatprep.subr.bf16.mxu0 0
      %5545 = vmatpush1.bf16.msra.mxu0 0
      %5546 = vmatprep.mubr.bf16.mxu0 0
      %5547 = vmatmul.mubr.bf16.gmra.mrb[0].mxu0 %v5443
      %v5548 = vpop.f32.mrb[0].mxu0
      %v5549 = vadd.f32 0.0, %v5548
      %v5550 = vpop.f32.mrb[0].mxu0
      %v5551 = vpop.f32.mrb[0].mxu0
      %v5552 = vadd.f32 0.0, %v5551
      %v5553 = vpop.f32.mrb[0].mxu0
      %5554 = vmatprep.mubr.bf16.mxu0 0
      %5555 = vmatmul.mubr.bf16.gmra.mrb[0].mxu0 %v5446
      %v5556 = vpop.f32.mrb[0].mxu0
      %v5557 = vadd.f32 0.0, %v5556
      %v5558 = vpop.f32.mrb[0].mxu0
      %v5559 = vpop.f32.mrb[0].mxu0
      %v5560 = vadd.f32 0.0, %v5559
      %v5561 = vpop.f32.mrb[0].mxu0
      %5562 = vmatprep.mubr.bf16.mxu0 0
      %5563 = vmatmul.mubr.bf16.gmra.mrb[0].mxu0 %v5449
      %v5564 = vpop.f32.mrb[0].mxu0
      %v5565 = vadd.f32 0.0, %v5564
      %v5566 = vpop.f32.mrb[0].mxu0
      %v5567 = vpop.f32.mrb[0].mxu0
      %v5568 = vadd.f32 0.0, %v5567
      %v5569 = vpop.f32.mrb[0].mxu0
      %5570 = vmatprep.mubr.bf16.mxu0 0
      %5571 = vmatmul.mubr.bf16.gmra.mrb[0].mxu0 %v5452
      %v5572 = vpop.f32.mrb[0].mxu0
      %v5573 = vadd.f32 0.0, %v5572
      %v5574 = vpop.f32.mrb[0].mxu0
      %v5575 = vpop.f32.mrb[0].mxu0
      %v5576 = vadd.f32 0.0, %v5575
      %v5577 = vpop.f32.mrb[0].mxu0
      %5578 = vmatprep.mubr.bf16.mxu0 0
      %5579 = vmatmul.mubr.bf16.gmra.mrb[0].mxu0 %v5455
      %v5580 = vpop.f32.mrb[0].mxu0
      %v5581 = vadd.f32 0.0, %v5580
      %v5582 = vpop.f32.mrb[0].mxu0
      %v5583 = vpop.f32.mrb[0].mxu0
      %v5584 = vadd.f32 0.0, %v5583
      %v5585 = vpop.f32.mrb[0].mxu0
      %5586 = vmatprep.mubr.bf16.mxu0 0
      %5587 = vmatmul.mubr.bf16.gmra.mrb[0].mxu0 %v5458
      %v5588 = vpop.f32.mrb[0].mxu0
      %v5589 = vadd.f32 0.0, %v5588
      %v5590 = vpop.f32.mrb[0].mxu0
      %v5591 = vpop.f32.mrb[0].mxu0
      %v5592 = vadd.f32 0.0, %v5591
      %v5593 = vpop.f32.mrb[0].mxu0
      %5594 = vmatprep.mubr.bf16.mxu0 0
      %5595 = vmatmul.mubr.bf16.gmra.mrb[0].mxu0 %v5461
      %v5596 = vpop.f32.mrb[0].mxu0
      %v5597 = vadd.f32 0.0, %v5596
      %v5598 = vpop.f32.mrb[0].mxu0
      %v5599 = vpop.f32.mrb[0].mxu0
      %v5600 = vadd.f32 0.0, %v5599
      %v5601 = vpop.f32.mrb[0].mxu0
      %5602 = vmatprep.mubr.bf16.mxu0 0
      %5603 = vmatmul.mubr.bf16.gmra.mrb[0].mxu0 %v5464
      %v5604 = vpop.f32.mrb[0].mxu0
      %v5605 = vadd.f32 0.0, %v5604
      %v5606 = vpop.f32.mrb[0].mxu0
      %v5607 = vpop.f32.mrb[0].mxu0
      %v5608 = vadd.f32 0.0, %v5607
      %v5609 = vpop.f32.mrb[0].mxu0
      %5610 = vmatprep.mubr.bf16.mxu0 0
      %5611 = vmatmul.mubr.bf16.gmra.mrb[0].mxu0 %v5467
      %v5612 = vpop.f32.mrb[0].mxu0
      %v5613 = vadd.f32 0.0, %v5612
      %v5614 = vpop.f32.mrb[0].mxu0
      %v5615 = vpop.f32.mrb[0].mxu0
      %v5616 = vadd.f32 0.0, %v5615
      %v5617 = vpop.f32.mrb[0].mxu0
      %5618 = vmatprep.mubr.bf16.mxu0 0
      %5619 = vmatmul.mubr.bf16.gmra.mrb[0].mxu0 %v5470
      %v5620 = vpop.f32.mrb[0].mxu0
      %v5621 = vadd.f32 0.0, %v5620
      %v5622 = vpop.f32.mrb[0].mxu0
      %v5623 = vpop.f32.mrb[0].mxu0
      %v5624 = vadd.f32 0.0, %v5623
      %v5625 = vpop.f32.mrb[0].mxu0
      %5626 = vmatprep.mubr.bf16.mxu0 0
      %5627 = vmatmul.mubr.bf16.gmra.mrb[0].mxu0 %v5473
      %v5628 = vpop.f32.mrb[0].mxu0
      %v5629 = vadd.f32 0.0, %v5628
      %v5630 = vpop.f32.mrb[0].mxu0
      %v5631 = vpop.f32.mrb[0].mxu0
      %v5632 = vadd.f32 0.0, %v5631
      %v5633 = vpop.f32.mrb[0].mxu0
      %5634 = vmatprep.mubr.bf16.mxu0 0
      %5635 = vmatmul.mubr.bf16.gmra.mrb[0].mxu0 %v5476
      %v5636 = vpop.f32.mrb[0].mxu0
      %v5637 = vadd.f32 0.0, %v5636
      %v5638 = vpop.f32.mrb[0].mxu0
      %v5639 = vpop.f32.mrb[0].mxu0
      %v5640 = vadd.f32 0.0, %v5639
      %v5641 = vpop.f32.mrb[0].mxu0
      %5642 = vmatprep.mubr.bf16.mxu0 0
      %5643 = vmatmul.mubr.bf16.gmra.mrb[0].mxu0 %v5479
      %v5644 = vpop.f32.mrb[0].mxu0
      %v5645 = vadd.f32 0.0, %v5644
      %v5646 = vpop.f32.mrb[0].mxu0
      %v5647 = vpop.f32.mrb[0].mxu0
      %v5648 = vadd.f32 0.0, %v5647
      %v5649 = vpop.f32.mrb[0].mxu0
      %5650 = vmatprep.mubr.bf16.mxu0 0
      %5651 = vmatmul.mubr.bf16.gmra.mrb[0].mxu0 %v5482
      %v5652 = vpop.f32.mrb[0].mxu0
      %v5653 = vadd.f32 0.0, %v5652
      %v5654 = vpop.f32.mrb[0].mxu0
      %v5655 = vpop.f32.mrb[0].mxu0
      %v5656 = vadd.f32 0.0, %v5655
      %v5657 = vpop.f32.mrb[0].mxu0
      %5658 = vmatprep.mubr.bf16.mxu0 0
      %5659 = vmatmul.mubr.bf16.gmra.mrb[0].mxu0 %v5485
      %v5660 = vpop.f32.mrb[0].mxu0
      %v5661 = vadd.f32 0.0, %v5660
      %v5662 = vpop.f32.mrb[0].mxu0
      %v5663 = vpop.f32.mrb[0].mxu0
      %v5664 = vadd.f32 0.0, %v5663
      %v5665 = vpop.f32.mrb[0].mxu0
      %5666 = vmatprep.mubr.bf16.mxu0 0
      %5667 = vmatmul.mubr.bf16.gmra.mrb[0].mxu0 %v5488
      %v5668 = vpop.f32.mrb[0].mxu0
      %v5669 = vadd.f32 0.0, %v5668
      %v5670 = vpop.f32.mrb[0].mxu0
      %v5671 = vpop.f32.mrb[0].mxu0
      %v5672 = vadd.f32 0.0, %v5671
      %v5673 = vpop.f32.mrb[0].mxu0
      %5674 = vmatprep.mubr.bf16.mxu0 0
      %5675 = vmatmul.mubr.bf16.gmra.mrb[0].mxu0 %v5491
      %v5676 = vpop.f32.mrb[0].mxu0
      %v5677 = vadd.f32 0.0, %v5676
      %v5678 = vpop.f32.mrb[0].mxu0
      %v5679 = vpop.f32.mrb[0].mxu0
      %v5680 = vadd.f32 0.0, %v5679
      %v5681 = vpop.f32.mrb[0].mxu0
      %5682 = vmatprep.mubr.bf16.mxu0 0
      %5683 = vmatmul.mubr.bf16.gmra.mrb[0].mxu0 %v5494
      %v5684 = vpop.f32.mrb[0].mxu0
      %v5685 = vadd.f32 0.0, %v5684
      %v5686 = vpop.f32.mrb[0].mxu0
      %v5687 = vpop.f32.mrb[0].mxu0
      %v5688 = vadd.f32 0.0, %v5687
      %v5689 = vpop.f32.mrb[0].mxu0
      %5690 = vmatprep.mubr.bf16.mxu0 0
      %5691 = vmatmul.mubr.bf16.gmra.mrb[0].mxu0 %v5497
      %v5692 = vpop.f32.mrb[0].mxu0
      %v5693 = vadd.f32 0.0, %v5692
      %v5694 = vpop.f32.mrb[0].mxu0
      %v5695 = vpop.f32.mrb[0].mxu0
      %v5696 = vadd.f32 0.0, %v5695
      %v5697 = vpop.f32.mrb[0].mxu0
      %5698 = vmatprep.mubr.bf16.mxu0 0
      %5699 = vmatmul.mubr.bf16.gmra.mrb[0].mxu0 %v5500
      %v5700 = vpop.f32.mrb[0].mxu0
      %v5701 = vadd.f32 0.0, %v5700
      %v5702 = vpop.f32.mrb[0].mxu0
      %v5703 = vpop.f32.mrb[0].mxu0
      %v5704 = vadd.f32 0.0, %v5703
      %v5705 = vpop.f32.mrb[0].mxu0
      %5706 = vmatprep.mubr.bf16.mxu0 0
      %5707 = vmatmul.mubr.bf16.gmra.mrb[0].mxu0 %v5503
      %v5708 = vpop.f32.mrb[0].mxu0
      %v5709 = vadd.f32 0.0, %v5708
      %v5710 = vpop.f32.mrb[0].mxu0
      %v5711 = vpop.f32.mrb[0].mxu0
      %v5712 = vadd.f32 0.0, %v5711
      %v5713 = vpop.f32.mrb[0].mxu0
      %5714 = vmatprep.mubr.bf16.mxu0 0
      %5715 = vmatmul.mubr.bf16.gmra.mrb[0].mxu0 %v5506
      %v5716 = vpop.f32.mrb[0].mxu0
      %v5717 = vadd.f32 0.0, %v5716
      %v5718 = vpop.f32.mrb[0].mxu0
      %v5719 = vpop.f32.mrb[0].mxu0
      %v5720 = vadd.f32 0.0, %v5719
      %v5721 = vpop.f32.mrb[0].mxu0
      %5722 = vmatprep.mubr.bf16.mxu0 0
      %5723 = vmatmul.mubr.bf16.gmra.mrb[0].mxu0 %v5509
      %v5724 = vpop.f32.mrb[0].mxu0
      %v5725 = vadd.f32 0.0, %v5724
      %v5726 = vpop.f32.mrb[0].mxu0
      %v5727 = vpop.f32.mrb[0].mxu0
      %v5728 = vadd.f32 0.0, %v5727
      %v5729 = vpop.f32.mrb[0].mxu0
      %5730 = vmatprep.mubr.bf16.mxu0 0
      %5731 = vmatmul.mubr.bf16.gmra.mrb[0].mxu0 %v5512
      %v5732 = vpop.f32.mrb[0].mxu0
      %v5733 = vadd.f32 0.0, %v5732
      %v5734 = vpop.f32.mrb[0].mxu0
      %v5735 = vpop.f32.mrb[0].mxu0
      %v5736 = vadd.f32 0.0, %v5735
      %v5737 = vpop.f32.mrb[0].mxu0
      %5738 = vdwg.mxu0
      %v5739 = vadd.f32 %v5267, %v5549
      %v5740 = vadd.f32 %v5268, %v5552
      %v5741 = vadd.f32 %v5269, %v5557
      %v5742 = vadd.f32 %v5270, %v5560
      %v5743 = vadd.f32 %v5271, %v5565
      %v5744 = vadd.f32 %v5272, %v5568
      %v5745 = vadd.f32 %v5273, %v5573
      %v5746 = vadd.f32 %v5274, %v5576
      %v5747 = vadd.f32 %v5275, %v5581
      %v5748 = vadd.f32 %v5276, %v5584
      %v5749 = vadd.f32 %v5277, %v5589
      %v5750 = vadd.f32 %v5278, %v5592
      %v5751 = vadd.f32 %v5279, %v5597
      %v5752 = vadd.f32 %v5280, %v5600
      %v5753 = vadd.f32 %v5281, %v5605
      %v5754 = vadd.f32 %v5282, %v5608
      %v5755 = vadd.f32 %v5283, %v5613
      %v5756 = vadd.f32 %v5284, %v5616
      %v5757 = vadd.f32 %v5285, %v5621
      %v5758 = vadd.f32 %v5286, %v5624
      %v5759 = vadd.f32 %v5287, %v5629
      %v5760 = vadd.f32 %v5288, %v5632
      %v5761 = vadd.f32 %v5289, %v5637
      %v5762 = vadd.f32 %v5290, %v5640
      %v5763 = vadd.f32 %v5291, %v5645
      %v5764 = vadd.f32 %v5292, %v5648
      %v5765 = vadd.f32 %v5293, %v5653
      %v5766 = vadd.f32 %v5294, %v5656
      %v5767 = vadd.f32 %v5295, %v5661
      %v5768 = vadd.f32 %v5296, %v5664
      %v5769 = vadd.f32 %v5297, %v5669
      %v5770 = vadd.f32 %v5298, %v5672
      %v5771 = vadd.f32 %v5299, %v5677
      %v5772 = vadd.f32 %v5300, %v5680
      %v5773 = vadd.f32 %v5301, %v5685
      %v5774 = vadd.f32 %v5302, %v5688
      %v5775 = vadd.f32 %v5303, %v5693
      %v5776 = vadd.f32 %v5304, %v5696
      %v5777 = vadd.f32 %v5305, %v5701
      %v5778 = vadd.f32 %v5306, %v5704
      %v5779 = vadd.f32 %v5307, %v5709
      %v5780 = vadd.f32 %v5308, %v5712
      %v5781 = vadd.f32 %v5309, %v5717
      %v5782 = vadd.f32 %v5310, %v5720
      %v5783 = vadd.f32 %v5311, %v5725
      %v5784 = vadd.f32 %v5312, %v5728
      %v5785 = vadd.f32 %v5313, %v5733
      %v5786 = vadd.f32 %v5314, %v5736
      %v5787 = vld [vmem:[%s6] sm:$0x1]
      %v5789 = vlaneseq
      %v5790 = vshrl.u32 %v5789, 7
      %v5791 = vsub.s32 0, %v5790
      %v5792 = vrot.slane %v5787, %v5791
      %v5794 = vadd.f32 %v5739, %v5792
      %v5795 = vadd.f32 %v5740, %v5792
      %v5796 = vadd.f32 %v5741, %v5792
      %v5797 = vadd.f32 %v5742, %v5792
      %v5798 = vadd.f32 %v5743, %v5792
      %v5799 = vadd.f32 %v5744, %v5792
      %v5800 = vadd.f32 %v5745, %v5792
      %v5801 = vadd.f32 %v5746, %v5792
      %v5802 = vadd.f32 %v5747, %v5792
      %v5803 = vadd.f32 %v5748, %v5792
      %v5804 = vadd.f32 %v5749, %v5792
      %v5805 = vadd.f32 %v5750, %v5792
      %v5806 = vadd.f32 %v5751, %v5792
      %v5807 = vadd.f32 %v5752, %v5792
      %v5808 = vadd.f32 %v5753, %v5792
      %v5809 = vadd.f32 %v5754, %v5792
      %v5810 = vadd.f32 %v5755, %v5792
      %v5811 = vadd.f32 %v5756, %v5792
      %v5812 = vadd.f32 %v5757, %v5792
      %v5813 = vadd.f32 %v5758, %v5792
      %v5814 = vadd.f32 %v5759, %v5792
      %v5815 = vadd.f32 %v5760, %v5792
      %v5816 = vadd.f32 %v5761, %v5792
      %v5817 = vadd.f32 %v5762, %v5792
      %v5818 = vadd.f32 %v5763, %v5792
      %v5819 = vadd.f32 %v5764, %v5792
      %v5820 = vadd.f32 %v5765, %v5792
      %v5821 = vadd.f32 %v5766, %v5792
      %v5822 = vadd.f32 %v5767, %v5792
      %v5823 = vadd.f32 %v5768, %v5792
      %v5824 = vadd.f32 %v5769, %v5792
      %v5825 = vadd.f32 %v5770, %v5792
      %v5826 = vadd.f32 %v5771, %v5792
      %v5827 = vadd.f32 %v5772, %v5792
      %v5828 = vadd.f32 %v5773, %v5792
      %v5829 = vadd.f32 %v5774, %v5792
      %v5830 = vadd.f32 %v5775, %v5792
      %v5831 = vadd.f32 %v5776, %v5792
      %v5832 = vadd.f32 %v5777, %v5792
      %v5833 = vadd.f32 %v5778, %v5792
      %v5834 = vadd.f32 %v5779, %v5792
      %v5835 = vadd.f32 %v5780, %v5792
      %v5836 = vadd.f32 %v5781, %v5792
      %v5837 = vadd.f32 %v5782, %v5792
      %v5838 = vadd.f32 %v5783, %v5792
      %v5839 = vadd.f32 %v5784, %v5792
      %v5840 = vadd.f32 %v5785, %v5792
      %v5841 = vadd.f32 %v5786, %v5792
      %v5842 = vmax.f32 %v5794, 0.0
      %v5843 = vmax.f32 %v5795, 0.0
      %v5844 = vmax.f32 %v5796, 0.0
      %v5845 = vmax.f32 %v5797, 0.0
      %v5846 = vmax.f32 %v5798, 0.0
      %v5847 = vmax.f32 %v5799, 0.0
      %v5848 = vmax.f32 %v5800, 0.0
      %v5849 = vmax.f32 %v5801, 0.0
      %v5850 = vmax.f32 %v5802, 0.0
      %v5851 = vmax.f32 %v5803, 0.0
      %v5852 = vmax.f32 %v5804, 0.0
      %v5853 = vmax.f32 %v5805, 0.0
      %v5854 = vmax.f32 %v5806, 0.0
      %v5855 = vmax.f32 %v5807, 0.0
      %v5856 = vmax.f32 %v5808, 0.0
      %v5857 = vmax.f32 %v5809, 0.0
      %v5858 = vmax.f32 %v5810, 0.0
      %v5859 = vmax.f32 %v5811, 0.0
      %v5860 = vmax.f32 %v5812, 0.0
      %v5861 = vmax.f32 %v5813, 0.0
      %v5862 = vmax.f32 %v5814, 0.0
      %v5863 = vmax.f32 %v5815, 0.0
      %v5864 = vmax.f32 %v5816, 0.0
      %v5865 = vmax.f32 %v5817, 0.0
      %v5866 = vmax.f32 %v5818, 0.0
      %v5867 = vmax.f32 %v5819, 0.0
      %v5868 = vmax.f32 %v5820, 0.0
      %v5869 = vmax.f32 %v5821, 0.0
      %v5870 = vmax.f32 %v5822, 0.0
      %v5871 = vmax.f32 %v5823, 0.0
      %v5872 = vmax.f32 %v5824, 0.0
      %v5873 = vmax.f32 %v5825, 0.0
      %v5874 = vmax.f32 %v5826, 0.0
      %v5875 = vmax.f32 %v5827, 0.0
      %v5876 = vmax.f32 %v5828, 0.0
      %v5877 = vmax.f32 %v5829, 0.0
      %v5878 = vmax.f32 %v5830, 0.0
      %v5879 = vmax.f32 %v5831, 0.0
      %v5880 = vmax.f32 %v5832, 0.0
      %v5881 = vmax.f32 %v5833, 0.0
      %v5882 = vmax.f32 %v5834, 0.0
      %v5883 = vmax.f32 %v5835, 0.0
      %v5884 = vmax.f32 %v5836, 0.0
      %v5885 = vmax.f32 %v5837, 0.0
      %v5886 = vmax.f32 %v5838, 0.0
      %v5887 = vmax.f32 %v5839, 0.0
      %v5888 = vmax.f32 %v5840, 0.0
      %v5889 = vmax.f32 %v5841, 0.0
      %v5890 = vpack.c.bf16 %v5843, %v5842
      %v5891 = vpack.c.bf16 %v5845, %v5844
      %v5892 = vpack.c.bf16 %v5847, %v5846
      %v5893 = vpack.c.bf16 %v5849, %v5848
      %v5894 = vpack.c.bf16 %v5851, %v5850
      %v5895 = vpack.c.bf16 %v5853, %v5852
      %v5896 = vpack.c.bf16 %v5855, %v5854
      %v5897 = vpack.c.bf16 %v5857, %v5856
      %v5898 = vpack.c.bf16 %v5859, %v5858
      %v5899 = vpack.c.bf16 %v5861, %v5860
      %v5900 = vpack.c.bf16 %v5863, %v5862
      %v5901 = vpack.c.bf16 %v5865, %v5864
      %v5902 = vpack.c.bf16 %v5867, %v5866
      %v5903 = vpack.c.bf16 %v5869, %v5868
      %v5904 = vpack.c.bf16 %v5871, %v5870
      %v5905 = vpack.c.bf16 %v5873, %v5872
      %v5906 = vpack.c.bf16 %v5875, %v5874
      %v5907 = vpack.c.bf16 %v5877, %v5876
      %v5908 = vpack.c.bf16 %v5879, %v5878
      %v5909 = vpack.c.bf16 %v5881, %v5880
      %v5910 = vpack.c.bf16 %v5883, %v5882
      %v5911 = vpack.c.bf16 %v5885, %v5884
      %v5912 = vpack.c.bf16 %v5887, %v5886
      %v5913 = vpack.c.bf16 %v5889, %v5888
      %v5914 = vld [vmem:[%s7] sm:$0xf]
      %v5915 = vld [vmem:[%s7 + $0x4] sm:$0xf]
      %v5916 = vld [vmem:[%s7 + $0x8] sm:$0xf]
      %v5917 = vld [vmem:[%s7 + $0xc] sm:$0xf]
      %v5918 = vld [vmem:[%s8] sm:$0x1]
      %v5920 = vlaneseq
      %v5921 = vshrl.u32 %v5920, 7
      %v5922 = vsub.s32 0, %v5921
      %v5923 = vrot.slane %v5918, %v5922
      %v5929 = vunpack.c.l.b16 %v5914
      %v5930 = vunpack.c.l.b16 %v5915
      %v5931 = vunpack.c.l.b16 %v5916
      %v5932 = vunpack.c.l.b16 %v5917
      %v5933 = vpack.c.b16 %v5930, %v5929
      %v5934 = vpack.c.b16 %v5932, %v5931
      %v5938 = vsel %vm348, %v5890, 0
      %v5941 = vsel %vm348, %v5891, 0
      %v5944 = vsel %vm348, %v5892, 0
      %v5947 = vsel %vm348, %v5893, 0
      %v5950 = vsel %vm348, %v5894, 0
      %v5953 = vsel %vm348, %v5895, 0
      %v5956 = vsel %vm348, %v5896, 0
      %v5959 = vsel %vm348, %v5897, 0
      %v5962 = vsel %vm348, %v5898, 0
      %v5965 = vsel %vm348, %v5899, 0
      %v5968 = vsel %vm348, %v5900, 0
      %v5971 = vsel %vm348, %v5901, 0
      %v5974 = vsel %vm348, %v5902, 0
      %v5977 = vsel %vm348, %v5903, 0
      %v5980 = vsel %vm348, %v5904, 0
      %v5983 = vsel %vm348, %v5905, 0
      %v5986 = vsel %vm348, %v5906, 0
      %v5989 = vsel %vm348, %v5907, 0
      %v5992 = vsel %vm348, %v5908, 0
      %v5995 = vsel %vm348, %v5909, 0
      %v5998 = vsel %vm348, %v5910, 0
      %v6001 = vsel %vm348, %v5911, 0
      %v6004 = vsel %vm348, %v5912, 0
      %v6007 = vsel %vm348, %v5913, 0
      %6009 = vmatprep.subr.bf16.mxu0 0
      %6010 = vmatpush1.bf16.msra.mxu0 %v5933
      %6011 = vmatprep.subr.bf16.mxu0 0
      %6012 = vmatpush1.bf16.msra.mxu0 %v5934
      %6013 = vmatprep.subr.bf16.mxu0 0
      %6014 = vmatpush1.bf16.msra.mxu0 0
      %6015 = vmatprep.subr.bf16.mxu0 0
      %6016 = vmatpush1.bf16.msra.mxu0 0
      %6017 = vmatprep.subr.bf16.mxu0 0
      %6018 = vmatpush1.bf16.msra.mxu0 0
      %6019 = vmatprep.subr.bf16.mxu0 0
      %6020 = vmatpush1.bf16.msra.mxu0 0
      %6021 = vmatprep.subr.bf16.mxu0 0
      %6022 = vmatpush1.bf16.msra.mxu0 0
      %6023 = vmatprep.subr.bf16.mxu0 0
      %6024 = vmatpush1.bf16.msra.mxu0 0
      %6025 = vmatprep.subr.bf16.mxu0 0
      %6026 = vmatpush1.bf16.msra.mxu0 0
      %6027 = vmatprep.subr.bf16.mxu0 0
      %6028 = vmatpush1.bf16.msra.mxu0 0
      %6029 = vmatprep.subr.bf16.mxu0 0
      %6030 = vmatpush1.bf16.msra.mxu0 0
      %6031 = vmatprep.subr.bf16.mxu0 0
      %6032 = vmatpush1.bf16.msra.mxu0 0
      %6033 = vmatprep.subr.bf16.mxu0 0
      %6034 = vmatpush1.bf16.msra.mxu0 0
      %6035 = vmatprep.subr.bf16.mxu0 0
      %6036 = vmatpush1.bf16.msra.mxu0 0
      %6037 = vmatprep.subr.bf16.mxu0 0
      %6038 = vmatpush1.bf16.msra.mxu0 0
      %6039 = vmatprep.subr.bf16.mxu0 0
      %6040 = vmatpush1.bf16.msra.mxu0 0
      %6041 = vmatprep.mubr.bf16.mxu0 0
      %6042 = vmatmul.mubr.bf16.gmra.mrb[0].mxu0 %v5938
      %v6043 = vpop.f32.mrb[0].mxu0
      %v6044 = vadd.f32 %v5923, %v6043
      %v6045 = vpop.f32.mrb[0].mxu0
      %v6046 = vpop.f32.mrb[0].mxu0
      %v6047 = vadd.f32 %v5923, %v6046
      %v6048 = vpop.f32.mrb[0].mxu0
      %6049 = vmatprep.mubr.bf16.mxu0 0
      %6050 = vmatmul.mubr.bf16.gmra.mrb[0].mxu0 %v5941
      %v6051 = vpop.f32.mrb[0].mxu0
      %v6052 = vadd.f32 %v5923, %v6051
      %v6053 = vpop.f32.mrb[0].mxu0
      %v6054 = vpop.f32.mrb[0].mxu0
      %v6055 = vadd.f32 %v5923, %v6054
      %v6056 = vpop.f32.mrb[0].mxu0
      %6057 = vmatprep.mubr.bf16.mxu0 0
      %6058 = vmatmul.mubr.bf16.gmra.mrb[0].mxu0 %v5944
      %v6059 = vpop.f32.mrb[0].mxu0
      %v6060 = vadd.f32 %v5923, %v6059
      %v6061 = vpop.f32.mrb[0].mxu0
      %v6062 = vpop.f32.mrb[0].mxu0
      %v6063 = vadd.f32 %v5923, %v6062
      %v6064 = vpop.f32.mrb[0].mxu0
      %6065 = vmatprep.mubr.bf16.mxu0 0
      %6066 = vmatmul.mubr.bf16.gmra.mrb[0].mxu0 %v5947
      %v6067 = vpop.f32.mrb[0].mxu0
      %v6068 = vadd.f32 %v5923, %v6067
      %v6069 = vpop.f32.mrb[0].mxu0
      %v6070 = vpop.f32.mrb[0].mxu0
      %v6071 = vadd.f32 %v5923, %v6070
      %v6072 = vpop.f32.mrb[0].mxu0
      %6073 = vmatprep.mubr.bf16.mxu0 0
      %6074 = vmatmul.mubr.bf16.gmra.mrb[0].mxu0 %v5950
      %v6075 = vpop.f32.mrb[0].mxu0
      %v6076 = vadd.f32 %v5923, %v6075
      %v6077 = vpop.f32.mrb[0].mxu0
      %v6078 = vpop.f32.mrb[0].mxu0
      %v6079 = vadd.f32 %v5923, %v6078
      %v6080 = vpop.f32.mrb[0].mxu0
      %6081 = vmatprep.mubr.bf16.mxu0 0
      %6082 = vmatmul.mubr.bf16.gmra.mrb[0].mxu0 %v5953
      %v6083 = vpop.f32.mrb[0].mxu0
      %v6084 = vadd.f32 %v5923, %v6083
      %v6085 = vpop.f32.mrb[0].mxu0
      %v6086 = vpop.f32.mrb[0].mxu0
      %v6087 = vadd.f32 %v5923, %v6086
      %v6088 = vpop.f32.mrb[0].mxu0
      %6089 = vmatprep.mubr.bf16.mxu0 0
      %6090 = vmatmul.mubr.bf16.gmra.mrb[0].mxu0 %v5956
      %v6091 = vpop.f32.mrb[0].mxu0
      %v6092 = vadd.f32 %v5923, %v6091
      %v6093 = vpop.f32.mrb[0].mxu0
      %v6094 = vpop.f32.mrb[0].mxu0
      %v6095 = vadd.f32 %v5923, %v6094
      %v6096 = vpop.f32.mrb[0].mxu0
      %6097 = vmatprep.mubr.bf16.mxu0 0
      %6098 = vmatmul.mubr.bf16.gmra.mrb[0].mxu0 %v5959
      %v6099 = vpop.f32.mrb[0].mxu0
      %v6100 = vadd.f32 %v5923, %v6099
      %v6101 = vpop.f32.mrb[0].mxu0
      %v6102 = vpop.f32.mrb[0].mxu0
      %v6103 = vadd.f32 %v5923, %v6102
      %v6104 = vpop.f32.mrb[0].mxu0
      %6105 = vmatprep.mubr.bf16.mxu0 0
      %6106 = vmatmul.mubr.bf16.gmra.mrb[0].mxu0 %v5962
      %v6107 = vpop.f32.mrb[0].mxu0
      %v6108 = vadd.f32 %v5923, %v6107
      %v6109 = vpop.f32.mrb[0].mxu0
      %v6110 = vpop.f32.mrb[0].mxu0
      %v6111 = vadd.f32 %v5923, %v6110
      %v6112 = vpop.f32.mrb[0].mxu0
      %6113 = vmatprep.mubr.bf16.mxu0 0
      %6114 = vmatmul.mubr.bf16.gmra.mrb[0].mxu0 %v5965
      %v6115 = vpop.f32.mrb[0].mxu0
      %v6116 = vadd.f32 %v5923, %v6115
      %v6117 = vpop.f32.mrb[0].mxu0
      %v6118 = vpop.f32.mrb[0].mxu0
      %v6119 = vadd.f32 %v5923, %v6118
      %v6120 = vpop.f32.mrb[0].mxu0
      %6121 = vmatprep.mubr.bf16.mxu0 0
      %6122 = vmatmul.mubr.bf16.gmra.mrb[0].mxu0 %v5968
      %v6123 = vpop.f32.mrb[0].mxu0
      %v6124 = vadd.f32 %v5923, %v6123
      %v6125 = vpop.f32.mrb[0].mxu0
      %v6126 = vpop.f32.mrb[0].mxu0
      %v6127 = vadd.f32 %v5923, %v6126
      %v6128 = vpop.f32.mrb[0].mxu0
      %6129 = vmatprep.mubr.bf16.mxu0 0
      %6130 = vmatmul.mubr.bf16.gmra.mrb[0].mxu0 %v5971
      %v6131 = vpop.f32.mrb[0].mxu0
      %v6132 = vadd.f32 %v5923, %v6131
      %v6133 = vpop.f32.mrb[0].mxu0
      %v6134 = vpop.f32.mrb[0].mxu0
      %v6135 = vadd.f32 %v5923, %v6134
      %v6136 = vpop.f32.mrb[0].mxu0
      %6137 = vmatprep.mubr.bf16.mxu0 0
      %6138 = vmatmul.mubr.bf16.gmra.mrb[0].mxu0 %v5974
      %v6139 = vpop.f32.mrb[0].mxu0
      %v6140 = vadd.f32 %v5923, %v6139
      %v6141 = vpop.f32.mrb[0].mxu0
      %v6142 = vpop.f32.mrb[0].mxu0
      %v6143 = vadd.f32 %v5923, %v6142
      %v6144 = vpop.f32.mrb[0].mxu0
      %6145 = vmatprep.mubr.bf16.mxu0 0
      %6146 = vmatmul.mubr.bf16.gmra.mrb[0].mxu0 %v5977
      %v6147 = vpop.f32.mrb[0].mxu0
      %v6148 = vadd.f32 %v5923, %v6147
      %v6149 = vpop.f32.mrb[0].mxu0
      %v6150 = vpop.f32.mrb[0].mxu0
      %v6151 = vadd.f32 %v5923, %v6150
      %v6152 = vpop.f32.mrb[0].mxu0
      %6153 = vmatprep.mubr.bf16.mxu0 0
      %6154 = vmatmul.mubr.bf16.gmra.mrb[0].mxu0 %v5980
      %v6155 = vpop.f32.mrb[0].mxu0
      %v6156 = vadd.f32 %v5923, %v6155
      %v6157 = vpop.f32.mrb[0].mxu0
      %v6158 = vpop.f32.mrb[0].mxu0
      %v6159 = vadd.f32 %v5923, %v6158
      %v6160 = vpop.f32.mrb[0].mxu0
      %6161 = vmatprep.mubr.bf16.mxu0 0
      %6162 = vmatmul.mubr.bf16.gmra.mrb[0].mxu0 %v5983
      %v6163 = vpop.f32.mrb[0].mxu0
      %v6164 = vadd.f32 %v5923, %v6163
      %v6165 = vpop.f32.mrb[0].mxu0
      %v6166 = vpop.f32.mrb[0].mxu0
      %v6167 = vadd.f32 %v5923, %v6166
      %v6168 = vpop.f32.mrb[0].mxu0
      %6169 = vmatprep.mubr.bf16.mxu0 0
      %6170 = vmatmul.mubr.bf16.gmra.mrb[0].mxu0 %v5986
      %v6171 = vpop.f32.mrb[0].mxu0
      %v6172 = vadd.f32 %v5923, %v6171
      %v6173 = vpop.f32.mrb[0].mxu0
      %v6174 = vpop.f32.mrb[0].mxu0
      %v6175 = vadd.f32 %v5923, %v6174
      %v6176 = vpop.f32.mrb[0].mxu0
      %6177 = vmatprep.mubr.bf16.mxu0 0
      %6178 = vmatmul.mubr.bf16.gmra.mrb[0].mxu0 %v5989
      %v6179 = vpop.f32.mrb[0].mxu0
      %v6180 = vadd.f32 %v5923, %v6179
      %v6181 = vpop.f32.mrb[0].mxu0
      %v6182 = vpop.f32.mrb[0].mxu0
      %v6183 = vadd.f32 %v5923, %v6182
      %v6184 = vpop.f32.mrb[0].mxu0
      %6185 = vmatprep.mubr.bf16.mxu0 0
      %6186 = vmatmul.mubr.bf16.gmra.mrb[0].mxu0 %v5992
      %v6187 = vpop.f32.mrb[0].mxu0
      %v6188 = vadd.f32 %v5923, %v6187
      %v6189 = vpop.f32.mrb[0].mxu0
      %v6190 = vpop.f32.mrb[0].mxu0
      %v6191 = vadd.f32 %v5923, %v6190
      %v6192 = vpop.f32.mrb[0].mxu0
      %6193 = vmatprep.mubr.bf16.mxu0 0
      %6194 = vmatmul.mubr.bf16.gmra.mrb[0].mxu0 %v5995
      %v6195 = vpop.f32.mrb[0].mxu0
      %v6196 = vadd.f32 %v5923, %v6195
      %v6197 = vpop.f32.mrb[0].mxu0
      %v6198 = vpop.f32.mrb[0].mxu0
      %v6199 = vadd.f32 %v5923, %v6198
      %v6200 = vpop.f32.mrb[0].mxu0
      %6201 = vmatprep.mubr.bf16.mxu0 0
      %6202 = vmatmul.mubr.bf16.gmra.mrb[0].mxu0 %v5998
      %v6203 = vpop.f32.mrb[0].mxu0
      %v6204 = vadd.f32 %v5923, %v6203
      %v6205 = vpop.f32.mrb[0].mxu0
      %v6206 = vpop.f32.mrb[0].mxu0
      %v6207 = vadd.f32 %v5923, %v6206
      %v6208 = vpop.f32.mrb[0].mxu0
      %6209 = vmatprep.mubr.bf16.mxu0 0
      %6210 = vmatmul.mubr.bf16.gmra.mrb[0].mxu0 %v6001
      %v6211 = vpop.f32.mrb[0].mxu0
      %v6212 = vadd.f32 %v5923, %v6211
      %v6213 = vpop.f32.mrb[0].mxu0
      %v6214 = vpop.f32.mrb[0].mxu0
      %v6215 = vadd.f32 %v5923, %v6214
      %v6216 = vpop.f32.mrb[0].mxu0
      %6217 = vmatprep.mubr.bf16.mxu0 0
      %6218 = vmatmul.mubr.bf16.gmra.mrb[0].mxu0 %v6004
      %v6219 = vpop.f32.mrb[0].mxu0
      %v6220 = vadd.f32 %v5923, %v6219
      %v6221 = vpop.f32.mrb[0].mxu0
      %v6222 = vpop.f32.mrb[0].mxu0
      %v6223 = vadd.f32 %v5923, %v6222
      %v6224 = vpop.f32.mrb[0].mxu0
      %6225 = vmatprep.mubr.bf16.mxu0 0
      %6226 = vmatmul.mubr.bf16.gmra.mrb[0].mxu0 %v6007
      %v6227 = vpop.f32.mrb[0].mxu0
      %v6228 = vadd.f32 %v5923, %v6227
      %v6229 = vpop.f32.mrb[0].mxu0
      %v6230 = vpop.f32.mrb[0].mxu0
      %v6231 = vadd.f32 %v5923, %v6230
      %v6232 = vpop.f32.mrb[0].mxu0
      %6233 = vdwg.mxu0
      %v6234 = vpack.c.bf16 %v6047, %v6044
      %v6235 = vpack.c.bf16 %v6055, %v6052
      %v6236 = vpack.c.bf16 %v6063, %v6060
      %v6237 = vpack.c.bf16 %v6071, %v6068
      %v6238 = vpack.c.bf16 %v6079, %v6076
      %v6239 = vpack.c.bf16 %v6087, %v6084
      %v6240 = vpack.c.bf16 %v6095, %v6092
      %v6241 = vpack.c.bf16 %v6103, %v6100
      %v6242 = vpack.c.bf16 %v6111, %v6108
      %v6243 = vpack.c.bf16 %v6119, %v6116
      %v6244 = vpack.c.bf16 %v6127, %v6124
      %v6245 = vpack.c.bf16 %v6135, %v6132
      %v6246 = vpack.c.bf16 %v6143, %v6140
      %v6247 = vpack.c.bf16 %v6151, %v6148
      %v6248 = vpack.c.bf16 %v6159, %v6156
      %v6249 = vpack.c.bf16 %v6167, %v6164
      %v6250 = vpack.c.bf16 %v6175, %v6172
      %v6251 = vpack.c.bf16 %v6183, %v6180
      %v6252 = vpack.c.bf16 %v6191, %v6188
      %v6253 = vpack.c.bf16 %v6199, %v6196
      %v6254 = vpack.c.bf16 %v6207, %v6204
      %v6255 = vpack.c.bf16 %v6215, %v6212
      %v6256 = vpack.c.bf16 %v6223, %v6220
      %v6257 = vpack.c.bf16 %v6231, %v6228
      %v6282 = vunpack.c.l.b16 %v6234
      %v6283 = vunpack.c.h.b16 %v6234
      %v6284 = vunpack.c.l.b16 %v6235
      %v6285 = vunpack.c.h.b16 %v6235
      %v6286 = vunpack.c.l.b16 %v6236
      %v6287 = vunpack.c.h.b16 %v6236
      %v6288 = vunpack.c.l.b16 %v6237
      %v6289 = vunpack.c.h.b16 %v6237
      %v6290 = vunpack.c.l.b16 %v6238
      %v6291 = vunpack.c.h.b16 %v6238
      %v6292 = vunpack.c.l.b16 %v6239
      %v6293 = vunpack.c.h.b16 %v6239
      %v6294 = vunpack.c.l.b16 %v6240
      %v6295 = vunpack.c.h.b16 %v6240
      %v6296 = vunpack.c.l.b16 %v6241
      %v6297 = vunpack.c.h.b16 %v6241
      %v6298 = vunpack.c.l.b16 %v6242
      %v6299 = vunpack.c.h.b16 %v6242
      %v6300 = vunpack.c.l.b16 %v6243
      %v6301 = vunpack.c.h.b16 %v6243
      %v6302 = vunpack.c.l.b16 %v6244
      %v6303 = vunpack.c.h.b16 %v6244
      %v6304 = vunpack.c.l.b16 %v6245
      %v6305 = vunpack.c.h.b16 %v6245
      %v6306 = vunpack.c.l.b16 %v6246
      %v6307 = vunpack.c.h.b16 %v6246
      %v6308 = vunpack.c.l.b16 %v6247
      %v6309 = vunpack.c.h.b16 %v6247
      %v6310 = vunpack.c.l.b16 %v6248
      %v6311 = vunpack.c.h.b16 %v6248
      %v6312 = vunpack.c.l.b16 %v6249
      %v6313 = vunpack.c.h.b16 %v6249
      %v6314 = vunpack.c.l.b16 %v6250
      %v6315 = vunpack.c.h.b16 %v6250
      %v6316 = vunpack.c.l.b16 %v6251
      %v6317 = vunpack.c.h.b16 %v6251
      %v6318 = vunpack.c.l.b16 %v6252
      %v6319 = vunpack.c.h.b16 %v6252
      %v6320 = vunpack.c.l.b16 %v6253
      %v6321 = vunpack.c.h.b16 %v6253
      %v6322 = vunpack.c.l.b16 %v6254
      %v6323 = vunpack.c.h.b16 %v6254
      %v6324 = vunpack.c.l.b16 %v6255
      %v6325 = vunpack.c.h.b16 %v6255
      %v6326 = vunpack.c.l.b16 %v6256
      %v6327 = vunpack.c.h.b16 %v6256
      %v6328 = vunpack.c.l.b16 %v6257
      %v6329 = vunpack.c.h.b16 %v6257
      %v6330 = vpack.c.b16 %v6282, %v6282
      %v6331 = vpack.c.b16 %v6283, %v6283
      %v6332 = vpack.c.b16 %v6284, %v6284
      %v6333 = vpack.c.b16 %v6285, %v6285
      %v6334 = vpack.c.b16 %v6286, %v6286
      %v6335 = vpack.c.b16 %v6287, %v6287
      %v6336 = vpack.c.b16 %v6288, %v6288
      %v6337 = vpack.c.b16 %v6289, %v6289
      %v6338 = vpack.c.b16 %v6290, %v6290
      %v6339 = vpack.c.b16 %v6291, %v6291
      %v6340 = vpack.c.b16 %v6292, %v6292
      %v6341 = vpack.c.b16 %v6293, %v6293
      %v6342 = vpack.c.b16 %v6294, %v6294
      %v6343 = vpack.c.b16 %v6295, %v6295
      %v6344 = vpack.c.b16 %v6296, %v6296
      %v6345 = vpack.c.b16 %v6297, %v6297
      %v6346 = vpack.c.b16 %v6298, %v6298
      %v6347 = vpack.c.b16 %v6299, %v6299
      %v6348 = vpack.c.b16 %v6300, %v6300
      %v6349 = vpack.c.b16 %v6301, %v6301
      %v6350 = vpack.c.b16 %v6302, %v6302
      %v6351 = vpack.c.b16 %v6303, %v6303
      %v6352 = vpack.c.b16 %v6304, %v6304
      %v6353 = vpack.c.b16 %v6305, %v6305
      %v6354 = vpack.c.b16 %v6306, %v6306
      %v6355 = vpack.c.b16 %v6307, %v6307
      %v6356 = vpack.c.b16 %v6308, %v6308
      %v6357 = vpack.c.b16 %v6309, %v6309
      %v6358 = vpack.c.b16 %v6310, %v6310
      %v6359 = vpack.c.b16 %v6311, %v6311
      %v6360 = vpack.c.b16 %v6312, %v6312
      %v6361 = vpack.c.b16 %v6313, %v6313
      %v6362 = vpack.c.b16 %v6314, %v6314
      %v6363 = vpack.c.b16 %v6315, %v6315
      %v6364 = vpack.c.b16 %v6316, %v6316
      %v6365 = vpack.c.b16 %v6317, %v6317
      %v6366 = vpack.c.b16 %v6318, %v6318
      %v6367 = vpack.c.b16 %v6319, %v6319
      %v6368 = vpack.c.b16 %v6320, %v6320
      %v6369 = vpack.c.b16 %v6321, %v6321
      %v6370 = vpack.c.b16 %v6322, %v6322
      %v6371 = vpack.c.b16 %v6323, %v6323
      %v6372 = vpack.c.b16 %v6324, %v6324
      %v6373 = vpack.c.b16 %v6325, %v6325
      %v6374 = vpack.c.b16 %v6326, %v6326
      %v6375 = vpack.c.b16 %v6327, %v6327
      %v6376 = vpack.c.b16 %v6328, %v6328
      %v6377 = vpack.c.b16 %v6329, %v6329
      %vm6426 = vcmask 125952
      %6427 = vst.msk [vmem:[%s346] sm:$0xf] %vm6426, %v6330
      %6428 = vst.msk [vmem:[%s346 + $0x4] sm:$0xf] %vm6426, %v6331
      %6429 = vst.msk [vmem:[%s346 + $0x8] sm:$0xf] %vm6426, %v6332
      %6430 = vst.msk [vmem:[%s346 + $0xc] sm:$0xf] %vm6426, %v6333
      %6431 = vst.msk [vmem:[%s346 + $0x10] sm:$0xf] %vm6426, %v6334
      %6432 = vst.msk [vmem:[%s346 + $0x14] sm:$0xf] %vm6426, %v6335
      %6433 = vst.msk [vmem:[%s346 + $0x18] sm:$0xf] %vm6426, %v6336
      %6434 = vst.msk [vmem:[%s346 + $0x1c] sm:$0xf] %vm6426, %v6337
      %6435 = vst.msk [vmem:[%s346 + $0x20] sm:$0xf] %vm6426, %v6338
      %6436 = vst.msk [vmem:[%s346 + $0x24] sm:$0xf] %vm6426, %v6339
      %6437 = vst.msk [vmem:[%s346 + $0x28] sm:$0xf] %vm6426, %v6340
      %6438 = vst.msk [vmem:[%s346 + $0x2c] sm:$0xf] %vm6426, %v6341
      %6439 = vst.msk [vmem:[%s346 + $0x30] sm:$0xf] %vm6426, %v6342
      %6440 = vst.msk [vmem:[%s346 + $0x34] sm:$0xf] %vm6426, %v6343
      %6441 = vst.msk [vmem:[%s346 + $0x38] sm:$0xf] %vm6426, %v6344
      %6442 = vst.msk [vmem:[%s346 + $0x3c] sm:$0xf] %vm6426, %v6345
      %6443 = vst.msk [vmem:[%s346 + $0x40] sm:$0xf] %vm6426, %v6346
      %6444 = vst.msk [vmem:[%s346 + $0x44] sm:$0xf] %vm6426, %v6347
      %6445 = vst.msk [vmem:[%s346 + $0x48] sm:$0xf] %vm6426, %v6348
      %6446 = vst.msk [vmem:[%s346 + $0x4c] sm:$0xf] %vm6426, %v6349
      %6447 = vst.msk [vmem:[%s346 + $0x50] sm:$0xf] %vm6426, %v6350
      %6448 = vst.msk [vmem:[%s346 + $0x54] sm:$0xf] %vm6426, %v6351
      %6449 = vst.msk [vmem:[%s346 + $0x58] sm:$0xf] %vm6426, %v6352
      %6450 = vst.msk [vmem:[%s346 + $0x5c] sm:$0xf] %vm6426, %v6353
      %6451 = vst.msk [vmem:[%s346 + $0x60] sm:$0xf] %vm6426, %v6354
      %6452 = vst.msk [vmem:[%s346 + $0x64] sm:$0xf] %vm6426, %v6355
      %6453 = vst.msk [vmem:[%s346 + $0x68] sm:$0xf] %vm6426, %v6356
      %6454 = vst.msk [vmem:[%s346 + $0x6c] sm:$0xf] %vm6426, %v6357
      %6455 = vst.msk [vmem:[%s346 + $0x70] sm:$0xf] %vm6426, %v6358
      %6456 = vst.msk [vmem:[%s346 + $0x74] sm:$0xf] %vm6426, %v6359
      %6457 = vst.msk [vmem:[%s346 + $0x78] sm:$0xf] %vm6426, %v6360
      %6458 = vst.msk [vmem:[%s346 + $0x7c] sm:$0xf] %vm6426, %v6361
      %6459 = vst.msk [vmem:[%s346 + $0x80] sm:$0xf] %vm6426, %v6362
      %6460 = vst.msk [vmem:[%s346 + $0x84] sm:$0xf] %vm6426, %v6363
      %6461 = vst.msk [vmem:[%s346 + $0x88] sm:$0xf] %vm6426, %v6364
      %6462 = vst.msk [vmem:[%s346 + $0x8c] sm:$0xf] %vm6426, %v6365
      %6463 = vst.msk [vmem:[%s346 + $0x90] sm:$0xf] %vm6426, %v6366
      %6464 = vst.msk [vmem:[%s346 + $0x94] sm:$0xf] %vm6426, %v6367
      %6465 = vst.msk [vmem:[%s346 + $0x98] sm:$0xf] %vm6426, %v6368
      %6466 = vst.msk [vmem:[%s346 + $0x9c] sm:$0xf] %vm6426, %v6369
      %6467 = vst.msk [vmem:[%s346 + $0xa0] sm:$0xf] %vm6426, %v6370
      %6468 = vst.msk [vmem:[%s346 + $0xa4] sm:$0xf] %vm6426, %v6371
      %6469 = vst.msk [vmem:[%s346 + $0xa8] sm:$0xf] %vm6426, %v6372
      %6470 = vst.msk [vmem:[%s346 + $0xac] sm:$0xf] %vm6426, %v6373
      %6471 = vst.msk [vmem:[%s346 + $0xb0] sm:$0xf] %vm6426, %v6374
      %6472 = vst.msk [vmem:[%s346 + $0xb4] sm:$0xf] %vm6426, %v6375
      %6473 = vst.msk [vmem:[%s346 + $0xb8] sm:$0xf] %vm6426, %v6376
      %6474 = vst.msk [vmem:[%s346 + $0xbc] sm:$0xf] %vm6426, %v6377
      %p6475 = scmp.lt.s32.totalorder %s20, 1
      %s6476 = scalar_select %p6475, %s20, 1
      %s6477 = smul.addr %s6476, 48
      %s6478 = smul.addr %s6477, 4
      %s6479 = scalar_lea.vmem %s9, %s6478
      // Predicated region
      $region57: #{forward.3} parent=55 // pred_check
        %p6480 = pneg %p237
      $region58: #{forward.3} parent=55 // pred_check_branch
        %6482 = sbr.rel (%p6480) target = $region60
      $region59: #{forward.3} parent=55 // pred_region
        _
      $region60: #{forward.3} parent=55 // pred_fallthru
        _
    $region56: #{forward.3} parent=5 // pred_fallthru
      _
    %p6483 = scmp.le.s32.totalorder 2, %s15
    // Predicated region
    $region61: #{forward.3} parent=5 // pred_check
      %p6484 = pneg %p6483
    $region62: #{forward.3} parent=5 // pred_check_branch
      %6486 = sbr.rel (%p6484) target = $region64
    $region63: #{forward.3} parent=5 // pred_region
      %s6487 = ssub.s32 %s15, 2
      // Predicated region
      $region65: #{forward.3} parent=63 // pred_check
        %p6488 = pneg %p243
      $region66: #{forward.3} parent=63 // pred_check_branch
        %6490 = sbr.rel (%p6488) target = $region68
      $region67: #{forward.3} parent=63 // pred_region
        %p6491 = scmp.lt.s32.totalorder %s21, 1
        %s6492 = scalar_select %p6491, %s21, 1
        %s6493 = smul.addr %s6492, 48
        %s6494 = smul.addr %s6493, 4
        %s6495 = scalar_lea.vmem %s9, %s6494
      $region68: #{forward.3} parent=63 // pred_fallthru
        _
    $region64: #{forward.3} parent=5 // pred_fallthru
      _
  $region6: #{forward.3} parent=0 // loop_footer
    %s19 = sadd.s32 1, %s15
  $region7: #{forward.3} parent=0 // loop_footer_branch
    %14 = sbr.rel target = $region3
  $region8: #{forward.3} parent=0 // loop_exit
    _

</llo_original>
